<compile_context>
chip_gen: v6e
topology: v6e:2x2x1
jax: 0.10.0
libtpu: 0.0.40
codegen_flags: <defaults>
</compile_context>

<pallas_src>
import functools

import jax
import jax.numpy as jnp
from jax.experimental import pallas as pl
from jax.experimental.pallas import tpu as pltpu

FEATURE_3_DIM = 1024
FEATURE_3_ENCODE_DIM = 32
LAYER_DIMS = [FEATURE_3_DIM, 512, 256, 128, 64, FEATURE_3_ENCODE_DIM]
NEG_SLOPE = 0.2

_BATCH_ALIGN = 128                       # keep batch tile MXU/sublane friendly
_VMEM_LIMIT_BYTES = 48 * 1024 * 1024     # comfortably inside v7x's 64 MiB VMEM


def _leaky_relu(v):
    return jnp.where(v > 0, v, NEG_SLOPE * v)


def encoder3_kernel(x_ref,
                    w1_ref, b1_ref,
                    w2_ref, b2_ref,
                    w3_ref, b3_ref,
                    w4_ref, b4_ref,
                    w5_ref, b5_ref,
                    o_ref):
    # Entire 5-layer MLP fused.  The bf16 weights (~1.4 MiB) stay resident in
    # VMEM across all grid steps; matmuls run on the MXU in bf16 with f32
    # accumulation; bias add / LeakyReLU / tanh stay in f32.
    h = x_ref[...].astype(jnp.bfloat16)            # single cast point for x

    h = jnp.dot(h, w1_ref[...], preferred_element_type=jnp.float32) + b1_ref[...]
    h = _leaky_relu(h)
    h = jnp.dot(h.astype(jnp.bfloat16), w2_ref[...],
                preferred_element_type=jnp.float32) + b2_ref[...]
    h = _leaky_relu(h)
    h = jnp.dot(h.astype(jnp.bfloat16), w3_ref[...],
                preferred_element_type=jnp.float32) + b3_ref[...]
    h = _leaky_relu(h)
    h = jnp.dot(h.astype(jnp.bfloat16), w4_ref[...],
                preferred_element_type=jnp.float32) + b4_ref[...]
    h = _leaky_relu(h)
    h = jnp.dot(h.astype(jnp.bfloat16), w5_ref[...],
                preferred_element_type=jnp.float32) + b5_ref[...]
    # Output is only 32 lanes wide; bytes are tiny so we accept the masked
    # store rather than padding the last layer out to 128 lanes.
    o_ref[...] = jnp.tanh(h).astype(o_ref.dtype)


def _round_up(n, m):
    return ((n + m - 1) // m) * m


@functools.partial(jax.jit, static_argnames=("block_b", "single_buffer_weights"))
def _encoder3_forward_impl(x, params, *, block_b, single_buffer_weights):
    B, D = x.shape
    assert D == FEATURE_3_DIM

    # Effective batch tile: shrink for small batches, and cap near ceil(B/2) so
    # the grid has >=2 "parallel" steps when the batch allows it (lets v7x use
    # both TensorCores).
    bb = min(block_b, max(_BATCH_ALIGN, _round_up(pl.cdiv(B, 2), _BATCH_ALIGN)))
    b_padded = _round_up(B, bb)
    if b_padded != B:
        x = jnp.pad(x, ((0, b_padded - B), (0, 0)))

    weight_kwargs = (
        {"pipeline_mode": pl.Buffered(1)} if single_buffer_weights else {}
    )

    in_specs = [pl.BlockSpec((bb, FEATURE_3_DIM), lambda i: (i, 0))]
    flat_params = []
    for (w, b) in params:
        # Constant index_map -> block stays resident; single-buffer it (there
        # is nothing to prefetch), saving VMEM for larger batch tiles.
        in_specs.append(pl.BlockSpec(w.shape, lambda i: (0, 0), **weight_kwargs))
        in_specs.append(pl.BlockSpec(b.shape, lambda i: (0, 0), **weight_kwargs))
        # bf16 MXU operands; biases stay f32 (added to the f32 accumulator).
        flat_params.extend([w.astype(jnp.bfloat16), b.astype(jnp.float32)])

    out_spec = pl.BlockSpec((bb, FEATURE_3_ENCODE_DIM), lambda i: (i, 0))

    out = pl.pallas_call(
        encoder3_kernel,
        out_shape=jax.ShapeDtypeStruct((b_padded, FEATURE_3_ENCODE_DIM), x.dtype),
        grid_spec=pltpu.PrefetchScalarGridSpec(
            num_scalar_prefetch=0,
            grid=(b_padded // bb,),
            in_specs=in_specs,
            out_specs=out_spec,
        ),
        compiler_params=pltpu.CompilerParams(
            dimension_semantics=("parallel",),
            vmem_limit_bytes=_VMEM_LIMIT_BYTES,
        ),
    )(x, *flat_params)

    return out[:B]


def encoder3_forward(x, params, *, block_b=512):
    """x: (B, 1024) float32. params: list of (W, b) with W:(in,out), b:(1,out)."""
    params = tuple((w, b) for (w, b) in params)
    try:
        return _encoder3_forward_impl(
            x, params, block_b=block_b, single_buffer_weights=True)
    except Exception:
        # Portability fallback: if this Pallas build rejects
        # pipeline_mode=pl.Buffered(1), fall back to default double-buffering
        # (costs only ~1.4 MiB of extra VMEM for the resident weights).
        return _encoder3_forward_impl(
            x, params, block_b=block_b, single_buffer_weights=False)


def init_params(key):
    """Deterministic synthetic init (torch Linear-style uniform bound 1/sqrt(fan_in))."""
    params = []
    for i in range(len(LAYER_DIMS) - 1):
        fan_in, fan_out = LAYER_DIMS[i], LAYER_DIMS[i + 1]
        key, kw, kb = jax.random.split(key, 3)
        bound = 1.0 / jnp.sqrt(float(fan_in))
        w = jax.random.uniform(kw, (fan_in, fan_out), jnp.float32, -bound, bound)
        b = jax.random.uniform(kb, (1, fan_out), jnp.float32, -bound, bound)
        params.append((w, b))
    return params


def reference_forward(x, params):
    """Pure-JAX reference using the same bf16-matmul / f32-accumulate recipe."""
    h = x
    for idx, (w, b) in enumerate(params):
        h = jnp.dot(h.astype(jnp.bfloat16), w.astype(jnp.bfloat16),
                    preferred_element_type=jnp.float32) + b
        if idx < len(params) - 1:
            h = jnp.where(h > 0, h, NEG_SLOPE * h)
        else:
            h = jnp.tanh(h)
    return h


if __name__ == "__main__":
    key = jax.random.PRNGKey(0)
    key, kx = jax.random.split(key)

    B = 8  # small demo batch; wrapper pads it up to one 128-row tile
    x = jax.random.normal(kx, (B, FEATURE_3_DIM), jnp.float32)
    params = init_params(key)

    out = jax.block_until_ready(encoder3_forward(x, params))
    ref = reference_forward(x, params)

    assert out.shape == (B, FEATURE_3_ENCODE_DIM)
    err = float(jnp.max(jnp.abs(out - ref)))
    assert jnp.allclose(out, ref, atol=2e-2, rtol=2e-2), err

    print("KERNEL_OK")
</pallas_src>

<mosaic_0001>
module attributes {stable_mosaic.version = 11 : i64} {
  func.func @encoder3_kernel(%arg0: i32, %arg1: memref<128x1024xf32, #tpu.memory_space<vmem>>, %arg2: memref<1024x512xbf16, #tpu.memory_space<vmem>>, %arg3: memref<1x512xf32, #tpu.memory_space<vmem>>, %arg4: memref<512x256xbf16, #tpu.memory_space<vmem>>, %arg5: memref<1x256xf32, #tpu.memory_space<vmem>>, %arg6: memref<256x128xbf16, #tpu.memory_space<vmem>>, %arg7: memref<1x128xf32, #tpu.memory_space<vmem>>, %arg8: memref<128x64xbf16, #tpu.memory_space<vmem>>, %arg9: memref<1x64xf32, #tpu.memory_space<vmem>>, %arg10: memref<64x32xbf16, #tpu.memory_space<vmem>>, %arg11: memref<1x32xf32, #tpu.memory_space<vmem>>, %arg12: memref<128x32xf32, #tpu.memory_space<vmem>>) attributes {dimension_semantics = [#tpu.dimension_semantics<parallel>], iteration_bounds = array<i64: 1>, scalar_prefetch = 0 : i64, scratch_operands = 0 : i64, tpu.core_type = #tpu.core_type<tc>, window_params = [{transform_indices = @transform_0, window_bounds = array<i64: 128, 1024>}, {pipeline_mode = #tpu.pipeline_mode<synchronous>, transform_indices = @transform_1, window_bounds = array<i64: 1024, 512>}, {pipeline_mode = #tpu.pipeline_mode<synchronous>, transform_indices = @transform_2, window_bounds = array<i64: 1, 512>}, {pipeline_mode = #tpu.pipeline_mode<synchronous>, transform_indices = @transform_3, window_bounds = array<i64: 512, 256>}, {pipeline_mode = #tpu.pipeline_mode<synchronous>, transform_indices = @transform_4, window_bounds = array<i64: 1, 256>}, {pipeline_mode = #tpu.pipeline_mode<synchronous>, transform_indices = @transform_5, window_bounds = array<i64: 256, 128>}, {pipeline_mode = #tpu.pipeline_mode<synchronous>, transform_indices = @transform_6, window_bounds = array<i64: 1, 128>}, {pipeline_mode = #tpu.pipeline_mode<synchronous>, transform_indices = @transform_7, window_bounds = array<i64: 128, 64>}, {pipeline_mode = #tpu.pipeline_mode<synchronous>, transform_indices = @transform_8, window_bounds = array<i64: 1, 64>}, {pipeline_mode = #tpu.pipeline_mode<synchronous>, transform_indices = @transform_9, window_bounds = array<i64: 64, 32>}, {pipeline_mode = #tpu.pipeline_mode<synchronous>, transform_indices = @transform_10, window_bounds = array<i64: 1, 32>}, {transform_indices = @transform_11, window_bounds = array<i64: 128, 32>}]} {
    %c0 = arith.constant 0 : index
    %c0_0 = arith.constant 0 : index
    %0 = vector.load %arg1[%c0, %c0_0] : memref<128x1024xf32, #tpu.memory_space<vmem>>, vector<128x1024xf32>
    %1 = arith.truncf %0 : vector<128x1024xf32> to vector<128x1024xbf16>
    %c0_1 = arith.constant 0 : index
    %c0_2 = arith.constant 0 : index
    %2 = vector.load %arg2[%c0_1, %c0_2] : memref<1024x512xbf16, #tpu.memory_space<vmem>>, vector<1024x512xbf16>
    %cst = arith.constant dense<0.000000e+00> : vector<128x512xf32>
    %3 = tpu.matmul %1, %2, %cst {dimension_numbers = #tpu.dot_dimension_numbers<[1], [0], [0], [1], [0, 0, 1, 1], [], []>} : vector<128x1024xbf16>, vector<1024x512xbf16>, vector<128x512xf32> -> vector<128x512xf32>
    %c0_3 = arith.constant 0 : index
    %c0_4 = arith.constant 0 : index
    %4 = vector.load %arg3[%c0_3, %c0_4] : memref<1x512xf32, #tpu.memory_space<vmem>>, vector<1x512xf32>
    %5 = vector.broadcast %4 : vector<1x512xf32> to vector<128x512xf32>
    %6 = arith.addf %3, %5 : vector<128x512xf32>
    %cst_5 = arith.constant 0.000000e+00 : f32
    %7 = vector.broadcast %cst_5 : f32 to vector<128x512xf32>
    %8 = arith.cmpf ogt, %6, %7 : vector<128x512xf32>
    %cst_6 = arith.constant 2.000000e-01 : f32
    %9 = vector.broadcast %cst_6 : f32 to vector<128x512xf32>
    %10 = arith.mulf %9, %6 : vector<128x512xf32>
    %11 = arith.select %8, %6, %10 : vector<128x512xi1>, vector<128x512xf32>
    %12 = arith.truncf %11 : vector<128x512xf32> to vector<128x512xbf16>
    %c0_7 = arith.constant 0 : index
    %c0_8 = arith.constant 0 : index
    %13 = vector.load %arg4[%c0_7, %c0_8] : memref<512x256xbf16, #tpu.memory_space<vmem>>, vector<512x256xbf16>
    %cst_9 = arith.constant dense<0.000000e+00> : vector<128x256xf32>
    %14 = tpu.matmul %12, %13, %cst_9 {dimension_numbers = #tpu.dot_dimension_numbers<[1], [0], [0], [1], [0, 0, 1, 1], [], []>} : vector<128x512xbf16>, vector<512x256xbf16>, vector<128x256xf32> -> vector<128x256xf32>
    %c0_10 = arith.constant 0 : index
    %c0_11 = arith.constant 0 : index
    %15 = vector.load %arg5[%c0_10, %c0_11] : memref<1x256xf32, #tpu.memory_space<vmem>>, vector<1x256xf32>
    %16 = vector.broadcast %15 : vector<1x256xf32> to vector<128x256xf32>
    %17 = arith.addf %14, %16 : vector<128x256xf32>
    %cst_12 = arith.constant 0.000000e+00 : f32
    %18 = vector.broadcast %cst_12 : f32 to vector<128x256xf32>
    %19 = arith.cmpf ogt, %17, %18 : vector<128x256xf32>
    %cst_13 = arith.constant 2.000000e-01 : f32
    %20 = vector.broadcast %cst_13 : f32 to vector<128x256xf32>
    %21 = arith.mulf %20, %17 : vector<128x256xf32>
    %22 = arith.select %19, %17, %21 : vector<128x256xi1>, vector<128x256xf32>
    %23 = arith.truncf %22 : vector<128x256xf32> to vector<128x256xbf16>
    %c0_14 = arith.constant 0 : index
    %c0_15 = arith.constant 0 : index
    %24 = vector.load %arg6[%c0_14, %c0_15] : memref<256x128xbf16, #tpu.memory_space<vmem>>, vector<256x128xbf16>
    %cst_16 = arith.constant dense<0.000000e+00> : vector<128x128xf32>
    %25 = tpu.matmul %23, %24, %cst_16 {dimension_numbers = #tpu.dot_dimension_numbers<[1], [0], [0], [1], [0, 0, 1, 1], [], []>} : vector<128x256xbf16>, vector<256x128xbf16>, vector<128x128xf32> -> vector<128x128xf32>
    %c0_17 = arith.constant 0 : index
    %c0_18 = arith.constant 0 : index
    %26 = vector.load %arg7[%c0_17, %c0_18] : memref<1x128xf32, #tpu.memory_space<vmem>>, vector<1x128xf32>
    %27 = vector.broadcast %26 : vector<1x128xf32> to vector<128x128xf32>
    %28 = arith.addf %25, %27 : vector<128x128xf32>
    %cst_19 = arith.constant 0.000000e+00 : f32
    %29 = vector.broadcast %cst_19 : f32 to vector<128x128xf32>
    %30 = arith.cmpf ogt, %28, %29 : vector<128x128xf32>
    %cst_20 = arith.constant 2.000000e-01 : f32
    %31 = vector.broadcast %cst_20 : f32 to vector<128x128xf32>
    %32 = arith.mulf %31, %28 : vector<128x128xf32>
    %33 = arith.select %30, %28, %32 : vector<128x128xi1>, vector<128x128xf32>
    %34 = arith.truncf %33 : vector<128x128xf32> to vector<128x128xbf16>
    %c0_21 = arith.constant 0 : index
    %c0_22 = arith.constant 0 : index
    %35 = vector.load %arg8[%c0_21, %c0_22] : memref<128x64xbf16, #tpu.memory_space<vmem>>, vector<128x64xbf16>
    %cst_23 = arith.constant dense<0.000000e+00> : vector<128x64xf32>
    %36 = tpu.matmul %34, %35, %cst_23 {dimension_numbers = #tpu.dot_dimension_numbers<[1], [0], [0], [1], [0, 0, 1, 1], [], []>} : vector<128x128xbf16>, vector<128x64xbf16>, vector<128x64xf32> -> vector<128x64xf32>
    %c0_24 = arith.constant 0 : index
    %c0_25 = arith.constant 0 : index
    %37 = vector.load %arg9[%c0_24, %c0_25] : memref<1x64xf32, #tpu.memory_space<vmem>>, vector<1x64xf32>
    %38 = vector.broadcast %37 : vector<1x64xf32> to vector<128x64xf32>
    %39 = arith.addf %36, %38 : vector<128x64xf32>
    %cst_26 = arith.constant 0.000000e+00 : f32
    %40 = vector.broadcast %cst_26 : f32 to vector<128x64xf32>
    %41 = arith.cmpf ogt, %39, %40 : vector<128x64xf32>
    %cst_27 = arith.constant 2.000000e-01 : f32
    %42 = vector.broadcast %cst_27 : f32 to vector<128x64xf32>
    %43 = arith.mulf %42, %39 : vector<128x64xf32>
    %44 = arith.select %41, %39, %43 : vector<128x64xi1>, vector<128x64xf32>
    %45 = arith.truncf %44 : vector<128x64xf32> to vector<128x64xbf16>
    %c0_28 = arith.constant 0 : index
    %c0_29 = arith.constant 0 : index
    %46 = vector.load %arg10[%c0_28, %c0_29] : memref<64x32xbf16, #tpu.memory_space<vmem>>, vector<64x32xbf16>
    %cst_30 = arith.constant dense<0.000000e+00> : vector<128x32xf32>
    %47 = tpu.matmul %45, %46, %cst_30 {dimension_numbers = #tpu.dot_dimension_numbers<[1], [0], [0], [1], [0, 0, 1, 1], [], []>} : vector<128x64xbf16>, vector<64x32xbf16>, vector<128x32xf32> -> vector<128x32xf32>
    %c0_31 = arith.constant 0 : index
    %c0_32 = arith.constant 0 : index
    %48 = vector.load %arg11[%c0_31, %c0_32] : memref<1x32xf32, #tpu.memory_space<vmem>>, vector<1x32xf32>
    %49 = vector.broadcast %48 : vector<1x32xf32> to vector<128x32xf32>
    %50 = arith.addf %47, %49 : vector<128x32xf32>
    %51 = math.tanh %50 : vector<128x32xf32>
    %c0_33 = arith.constant 0 : index
    %c0_34 = arith.constant 0 : index
    %52 = vector.load %arg12[%c0_33, %c0_34] : memref<128x32xf32, #tpu.memory_space<vmem>>, vector<128x32xf32>
    tpu.vector_store %arg12[%c0_33, %c0_34], %51 {strides = array<i32>} : memref<128x32xf32, #tpu.memory_space<vmem>>, vector<128x32xf32>,
    return
  }
  func.func @transform_0(%arg0: i32) -> (i32, i32) {
    %c0_i32 = arith.constant 0 : i32
    %c0_i32_0 = arith.constant 0 : i32
    return %arg0, %c0_i32 : i32, i32
  }
  func.func @transform_1(%arg0: i32) -> (i32, i32) {
    %c0_i32 = arith.constant 0 : i32
    %c0_i32_0 = arith.constant 0 : i32
    %c0_i32_1 = arith.constant 0 : i32
    return %c0_i32, %c0_i32_0 : i32, i32
  }
  func.func @transform_2(%arg0: i32) -> (i32, i32) {
    %c0_i32 = arith.constant 0 : i32
    %c0_i32_0 = arith.constant 0 : i32
    %c0_i32_1 = arith.constant 0 : i32
    return %c0_i32, %c0_i32_0 : i32, i32
  }
  func.func @transform_3(%arg0: i32) -> (i32, i32) {
    %c0_i32 = arith.constant 0 : i32
    %c0_i32_0 = arith.constant 0 : i32
    %c0_i32_1 = arith.constant 0 : i32
    return %c0_i32, %c0_i32_0 : i32, i32
  }
  func.func @transform_4(%arg0: i32) -> (i32, i32) {
    %c0_i32 = arith.constant 0 : i32
    %c0_i32_0 = arith.constant 0 : i32
    %c0_i32_1 = arith.constant 0 : i32
    return %c0_i32, %c0_i32_0 : i32, i32
  }
  func.func @transform_5(%arg0: i32) -> (i32, i32) {
    %c0_i32 = arith.constant 0 : i32
    %c0_i32_0 = arith.constant 0 : i32
    %c0_i32_1 = arith.constant 0 : i32
    return %c0_i32, %c0_i32_0 : i32, i32
  }
  func.func @transform_6(%arg0: i32) -> (i32, i32) {
    %c0_i32 = arith.constant 0 : i32
    %c0_i32_0 = arith.constant 0 : i32
    %c0_i32_1 = arith.constant 0 : i32
    return %c0_i32, %c0_i32_0 : i32, i32
  }
  func.func @transform_7(%arg0: i32) -> (i32, i32) {
    %c0_i32 = arith.constant 0 : i32
    %c0_i32_0 = arith.constant 0 : i32
    %c0_i32_1 = arith.constant 0 : i32
    return %c0_i32, %c0_i32_0 : i32, i32
  }
  func.func @transform_8(%arg0: i32) -> (i32, i32) {
    %c0_i32 = arith.constant 0 : i32
    %c0_i32_0 = arith.constant 0 : i32
    %c0_i32_1 = arith.constant 0 : i32
    return %c0_i32, %c0_i32_0 : i32, i32
  }
  func.func @transform_9(%arg0: i32) -> (i32, i32) {
    %c0_i32 = arith.constant 0 : i32
    %c0_i32_0 = arith.constant 0 : i32
    %c0_i32_1 = arith.constant 0 : i32
    return %c0_i32, %c0_i32_0 : i32, i32
  }
  func.func @transform_10(%arg0: i32) -> (i32, i32) {
    %c0_i32 = arith.constant 0 : i32
    %c0_i32_0 = arith.constant 0 : i32
    %c0_i32_1 = arith.constant 0 : i32
    return %c0_i32, %c0_i32_0 : i32, i32
  }
  func.func @transform_11(%arg0: i32) -> (i32, i32) {
    %c0_i32 = arith.constant 0 : i32
    %c0_i32_0 = arith.constant 0 : i32
    return %arg0, %c0_i32 : i32, i32
  }
}

module attributes {stable_mosaic.version = 11 : i64} {
  func.func @encoder3_kernel(%arg0: i32, %arg1: memref<128x1024xf32, #tpu.memory_space<vmem>>, %arg2: memref<1024x512xbf16, #tpu.memory_space<vmem>>, %arg3: memref<1x512xf32, #tpu.memory_space<vmem>>, %arg4: memref<512x256xbf16, #tpu.memory_space<vmem>>, %arg5: memref<1x256xf32, #tpu.memory_space<vmem>>, %arg6: memref<256x128xbf16, #tpu.memory_space<vmem>>, %arg7: memref<1x128xf32, #tpu.memory_space<vmem>>, %arg8: memref<128x64xbf16, #tpu.memory_space<vmem>>, %arg9: memref<1x64xf32, #tpu.memory_space<vmem>>, %arg10: memref<64x32xbf16, #tpu.memory_space<vmem>>, %arg11: memref<1x32xf32, #tpu.memory_space<vmem>>, %arg12: memref<128x32xf32, #tpu.memory_space<vmem>>) attributes {dimension_semantics = [#tpu.dimension_semantics<parallel>], iteration_bounds = array<i64: 1>, scalar_prefetch = 0 : i64, scratch_operands = 0 : i64, tpu.core_type = #tpu.core_type<tc>, window_params = [{transform_indices = @transform_0, window_bounds = array<i64: 128, 1024>}, {pipeline_mode = #tpu.pipeline_mode<synchronous>, transform_indices = @transform_1, window_bounds = array<i64: 1024, 512>}, {pipeline_mode = #tpu.pipeline_mode<synchronous>, transform_indices = @transform_2, window_bounds = array<i64: 1, 512>}, {pipeline_mode = #tpu.pipeline_mode<synchronous>, transform_indices = @transform_3, window_bounds = array<i64: 512, 256>}, {pipeline_mode = #tpu.pipeline_mode<synchronous>, transform_indices = @transform_4, window_bounds = array<i64: 1, 256>}, {pipeline_mode = #tpu.pipeline_mode<synchronous>, transform_indices = @transform_5, window_bounds = array<i64: 256, 128>}, {pipeline_mode = #tpu.pipeline_mode<synchronous>, transform_indices = @transform_6, window_bounds = array<i64: 1, 128>}, {pipeline_mode = #tpu.pipeline_mode<synchronous>, transform_indices = @transform_7, window_bounds = array<i64: 128, 64>}, {pipeline_mode = #tpu.pipeline_mode<synchronous>, transform_indices = @transform_8, window_bounds = array<i64: 1, 64>}, {pipeline_mode = #tpu.pipeline_mode<synchronous>, transform_indices = @transform_9, window_bounds = array<i64: 64, 32>}, {pipeline_mode = #tpu.pipeline_mode<synchronous>, transform_indices = @transform_10, window_bounds = array<i64: 1, 32>}, {transform_indices = @transform_11, window_bounds = array<i64: 128, 32>}]} {
    %c0 = arith.constant 0 : index
    %c0_0 = arith.constant 0 : index
    %0 = vector.load %arg1[%c0, %c0_0] : memref<128x1024xf32, #tpu.memory_space<vmem>>, vector<128x1024xf32>
    %1 = arith.truncf %0 : vector<128x1024xf32> to vector<128x1024xbf16>
    %c0_1 = arith.constant 0 : index
    %c0_2 = arith.constant 0 : index
    %2 = vector.load %arg2[%c0_1, %c0_2] : memref<1024x512xbf16, #tpu.memory_space<vmem>>, vector<1024x512xbf16>
    %cst = arith.constant dense<0.000000e+00> : vector<128x512xf32>
    %3 = tpu.matmul %1, %2, %cst {dimension_numbers = #tpu.dot_dimension_numbers<[1], [0], [0], [1], [0, 0, 1, 1], [], []>} : vector<128x1024xbf16>, vector<1024x512xbf16>, vector<128x512xf32> -> vector<128x512xf32>
    %c0_3 = arith.constant 0 : index
    %c0_4 = arith.constant 0 : index
    %4 = vector.load %arg3[%c0_3, %c0_4] : memref<1x512xf32, #tpu.memory_space<vmem>>, vector<1x512xf32>
    %5 = vector.broadcast %4 : vector<1x512xf32> to vector<128x512xf32>
    %6 = arith.addf %3, %5 : vector<128x512xf32>
    %cst_5 = arith.constant 0.000000e+00 : f32
    %7 = vector.broadcast %cst_5 : f32 to vector<128x512xf32>
    %8 = arith.cmpf ogt, %6, %7 : vector<128x512xf32>
    %cst_6 = arith.constant 2.000000e-01 : f32
    %9 = vector.broadcast %cst_6 : f32 to vector<128x512xf32>
    %10 = arith.mulf %9, %6 : vector<128x512xf32>
    %11 = arith.select %8, %6, %10 : vector<128x512xi1>, vector<128x512xf32>
    %12 = arith.truncf %11 : vector<128x512xf32> to vector<128x512xbf16>
    %c0_7 = arith.constant 0 : index
    %c0_8 = arith.constant 0 : index
    %13 = vector.load %arg4[%c0_7, %c0_8] : memref<512x256xbf16, #tpu.memory_space<vmem>>, vector<512x256xbf16>
    %cst_9 = arith.constant dense<0.000000e+00> : vector<128x256xf32>
    %14 = tpu.matmul %12, %13, %cst_9 {dimension_numbers = #tpu.dot_dimension_numbers<[1], [0], [0], [1], [0, 0, 1, 1], [], []>} : vector<128x512xbf16>, vector<512x256xbf16>, vector<128x256xf32> -> vector<128x256xf32>
    %c0_10 = arith.constant 0 : index
    %c0_11 = arith.constant 0 : index
    %15 = vector.load %arg5[%c0_10, %c0_11] : memref<1x256xf32, #tpu.memory_space<vmem>>, vector<1x256xf32>
    %16 = vector.broadcast %15 : vector<1x256xf32> to vector<128x256xf32>
    %17 = arith.addf %14, %16 : vector<128x256xf32>
    %cst_12 = arith.constant 0.000000e+00 : f32
    %18 = vector.broadcast %cst_12 : f32 to vector<128x256xf32>
    %19 = arith.cmpf ogt, %17, %18 : vector<128x256xf32>
    %cst_13 = arith.constant 2.000000e-01 : f32
    %20 = vector.broadcast %cst_13 : f32 to vector<128x256xf32>
    %21 = arith.mulf %20, %17 : vector<128x256xf32>
    %22 = arith.select %19, %17, %21 : vector<128x256xi1>, vector<128x256xf32>
    %23 = arith.truncf %22 : vector<128x256xf32> to vector<128x256xbf16>
    %c0_14 = arith.constant 0 : index
    %c0_15 = arith.constant 0 : index
    %24 = vector.load %arg6[%c0_14, %c0_15] : memref<256x128xbf16, #tpu.memory_space<vmem>>, vector<256x128xbf16>
    %cst_16 = arith.constant dense<0.000000e+00> : vector<128x128xf32>
    %25 = tpu.matmul %23, %24, %cst_16 {dimension_numbers = #tpu.dot_dimension_numbers<[1], [0], [0], [1], [0, 0, 1, 1], [], []>} : vector<128x256xbf16>, vector<256x128xbf16>, vector<128x128xf32> -> vector<128x128xf32>
    %c0_17 = arith.constant 0 : index
    %c0_18 = arith.constant 0 : index
    %26 = vector.load %arg7[%c0_17, %c0_18] : memref<1x128xf32, #tpu.memory_space<vmem>>, vector<1x128xf32>
    %27 = vector.broadcast %26 : vector<1x128xf32> to vector<128x128xf32>
    %28 = arith.addf %25, %27 : vector<128x128xf32>
    %cst_19 = arith.constant 0.000000e+00 : f32
    %29 = vector.broadcast %cst_19 : f32 to vector<128x128xf32>
    %30 = arith.cmpf ogt, %28, %29 : vector<128x128xf32>
    %cst_20 = arith.constant 2.000000e-01 : f32
    %31 = vector.broadcast %cst_20 : f32 to vector<128x128xf32>
    %32 = arith.mulf %31, %28 : vector<128x128xf32>
    %33 = arith.select %30, %28, %32 : vector<128x128xi1>, vector<128x128xf32>
    %34 = arith.truncf %33 : vector<128x128xf32> to vector<128x128xbf16>
    %c0_21 = arith.constant 0 : index
    %c0_22 = arith.constant 0 : index
    %35 = vector.load %arg8[%c0_21, %c0_22] : memref<128x64xbf16, #tpu.memory_space<vmem>>, vector<128x64xbf16>
    %cst_23 = arith.constant dense<0.000000e+00> : vector<128x64xf32>
    %36 = tpu.matmul %34, %35, %cst_23 {dimension_numbers = #tpu.dot_dimension_numbers<[1], [0], [0], [1], [0, 0, 1, 1], [], []>} : vector<128x128xbf16>, vector<128x64xbf16>, vector<128x64xf32> -> vector<128x64xf32>
    %c0_24 = arith.constant 0 : index
    %c0_25 = arith.constant 0 : index
    %37 = vector.load %arg9[%c0_24, %c0_25] : memref<1x64xf32, #tpu.memory_space<vmem>>, vector<1x64xf32>
    %38 = vector.broadcast %37 : vector<1x64xf32> to vector<128x64xf32>
    %39 = arith.addf %36, %38 : vector<128x64xf32>
    %cst_26 = arith.constant 0.000000e+00 : f32
    %40 = vector.broadcast %cst_26 : f32 to vector<128x64xf32>
    %41 = arith.cmpf ogt, %39, %40 : vector<128x64xf32>
    %cst_27 = arith.constant 2.000000e-01 : f32
    %42 = vector.broadcast %cst_27 : f32 to vector<128x64xf32>
    %43 = arith.mulf %42, %39 : vector<128x64xf32>
    %44 = arith.select %41, %39, %43 : vector<128x64xi1>, vector<128x64xf32>
    %45 = arith.truncf %44 : vector<128x64xf32> to vector<128x64xbf16>
    %c0_28 = arith.constant 0 : index
    %c0_29 = arith.constant 0 : index
    %46 = vector.load %arg10[%c0_28, %c0_29] : memref<64x32xbf16, #tpu.memory_space<vmem>>, vector<64x32xbf16>
    %cst_30 = arith.constant dense<0.000000e+00> : vector<128x32xf32>
    %47 = tpu.matmul %45, %46, %cst_30 {dimension_numbers = #tpu.dot_dimension_numbers<[1], [0], [0], [1], [0, 0, 1, 1], [], []>} : vector<128x64xbf16>, vector<64x32xbf16>, vector<128x32xf32> -> vector<128x32xf32>
    %c0_31 = arith.constant 0 : index
    %c0_32 = arith.constant 0 : index
    %48 = vector.load %arg11[%c0_31, %c0_32] : memref<1x32xf32, #tpu.memory_space<vmem>>, vector<1x32xf32>
    %49 = vector.broadcast %48 : vector<1x32xf32> to vector<128x32xf32>
    %50 = arith.addf %47, %49 : vector<128x32xf32>
    %51 = math.tanh %50 : vector<128x32xf32>
    %c0_33 = arith.constant 0 : index
    %c0_34 = arith.constant 0 : index
    %52 = vector.load %arg12[%c0_33, %c0_34] : memref<128x32xf32, #tpu.memory_space<vmem>>, vector<128x32xf32>
    tpu.vector_store %arg12[%c0_33, %c0_34], %51 {strides = array<i32>} : memref<128x32xf32, #tpu.memory_space<vmem>>, vector<128x32xf32>,
    return
  }
  func.func @transform_0(%arg0: i32) -> (i32, i32) {
    %c0_i32 = arith.constant 0 : i32
    %c0_i32_0 = arith.constant 0 : i32
    return %arg0, %c0_i32 : i32, i32
  }
  func.func @transform_1(%arg0: i32) -> (i32, i32) {
    %c0_i32 = arith.constant 0 : i32
    %c0_i32_0 = arith.constant 0 : i32
    %c0_i32_1 = arith.constant 0 : i32
    return %c0_i32, %c0_i32_0 : i32, i32
  }
  func.func @transform_2(%arg0: i32) -> (i32, i32) {
    %c0_i32 = arith.constant 0 : i32
    %c0_i32_0 = arith.constant 0 : i32
    %c0_i32_1 = arith.constant 0 : i32
    return %c0_i32, %c0_i32_0 : i32, i32
  }
  func.func @transform_3(%arg0: i32) -> (i32, i32) {
    %c0_i32 = arith.constant 0 : i32
    %c0_i32_0 = arith.constant 0 : i32
    %c0_i32_1 = arith.constant 0 : i32
    return %c0_i32, %c0_i32_0 : i32, i32
  }
  func.func @transform_4(%arg0: i32) -> (i32, i32) {
    %c0_i32 = arith.constant 0 : i32
    %c0_i32_0 = arith.constant 0 : i32
    %c0_i32_1 = arith.constant 0 : i32
    return %c0_i32, %c0_i32_0 : i32, i32
  }
  func.func @transform_5(%arg0: i32) -> (i32, i32) {
    %c0_i32 = arith.constant 0 : i32
    %c0_i32_0 = arith.constant 0 : i32
    %c0_i32_1 = arith.constant 0 : i32
    return %c0_i32, %c0_i32_0 : i32, i32
  }
  func.func @transform_6(%arg0: i32) -> (i32, i32) {
    %c0_i32 = arith.constant 0 : i32
    %c0_i32_0 = arith.constant 0 : i32
    %c0_i32_1 = arith.constant 0 : i32
    return %c0_i32, %c0_i32_0 : i32, i32
  }
  func.func @transform_7(%arg0: i32) -> (i32, i32) {
    %c0_i32 = arith.constant 0 : i32
    %c0_i32_0 = arith.constant 0 : i32
    %c0_i32_1 = arith.constant 0 : i32
    return %c0_i32, %c0_i32_0 : i32, i32
  }
  func.func @transform_8(%arg0: i32) -> (i32, i32) {
    %c0_i32 = arith.constant 0 : i32
    %c0_i32_0 = arith.constant 0 : i32
    %c0_i32_1 = arith.constant 0 : i32
    return %c0_i32, %c0_i32_0 : i32, i32
  }
  func.func @transform_9(%arg0: i32) -> (i32, i32) {
    %c0_i32 = arith.constant 0 : i32
    %c0_i32_0 = arith.constant 0 : i32
    %c0_i32_1 = arith.constant 0 : i32
    return %c0_i32, %c0_i32_0 : i32, i32
  }
  func.func @transform_10(%arg0: i32) -> (i32, i32) {
    %c0_i32 = arith.constant 0 : i32
    %c0_i32_0 = arith.constant 0 : i32
    %c0_i32_1 = arith.constant 0 : i32
    return %c0_i32, %c0_i32_0 : i32, i32
  }
  func.func @transform_11(%arg0: i32) -> (i32, i32) {
    %c0_i32 = arith.constant 0 : i32
    %c0_i32_0 = arith.constant 0 : i32
    return %arg0, %c0_i32 : i32, i32
  }
}

</mosaic_0001>

<llo_original>
// kernel: _encoder3_forward_impl.1
$region0: #{_encoder3_forward_impl.1}
  #allocation0 [shape = 'u32[]', space=smem, size = 0x4, offset = 0x4, fixed_abs, tag = 'smem constant byte address 0x4 - core index']
  #allocation1 [shape = 'u32[144,128]{1,0:T(1,128)}', space=vmem, size = 0x12000, scoped, tag = 'internal scratch']
  %s0 = inlined_call_operand.vmem [shape: f32[128,1024], index: 0, kind: input, shape index: {}]
  %s1 = inlined_call_operand.vmem [shape: bf16[1024,512], index: 1, kind: input, shape index: {}]
  %s2 = inlined_call_operand.vmem [shape: f32[1,512], index: 2, kind: input, shape index: {}]
  %s3 = inlined_call_operand.vmem [shape: bf16[512,256], index: 3, kind: input, shape index: {}]
  %s4 = inlined_call_operand.vmem [shape: f32[1,256], index: 4, kind: input, shape index: {}]
  %s5 = inlined_call_operand.vmem [shape: bf16[256,128], index: 5, kind: input, shape index: {}]
  %s6 = inlined_call_operand.vmem [shape: f32[1,128], index: 6, kind: input, shape index: {}]
  %s7 = inlined_call_operand.vmem [shape: bf16[128,64], index: 7, kind: input, shape index: {}]
  %s8 = inlined_call_operand.vmem [shape: f32[1,64], index: 8, kind: input, shape index: {}]
  %s9 = inlined_call_operand.vmem [shape: bf16[64,32], index: 9, kind: input, shape index: {}]
  %s10 = inlined_call_operand.vmem [shape: f32[1,32], index: 10, kind: input, shape index: {}]
  %s11 = inlined_call_operand.vmem [shape: f32[128,32], index: 11, kind: output, shape index: {}]
  %s12 = sld [smem:[#allocation0]]
  $region54: #{_encoder3_forward_impl.1} parent=0
    _
  %s14 = ssub.s32 1, %s12
  %s15 = scalar_select 0, %s14, %s12
  // Predicated region
  $region2: #{_encoder3_forward_impl.1} parent=0 // pred_check
    _
  $region3: #{_encoder3_forward_impl.1} parent=0 // pred_check_branch
    %17 = sbr.rel (0) target = $region5
  $region4: #{_encoder3_forward_impl.1} parent=0 // pred_region
    _
  $region5: #{_encoder3_forward_impl.1} parent=0 // pred_fallthru
    _
  // Predicated region
  $region6: #{_encoder3_forward_impl.1} parent=0 // pred_check
    _
  $region7: #{_encoder3_forward_impl.1} parent=0 // pred_check_branch
    %19 = sbr.rel (0) target = $region9
  $region8: #{_encoder3_forward_impl.1} parent=0 // pred_region
    _
  $region9: #{_encoder3_forward_impl.1} parent=0 // pred_fallthru
    _
  // Predicated region
  $region10: #{_encoder3_forward_impl.1} parent=0 // pred_check
    _
  $region11: #{_encoder3_forward_impl.1} parent=0 // pred_check_branch
    %21 = sbr.rel (0) target = $region13
  $region12: #{_encoder3_forward_impl.1} parent=0 // pred_region
    _
  $region13: #{_encoder3_forward_impl.1} parent=0 // pred_fallthru
    _
  // Predicated region
  $region14: #{_encoder3_forward_impl.1} parent=0 // pred_check
    _
  $region15: #{_encoder3_forward_impl.1} parent=0 // pred_check_branch
    %23 = sbr.rel (0) target = $region17
  $region16: #{_encoder3_forward_impl.1} parent=0 // pred_region
    _
  $region17: #{_encoder3_forward_impl.1} parent=0 // pred_fallthru
    _
  // Predicated region
  $region18: #{_encoder3_forward_impl.1} parent=0 // pred_check
    _
  $region19: #{_encoder3_forward_impl.1} parent=0 // pred_check_branch
    %25 = sbr.rel (0) target = $region21
  $region20: #{_encoder3_forward_impl.1} parent=0 // pred_region
    _
  $region21: #{_encoder3_forward_impl.1} parent=0 // pred_fallthru
    _
  // Predicated region
  $region22: #{_encoder3_forward_impl.1} parent=0 // pred_check
    _
  $region23: #{_encoder3_forward_impl.1} parent=0 // pred_check_branch
    %27 = sbr.rel (0) target = $region25
  $region24: #{_encoder3_forward_impl.1} parent=0 // pred_region
    _
  $region25: #{_encoder3_forward_impl.1} parent=0 // pred_fallthru
    _
  // Predicated region
  $region26: #{_encoder3_forward_impl.1} parent=0 // pred_check
    _
  $region27: #{_encoder3_forward_impl.1} parent=0 // pred_check_branch
    %29 = sbr.rel (0) target = $region29
  $region28: #{_encoder3_forward_impl.1} parent=0 // pred_region
    _
  $region29: #{_encoder3_forward_impl.1} parent=0 // pred_fallthru
    _
  // Predicated region
  $region30: #{_encoder3_forward_impl.1} parent=0 // pred_check
    _
  $region31: #{_encoder3_forward_impl.1} parent=0 // pred_check_branch
    %31 = sbr.rel (0) target = $region33
  $region32: #{_encoder3_forward_impl.1} parent=0 // pred_region
    _
  $region33: #{_encoder3_forward_impl.1} parent=0 // pred_fallthru
    _
  // Predicated region
  $region34: #{_encoder3_forward_impl.1} parent=0 // pred_check
    _
  $region35: #{_encoder3_forward_impl.1} parent=0 // pred_check_branch
    %33 = sbr.rel (0) target = $region37
  $region36: #{_encoder3_forward_impl.1} parent=0 // pred_region
    _
  $region37: #{_encoder3_forward_impl.1} parent=0 // pred_fallthru
    _
  // Predicated region
  $region38: #{_encoder3_forward_impl.1} parent=0 // pred_check
    _
  $region39: #{_encoder3_forward_impl.1} parent=0 // pred_check_branch
    %35 = sbr.rel (0) target = $region41
  $region40: #{_encoder3_forward_impl.1} parent=0 // pred_region
    _
  $region41: #{_encoder3_forward_impl.1} parent=0 // pred_fallthru
    _
  // Predicated region
  $region42: #{_encoder3_forward_impl.1} parent=0 // pred_check
    _
  $region43: #{_encoder3_forward_impl.1} parent=0 // pred_check_branch
    %37 = sbr.rel (0) target = $region45
  $region44: #{_encoder3_forward_impl.1} parent=0 // pred_region
    _
  $region45: #{_encoder3_forward_impl.1} parent=0 // pred_fallthru
    _
  %v39 = vld [vmem:[%s0] sm:$0xff]
  %v40 = vld [vmem:[%s0 + $0x8] sm:$0xff]
  %v41 = vld [vmem:[%s0 + $0x10] sm:$0xff]
  %v42 = vld [vmem:[%s0 + $0x18] sm:$0xff]
  %v43 = vld [vmem:[%s0 + $0x20] sm:$0xff]
  %v44 = vld [vmem:[%s0 + $0x28] sm:$0xff]
  %v45 = vld [vmem:[%s0 + $0x30] sm:$0xff]
  %v46 = vld [vmem:[%s0 + $0x38] sm:$0xff]
  %v47 = vld [vmem:[%s0 + $0x40] sm:$0xff]
  %v48 = vld [vmem:[%s0 + $0x48] sm:$0xff]
  %v49 = vld [vmem:[%s0 + $0x50] sm:$0xff]
  %v50 = vld [vmem:[%s0 + $0x58] sm:$0xff]
  %v51 = vld [vmem:[%s0 + $0x60] sm:$0xff]
  %v52 = vld [vmem:[%s0 + $0x68] sm:$0xff]
  %v53 = vld [vmem:[%s0 + $0x70] sm:$0xff]
  %v54 = vld [vmem:[%s0 + $0x78] sm:$0xff]
  %v55 = vld [vmem:[%s0 + $0x80] sm:$0xff]
  %v56 = vld [vmem:[%s0 + $0x88] sm:$0xff]
  %v57 = vld [vmem:[%s0 + $0x90] sm:$0xff]
  %v58 = vld [vmem:[%s0 + $0x98] sm:$0xff]
  %v59 = vld [vmem:[%s0 + $0xa0] sm:$0xff]
  %v60 = vld [vmem:[%s0 + $0xa8] sm:$0xff]
  %v61 = vld [vmem:[%s0 + $0xb0] sm:$0xff]
  %v62 = vld [vmem:[%s0 + $0xb8] sm:$0xff]
  %v63 = vld [vmem:[%s0 + $0xc0] sm:$0xff]
  %v64 = vld [vmem:[%s0 + $0xc8] sm:$0xff]
  %v65 = vld [vmem:[%s0 + $0xd0] sm:$0xff]
  %v66 = vld [vmem:[%s0 + $0xd8] sm:$0xff]
  %v67 = vld [vmem:[%s0 + $0xe0] sm:$0xff]
  %v68 = vld [vmem:[%s0 + $0xe8] sm:$0xff]
  %v69 = vld [vmem:[%s0 + $0xf0] sm:$0xff]
  %v70 = vld [vmem:[%s0 + $0xf8] sm:$0xff]
  %v71 = vld [vmem:[%s0 + $0x100] sm:$0xff]
  %v72 = vld [vmem:[%s0 + $0x108] sm:$0xff]
  %v73 = vld [vmem:[%s0 + $0x110] sm:$0xff]
  %v74 = vld [vmem:[%s0 + $0x118] sm:$0xff]
  %v75 = vld [vmem:[%s0 + $0x120] sm:$0xff]
  %v76 = vld [vmem:[%s0 + $0x128] sm:$0xff]
  %v77 = vld [vmem:[%s0 + $0x130] sm:$0xff]
  %v78 = vld [vmem:[%s0 + $0x138] sm:$0xff]
  %v79 = vld [vmem:[%s0 + $0x140] sm:$0xff]
  %v80 = vld [vmem:[%s0 + $0x148] sm:$0xff]
  %v81 = vld [vmem:[%s0 + $0x150] sm:$0xff]
  %v82 = vld [vmem:[%s0 + $0x158] sm:$0xff]
  %v83 = vld [vmem:[%s0 + $0x160] sm:$0xff]
  %v84 = vld [vmem:[%s0 + $0x168] sm:$0xff]
  %v85 = vld [vmem:[%s0 + $0x170] sm:$0xff]
  %v86 = vld [vmem:[%s0 + $0x178] sm:$0xff]
  %v87 = vld [vmem:[%s0 + $0x180] sm:$0xff]
  %v88 = vld [vmem:[%s0 + $0x188] sm:$0xff]
  %v89 = vld [vmem:[%s0 + $0x190] sm:$0xff]
  %v90 = vld [vmem:[%s0 + $0x198] sm:$0xff]
  %v91 = vld [vmem:[%s0 + $0x1a0] sm:$0xff]
  %v92 = vld [vmem:[%s0 + $0x1a8] sm:$0xff]
  %v93 = vld [vmem:[%s0 + $0x1b0] sm:$0xff]
  %v94 = vld [vmem:[%s0 + $0x1b8] sm:$0xff]
  %v95 = vld [vmem:[%s0 + $0x1c0] sm:$0xff]
  %v96 = vld [vmem:[%s0 + $0x1c8] sm:$0xff]
  %v97 = vld [vmem:[%s0 + $0x1d0] sm:$0xff]
  %v98 = vld [vmem:[%s0 + $0x1d8] sm:$0xff]
  %v99 = vld [vmem:[%s0 + $0x1e0] sm:$0xff]
  %v100 = vld [vmem:[%s0 + $0x1e8] sm:$0xff]
  %v101 = vld [vmem:[%s0 + $0x1f0] sm:$0xff]
  %v102 = vld [vmem:[%s0 + $0x1f8] sm:$0xff]
  %v103 = vld [vmem:[%s0 + $0x200] sm:$0xff]
  %v104 = vld [vmem:[%s0 + $0x208] sm:$0xff]
  %v105 = vld [vmem:[%s0 + $0x210] sm:$0xff]
  %v106 = vld [vmem:[%s0 + $0x218] sm:$0xff]
  %v107 = vld [vmem:[%s0 + $0x220] sm:$0xff]
  %v108 = vld [vmem:[%s0 + $0x228] sm:$0xff]
  %v109 = vld [vmem:[%s0 + $0x230] sm:$0xff]
  %v110 = vld [vmem:[%s0 + $0x238] sm:$0xff]
  %v111 = vld [vmem:[%s0 + $0x240] sm:$0xff]
  %v112 = vld [vmem:[%s0 + $0x248] sm:$0xff]
  %v113 = vld [vmem:[%s0 + $0x250] sm:$0xff]
  %v114 = vld [vmem:[%s0 + $0x258] sm:$0xff]
  %v115 = vld [vmem:[%s0 + $0x260] sm:$0xff]
  %v116 = vld [vmem:[%s0 + $0x268] sm:$0xff]
  %v117 = vld [vmem:[%s0 + $0x270] sm:$0xff]
  %v118 = vld [vmem:[%s0 + $0x278] sm:$0xff]
  %v119 = vld [vmem:[%s0 + $0x280] sm:$0xff]
  %v120 = vld [vmem:[%s0 + $0x288] sm:$0xff]
  %v121 = vld [vmem:[%s0 + $0x290] sm:$0xff]
  %v122 = vld [vmem:[%s0 + $0x298] sm:$0xff]
  %v123 = vld [vmem:[%s0 + $0x2a0] sm:$0xff]
  %v124 = vld [vmem:[%s0 + $0x2a8] sm:$0xff]
  %v125 = vld [vmem:[%s0 + $0x2b0] sm:$0xff]
  %v126 = vld [vmem:[%s0 + $0x2b8] sm:$0xff]
  %v127 = vld [vmem:[%s0 + $0x2c0] sm:$0xff]
  %v128 = vld [vmem:[%s0 + $0x2c8] sm:$0xff]
  %v129 = vld [vmem:[%s0 + $0x2d0] sm:$0xff]
  %v130 = vld [vmem:[%s0 + $0x2d8] sm:$0xff]
  %v131 = vld [vmem:[%s0 + $0x2e0] sm:$0xff]
  %v132 = vld [vmem:[%s0 + $0x2e8] sm:$0xff]
  %v133 = vld [vmem:[%s0 + $0x2f0] sm:$0xff]
  %v134 = vld [vmem:[%s0 + $0x2f8] sm:$0xff]
  %v135 = vld [vmem:[%s0 + $0x300] sm:$0xff]
  %v136 = vld [vmem:[%s0 + $0x308] sm:$0xff]
  %v137 = vld [vmem:[%s0 + $0x310] sm:$0xff]
  %v138 = vld [vmem:[%s0 + $0x318] sm:$0xff]
  %v139 = vld [vmem:[%s0 + $0x320] sm:$0xff]
  %v140 = vld [vmem:[%s0 + $0x328] sm:$0xff]
  %v141 = vld [vmem:[%s0 + $0x330] sm:$0xff]
  %v142 = vld [vmem:[%s0 + $0x338] sm:$0xff]
  %v143 = vld [vmem:[%s0 + $0x340] sm:$0xff]
  %v144 = vld [vmem:[%s0 + $0x348] sm:$0xff]
  %v145 = vld [vmem:[%s0 + $0x350] sm:$0xff]
  %v146 = vld [vmem:[%s0 + $0x358] sm:$0xff]
  %v147 = vld [vmem:[%s0 + $0x360] sm:$0xff]
  %v148 = vld [vmem:[%s0 + $0x368] sm:$0xff]
  %v149 = vld [vmem:[%s0 + $0x370] sm:$0xff]
  %v150 = vld [vmem:[%s0 + $0x378] sm:$0xff]
  %v151 = vld [vmem:[%s0 + $0x380] sm:$0xff]
  %v152 = vld [vmem:[%s0 + $0x388] sm:$0xff]
  %v153 = vld [vmem:[%s0 + $0x390] sm:$0xff]
  %v154 = vld [vmem:[%s0 + $0x398] sm:$0xff]
  %v155 = vld [vmem:[%s0 + $0x3a0] sm:$0xff]
  %v156 = vld [vmem:[%s0 + $0x3a8] sm:$0xff]
  %v157 = vld [vmem:[%s0 + $0x3b0] sm:$0xff]
  %v158 = vld [vmem:[%s0 + $0x3b8] sm:$0xff]
  %v159 = vld [vmem:[%s0 + $0x3c0] sm:$0xff]
  %v160 = vld [vmem:[%s0 + $0x3c8] sm:$0xff]
  %v161 = vld [vmem:[%s0 + $0x3d0] sm:$0xff]
  %v162 = vld [vmem:[%s0 + $0x3d8] sm:$0xff]
  %v163 = vld [vmem:[%s0 + $0x3e0] sm:$0xff]
  %v164 = vld [vmem:[%s0 + $0x3e8] sm:$0xff]
  %v165 = vld [vmem:[%s0 + $0x3f0] sm:$0xff]
  %v166 = vld [vmem:[%s0 + $0x3f8] sm:$0xff]
  %v167 = vpack.c.bf16 %v47, %v39
  %v168 = vpack.c.bf16 %v48, %v40
  %v169 = vpack.c.bf16 %v49, %v41
  %v170 = vpack.c.bf16 %v50, %v42
  %v171 = vpack.c.bf16 %v51, %v43
  %v172 = vpack.c.bf16 %v52, %v44
  %v173 = vpack.c.bf16 %v53, %v45
  %v174 = vpack.c.bf16 %v54, %v46
  %v175 = vpack.c.bf16 %v63, %v55
  %v176 = vpack.c.bf16 %v64, %v56
  %v177 = vpack.c.bf16 %v65, %v57
  %v178 = vpack.c.bf16 %v66, %v58
  %v179 = vpack.c.bf16 %v67, %v59
  %v180 = vpack.c.bf16 %v68, %v60
  %v181 = vpack.c.bf16 %v69, %v61
  %v182 = vpack.c.bf16 %v70, %v62
  %v183 = vpack.c.bf16 %v79, %v71
  %v184 = vpack.c.bf16 %v80, %v72
  %v185 = vpack.c.bf16 %v81, %v73
  %v186 = vpack.c.bf16 %v82, %v74
  %v187 = vpack.c.bf16 %v83, %v75
  %v188 = vpack.c.bf16 %v84, %v76
  %v189 = vpack.c.bf16 %v85, %v77
  %v190 = vpack.c.bf16 %v86, %v78
  %v191 = vpack.c.bf16 %v95, %v87
  %v192 = vpack.c.bf16 %v96, %v88
  %v193 = vpack.c.bf16 %v97, %v89
  %v194 = vpack.c.bf16 %v98, %v90
  %v195 = vpack.c.bf16 %v99, %v91
  %v196 = vpack.c.bf16 %v100, %v92
  %v197 = vpack.c.bf16 %v101, %v93
  %v198 = vpack.c.bf16 %v102, %v94
  %v199 = vpack.c.bf16 %v111, %v103
  %v200 = vpack.c.bf16 %v112, %v104
  %v201 = vpack.c.bf16 %v113, %v105
  %v202 = vpack.c.bf16 %v114, %v106
  %v203 = vpack.c.bf16 %v115, %v107
  %v204 = vpack.c.bf16 %v116, %v108
  %v205 = vpack.c.bf16 %v117, %v109
  %v206 = vpack.c.bf16 %v118, %v110
  %v207 = vpack.c.bf16 %v127, %v119
  %v208 = vpack.c.bf16 %v128, %v120
  %v209 = vpack.c.bf16 %v129, %v121
  %v210 = vpack.c.bf16 %v130, %v122
  %v211 = vpack.c.bf16 %v131, %v123
  %v212 = vpack.c.bf16 %v132, %v124
  %v213 = vpack.c.bf16 %v133, %v125
  %v214 = vpack.c.bf16 %v134, %v126
  %v215 = vpack.c.bf16 %v143, %v135
  %v216 = vpack.c.bf16 %v144, %v136
  %v217 = vpack.c.bf16 %v145, %v137
  %v218 = vpack.c.bf16 %v146, %v138
  %v219 = vpack.c.bf16 %v147, %v139
  %v220 = vpack.c.bf16 %v148, %v140
  %v221 = vpack.c.bf16 %v149, %v141
  %v222 = vpack.c.bf16 %v150, %v142
  %v223 = vpack.c.bf16 %v159, %v151
  %v224 = vpack.c.bf16 %v160, %v152
  %v225 = vpack.c.bf16 %v161, %v153
  %v226 = vpack.c.bf16 %v162, %v154
  %v227 = vpack.c.bf16 %v163, %v155
  %v228 = vpack.c.bf16 %v164, %v156
  %v229 = vpack.c.bf16 %v165, %v157
  %v230 = vpack.c.bf16 %v166, %v158
  %v231 = vld [vmem:[%s1] sm:$0xff]
  %v232 = vld [vmem:[%s1 + $0x8] sm:$0xff]
  %v233 = vld [vmem:[%s1 + $0x10] sm:$0xff]
  %v234 = vld [vmem:[%s1 + $0x18] sm:$0xff]
  %v235 = vld [vmem:[%s1 + $0x20] sm:$0xff]
  %v236 = vld [vmem:[%s1 + $0x28] sm:$0xff]
  %v237 = vld [vmem:[%s1 + $0x30] sm:$0xff]
  %v238 = vld [vmem:[%s1 + $0x38] sm:$0xff]
  %v239 = vld [vmem:[%s1 + $0x40] sm:$0xff]
  %v240 = vld [vmem:[%s1 + $0x48] sm:$0xff]
  %v241 = vld [vmem:[%s1 + $0x50] sm:$0xff]
  %v242 = vld [vmem:[%s1 + $0x58] sm:$0xff]
  %v243 = vld [vmem:[%s1 + $0x60] sm:$0xff]
  %v244 = vld [vmem:[%s1 + $0x68] sm:$0xff]
  %v245 = vld [vmem:[%s1 + $0x70] sm:$0xff]
  %v246 = vld [vmem:[%s1 + $0x78] sm:$0xff]
  %v247 = vld [vmem:[%s1 + $0x80] sm:$0xff]
  %v248 = vld [vmem:[%s1 + $0x88] sm:$0xff]
  %v249 = vld [vmem:[%s1 + $0x90] sm:$0xff]
  %v250 = vld [vmem:[%s1 + $0x98] sm:$0xff]
  %v251 = vld [vmem:[%s1 + $0xa0] sm:$0xff]
  %v252 = vld [vmem:[%s1 + $0xa8] sm:$0xff]
  %v253 = vld [vmem:[%s1 + $0xb0] sm:$0xff]
  %v254 = vld [vmem:[%s1 + $0xb8] sm:$0xff]
  %v255 = vld [vmem:[%s1 + $0xc0] sm:$0xff]
  %v256 = vld [vmem:[%s1 + $0xc8] sm:$0xff]
  %v257 = vld [vmem:[%s1 + $0xd0] sm:$0xff]
  %v258 = vld [vmem:[%s1 + $0xd8] sm:$0xff]
  %v259 = vld [vmem:[%s1 + $0xe0] sm:$0xff]
  %v260 = vld [vmem:[%s1 + $0xe8] sm:$0xff]
  %v261 = vld [vmem:[%s1 + $0xf0] sm:$0xff]
  %v262 = vld [vmem:[%s1 + $0xf8] sm:$0xff]
  %v263 = vld [vmem:[%s1 + $0x100] sm:$0xff]
  %v264 = vld [vmem:[%s1 + $0x108] sm:$0xff]
  %v265 = vld [vmem:[%s1 + $0x110] sm:$0xff]
  %v266 = vld [vmem:[%s1 + $0x118] sm:$0xff]
  %v267 = vld [vmem:[%s1 + $0x120] sm:$0xff]
  %v268 = vld [vmem:[%s1 + $0x128] sm:$0xff]
  %v269 = vld [vmem:[%s1 + $0x130] sm:$0xff]
  %v270 = vld [vmem:[%s1 + $0x138] sm:$0xff]
  %v271 = vld [vmem:[%s1 + $0x140] sm:$0xff]
  %v272 = vld [vmem:[%s1 + $0x148] sm:$0xff]
  %v273 = vld [vmem:[%s1 + $0x150] sm:$0xff]
  %v274 = vld [vmem:[%s1 + $0x158] sm:$0xff]
  %v275 = vld [vmem:[%s1 + $0x160] sm:$0xff]
  %v276 = vld [vmem:[%s1 + $0x168] sm:$0xff]
  %v277 = vld [vmem:[%s1 + $0x170] sm:$0xff]
  %v278 = vld [vmem:[%s1 + $0x178] sm:$0xff]
  %v279 = vld [vmem:[%s1 + $0x180] sm:$0xff]
  %v280 = vld [vmem:[%s1 + $0x188] sm:$0xff]
  %v281 = vld [vmem:[%s1 + $0x190] sm:$0xff]
  %v282 = vld [vmem:[%s1 + $0x198] sm:$0xff]
  %v283 = vld [vmem:[%s1 + $0x1a0] sm:$0xff]
  %v284 = vld [vmem:[%s1 + $0x1a8] sm:$0xff]
  %v285 = vld [vmem:[%s1 + $0x1b0] sm:$0xff]
  %v286 = vld [vmem:[%s1 + $0x1b8] sm:$0xff]
  %v287 = vld [vmem:[%s1 + $0x1c0] sm:$0xff]
  %v288 = vld [vmem:[%s1 + $0x1c8] sm:$0xff]
  %v289 = vld [vmem:[%s1 + $0x1d0] sm:$0xff]
  %v290 = vld [vmem:[%s1 + $0x1d8] sm:$0xff]
  %v291 = vld [vmem:[%s1 + $0x1e0] sm:$0xff]
  %v292 = vld [vmem:[%s1 + $0x1e8] sm:$0xff]
  %v293 = vld [vmem:[%s1 + $0x1f0] sm:$0xff]
  %v294 = vld [vmem:[%s1 + $0x1f8] sm:$0xff]
  %v295 = vld [vmem:[%s1 + $0x200] sm:$0xff]
  %v296 = vld [vmem:[%s1 + $0x208] sm:$0xff]
  %v297 = vld [vmem:[%s1 + $0x210] sm:$0xff]
  %v298 = vld [vmem:[%s1 + $0x218] sm:$0xff]
  %v299 = vld [vmem:[%s1 + $0x220] sm:$0xff]
  %v300 = vld [vmem:[%s1 + $0x228] sm:$0xff]
  %v301 = vld [vmem:[%s1 + $0x230] sm:$0xff]
  %v302 = vld [vmem:[%s1 + $0x238] sm:$0xff]
  %v303 = vld [vmem:[%s1 + $0x240] sm:$0xff]
  %v304 = vld [vmem:[%s1 + $0x248] sm:$0xff]
  %v305 = vld [vmem:[%s1 + $0x250] sm:$0xff]
  %v306 = vld [vmem:[%s1 + $0x258] sm:$0xff]
  %v307 = vld [vmem:[%s1 + $0x260] sm:$0xff]
  %v308 = vld [vmem:[%s1 + $0x268] sm:$0xff]
  %v309 = vld [vmem:[%s1 + $0x270] sm:$0xff]
  %v310 = vld [vmem:[%s1 + $0x278] sm:$0xff]
  %v311 = vld [vmem:[%s1 + $0x280] sm:$0xff]
  %v312 = vld [vmem:[%s1 + $0x288] sm:$0xff]
  %v313 = vld [vmem:[%s1 + $0x290] sm:$0xff]
  %v314 = vld [vmem:[%s1 + $0x298] sm:$0xff]
  %v315 = vld [vmem:[%s1 + $0x2a0] sm:$0xff]
  %v316 = vld [vmem:[%s1 + $0x2a8] sm:$0xff]
  %v317 = vld [vmem:[%s1 + $0x2b0] sm:$0xff]
  %v318 = vld [vmem:[%s1 + $0x2b8] sm:$0xff]
  %v319 = vld [vmem:[%s1 + $0x2c0] sm:$0xff]
  %v320 = vld [vmem:[%s1 + $0x2c8] sm:$0xff]
  %v321 = vld [vmem:[%s1 + $0x2d0] sm:$0xff]
  %v322 = vld [vmem:[%s1 + $0x2d8] sm:$0xff]
  %v323 = vld [vmem:[%s1 + $0x2e0] sm:$0xff]
  %v324 = vld [vmem:[%s1 + $0x2e8] sm:$0xff]
  %v325 = vld [vmem:[%s1 + $0x2f0] sm:$0xff]
  %v326 = vld [vmem:[%s1 + $0x2f8] sm:$0xff]
  %v327 = vld [vmem:[%s1 + $0x300] sm:$0xff]
  %v328 = vld [vmem:[%s1 + $0x308] sm:$0xff]
  %v329 = vld [vmem:[%s1 + $0x310] sm:$0xff]
  %v330 = vld [vmem:[%s1 + $0x318] sm:$0xff]
  %v331 = vld [vmem:[%s1 + $0x320] sm:$0xff]
  %v332 = vld [vmem:[%s1 + $0x328] sm:$0xff]
  %v333 = vld [vmem:[%s1 + $0x330] sm:$0xff]
  %v334 = vld [vmem:[%s1 + $0x338] sm:$0xff]
  %v335 = vld [vmem:[%s1 + $0x340] sm:$0xff]
  %v336 = vld [vmem:[%s1 + $0x348] sm:$0xff]
  %v337 = vld [vmem:[%s1 + $0x350] sm:$0xff]
  %v338 = vld [vmem:[%s1 + $0x358] sm:$0xff]
  %v339 = vld [vmem:[%s1 + $0x360] sm:$0xff]
  %v340 = vld [vmem:[%s1 + $0x368] sm:$0xff]
  %v341 = vld [vmem:[%s1 + $0x370] sm:$0xff]
  %v342 = vld [vmem:[%s1 + $0x378] sm:$0xff]
  %v343 = vld [vmem:[%s1 + $0x380] sm:$0xff]
  %v344 = vld [vmem:[%s1 + $0x388] sm:$0xff]
  %v345 = vld [vmem:[%s1 + $0x390] sm:$0xff]
  %v346 = vld [vmem:[%s1 + $0x398] sm:$0xff]
  %v347 = vld [vmem:[%s1 + $0x3a0] sm:$0xff]
  %v348 = vld [vmem:[%s1 + $0x3a8] sm:$0xff]
  %v349 = vld [vmem:[%s1 + $0x3b0] sm:$0xff]
  %v350 = vld [vmem:[%s1 + $0x3b8] sm:$0xff]
  %v351 = vld [vmem:[%s1 + $0x3c0] sm:$0xff]
  %v352 = vld [vmem:[%s1 + $0x3c8] sm:$0xff]
  %v353 = vld [vmem:[%s1 + $0x3d0] sm:$0xff]
  %v354 = vld [vmem:[%s1 + $0x3d8] sm:$0xff]
  %v355 = vld [vmem:[%s1 + $0x3e0] sm:$0xff]
  %v356 = vld [vmem:[%s1 + $0x3e8] sm:$0xff]
  %v357 = vld [vmem:[%s1 + $0x3f0] sm:$0xff]
  %v358 = vld [vmem:[%s1 + $0x3f8] sm:$0xff]
  %v359 = vld [vmem:[%s1 + $0x400] sm:$0xff]
  %v360 = vld [vmem:[%s1 + $0x408] sm:$0xff]
  %v361 = vld [vmem:[%s1 + $0x410] sm:$0xff]
  %v362 = vld [vmem:[%s1 + $0x418] sm:$0xff]
  %v363 = vld [vmem:[%s1 + $0x420] sm:$0xff]
  %v364 = vld [vmem:[%s1 + $0x428] sm:$0xff]
  %v365 = vld [vmem:[%s1 + $0x430] sm:$0xff]
  %v366 = vld [vmem:[%s1 + $0x438] sm:$0xff]
  %v367 = vld [vmem:[%s1 + $0x440] sm:$0xff]
  %v368 = vld [vmem:[%s1 + $0x448] sm:$0xff]
  %v369 = vld [vmem:[%s1 + $0x450] sm:$0xff]
  %v370 = vld [vmem:[%s1 + $0x458] sm:$0xff]
  %v371 = vld [vmem:[%s1 + $0x460] sm:$0xff]
  %v372 = vld [vmem:[%s1 + $0x468] sm:$0xff]
  %v373 = vld [vmem:[%s1 + $0x470] sm:$0xff]
  %v374 = vld [vmem:[%s1 + $0x478] sm:$0xff]
  %v375 = vld [vmem:[%s1 + $0x480] sm:$0xff]
  %v376 = vld [vmem:[%s1 + $0x488] sm:$0xff]
  %v377 = vld [vmem:[%s1 + $0x490] sm:$0xff]
  %v378 = vld [vmem:[%s1 + $0x498] sm:$0xff]
  %v379 = vld [vmem:[%s1 + $0x4a0] sm:$0xff]
  %v380 = vld [vmem:[%s1 + $0x4a8] sm:$0xff]
  %v381 = vld [vmem:[%s1 + $0x4b0] sm:$0xff]
  %v382 = vld [vmem:[%s1 + $0x4b8] sm:$0xff]
  %v383 = vld [vmem:[%s1 + $0x4c0] sm:$0xff]
  %v384 = vld [vmem:[%s1 + $0x4c8] sm:$0xff]
  %v385 = vld [vmem:[%s1 + $0x4d0] sm:$0xff]
  %v386 = vld [vmem:[%s1 + $0x4d8] sm:$0xff]
  %v387 = vld [vmem:[%s1 + $0x4e0] sm:$0xff]
  %v388 = vld [vmem:[%s1 + $0x4e8] sm:$0xff]
  %v389 = vld [vmem:[%s1 + $0x4f0] sm:$0xff]
  %v390 = vld [vmem:[%s1 + $0x4f8] sm:$0xff]
  %v391 = vld [vmem:[%s1 + $0x500] sm:$0xff]
  %v392 = vld [vmem:[%s1 + $0x508] sm:$0xff]
  %v393 = vld [vmem:[%s1 + $0x510] sm:$0xff]
  %v394 = vld [vmem:[%s1 + $0x518] sm:$0xff]
  %v395 = vld [vmem:[%s1 + $0x520] sm:$0xff]
  %v396 = vld [vmem:[%s1 + $0x528] sm:$0xff]
  %v397 = vld [vmem:[%s1 + $0x530] sm:$0xff]
  %v398 = vld [vmem:[%s1 + $0x538] sm:$0xff]
  %v399 = vld [vmem:[%s1 + $0x540] sm:$0xff]
  %v400 = vld [vmem:[%s1 + $0x548] sm:$0xff]
  %v401 = vld [vmem:[%s1 + $0x550] sm:$0xff]
  %v402 = vld [vmem:[%s1 + $0x558] sm:$0xff]
  %v403 = vld [vmem:[%s1 + $0x560] sm:$0xff]
  %v404 = vld [vmem:[%s1 + $0x568] sm:$0xff]
  %v405 = vld [vmem:[%s1 + $0x570] sm:$0xff]
  %v406 = vld [vmem:[%s1 + $0x578] sm:$0xff]
  %v407 = vld [vmem:[%s1 + $0x580] sm:$0xff]
  %v408 = vld [vmem:[%s1 + $0x588] sm:$0xff]
  %v409 = vld [vmem:[%s1 + $0x590] sm:$0xff]
  %v410 = vld [vmem:[%s1 + $0x598] sm:$0xff]
  %v411 = vld [vmem:[%s1 + $0x5a0] sm:$0xff]
  %v412 = vld [vmem:[%s1 + $0x5a8] sm:$0xff]
  %v413 = vld [vmem:[%s1 + $0x5b0] sm:$0xff]
  %v414 = vld [vmem:[%s1 + $0x5b8] sm:$0xff]
  %v415 = vld [vmem:[%s1 + $0x5c0] sm:$0xff]
  %v416 = vld [vmem:[%s1 + $0x5c8] sm:$0xff]
  %v417 = vld [vmem:[%s1 + $0x5d0] sm:$0xff]
  %v418 = vld [vmem:[%s1 + $0x5d8] sm:$0xff]
  %v419 = vld [vmem:[%s1 + $0x5e0] sm:$0xff]
  %v420 = vld [vmem:[%s1 + $0x5e8] sm:$0xff]
  %v421 = vld [vmem:[%s1 + $0x5f0] sm:$0xff]
  %v422 = vld [vmem:[%s1 + $0x5f8] sm:$0xff]
  %v423 = vld [vmem:[%s1 + $0x600] sm:$0xff]
  %v424 = vld [vmem:[%s1 + $0x608] sm:$0xff]
  %v425 = vld [vmem:[%s1 + $0x610] sm:$0xff]
  %v426 = vld [vmem:[%s1 + $0x618] sm:$0xff]
  %v427 = vld [vmem:[%s1 + $0x620] sm:$0xff]
  %v428 = vld [vmem:[%s1 + $0x628] sm:$0xff]
  %v429 = vld [vmem:[%s1 + $0x630] sm:$0xff]
  %v430 = vld [vmem:[%s1 + $0x638] sm:$0xff]
  %v431 = vld [vmem:[%s1 + $0x640] sm:$0xff]
  %v432 = vld [vmem:[%s1 + $0x648] sm:$0xff]
  %v433 = vld [vmem:[%s1 + $0x650] sm:$0xff]
  %v434 = vld [vmem:[%s1 + $0x658] sm:$0xff]
  %v435 = vld [vmem:[%s1 + $0x660] sm:$0xff]
  %v436 = vld [vmem:[%s1 + $0x668] sm:$0xff]
  %v437 = vld [vmem:[%s1 + $0x670] sm:$0xff]
  %v438 = vld [vmem:[%s1 + $0x678] sm:$0xff]
  %v439 = vld [vmem:[%s1 + $0x680] sm:$0xff]
  %v440 = vld [vmem:[%s1 + $0x688] sm:$0xff]
  %v441 = vld [vmem:[%s1 + $0x690] sm:$0xff]
  %v442 = vld [vmem:[%s1 + $0x698] sm:$0xff]
  %v443 = vld [vmem:[%s1 + $0x6a0] sm:$0xff]
  %v444 = vld [vmem:[%s1 + $0x6a8] sm:$0xff]
  %v445 = vld [vmem:[%s1 + $0x6b0] sm:$0xff]
  %v446 = vld [vmem:[%s1 + $0x6b8] sm:$0xff]
  %v447 = vld [vmem:[%s1 + $0x6c0] sm:$0xff]
  %v448 = vld [vmem:[%s1 + $0x6c8] sm:$0xff]
  %v449 = vld [vmem:[%s1 + $0x6d0] sm:$0xff]
  %v450 = vld [vmem:[%s1 + $0x6d8] sm:$0xff]
  %v451 = vld [vmem:[%s1 + $0x6e0] sm:$0xff]
  %v452 = vld [vmem:[%s1 + $0x6e8] sm:$0xff]
  %v453 = vld [vmem:[%s1 + $0x6f0] sm:$0xff]
  %v454 = vld [vmem:[%s1 + $0x6f8] sm:$0xff]
  %v455 = vld [vmem:[%s1 + $0x700] sm:$0xff]
  %v456 = vld [vmem:[%s1 + $0x708] sm:$0xff]
  %v457 = vld [vmem:[%s1 + $0x710] sm:$0xff]
  %v458 = vld [vmem:[%s1 + $0x718] sm:$0xff]
  %v459 = vld [vmem:[%s1 + $0x720] sm:$0xff]
  %v460 = vld [vmem:[%s1 + $0x728] sm:$0xff]
  %v461 = vld [vmem:[%s1 + $0x730] sm:$0xff]
  %v462 = vld [vmem:[%s1 + $0x738] sm:$0xff]
  %v463 = vld [vmem:[%s1 + $0x740] sm:$0xff]
  %v464 = vld [vmem:[%s1 + $0x748] sm:$0xff]
  %v465 = vld [vmem:[%s1 + $0x750] sm:$0xff]
  %v466 = vld [vmem:[%s1 + $0x758] sm:$0xff]
  %v467 = vld [vmem:[%s1 + $0x760] sm:$0xff]
  %v468 = vld [vmem:[%s1 + $0x768] sm:$0xff]
  %v469 = vld [vmem:[%s1 + $0x770] sm:$0xff]
  %v470 = vld [vmem:[%s1 + $0x778] sm:$0xff]
  %v471 = vld [vmem:[%s1 + $0x780] sm:$0xff]
  %v472 = vld [vmem:[%s1 + $0x788] sm:$0xff]
  %v473 = vld [vmem:[%s1 + $0x790] sm:$0xff]
  %v474 = vld [vmem:[%s1 + $0x798] sm:$0xff]
  %v475 = vld [vmem:[%s1 + $0x7a0] sm:$0xff]
  %v476 = vld [vmem:[%s1 + $0x7a8] sm:$0xff]
  %v477 = vld [vmem:[%s1 + $0x7b0] sm:$0xff]
  %v478 = vld [vmem:[%s1 + $0x7b8] sm:$0xff]
  %v479 = vld [vmem:[%s1 + $0x7c0] sm:$0xff]
  %v480 = vld [vmem:[%s1 + $0x7c8] sm:$0xff]
  %v481 = vld [vmem:[%s1 + $0x7d0] sm:$0xff]
  %v482 = vld [vmem:[%s1 + $0x7d8] sm:$0xff]
  %v483 = vld [vmem:[%s1 + $0x7e0] sm:$0xff]
  %v484 = vld [vmem:[%s1 + $0x7e8] sm:$0xff]
  %v485 = vld [vmem:[%s1 + $0x7f0] sm:$0xff]
  %v486 = vld [vmem:[%s1 + $0x7f8] sm:$0xff]
  %v487 = vld [vmem:[%s2] sm:$0xf]
  %v489 = vlaneseq
  %v490 = vshrl.u32 %v489, 7
  %v491 = vsub.s32 0, %v490
  %v492 = vrot.slane %v487, %v491
  %v493 = vlaneseq
  %v494 = vshrl.u32 %v493, 7
  %v495 = vsub.s32 1, %v494
  %v496 = vrot.slane %v487, %v495
  %v497 = vlaneseq
  %v498 = vshrl.u32 %v497, 7
  %v499 = vsub.s32 2, %v498
  %v500 = vrot.slane %v487, %v499
  %v501 = vlaneseq
  %v502 = vshrl.u32 %v501, 7
  %v503 = vsub.s32 3, %v502
  %v504 = vrot.slane %v487, %v503
  %v765 = vunpack.c.l.b16 %v231
  %v766 = vunpack.c.h.b16 %v231
  %v767 = vunpack.c.l.b16 %v232
  %v768 = vunpack.c.h.b16 %v232
  %v769 = vunpack.c.l.b16 %v233
  %v770 = vunpack.c.h.b16 %v233
  %v771 = vunpack.c.l.b16 %v234
  %v772 = vunpack.c.h.b16 %v234
  %v773 = vunpack.c.l.b16 %v235
  %v774 = vunpack.c.h.b16 %v235
  %v775 = vunpack.c.l.b16 %v236
  %v776 = vunpack.c.h.b16 %v236
  %v777 = vunpack.c.l.b16 %v237
  %v778 = vunpack.c.h.b16 %v237
  %v779 = vunpack.c.l.b16 %v238
  %v780 = vunpack.c.h.b16 %v238
  %v781 = vunpack.c.l.b16 %v239
  %v782 = vunpack.c.h.b16 %v239
  %v783 = vunpack.c.l.b16 %v240
  %v784 = vunpack.c.h.b16 %v240
  %v785 = vunpack.c.l.b16 %v241
  %v786 = vunpack.c.h.b16 %v241
  %v787 = vunpack.c.l.b16 %v242
  %v788 = vunpack.c.h.b16 %v242
  %v789 = vunpack.c.l.b16 %v243
  %v790 = vunpack.c.h.b16 %v243
  %v791 = vunpack.c.l.b16 %v244
  %v792 = vunpack.c.h.b16 %v244
  %v793 = vunpack.c.l.b16 %v245
  %v794 = vunpack.c.h.b16 %v245
  %v795 = vunpack.c.l.b16 %v246
  %v796 = vunpack.c.h.b16 %v246
  %v797 = vunpack.c.l.b16 %v247
  %v798 = vunpack.c.h.b16 %v247
  %v799 = vunpack.c.l.b16 %v248
  %v800 = vunpack.c.h.b16 %v248
  %v801 = vunpack.c.l.b16 %v249
  %v802 = vunpack.c.h.b16 %v249
  %v803 = vunpack.c.l.b16 %v250
  %v804 = vunpack.c.h.b16 %v250
  %v805 = vunpack.c.l.b16 %v251
  %v806 = vunpack.c.h.b16 %v251
  %v807 = vunpack.c.l.b16 %v252
  %v808 = vunpack.c.h.b16 %v252
  %v809 = vunpack.c.l.b16 %v253
  %v810 = vunpack.c.h.b16 %v253
  %v811 = vunpack.c.l.b16 %v254
  %v812 = vunpack.c.h.b16 %v254
  %v813 = vunpack.c.l.b16 %v255
  %v814 = vunpack.c.h.b16 %v255
  %v815 = vunpack.c.l.b16 %v256
  %v816 = vunpack.c.h.b16 %v256
  %v817 = vunpack.c.l.b16 %v257
  %v818 = vunpack.c.h.b16 %v257
  %v819 = vunpack.c.l.b16 %v258
  %v820 = vunpack.c.h.b16 %v258
  %v821 = vunpack.c.l.b16 %v259
  %v822 = vunpack.c.h.b16 %v259
  %v823 = vunpack.c.l.b16 %v260
  %v824 = vunpack.c.h.b16 %v260
  %v825 = vunpack.c.l.b16 %v261
  %v826 = vunpack.c.h.b16 %v261
  %v827 = vunpack.c.l.b16 %v262
  %v828 = vunpack.c.h.b16 %v262
  %v829 = vunpack.c.l.b16 %v263
  %v830 = vunpack.c.h.b16 %v263
  %v831 = vunpack.c.l.b16 %v264
  %v832 = vunpack.c.h.b16 %v264
  %v833 = vunpack.c.l.b16 %v265
  %v834 = vunpack.c.h.b16 %v265
  %v835 = vunpack.c.l.b16 %v266
  %v836 = vunpack.c.h.b16 %v266
  %v837 = vunpack.c.l.b16 %v267
  %v838 = vunpack.c.h.b16 %v267
  %v839 = vunpack.c.l.b16 %v268
  %v840 = vunpack.c.h.b16 %v268
  %v841 = vunpack.c.l.b16 %v269
  %v842 = vunpack.c.h.b16 %v269
  %v843 = vunpack.c.l.b16 %v270
  %v844 = vunpack.c.h.b16 %v270
  %v845 = vunpack.c.l.b16 %v271
  %v846 = vunpack.c.h.b16 %v271
  %v847 = vunpack.c.l.b16 %v272
  %v848 = vunpack.c.h.b16 %v272
  %v849 = vunpack.c.l.b16 %v273
  %v850 = vunpack.c.h.b16 %v273
  %v851 = vunpack.c.l.b16 %v274
  %v852 = vunpack.c.h.b16 %v274
  %v853 = vunpack.c.l.b16 %v275
  %v854 = vunpack.c.h.b16 %v275
  %v855 = vunpack.c.l.b16 %v276
  %v856 = vunpack.c.h.b16 %v276
  %v857 = vunpack.c.l.b16 %v277
  %v858 = vunpack.c.h.b16 %v277
  %v859 = vunpack.c.l.b16 %v278
  %v860 = vunpack.c.h.b16 %v278
  %v861 = vunpack.c.l.b16 %v279
  %v862 = vunpack.c.h.b16 %v279
  %v863 = vunpack.c.l.b16 %v280
  %v864 = vunpack.c.h.b16 %v280
  %v865 = vunpack.c.l.b16 %v281
  %v866 = vunpack.c.h.b16 %v281
  %v867 = vunpack.c.l.b16 %v282
  %v868 = vunpack.c.h.b16 %v282
  %v869 = vunpack.c.l.b16 %v283
  %v870 = vunpack.c.h.b16 %v283
  %v871 = vunpack.c.l.b16 %v284
  %v872 = vunpack.c.h.b16 %v284
  %v873 = vunpack.c.l.b16 %v285
  %v874 = vunpack.c.h.b16 %v285
  %v875 = vunpack.c.l.b16 %v286
  %v876 = vunpack.c.h.b16 %v286
  %v877 = vunpack.c.l.b16 %v287
  %v878 = vunpack.c.h.b16 %v287
  %v879 = vunpack.c.l.b16 %v288
  %v880 = vunpack.c.h.b16 %v288
  %v881 = vunpack.c.l.b16 %v289
  %v882 = vunpack.c.h.b16 %v289
  %v883 = vunpack.c.l.b16 %v290
  %v884 = vunpack.c.h.b16 %v290
  %v885 = vunpack.c.l.b16 %v291
  %v886 = vunpack.c.h.b16 %v291
  %v887 = vunpack.c.l.b16 %v292
  %v888 = vunpack.c.h.b16 %v292
  %v889 = vunpack.c.l.b16 %v293
  %v890 = vunpack.c.h.b16 %v293
  %v891 = vunpack.c.l.b16 %v294
  %v892 = vunpack.c.h.b16 %v294
  %v893 = vunpack.c.l.b16 %v295
  %v894 = vunpack.c.h.b16 %v295
  %v895 = vunpack.c.l.b16 %v296
  %v896 = vunpack.c.h.b16 %v296
  %v897 = vunpack.c.l.b16 %v297
  %v898 = vunpack.c.h.b16 %v297
  %v899 = vunpack.c.l.b16 %v298
  %v900 = vunpack.c.h.b16 %v298
  %v901 = vunpack.c.l.b16 %v299
  %v902 = vunpack.c.h.b16 %v299
  %v903 = vunpack.c.l.b16 %v300
  %v904 = vunpack.c.h.b16 %v300
  %v905 = vunpack.c.l.b16 %v301
  %v906 = vunpack.c.h.b16 %v301
  %v907 = vunpack.c.l.b16 %v302
  %v908 = vunpack.c.h.b16 %v302
  %v909 = vunpack.c.l.b16 %v303
  %v910 = vunpack.c.h.b16 %v303
  %v911 = vunpack.c.l.b16 %v304
  %v912 = vunpack.c.h.b16 %v304
  %v913 = vunpack.c.l.b16 %v305
  %v914 = vunpack.c.h.b16 %v305
  %v915 = vunpack.c.l.b16 %v306
  %v916 = vunpack.c.h.b16 %v306
  %v917 = vunpack.c.l.b16 %v307
  %v918 = vunpack.c.h.b16 %v307
  %v919 = vunpack.c.l.b16 %v308
  %v920 = vunpack.c.h.b16 %v308
  %v921 = vunpack.c.l.b16 %v309
  %v922 = vunpack.c.h.b16 %v309
  %v923 = vunpack.c.l.b16 %v310
  %v924 = vunpack.c.h.b16 %v310
  %v925 = vunpack.c.l.b16 %v311
  %v926 = vunpack.c.h.b16 %v311
  %v927 = vunpack.c.l.b16 %v312
  %v928 = vunpack.c.h.b16 %v312
  %v929 = vunpack.c.l.b16 %v313
  %v930 = vunpack.c.h.b16 %v313
  %v931 = vunpack.c.l.b16 %v314
  %v932 = vunpack.c.h.b16 %v314
  %v933 = vunpack.c.l.b16 %v315
  %v934 = vunpack.c.h.b16 %v315
  %v935 = vunpack.c.l.b16 %v316
  %v936 = vunpack.c.h.b16 %v316
  %v937 = vunpack.c.l.b16 %v317
  %v938 = vunpack.c.h.b16 %v317
  %v939 = vunpack.c.l.b16 %v318
  %v940 = vunpack.c.h.b16 %v318
  %v941 = vunpack.c.l.b16 %v319
  %v942 = vunpack.c.h.b16 %v319
  %v943 = vunpack.c.l.b16 %v320
  %v944 = vunpack.c.h.b16 %v320
  %v945 = vunpack.c.l.b16 %v321
  %v946 = vunpack.c.h.b16 %v321
  %v947 = vunpack.c.l.b16 %v322
  %v948 = vunpack.c.h.b16 %v322
  %v949 = vunpack.c.l.b16 %v323
  %v950 = vunpack.c.h.b16 %v323
  %v951 = vunpack.c.l.b16 %v324
  %v952 = vunpack.c.h.b16 %v324
  %v953 = vunpack.c.l.b16 %v325
  %v954 = vunpack.c.h.b16 %v325
  %v955 = vunpack.c.l.b16 %v326
  %v956 = vunpack.c.h.b16 %v326
  %v957 = vunpack.c.l.b16 %v327
  %v958 = vunpack.c.h.b16 %v327
  %v959 = vunpack.c.l.b16 %v328
  %v960 = vunpack.c.h.b16 %v328
  %v961 = vunpack.c.l.b16 %v329
  %v962 = vunpack.c.h.b16 %v329
  %v963 = vunpack.c.l.b16 %v330
  %v964 = vunpack.c.h.b16 %v330
  %v965 = vunpack.c.l.b16 %v331
  %v966 = vunpack.c.h.b16 %v331
  %v967 = vunpack.c.l.b16 %v332
  %v968 = vunpack.c.h.b16 %v332
  %v969 = vunpack.c.l.b16 %v333
  %v970 = vunpack.c.h.b16 %v333
  %v971 = vunpack.c.l.b16 %v334
  %v972 = vunpack.c.h.b16 %v334
  %v973 = vunpack.c.l.b16 %v335
  %v974 = vunpack.c.h.b16 %v335
  %v975 = vunpack.c.l.b16 %v336
  %v976 = vunpack.c.h.b16 %v336
  %v977 = vunpack.c.l.b16 %v337
  %v978 = vunpack.c.h.b16 %v337
  %v979 = vunpack.c.l.b16 %v338
  %v980 = vunpack.c.h.b16 %v338
  %v981 = vunpack.c.l.b16 %v339
  %v982 = vunpack.c.h.b16 %v339
  %v983 = vunpack.c.l.b16 %v340
  %v984 = vunpack.c.h.b16 %v340
  %v985 = vunpack.c.l.b16 %v341
  %v986 = vunpack.c.h.b16 %v341
  %v987 = vunpack.c.l.b16 %v342
  %v988 = vunpack.c.h.b16 %v342
  %v989 = vunpack.c.l.b16 %v343
  %v990 = vunpack.c.h.b16 %v343
  %v991 = vunpack.c.l.b16 %v344
  %v992 = vunpack.c.h.b16 %v344
  %v993 = vunpack.c.l.b16 %v345
  %v994 = vunpack.c.h.b16 %v345
  %v995 = vunpack.c.l.b16 %v346
  %v996 = vunpack.c.h.b16 %v346
  %v997 = vunpack.c.l.b16 %v347
  %v998 = vunpack.c.h.b16 %v347
  %v999 = vunpack.c.l.b16 %v348
  %v1000 = vunpack.c.h.b16 %v348
  %v1001 = vunpack.c.l.b16 %v349
  %v1002 = vunpack.c.h.b16 %v349
  %v1003 = vunpack.c.l.b16 %v350
  %v1004 = vunpack.c.h.b16 %v350
  %v1005 = vunpack.c.l.b16 %v351
  %v1006 = vunpack.c.h.b16 %v351
  %v1007 = vunpack.c.l.b16 %v352
  %v1008 = vunpack.c.h.b16 %v352
  %v1009 = vunpack.c.l.b16 %v353
  %v1010 = vunpack.c.h.b16 %v353
  %v1011 = vunpack.c.l.b16 %v354
  %v1012 = vunpack.c.h.b16 %v354
  %v1013 = vunpack.c.l.b16 %v355
  %v1014 = vunpack.c.h.b16 %v355
  %v1015 = vunpack.c.l.b16 %v356
  %v1016 = vunpack.c.h.b16 %v356
  %v1017 = vunpack.c.l.b16 %v357
  %v1018 = vunpack.c.h.b16 %v357
  %v1019 = vunpack.c.l.b16 %v358
  %v1020 = vunpack.c.h.b16 %v358
  %v1021 = vunpack.c.l.b16 %v359
  %v1022 = vunpack.c.h.b16 %v359
  %v1023 = vunpack.c.l.b16 %v360
  %v1024 = vunpack.c.h.b16 %v360
  %v1025 = vunpack.c.l.b16 %v361
  %v1026 = vunpack.c.h.b16 %v361
  %v1027 = vunpack.c.l.b16 %v362
  %v1028 = vunpack.c.h.b16 %v362
  %v1029 = vunpack.c.l.b16 %v363
  %v1030 = vunpack.c.h.b16 %v363
  %v1031 = vunpack.c.l.b16 %v364
  %v1032 = vunpack.c.h.b16 %v364
  %v1033 = vunpack.c.l.b16 %v365
  %v1034 = vunpack.c.h.b16 %v365
  %v1035 = vunpack.c.l.b16 %v366
  %v1036 = vunpack.c.h.b16 %v366
  %v1037 = vunpack.c.l.b16 %v367
  %v1038 = vunpack.c.h.b16 %v367
  %v1039 = vunpack.c.l.b16 %v368
  %v1040 = vunpack.c.h.b16 %v368
  %v1041 = vunpack.c.l.b16 %v369
  %v1042 = vunpack.c.h.b16 %v369
  %v1043 = vunpack.c.l.b16 %v370
  %v1044 = vunpack.c.h.b16 %v370
  %v1045 = vunpack.c.l.b16 %v371
  %v1046 = vunpack.c.h.b16 %v371
  %v1047 = vunpack.c.l.b16 %v372
  %v1048 = vunpack.c.h.b16 %v372
  %v1049 = vunpack.c.l.b16 %v373
  %v1050 = vunpack.c.h.b16 %v373
  %v1051 = vunpack.c.l.b16 %v374
  %v1052 = vunpack.c.h.b16 %v374
  %v1053 = vunpack.c.l.b16 %v375
  %v1054 = vunpack.c.h.b16 %v375
  %v1055 = vunpack.c.l.b16 %v376
  %v1056 = vunpack.c.h.b16 %v376
  %v1057 = vunpack.c.l.b16 %v377
  %v1058 = vunpack.c.h.b16 %v377
  %v1059 = vunpack.c.l.b16 %v378
  %v1060 = vunpack.c.h.b16 %v378
  %v1061 = vunpack.c.l.b16 %v379
  %v1062 = vunpack.c.h.b16 %v379
  %v1063 = vunpack.c.l.b16 %v380
  %v1064 = vunpack.c.h.b16 %v380
  %v1065 = vunpack.c.l.b16 %v381
  %v1066 = vunpack.c.h.b16 %v381
  %v1067 = vunpack.c.l.b16 %v382
  %v1068 = vunpack.c.h.b16 %v382
  %v1069 = vunpack.c.l.b16 %v383
  %v1070 = vunpack.c.h.b16 %v383
  %v1071 = vunpack.c.l.b16 %v384
  %v1072 = vunpack.c.h.b16 %v384
  %v1073 = vunpack.c.l.b16 %v385
  %v1074 = vunpack.c.h.b16 %v385
  %v1075 = vunpack.c.l.b16 %v386
  %v1076 = vunpack.c.h.b16 %v386
  %v1077 = vunpack.c.l.b16 %v387
  %v1078 = vunpack.c.h.b16 %v387
  %v1079 = vunpack.c.l.b16 %v388
  %v1080 = vunpack.c.h.b16 %v388
  %v1081 = vunpack.c.l.b16 %v389
  %v1082 = vunpack.c.h.b16 %v389
  %v1083 = vunpack.c.l.b16 %v390
  %v1084 = vunpack.c.h.b16 %v390
  %v1085 = vunpack.c.l.b16 %v391
  %v1086 = vunpack.c.h.b16 %v391
  %v1087 = vunpack.c.l.b16 %v392
  %v1088 = vunpack.c.h.b16 %v392
  %v1089 = vunpack.c.l.b16 %v393
  %v1090 = vunpack.c.h.b16 %v393
  %v1091 = vunpack.c.l.b16 %v394
  %v1092 = vunpack.c.h.b16 %v394
  %v1093 = vunpack.c.l.b16 %v395
  %v1094 = vunpack.c.h.b16 %v395
  %v1095 = vunpack.c.l.b16 %v396
  %v1096 = vunpack.c.h.b16 %v396
  %v1097 = vunpack.c.l.b16 %v397
  %v1098 = vunpack.c.h.b16 %v397
  %v1099 = vunpack.c.l.b16 %v398
  %v1100 = vunpack.c.h.b16 %v398
  %v1101 = vunpack.c.l.b16 %v399
  %v1102 = vunpack.c.h.b16 %v399
  %v1103 = vunpack.c.l.b16 %v400
  %v1104 = vunpack.c.h.b16 %v400
  %v1105 = vunpack.c.l.b16 %v401
  %v1106 = vunpack.c.h.b16 %v401
  %v1107 = vunpack.c.l.b16 %v402
  %v1108 = vunpack.c.h.b16 %v402
  %v1109 = vunpack.c.l.b16 %v403
  %v1110 = vunpack.c.h.b16 %v403
  %v1111 = vunpack.c.l.b16 %v404
  %v1112 = vunpack.c.h.b16 %v404
  %v1113 = vunpack.c.l.b16 %v405
  %v1114 = vunpack.c.h.b16 %v405
  %v1115 = vunpack.c.l.b16 %v406
  %v1116 = vunpack.c.h.b16 %v406
  %v1117 = vunpack.c.l.b16 %v407
  %v1118 = vunpack.c.h.b16 %v407
  %v1119 = vunpack.c.l.b16 %v408
  %v1120 = vunpack.c.h.b16 %v408
  %v1121 = vunpack.c.l.b16 %v409
  %v1122 = vunpack.c.h.b16 %v409
  %v1123 = vunpack.c.l.b16 %v410
  %v1124 = vunpack.c.h.b16 %v410
  %v1125 = vunpack.c.l.b16 %v411
  %v1126 = vunpack.c.h.b16 %v411
  %v1127 = vunpack.c.l.b16 %v412
  %v1128 = vunpack.c.h.b16 %v412
  %v1129 = vunpack.c.l.b16 %v413
  %v1130 = vunpack.c.h.b16 %v413
  %v1131 = vunpack.c.l.b16 %v414
  %v1132 = vunpack.c.h.b16 %v414
  %v1133 = vunpack.c.l.b16 %v415
  %v1134 = vunpack.c.h.b16 %v415
  %v1135 = vunpack.c.l.b16 %v416
  %v1136 = vunpack.c.h.b16 %v416
  %v1137 = vunpack.c.l.b16 %v417
  %v1138 = vunpack.c.h.b16 %v417
  %v1139 = vunpack.c.l.b16 %v418
  %v1140 = vunpack.c.h.b16 %v418
  %v1141 = vunpack.c.l.b16 %v419
  %v1142 = vunpack.c.h.b16 %v419
  %v1143 = vunpack.c.l.b16 %v420
  %v1144 = vunpack.c.h.b16 %v420
  %v1145 = vunpack.c.l.b16 %v421
  %v1146 = vunpack.c.h.b16 %v421
  %v1147 = vunpack.c.l.b16 %v422
  %v1148 = vunpack.c.h.b16 %v422
  %v1149 = vunpack.c.l.b16 %v423
  %v1150 = vunpack.c.h.b16 %v423
  %v1151 = vunpack.c.l.b16 %v424
  %v1152 = vunpack.c.h.b16 %v424
  %v1153 = vunpack.c.l.b16 %v425
  %v1154 = vunpack.c.h.b16 %v425
  %v1155 = vunpack.c.l.b16 %v426
  %v1156 = vunpack.c.h.b16 %v426
  %v1157 = vunpack.c.l.b16 %v427
  %v1158 = vunpack.c.h.b16 %v427
  %v1159 = vunpack.c.l.b16 %v428
  %v1160 = vunpack.c.h.b16 %v428
  %v1161 = vunpack.c.l.b16 %v429
  %v1162 = vunpack.c.h.b16 %v429
  %v1163 = vunpack.c.l.b16 %v430
  %v1164 = vunpack.c.h.b16 %v430
  %v1165 = vunpack.c.l.b16 %v431
  %v1166 = vunpack.c.h.b16 %v431
  %v1167 = vunpack.c.l.b16 %v432
  %v1168 = vunpack.c.h.b16 %v432
  %v1169 = vunpack.c.l.b16 %v433
  %v1170 = vunpack.c.h.b16 %v433
  %v1171 = vunpack.c.l.b16 %v434
  %v1172 = vunpack.c.h.b16 %v434
  %v1173 = vunpack.c.l.b16 %v435
  %v1174 = vunpack.c.h.b16 %v435
  %v1175 = vunpack.c.l.b16 %v436
  %v1176 = vunpack.c.h.b16 %v436
  %v1177 = vunpack.c.l.b16 %v437
  %v1178 = vunpack.c.h.b16 %v437
  %v1179 = vunpack.c.l.b16 %v438
  %v1180 = vunpack.c.h.b16 %v438
  %v1181 = vunpack.c.l.b16 %v439
  %v1182 = vunpack.c.h.b16 %v439
  %v1183 = vunpack.c.l.b16 %v440
  %v1184 = vunpack.c.h.b16 %v440
  %v1185 = vunpack.c.l.b16 %v441
  %v1186 = vunpack.c.h.b16 %v441
  %v1187 = vunpack.c.l.b16 %v442
  %v1188 = vunpack.c.h.b16 %v442
  %v1189 = vunpack.c.l.b16 %v443
  %v1190 = vunpack.c.h.b16 %v443
  %v1191 = vunpack.c.l.b16 %v444
  %v1192 = vunpack.c.h.b16 %v444
  %v1193 = vunpack.c.l.b16 %v445
  %v1194 = vunpack.c.h.b16 %v445
  %v1195 = vunpack.c.l.b16 %v446
  %v1196 = vunpack.c.h.b16 %v446
  %v1197 = vunpack.c.l.b16 %v447
  %v1198 = vunpack.c.h.b16 %v447
  %v1199 = vunpack.c.l.b16 %v448
  %v1200 = vunpack.c.h.b16 %v448
  %v1201 = vunpack.c.l.b16 %v449
  %v1202 = vunpack.c.h.b16 %v449
  %v1203 = vunpack.c.l.b16 %v450
  %v1204 = vunpack.c.h.b16 %v450
  %v1205 = vunpack.c.l.b16 %v451
  %v1206 = vunpack.c.h.b16 %v451
  %v1207 = vunpack.c.l.b16 %v452
  %v1208 = vunpack.c.h.b16 %v452
  %v1209 = vunpack.c.l.b16 %v453
  %v1210 = vunpack.c.h.b16 %v453
  %v1211 = vunpack.c.l.b16 %v454
  %v1212 = vunpack.c.h.b16 %v454
  %v1213 = vunpack.c.l.b16 %v455
  %v1214 = vunpack.c.h.b16 %v455
  %v1215 = vunpack.c.l.b16 %v456
  %v1216 = vunpack.c.h.b16 %v456
  %v1217 = vunpack.c.l.b16 %v457
  %v1218 = vunpack.c.h.b16 %v457
  %v1219 = vunpack.c.l.b16 %v458
  %v1220 = vunpack.c.h.b16 %v458
  %v1221 = vunpack.c.l.b16 %v459
  %v1222 = vunpack.c.h.b16 %v459
  %v1223 = vunpack.c.l.b16 %v460
  %v1224 = vunpack.c.h.b16 %v460
  %v1225 = vunpack.c.l.b16 %v461
  %v1226 = vunpack.c.h.b16 %v461
  %v1227 = vunpack.c.l.b16 %v462
  %v1228 = vunpack.c.h.b16 %v462
  %v1229 = vunpack.c.l.b16 %v463
  %v1230 = vunpack.c.h.b16 %v463
  %v1231 = vunpack.c.l.b16 %v464
  %v1232 = vunpack.c.h.b16 %v464
  %v1233 = vunpack.c.l.b16 %v465
  %v1234 = vunpack.c.h.b16 %v465
  %v1235 = vunpack.c.l.b16 %v466
  %v1236 = vunpack.c.h.b16 %v466
  %v1237 = vunpack.c.l.b16 %v467
  %v1238 = vunpack.c.h.b16 %v467
  %v1239 = vunpack.c.l.b16 %v468
  %v1240 = vunpack.c.h.b16 %v468
  %v1241 = vunpack.c.l.b16 %v469
  %v1242 = vunpack.c.h.b16 %v469
  %v1243 = vunpack.c.l.b16 %v470
  %v1244 = vunpack.c.h.b16 %v470
  %v1245 = vunpack.c.l.b16 %v471
  %v1246 = vunpack.c.h.b16 %v471
  %v1247 = vunpack.c.l.b16 %v472
  %v1248 = vunpack.c.h.b16 %v472
  %v1249 = vunpack.c.l.b16 %v473
  %v1250 = vunpack.c.h.b16 %v473
  %v1251 = vunpack.c.l.b16 %v474
  %v1252 = vunpack.c.h.b16 %v474
  %v1253 = vunpack.c.l.b16 %v475
  %v1254 = vunpack.c.h.b16 %v475
  %v1255 = vunpack.c.l.b16 %v476
  %v1256 = vunpack.c.h.b16 %v476
  %v1257 = vunpack.c.l.b16 %v477
  %v1258 = vunpack.c.h.b16 %v477
  %v1259 = vunpack.c.l.b16 %v478
  %v1260 = vunpack.c.h.b16 %v478
  %v1261 = vunpack.c.l.b16 %v479
  %v1262 = vunpack.c.h.b16 %v479
  %v1263 = vunpack.c.l.b16 %v480
  %v1264 = vunpack.c.h.b16 %v480
  %v1265 = vunpack.c.l.b16 %v481
  %v1266 = vunpack.c.h.b16 %v481
  %v1267 = vunpack.c.l.b16 %v482
  %v1268 = vunpack.c.h.b16 %v482
  %v1269 = vunpack.c.l.b16 %v483
  %v1270 = vunpack.c.h.b16 %v483
  %v1271 = vunpack.c.l.b16 %v484
  %v1272 = vunpack.c.h.b16 %v484
  %v1273 = vunpack.c.l.b16 %v485
  %v1274 = vunpack.c.h.b16 %v485
  %v1275 = vunpack.c.l.b16 %v486
  %v1276 = vunpack.c.h.b16 %v486
  %v1277 = vpack.c.b16 %v769, %v765
  %v1278 = vpack.c.b16 %v770, %v766
  %v1279 = vpack.c.b16 %v771, %v767
  %v1280 = vpack.c.b16 %v772, %v768
  %v1281 = vpack.c.b16 %v777, %v773
  %v1282 = vpack.c.b16 %v778, %v774
  %v1283 = vpack.c.b16 %v779, %v775
  %v1284 = vpack.c.b16 %v780, %v776
  %v1285 = vpack.c.b16 %v785, %v781
  %v1286 = vpack.c.b16 %v786, %v782
  %v1287 = vpack.c.b16 %v787, %v783
  %v1288 = vpack.c.b16 %v788, %v784
  %v1289 = vpack.c.b16 %v793, %v789
  %v1290 = vpack.c.b16 %v794, %v790
  %v1291 = vpack.c.b16 %v795, %v791
  %v1292 = vpack.c.b16 %v796, %v792
  %v1293 = vpack.c.b16 %v801, %v797
  %v1294 = vpack.c.b16 %v802, %v798
  %v1295 = vpack.c.b16 %v803, %v799
  %v1296 = vpack.c.b16 %v804, %v800
  %v1297 = vpack.c.b16 %v809, %v805
  %v1298 = vpack.c.b16 %v810, %v806
  %v1299 = vpack.c.b16 %v811, %v807
  %v1300 = vpack.c.b16 %v812, %v808
  %v1301 = vpack.c.b16 %v817, %v813
  %v1302 = vpack.c.b16 %v818, %v814
  %v1303 = vpack.c.b16 %v819, %v815
  %v1304 = vpack.c.b16 %v820, %v816
  %v1305 = vpack.c.b16 %v825, %v821
  %v1306 = vpack.c.b16 %v826, %v822
  %v1307 = vpack.c.b16 %v827, %v823
  %v1308 = vpack.c.b16 %v828, %v824
  %v1309 = vpack.c.b16 %v833, %v829
  %v1310 = vpack.c.b16 %v834, %v830
  %v1311 = vpack.c.b16 %v835, %v831
  %v1312 = vpack.c.b16 %v836, %v832
  %v1313 = vpack.c.b16 %v841, %v837
  %v1314 = vpack.c.b16 %v842, %v838
  %v1315 = vpack.c.b16 %v843, %v839
  %v1316 = vpack.c.b16 %v844, %v840
  %v1317 = vpack.c.b16 %v849, %v845
  %v1318 = vpack.c.b16 %v850, %v846
  %v1319 = vpack.c.b16 %v851, %v847
  %v1320 = vpack.c.b16 %v852, %v848
  %v1321 = vpack.c.b16 %v857, %v853
  %v1322 = vpack.c.b16 %v858, %v854
  %v1323 = vpack.c.b16 %v859, %v855
  %v1324 = vpack.c.b16 %v860, %v856
  %v1325 = vpack.c.b16 %v865, %v861
  %v1326 = vpack.c.b16 %v866, %v862
  %v1327 = vpack.c.b16 %v867, %v863
  %v1328 = vpack.c.b16 %v868, %v864
  %v1329 = vpack.c.b16 %v873, %v869
  %v1330 = vpack.c.b16 %v874, %v870
  %v1331 = vpack.c.b16 %v875, %v871
  %v1332 = vpack.c.b16 %v876, %v872
  %v1333 = vpack.c.b16 %v881, %v877
  %v1334 = vpack.c.b16 %v882, %v878
  %v1335 = vpack.c.b16 %v883, %v879
  %v1336 = vpack.c.b16 %v884, %v880
  %v1337 = vpack.c.b16 %v889, %v885
  %v1338 = vpack.c.b16 %v890, %v886
  %v1339 = vpack.c.b16 %v891, %v887
  %v1340 = vpack.c.b16 %v892, %v888
  %v1341 = vpack.c.b16 %v897, %v893
  %v1342 = vpack.c.b16 %v898, %v894
  %v1343 = vpack.c.b16 %v899, %v895
  %v1344 = vpack.c.b16 %v900, %v896
  %v1345 = vpack.c.b16 %v905, %v901
  %v1346 = vpack.c.b16 %v906, %v902
  %v1347 = vpack.c.b16 %v907, %v903
  %v1348 = vpack.c.b16 %v908, %v904
  %v1349 = vpack.c.b16 %v913, %v909
  %v1350 = vpack.c.b16 %v914, %v910
  %v1351 = vpack.c.b16 %v915, %v911
  %v1352 = vpack.c.b16 %v916, %v912
  %v1353 = vpack.c.b16 %v921, %v917
  %v1354 = vpack.c.b16 %v922, %v918
  %v1355 = vpack.c.b16 %v923, %v919
  %v1356 = vpack.c.b16 %v924, %v920
  %v1357 = vpack.c.b16 %v929, %v925
  %v1358 = vpack.c.b16 %v930, %v926
  %v1359 = vpack.c.b16 %v931, %v927
  %v1360 = vpack.c.b16 %v932, %v928
  %v1361 = vpack.c.b16 %v937, %v933
  %v1362 = vpack.c.b16 %v938, %v934
  %v1363 = vpack.c.b16 %v939, %v935
  %v1364 = vpack.c.b16 %v940, %v936
  %v1365 = vpack.c.b16 %v945, %v941
  %v1366 = vpack.c.b16 %v946, %v942
  %v1367 = vpack.c.b16 %v947, %v943
  %v1368 = vpack.c.b16 %v948, %v944
  %v1369 = vpack.c.b16 %v953, %v949
  %v1370 = vpack.c.b16 %v954, %v950
  %v1371 = vpack.c.b16 %v955, %v951
  %v1372 = vpack.c.b16 %v956, %v952
  %v1373 = vpack.c.b16 %v961, %v957
  %v1374 = vpack.c.b16 %v962, %v958
  %v1375 = vpack.c.b16 %v963, %v959
  %v1376 = vpack.c.b16 %v964, %v960
  %v1377 = vpack.c.b16 %v969, %v965
  %v1378 = vpack.c.b16 %v970, %v966
  %v1379 = vpack.c.b16 %v971, %v967
  %v1380 = vpack.c.b16 %v972, %v968
  %v1381 = vpack.c.b16 %v977, %v973
  %v1382 = vpack.c.b16 %v978, %v974
  %v1383 = vpack.c.b16 %v979, %v975
  %v1384 = vpack.c.b16 %v980, %v976
  %v1385 = vpack.c.b16 %v985, %v981
  %v1386 = vpack.c.b16 %v986, %v982
  %v1387 = vpack.c.b16 %v987, %v983
  %v1388 = vpack.c.b16 %v988, %v984
  %v1389 = vpack.c.b16 %v993, %v989
  %v1390 = vpack.c.b16 %v994, %v990
  %v1391 = vpack.c.b16 %v995, %v991
  %v1392 = vpack.c.b16 %v996, %v992
  %v1393 = vpack.c.b16 %v1001, %v997
  %v1394 = vpack.c.b16 %v1002, %v998
  %v1395 = vpack.c.b16 %v1003, %v999
  %v1396 = vpack.c.b16 %v1004, %v1000
  %v1397 = vpack.c.b16 %v1009, %v1005
  %v1398 = vpack.c.b16 %v1010, %v1006
  %v1399 = vpack.c.b16 %v1011, %v1007
  %v1400 = vpack.c.b16 %v1012, %v1008
  %v1401 = vpack.c.b16 %v1017, %v1013
  %v1402 = vpack.c.b16 %v1018, %v1014
  %v1403 = vpack.c.b16 %v1019, %v1015
  %v1404 = vpack.c.b16 %v1020, %v1016
  %v1405 = vpack.c.b16 %v1025, %v1021
  %v1406 = vpack.c.b16 %v1026, %v1022
  %v1407 = vpack.c.b16 %v1027, %v1023
  %v1408 = vpack.c.b16 %v1028, %v1024
  %v1409 = vpack.c.b16 %v1033, %v1029
  %v1410 = vpack.c.b16 %v1034, %v1030
  %v1411 = vpack.c.b16 %v1035, %v1031
  %v1412 = vpack.c.b16 %v1036, %v1032
  %v1413 = vpack.c.b16 %v1041, %v1037
  %v1414 = vpack.c.b16 %v1042, %v1038
  %v1415 = vpack.c.b16 %v1043, %v1039
  %v1416 = vpack.c.b16 %v1044, %v1040
  %v1417 = vpack.c.b16 %v1049, %v1045
  %v1418 = vpack.c.b16 %v1050, %v1046
  %v1419 = vpack.c.b16 %v1051, %v1047
  %v1420 = vpack.c.b16 %v1052, %v1048
  %v1421 = vpack.c.b16 %v1057, %v1053
  %v1422 = vpack.c.b16 %v1058, %v1054
  %v1423 = vpack.c.b16 %v1059, %v1055
  %v1424 = vpack.c.b16 %v1060, %v1056
  %v1425 = vpack.c.b16 %v1065, %v1061
  %v1426 = vpack.c.b16 %v1066, %v1062
  %v1427 = vpack.c.b16 %v1067, %v1063
  %v1428 = vpack.c.b16 %v1068, %v1064
  %v1429 = vpack.c.b16 %v1073, %v1069
  %v1430 = vpack.c.b16 %v1074, %v1070
  %v1431 = vpack.c.b16 %v1075, %v1071
  %v1432 = vpack.c.b16 %v1076, %v1072
  %v1433 = vpack.c.b16 %v1081, %v1077
  %v1434 = vpack.c.b16 %v1082, %v1078
  %v1435 = vpack.c.b16 %v1083, %v1079
  %v1436 = vpack.c.b16 %v1084, %v1080
  %v1437 = vpack.c.b16 %v1089, %v1085
  %v1438 = vpack.c.b16 %v1090, %v1086
  %v1439 = vpack.c.b16 %v1091, %v1087
  %v1440 = vpack.c.b16 %v1092, %v1088
  %v1441 = vpack.c.b16 %v1097, %v1093
  %v1442 = vpack.c.b16 %v1098, %v1094
  %v1443 = vpack.c.b16 %v1099, %v1095
  %v1444 = vpack.c.b16 %v1100, %v1096
  %v1445 = vpack.c.b16 %v1105, %v1101
  %v1446 = vpack.c.b16 %v1106, %v1102
  %v1447 = vpack.c.b16 %v1107, %v1103
  %v1448 = vpack.c.b16 %v1108, %v1104
  %v1449 = vpack.c.b16 %v1113, %v1109
  %v1450 = vpack.c.b16 %v1114, %v1110
  %v1451 = vpack.c.b16 %v1115, %v1111
  %v1452 = vpack.c.b16 %v1116, %v1112
  %v1453 = vpack.c.b16 %v1121, %v1117
  %v1454 = vpack.c.b16 %v1122, %v1118
  %v1455 = vpack.c.b16 %v1123, %v1119
  %v1456 = vpack.c.b16 %v1124, %v1120
  %v1457 = vpack.c.b16 %v1129, %v1125
  %v1458 = vpack.c.b16 %v1130, %v1126
  %v1459 = vpack.c.b16 %v1131, %v1127
  %v1460 = vpack.c.b16 %v1132, %v1128
  %v1461 = vpack.c.b16 %v1137, %v1133
  %v1462 = vpack.c.b16 %v1138, %v1134
  %v1463 = vpack.c.b16 %v1139, %v1135
  %v1464 = vpack.c.b16 %v1140, %v1136
  %v1465 = vpack.c.b16 %v1145, %v1141
  %v1466 = vpack.c.b16 %v1146, %v1142
  %v1467 = vpack.c.b16 %v1147, %v1143
  %v1468 = vpack.c.b16 %v1148, %v1144
  %v1469 = vpack.c.b16 %v1153, %v1149
  %v1470 = vpack.c.b16 %v1154, %v1150
  %v1471 = vpack.c.b16 %v1155, %v1151
  %v1472 = vpack.c.b16 %v1156, %v1152
  %v1473 = vpack.c.b16 %v1161, %v1157
  %v1474 = vpack.c.b16 %v1162, %v1158
  %v1475 = vpack.c.b16 %v1163, %v1159
  %v1476 = vpack.c.b16 %v1164, %v1160
  %v1477 = vpack.c.b16 %v1169, %v1165
  %v1478 = vpack.c.b16 %v1170, %v1166
  %v1479 = vpack.c.b16 %v1171, %v1167
  %v1480 = vpack.c.b16 %v1172, %v1168
  %v1481 = vpack.c.b16 %v1177, %v1173
  %v1482 = vpack.c.b16 %v1178, %v1174
  %v1483 = vpack.c.b16 %v1179, %v1175
  %v1484 = vpack.c.b16 %v1180, %v1176
  %v1485 = vpack.c.b16 %v1185, %v1181
  %v1486 = vpack.c.b16 %v1186, %v1182
  %v1487 = vpack.c.b16 %v1187, %v1183
  %v1488 = vpack.c.b16 %v1188, %v1184
  %v1489 = vpack.c.b16 %v1193, %v1189
  %v1490 = vpack.c.b16 %v1194, %v1190
  %v1491 = vpack.c.b16 %v1195, %v1191
  %v1492 = vpack.c.b16 %v1196, %v1192
  %v1493 = vpack.c.b16 %v1201, %v1197
  %v1494 = vpack.c.b16 %v1202, %v1198
  %v1495 = vpack.c.b16 %v1203, %v1199
  %v1496 = vpack.c.b16 %v1204, %v1200
  %v1497 = vpack.c.b16 %v1209, %v1205
  %v1498 = vpack.c.b16 %v1210, %v1206
  %v1499 = vpack.c.b16 %v1211, %v1207
  %v1500 = vpack.c.b16 %v1212, %v1208
  %v1501 = vpack.c.b16 %v1217, %v1213
  %v1502 = vpack.c.b16 %v1218, %v1214
  %v1503 = vpack.c.b16 %v1219, %v1215
  %v1504 = vpack.c.b16 %v1220, %v1216
  %v1505 = vpack.c.b16 %v1225, %v1221
  %v1506 = vpack.c.b16 %v1226, %v1222
  %v1507 = vpack.c.b16 %v1227, %v1223
  %v1508 = vpack.c.b16 %v1228, %v1224
  %v1509 = vpack.c.b16 %v1233, %v1229
  %v1510 = vpack.c.b16 %v1234, %v1230
  %v1511 = vpack.c.b16 %v1235, %v1231
  %v1512 = vpack.c.b16 %v1236, %v1232
  %v1513 = vpack.c.b16 %v1241, %v1237
  %v1514 = vpack.c.b16 %v1242, %v1238
  %v1515 = vpack.c.b16 %v1243, %v1239
  %v1516 = vpack.c.b16 %v1244, %v1240
  %v1517 = vpack.c.b16 %v1249, %v1245
  %v1518 = vpack.c.b16 %v1250, %v1246
  %v1519 = vpack.c.b16 %v1251, %v1247
  %v1520 = vpack.c.b16 %v1252, %v1248
  %v1521 = vpack.c.b16 %v1257, %v1253
  %v1522 = vpack.c.b16 %v1258, %v1254
  %v1523 = vpack.c.b16 %v1259, %v1255
  %v1524 = vpack.c.b16 %v1260, %v1256
  %v1525 = vpack.c.b16 %v1265, %v1261
  %v1526 = vpack.c.b16 %v1266, %v1262
  %v1527 = vpack.c.b16 %v1267, %v1263
  %v1528 = vpack.c.b16 %v1268, %v1264
  %v1529 = vpack.c.b16 %v1273, %v1269
  %v1530 = vpack.c.b16 %v1274, %v1270
  %v1531 = vpack.c.b16 %v1275, %v1271
  %v1532 = vpack.c.b16 %v1276, %v1272
  %1789 = vmatprep.subr.bf16.mxu0 %v1306
  %1790 = vmatpush1.bf16.msra.mxu0 %v1305
  %1791 = vmatprep.subr.bf16.mxu0 %v1302
  %1792 = vmatpush1.bf16.msra.mxu0 %v1301
  %1793 = vmatprep.subr.bf16.mxu0 %v1298
  %1794 = vmatpush1.bf16.msra.mxu0 %v1297
  %1795 = vmatprep.subr.bf16.mxu0 %v1294
  %1796 = vmatpush1.bf16.msra.mxu0 %v1293
  %1797 = vmatprep.subr.bf16.mxu0 %v1290
  %1798 = vmatpush1.bf16.msra.mxu0 %v1289
  %1799 = vmatprep.subr.bf16.mxu0 %v1286
  %1800 = vmatpush1.bf16.msra.mxu0 %v1285
  %1801 = vmatprep.subr.bf16.mxu0 %v1282
  %1802 = vmatpush1.bf16.msra.mxu0 %v1281
  %1803 = vmatprep.subr.bf16.mxu0 %v1278
  %1804 = vmatpush1.bf16.msra.mxu0 %v1277
  %1805 = vmatprep.subr.bf16.mxu0 %v1338
  %1806 = vmatpush2.bf16.msra.mxu0 %v1337
  %1807 = vmatprep.subr.bf16.mxu0 %v1334
  %1808 = vmatpush2.bf16.msra.mxu0 %v1333
  %1809 = vmatprep.subr.bf16.mxu0 %v1330
  %1810 = vmatpush2.bf16.msra.mxu0 %v1329
  %1811 = vmatprep.subr.bf16.mxu0 %v1326
  %1812 = vmatpush2.bf16.msra.mxu0 %v1325
  %1813 = vmatprep.subr.bf16.mxu0 %v1322
  %1814 = vmatpush2.bf16.msra.mxu0 %v1321
  %1815 = vmatprep.subr.bf16.mxu0 %v1318
  %1816 = vmatpush2.bf16.msra.mxu0 %v1317
  %1817 = vmatprep.subr.bf16.mxu0 %v1314
  %1818 = vmatpush2.bf16.msra.mxu0 %v1313
  %1819 = vmatprep.subr.bf16.mxu0 %v1310
  %1820 = vmatpush2.bf16.msra.mxu0 %v1309
  %1821 = vmatprep.mubr.bf16.mxu0 %v168
  %1822 = vmatmul.mubr.bf16.gmra.mxu0 %v167
  %v1823 = vpop.f32.mrf.mxu0
  %v1824 = vadd.f32 %v492, %v1823
  %v1825 = vpop.f32.mrf.mxu0
  %v1826 = vadd.f32 %v496, %v1825
  %v1827 = vpop.f32.mrf.mxu0
  %v1828 = vadd.f32 %v492, %v1827
  %v1829 = vpop.f32.mrf.mxu0
  %v1830 = vadd.f32 %v496, %v1829
  %1831 = vmatprep.mubr.bf16.mxu0 %v176
  %1832 = vmatmul.mubr.bf16.gmra.mxu0 %v175
  %v1833 = vpop.f32.mrf.mxu0
  %v1834 = vadd.f32 %v492, %v1833
  %v1835 = vpop.f32.mrf.mxu0
  %v1836 = vadd.f32 %v496, %v1835
  %v1837 = vpop.f32.mrf.mxu0
  %v1838 = vadd.f32 %v492, %v1837
  %v1839 = vpop.f32.mrf.mxu0
  %v1840 = vadd.f32 %v496, %v1839
  %1841 = vmatprep.mubr.bf16.mxu0 %v184
  %1842 = vmatmul.mubr.bf16.gmra.mxu0 %v183
  %v1843 = vpop.f32.mrf.mxu0
  %v1844 = vadd.f32 %v492, %v1843
  %v1845 = vpop.f32.mrf.mxu0
  %v1846 = vadd.f32 %v496, %v1845
  %v1847 = vpop.f32.mrf.mxu0
  %v1848 = vadd.f32 %v492, %v1847
  %v1849 = vpop.f32.mrf.mxu0
  %v1850 = vadd.f32 %v496, %v1849
  %1851 = vmatprep.mubr.bf16.mxu0 %v192
  %1852 = vmatmul.mubr.bf16.gmra.mxu0 %v191
  %v1853 = vpop.f32.mrf.mxu0
  %v1854 = vadd.f32 %v492, %v1853
  %v1855 = vpop.f32.mrf.mxu0
  %v1856 = vadd.f32 %v496, %v1855
  %v1857 = vpop.f32.mrf.mxu0
  %v1858 = vadd.f32 %v492, %v1857
  %v1859 = vpop.f32.mrf.mxu0
  %v1860 = vadd.f32 %v496, %v1859
  %1861 = vmatprep.mubr.bf16.mxu0 %v200
  %1862 = vmatmul.mubr.bf16.gmra.mxu0 %v199
  %v1863 = vpop.f32.mrf.mxu0
  %v1864 = vadd.f32 %v492, %v1863
  %v1865 = vpop.f32.mrf.mxu0
  %v1866 = vadd.f32 %v496, %v1865
  %v1867 = vpop.f32.mrf.mxu0
  %v1868 = vadd.f32 %v492, %v1867
  %v1869 = vpop.f32.mrf.mxu0
  %v1870 = vadd.f32 %v496, %v1869
  %1871 = vmatprep.mubr.bf16.mxu0 %v208
  %1872 = vmatmul.mubr.bf16.gmra.mxu0 %v207
  %v1873 = vpop.f32.mrf.mxu0
  %v1874 = vadd.f32 %v492, %v1873
  %v1875 = vpop.f32.mrf.mxu0
  %v1876 = vadd.f32 %v496, %v1875
  %v1877 = vpop.f32.mrf.mxu0
  %v1878 = vadd.f32 %v492, %v1877
  %v1879 = vpop.f32.mrf.mxu0
  %v1880 = vadd.f32 %v496, %v1879
  %1881 = vmatprep.mubr.bf16.mxu0 %v216
  %1882 = vmatmul.mubr.bf16.gmra.mxu0 %v215
  %v1883 = vpop.f32.mrf.mxu0
  %v1884 = vadd.f32 %v492, %v1883
  %v1885 = vpop.f32.mrf.mxu0
  %v1886 = vadd.f32 %v496, %v1885
  %v1887 = vpop.f32.mrf.mxu0
  %v1888 = vadd.f32 %v492, %v1887
  %v1889 = vpop.f32.mrf.mxu0
  %v1890 = vadd.f32 %v496, %v1889
  %1891 = vmatprep.mubr.bf16.mxu0 %v224
  %1892 = vmatmul.mubr.bf16.gmra.mxu0 %v223
  %v1893 = vpop.f32.mrf.mxu0
  %v1894 = vadd.f32 %v492, %v1893
  %v1895 = vpop.f32.mrf.mxu0
  %v1896 = vadd.f32 %v496, %v1895
  %v1897 = vpop.f32.mrf.mxu0
  %v1898 = vadd.f32 %v492, %v1897
  %v1899 = vpop.f32.mrf.mxu0
  %v1900 = vadd.f32 %v496, %v1899
  %1901 = vdwg.mxu0
  %1902 = vmatprep.subr.bf16.mxu0 %v1370
  %1903 = vmatpush1.bf16.msra.mxu0 %v1369
  %1904 = vmatprep.subr.bf16.mxu0 %v1366
  %1905 = vmatpush1.bf16.msra.mxu0 %v1365
  %1906 = vmatprep.subr.bf16.mxu0 %v1362
  %1907 = vmatpush1.bf16.msra.mxu0 %v1361
  %1908 = vmatprep.subr.bf16.mxu0 %v1358
  %1909 = vmatpush1.bf16.msra.mxu0 %v1357
  %1910 = vmatprep.subr.bf16.mxu0 %v1354
  %1911 = vmatpush1.bf16.msra.mxu0 %v1353
  %1912 = vmatprep.subr.bf16.mxu0 %v1350
  %1913 = vmatpush1.bf16.msra.mxu0 %v1349
  %1914 = vmatprep.subr.bf16.mxu0 %v1346
  %1915 = vmatpush1.bf16.msra.mxu0 %v1345
  %1916 = vmatprep.subr.bf16.mxu0 %v1342
  %1917 = vmatpush1.bf16.msra.mxu0 %v1341
  %1918 = vmatprep.subr.bf16.mxu0 %v1402
  %1919 = vmatpush2.bf16.msra.mxu0 %v1401
  %1920 = vmatprep.subr.bf16.mxu0 %v1398
  %1921 = vmatpush2.bf16.msra.mxu0 %v1397
  %1922 = vmatprep.subr.bf16.mxu0 %v1394
  %1923 = vmatpush2.bf16.msra.mxu0 %v1393
  %1924 = vmatprep.subr.bf16.mxu0 %v1390
  %1925 = vmatpush2.bf16.msra.mxu0 %v1389
  %1926 = vmatprep.subr.bf16.mxu0 %v1386
  %1927 = vmatpush2.bf16.msra.mxu0 %v1385
  %1928 = vmatprep.subr.bf16.mxu0 %v1382
  %1929 = vmatpush2.bf16.msra.mxu0 %v1381
  %1930 = vmatprep.subr.bf16.mxu0 %v1378
  %1931 = vmatpush2.bf16.msra.mxu0 %v1377
  %1932 = vmatprep.subr.bf16.mxu0 %v1374
  %1933 = vmatpush2.bf16.msra.mxu0 %v1373
  %1934 = vmatprep.mubr.bf16.mxu0 %v170
  %1935 = vmatmul.mubr.bf16.gmra.mxu0 %v169
  %v1936 = vpop.f32.mrf.mxu0
  %v1937 = vadd.f32 %v1824, %v1936
  %v1938 = vpop.f32.mrf.mxu0
  %v1939 = vadd.f32 %v1826, %v1938
  %v1940 = vpop.f32.mrf.mxu0
  %v1941 = vadd.f32 %v1828, %v1940
  %v1942 = vpop.f32.mrf.mxu0
  %v1943 = vadd.f32 %v1830, %v1942
  %1944 = vmatprep.mubr.bf16.mxu0 %v178
  %1945 = vmatmul.mubr.bf16.gmra.mxu0 %v177
  %v1946 = vpop.f32.mrf.mxu0
  %v1947 = vadd.f32 %v1834, %v1946
  %v1948 = vpop.f32.mrf.mxu0
  %v1949 = vadd.f32 %v1836, %v1948
  %v1950 = vpop.f32.mrf.mxu0
  %v1951 = vadd.f32 %v1838, %v1950
  %v1952 = vpop.f32.mrf.mxu0
  %v1953 = vadd.f32 %v1840, %v1952
  %1954 = vmatprep.mubr.bf16.mxu0 %v186
  %1955 = vmatmul.mubr.bf16.gmra.mxu0 %v185
  %v1956 = vpop.f32.mrf.mxu0
  %v1957 = vadd.f32 %v1844, %v1956
  %v1958 = vpop.f32.mrf.mxu0
  %v1959 = vadd.f32 %v1846, %v1958
  %v1960 = vpop.f32.mrf.mxu0
  %v1961 = vadd.f32 %v1848, %v1960
  %v1962 = vpop.f32.mrf.mxu0
  %v1963 = vadd.f32 %v1850, %v1962
  %1964 = vmatprep.mubr.bf16.mxu0 %v194
  %1965 = vmatmul.mubr.bf16.gmra.mxu0 %v193
  %v1966 = vpop.f32.mrf.mxu0
  %v1967 = vadd.f32 %v1854, %v1966
  %v1968 = vpop.f32.mrf.mxu0
  %v1969 = vadd.f32 %v1856, %v1968
  %v1970 = vpop.f32.mrf.mxu0
  %v1971 = vadd.f32 %v1858, %v1970
  %v1972 = vpop.f32.mrf.mxu0
  %v1973 = vadd.f32 %v1860, %v1972
  %1974 = vmatprep.mubr.bf16.mxu0 %v202
  %1975 = vmatmul.mubr.bf16.gmra.mxu0 %v201
  %v1976 = vpop.f32.mrf.mxu0
  %v1977 = vadd.f32 %v1864, %v1976
  %v1978 = vpop.f32.mrf.mxu0
  %v1979 = vadd.f32 %v1866, %v1978
  %v1980 = vpop.f32.mrf.mxu0
  %v1981 = vadd.f32 %v1868, %v1980
  %v1982 = vpop.f32.mrf.mxu0
  %v1983 = vadd.f32 %v1870, %v1982
  %1984 = vmatprep.mubr.bf16.mxu0 %v210
  %1985 = vmatmul.mubr.bf16.gmra.mxu0 %v209
  %v1986 = vpop.f32.mrf.mxu0
  %v1987 = vadd.f32 %v1874, %v1986
  %v1988 = vpop.f32.mrf.mxu0
  %v1989 = vadd.f32 %v1876, %v1988
  %v1990 = vpop.f32.mrf.mxu0
  %v1991 = vadd.f32 %v1878, %v1990
  %v1992 = vpop.f32.mrf.mxu0
  %v1993 = vadd.f32 %v1880, %v1992
  %1994 = vmatprep.mubr.bf16.mxu0 %v218
  %1995 = vmatmul.mubr.bf16.gmra.mxu0 %v217
  %v1996 = vpop.f32.mrf.mxu0
  %v1997 = vadd.f32 %v1884, %v1996
  %v1998 = vpop.f32.mrf.mxu0
  %v1999 = vadd.f32 %v1886, %v1998
  %v2000 = vpop.f32.mrf.mxu0
  %v2001 = vadd.f32 %v1888, %v2000
  %v2002 = vpop.f32.mrf.mxu0
  %v2003 = vadd.f32 %v1890, %v2002
  %2004 = vmatprep.mubr.bf16.mxu0 %v226
  %2005 = vmatmul.mubr.bf16.gmra.mxu0 %v225
  %v2006 = vpop.f32.mrf.mxu0
  %v2007 = vadd.f32 %v1894, %v2006
  %v2008 = vpop.f32.mrf.mxu0
  %v2009 = vadd.f32 %v1896, %v2008
  %v2010 = vpop.f32.mrf.mxu0
  %v2011 = vadd.f32 %v1898, %v2010
  %v2012 = vpop.f32.mrf.mxu0
  %v2013 = vadd.f32 %v1900, %v2012
  %2014 = vdwg.mxu0
  %2015 = vmatprep.subr.bf16.mxu0 %v1434
  %2016 = vmatpush1.bf16.msra.mxu0 %v1433
  %2017 = vmatprep.subr.bf16.mxu0 %v1430
  %2018 = vmatpush1.bf16.msra.mxu0 %v1429
  %2019 = vmatprep.subr.bf16.mxu0 %v1426
  %2020 = vmatpush1.bf16.msra.mxu0 %v1425
  %2021 = vmatprep.subr.bf16.mxu0 %v1422
  %2022 = vmatpush1.bf16.msra.mxu0 %v1421
  %2023 = vmatprep.subr.bf16.mxu0 %v1418
  %2024 = vmatpush1.bf16.msra.mxu0 %v1417
  %2025 = vmatprep.subr.bf16.mxu0 %v1414
  %2026 = vmatpush1.bf16.msra.mxu0 %v1413
  %2027 = vmatprep.subr.bf16.mxu0 %v1410
  %2028 = vmatpush1.bf16.msra.mxu0 %v1409
  %2029 = vmatprep.subr.bf16.mxu0 %v1406
  %2030 = vmatpush1.bf16.msra.mxu0 %v1405
  %2031 = vmatprep.subr.bf16.mxu0 %v1466
  %2032 = vmatpush2.bf16.msra.mxu0 %v1465
  %2033 = vmatprep.subr.bf16.mxu0 %v1462
  %2034 = vmatpush2.bf16.msra.mxu0 %v1461
  %2035 = vmatprep.subr.bf16.mxu0 %v1458
  %2036 = vmatpush2.bf16.msra.mxu0 %v1457
  %2037 = vmatprep.subr.bf16.mxu0 %v1454
  %2038 = vmatpush2.bf16.msra.mxu0 %v1453
  %2039 = vmatprep.subr.bf16.mxu0 %v1450
  %2040 = vmatpush2.bf16.msra.mxu0 %v1449
  %2041 = vmatprep.subr.bf16.mxu0 %v1446
  %2042 = vmatpush2.bf16.msra.mxu0 %v1445
  %2043 = vmatprep.subr.bf16.mxu0 %v1442
  %2044 = vmatpush2.bf16.msra.mxu0 %v1441
  %2045 = vmatprep.subr.bf16.mxu0 %v1438
  %2046 = vmatpush2.bf16.msra.mxu0 %v1437
  %2047 = vmatprep.mubr.bf16.mxu0 %v172
  %2048 = vmatmul.mubr.bf16.gmra.mxu0 %v171
  %v2049 = vpop.f32.mrf.mxu0
  %v2050 = vadd.f32 %v1937, %v2049
  %v2051 = vpop.f32.mrf.mxu0
  %v2052 = vadd.f32 %v1939, %v2051
  %v2053 = vpop.f32.mrf.mxu0
  %v2054 = vadd.f32 %v1941, %v2053
  %v2055 = vpop.f32.mrf.mxu0
  %v2056 = vadd.f32 %v1943, %v2055
  %2057 = vmatprep.mubr.bf16.mxu0 %v180
  %2058 = vmatmul.mubr.bf16.gmra.mxu0 %v179
  %v2059 = vpop.f32.mrf.mxu0
  %v2060 = vadd.f32 %v1947, %v2059
  %v2061 = vpop.f32.mrf.mxu0
  %v2062 = vadd.f32 %v1949, %v2061
  %v2063 = vpop.f32.mrf.mxu0
  %v2064 = vadd.f32 %v1951, %v2063
  %v2065 = vpop.f32.mrf.mxu0
  %v2066 = vadd.f32 %v1953, %v2065
  %2067 = vmatprep.mubr.bf16.mxu0 %v188
  %2068 = vmatmul.mubr.bf16.gmra.mxu0 %v187
  %v2069 = vpop.f32.mrf.mxu0
  %v2070 = vadd.f32 %v1957, %v2069
  %v2071 = vpop.f32.mrf.mxu0
  %v2072 = vadd.f32 %v1959, %v2071
  %v2073 = vpop.f32.mrf.mxu0
  %v2074 = vadd.f32 %v1961, %v2073
  %v2075 = vpop.f32.mrf.mxu0
  %v2076 = vadd.f32 %v1963, %v2075
  %2077 = vmatprep.mubr.bf16.mxu0 %v196
  %2078 = vmatmul.mubr.bf16.gmra.mxu0 %v195
  %v2079 = vpop.f32.mrf.mxu0
  %v2080 = vadd.f32 %v1967, %v2079
  %v2081 = vpop.f32.mrf.mxu0
  %v2082 = vadd.f32 %v1969, %v2081
  %v2083 = vpop.f32.mrf.mxu0
  %v2084 = vadd.f32 %v1971, %v2083
  %v2085 = vpop.f32.mrf.mxu0
  %v2086 = vadd.f32 %v1973, %v2085
  %2087 = vmatprep.mubr.bf16.mxu0 %v204
  %2088 = vmatmul.mubr.bf16.gmra.mxu0 %v203
  %v2089 = vpop.f32.mrf.mxu0
  %v2090 = vadd.f32 %v1977, %v2089
  %v2091 = vpop.f32.mrf.mxu0
  %v2092 = vadd.f32 %v1979, %v2091
  %v2093 = vpop.f32.mrf.mxu0
  %v2094 = vadd.f32 %v1981, %v2093
  %v2095 = vpop.f32.mrf.mxu0
  %v2096 = vadd.f32 %v1983, %v2095
  %2097 = vmatprep.mubr.bf16.mxu0 %v212
  %2098 = vmatmul.mubr.bf16.gmra.mxu0 %v211
  %v2099 = vpop.f32.mrf.mxu0
  %v2100 = vadd.f32 %v1987, %v2099
  %v2101 = vpop.f32.mrf.mxu0
  %v2102 = vadd.f32 %v1989, %v2101
  %v2103 = vpop.f32.mrf.mxu0
  %v2104 = vadd.f32 %v1991, %v2103
  %v2105 = vpop.f32.mrf.mxu0
  %v2106 = vadd.f32 %v1993, %v2105
  %2107 = vmatprep.mubr.bf16.mxu0 %v220
  %2108 = vmatmul.mubr.bf16.gmra.mxu0 %v219
  %v2109 = vpop.f32.mrf.mxu0
  %v2110 = vadd.f32 %v1997, %v2109
  %v2111 = vpop.f32.mrf.mxu0
  %v2112 = vadd.f32 %v1999, %v2111
  %v2113 = vpop.f32.mrf.mxu0
  %v2114 = vadd.f32 %v2001, %v2113
  %v2115 = vpop.f32.mrf.mxu0
  %v2116 = vadd.f32 %v2003, %v2115
  %2117 = vmatprep.mubr.bf16.mxu0 %v228
  %2118 = vmatmul.mubr.bf16.gmra.mxu0 %v227
  %v2119 = vpop.f32.mrf.mxu0
  %v2120 = vadd.f32 %v2007, %v2119
  %v2121 = vpop.f32.mrf.mxu0
  %v2122 = vadd.f32 %v2009, %v2121
  %v2123 = vpop.f32.mrf.mxu0
  %v2124 = vadd.f32 %v2011, %v2123
  %v2125 = vpop.f32.mrf.mxu0
  %v2126 = vadd.f32 %v2013, %v2125
  %2127 = vdwg.mxu0
  %2128 = vmatprep.subr.bf16.mxu0 %v1498
  %2129 = vmatpush1.bf16.msra.mxu0 %v1497
  %2130 = vmatprep.subr.bf16.mxu0 %v1494
  %2131 = vmatpush1.bf16.msra.mxu0 %v1493
  %2132 = vmatprep.subr.bf16.mxu0 %v1490
  %2133 = vmatpush1.bf16.msra.mxu0 %v1489
  %2134 = vmatprep.subr.bf16.mxu0 %v1486
  %2135 = vmatpush1.bf16.msra.mxu0 %v1485
  %2136 = vmatprep.subr.bf16.mxu0 %v1482
  %2137 = vmatpush1.bf16.msra.mxu0 %v1481
  %2138 = vmatprep.subr.bf16.mxu0 %v1478
  %2139 = vmatpush1.bf16.msra.mxu0 %v1477
  %2140 = vmatprep.subr.bf16.mxu0 %v1474
  %2141 = vmatpush1.bf16.msra.mxu0 %v1473
  %2142 = vmatprep.subr.bf16.mxu0 %v1470
  %2143 = vmatpush1.bf16.msra.mxu0 %v1469
  %2144 = vmatprep.subr.bf16.mxu0 %v1530
  %2145 = vmatpush2.bf16.msra.mxu0 %v1529
  %2146 = vmatprep.subr.bf16.mxu0 %v1526
  %2147 = vmatpush2.bf16.msra.mxu0 %v1525
  %2148 = vmatprep.subr.bf16.mxu0 %v1522
  %2149 = vmatpush2.bf16.msra.mxu0 %v1521
  %2150 = vmatprep.subr.bf16.mxu0 %v1518
  %2151 = vmatpush2.bf16.msra.mxu0 %v1517
  %2152 = vmatprep.subr.bf16.mxu0 %v1514
  %2153 = vmatpush2.bf16.msra.mxu0 %v1513
  %2154 = vmatprep.subr.bf16.mxu0 %v1510
  %2155 = vmatpush2.bf16.msra.mxu0 %v1509
  %2156 = vmatprep.subr.bf16.mxu0 %v1506
  %2157 = vmatpush2.bf16.msra.mxu0 %v1505
  %2158 = vmatprep.subr.bf16.mxu0 %v1502
  %2159 = vmatpush2.bf16.msra.mxu0 %v1501
  %2160 = vmatprep.mubr.bf16.mxu0 %v174
  %2161 = vmatmul.mubr.bf16.gmra.mxu0 %v173
  %v2162 = vpop.f32.mrf.mxu0
  %v2163 = vadd.f32 %v2050, %v2162
  %v2164 = vpop.f32.mrf.mxu0
  %v2165 = vadd.f32 %v2052, %v2164
  %v2166 = vpop.f32.mrf.mxu0
  %v2167 = vadd.f32 %v2054, %v2166
  %v2168 = vpop.f32.mrf.mxu0
  %v2169 = vadd.f32 %v2056, %v2168
  %2170 = vmatprep.mubr.bf16.mxu0 %v182
  %2171 = vmatmul.mubr.bf16.gmra.mxu0 %v181
  %v2172 = vpop.f32.mrf.mxu0
  %v2173 = vadd.f32 %v2060, %v2172
  %v2174 = vpop.f32.mrf.mxu0
  %v2175 = vadd.f32 %v2062, %v2174
  %v2176 = vpop.f32.mrf.mxu0
  %v2177 = vadd.f32 %v2064, %v2176
  %v2178 = vpop.f32.mrf.mxu0
  %v2179 = vadd.f32 %v2066, %v2178
  %2180 = vmatprep.mubr.bf16.mxu0 %v190
  %2181 = vmatmul.mubr.bf16.gmra.mxu0 %v189
  %v2182 = vpop.f32.mrf.mxu0
  %v2183 = vadd.f32 %v2070, %v2182
  %v2184 = vpop.f32.mrf.mxu0
  %v2185 = vadd.f32 %v2072, %v2184
  %v2186 = vpop.f32.mrf.mxu0
  %v2187 = vadd.f32 %v2074, %v2186
  %v2188 = vpop.f32.mrf.mxu0
  %v2189 = vadd.f32 %v2076, %v2188
  %2190 = vmatprep.mubr.bf16.mxu0 %v198
  %2191 = vmatmul.mubr.bf16.gmra.mxu0 %v197
  %v2192 = vpop.f32.mrf.mxu0
  %v2193 = vadd.f32 %v2080, %v2192
  %v2194 = vpop.f32.mrf.mxu0
  %v2195 = vadd.f32 %v2082, %v2194
  %v2196 = vpop.f32.mrf.mxu0
  %v2197 = vadd.f32 %v2084, %v2196
  %v2198 = vpop.f32.mrf.mxu0
  %v2199 = vadd.f32 %v2086, %v2198
  %2200 = vmatprep.mubr.bf16.mxu0 %v206
  %2201 = vmatmul.mubr.bf16.gmra.mxu0 %v205
  %v2202 = vpop.f32.mrf.mxu0
  %v2203 = vadd.f32 %v2090, %v2202
  %v2204 = vpop.f32.mrf.mxu0
  %v2205 = vadd.f32 %v2092, %v2204
  %v2206 = vpop.f32.mrf.mxu0
  %v2207 = vadd.f32 %v2094, %v2206
  %v2208 = vpop.f32.mrf.mxu0
  %v2209 = vadd.f32 %v2096, %v2208
  %2210 = vmatprep.mubr.bf16.mxu0 %v214
  %2211 = vmatmul.mubr.bf16.gmra.mxu0 %v213
  %v2212 = vpop.f32.mrf.mxu0
  %v2213 = vadd.f32 %v2100, %v2212
  %v2214 = vpop.f32.mrf.mxu0
  %v2215 = vadd.f32 %v2102, %v2214
  %v2216 = vpop.f32.mrf.mxu0
  %v2217 = vadd.f32 %v2104, %v2216
  %v2218 = vpop.f32.mrf.mxu0
  %v2219 = vadd.f32 %v2106, %v2218
  %2220 = vmatprep.mubr.bf16.mxu0 %v222
  %2221 = vmatmul.mubr.bf16.gmra.mxu0 %v221
  %v2222 = vpop.f32.mrf.mxu0
  %v2223 = vadd.f32 %v2110, %v2222
  %v2224 = vpop.f32.mrf.mxu0
  %v2225 = vadd.f32 %v2112, %v2224
  %v2226 = vpop.f32.mrf.mxu0
  %v2227 = vadd.f32 %v2114, %v2226
  %v2228 = vpop.f32.mrf.mxu0
  %v2229 = vadd.f32 %v2116, %v2228
  %2230 = vmatprep.mubr.bf16.mxu0 %v230
  %2231 = vmatmul.mubr.bf16.gmra.mxu0 %v229
  %v2232 = vpop.f32.mrf.mxu0
  %v2233 = vadd.f32 %v2120, %v2232
  %v2234 = vpop.f32.mrf.mxu0
  %v2235 = vadd.f32 %v2122, %v2234
  %v2236 = vpop.f32.mrf.mxu0
  %v2237 = vadd.f32 %v2124, %v2236
  %v2238 = vpop.f32.mrf.mxu0
  %v2239 = vadd.f32 %v2126, %v2238
  %2240 = vdwg.mxu0
  %2241 = vmatprep.subr.bf16.mxu0 %v1308
  %2242 = vmatpush1.bf16.msra.mxu0 %v1307
  %2243 = vmatprep.subr.bf16.mxu0 %v1304
  %2244 = vmatpush1.bf16.msra.mxu0 %v1303
  %2245 = vmatprep.subr.bf16.mxu0 %v1300
  %2246 = vmatpush1.bf16.msra.mxu0 %v1299
  %2247 = vmatprep.subr.bf16.mxu0 %v1296
  %2248 = vmatpush1.bf16.msra.mxu0 %v1295
  %2249 = vmatprep.subr.bf16.mxu0 %v1292
  %2250 = vmatpush1.bf16.msra.mxu0 %v1291
  %2251 = vmatprep.subr.bf16.mxu0 %v1288
  %2252 = vmatpush1.bf16.msra.mxu0 %v1287
  %2253 = vmatprep.subr.bf16.mxu0 %v1284
  %2254 = vmatpush1.bf16.msra.mxu0 %v1283
  %2255 = vmatprep.subr.bf16.mxu0 %v1280
  %2256 = vmatpush1.bf16.msra.mxu0 %v1279
  %2257 = vmatprep.subr.bf16.mxu0 %v1340
  %2258 = vmatpush2.bf16.msra.mxu0 %v1339
  %2259 = vmatprep.subr.bf16.mxu0 %v1336
  %2260 = vmatpush2.bf16.msra.mxu0 %v1335
  %2261 = vmatprep.subr.bf16.mxu0 %v1332
  %2262 = vmatpush2.bf16.msra.mxu0 %v1331
  %2263 = vmatprep.subr.bf16.mxu0 %v1328
  %2264 = vmatpush2.bf16.msra.mxu0 %v1327
  %2265 = vmatprep.subr.bf16.mxu0 %v1324
  %2266 = vmatpush2.bf16.msra.mxu0 %v1323
  %2267 = vmatprep.subr.bf16.mxu0 %v1320
  %2268 = vmatpush2.bf16.msra.mxu0 %v1319
  %2269 = vmatprep.subr.bf16.mxu0 %v1316
  %2270 = vmatpush2.bf16.msra.mxu0 %v1315
  %2271 = vmatprep.subr.bf16.mxu0 %v1312
  %2272 = vmatpush2.bf16.msra.mxu0 %v1311
  %2273 = vmatprep.mubr.bf16.mxu0 %v168
  %2274 = vmatmul.mubr.bf16.gmra.mxu0 %v167
  %v2275 = vpop.f32.mrf.mxu0
  %v2276 = vadd.f32 %v500, %v2275
  %v2277 = vpop.f32.mrf.mxu0
  %v2278 = vadd.f32 %v504, %v2277
  %v2279 = vpop.f32.mrf.mxu0
  %v2280 = vadd.f32 %v500, %v2279
  %v2281 = vpop.f32.mrf.mxu0
  %v2282 = vadd.f32 %v504, %v2281
  %2283 = vmatprep.mubr.bf16.mxu0 %v176
  %2284 = vmatmul.mubr.bf16.gmra.mxu0 %v175
  %v2285 = vpop.f32.mrf.mxu0
  %v2286 = vadd.f32 %v500, %v2285
  %v2287 = vpop.f32.mrf.mxu0
  %v2288 = vadd.f32 %v504, %v2287
  %v2289 = vpop.f32.mrf.mxu0
  %v2290 = vadd.f32 %v500, %v2289
  %v2291 = vpop.f32.mrf.mxu0
  %v2292 = vadd.f32 %v504, %v2291
  %2293 = vmatprep.mubr.bf16.mxu0 %v184
  %2294 = vmatmul.mubr.bf16.gmra.mxu0 %v183
  %v2295 = vpop.f32.mrf.mxu0
  %v2296 = vadd.f32 %v500, %v2295
  %v2297 = vpop.f32.mrf.mxu0
  %v2298 = vadd.f32 %v504, %v2297
  %v2299 = vpop.f32.mrf.mxu0
  %v2300 = vadd.f32 %v500, %v2299
  %v2301 = vpop.f32.mrf.mxu0
  %v2302 = vadd.f32 %v504, %v2301
  %2303 = vmatprep.mubr.bf16.mxu0 %v192
  %2304 = vmatmul.mubr.bf16.gmra.mxu0 %v191
  %v2305 = vpop.f32.mrf.mxu0
  %v2306 = vadd.f32 %v500, %v2305
  %v2307 = vpop.f32.mrf.mxu0
  %v2308 = vadd.f32 %v504, %v2307
  %v2309 = vpop.f32.mrf.mxu0
  %v2310 = vadd.f32 %v500, %v2309
  %v2311 = vpop.f32.mrf.mxu0
  %v2312 = vadd.f32 %v504, %v2311
  %2313 = vmatprep.mubr.bf16.mxu0 %v200
  %2314 = vmatmul.mubr.bf16.gmra.mxu0 %v199
  %v2315 = vpop.f32.mrf.mxu0
  %v2316 = vadd.f32 %v500, %v2315
  %v2317 = vpop.f32.mrf.mxu0
  %v2318 = vadd.f32 %v504, %v2317
  %v2319 = vpop.f32.mrf.mxu0
  %v2320 = vadd.f32 %v500, %v2319
  %v2321 = vpop.f32.mrf.mxu0
  %v2322 = vadd.f32 %v504, %v2321
  %2323 = vmatprep.mubr.bf16.mxu0 %v208
  %2324 = vmatmul.mubr.bf16.gmra.mxu0 %v207
  %v2325 = vpop.f32.mrf.mxu0
  %v2326 = vadd.f32 %v500, %v2325
  %v2327 = vpop.f32.mrf.mxu0
  %v2328 = vadd.f32 %v504, %v2327
  %v2329 = vpop.f32.mrf.mxu0
  %v2330 = vadd.f32 %v500, %v2329
  %v2331 = vpop.f32.mrf.mxu0
  %v2332 = vadd.f32 %v504, %v2331
  %2333 = vmatprep.mubr.bf16.mxu0 %v216
  %2334 = vmatmul.mubr.bf16.gmra.mxu0 %v215
  %v2335 = vpop.f32.mrf.mxu0
  %v2336 = vadd.f32 %v500, %v2335
  %v2337 = vpop.f32.mrf.mxu0
  %v2338 = vadd.f32 %v504, %v2337
  %v2339 = vpop.f32.mrf.mxu0
  %v2340 = vadd.f32 %v500, %v2339
  %v2341 = vpop.f32.mrf.mxu0
  %v2342 = vadd.f32 %v504, %v2341
  %2343 = vmatprep.mubr.bf16.mxu0 %v224
  %2344 = vmatmul.mubr.bf16.gmra.mxu0 %v223
  %v2345 = vpop.f32.mrf.mxu0
  %v2346 = vadd.f32 %v500, %v2345
  %v2347 = vpop.f32.mrf.mxu0
  %v2348 = vadd.f32 %v504, %v2347
  %v2349 = vpop.f32.mrf.mxu0
  %v2350 = vadd.f32 %v500, %v2349
  %v2351 = vpop.f32.mrf.mxu0
  %v2352 = vadd.f32 %v504, %v2351
  %2353 = vdwg.mxu0
  %2354 = vmatprep.subr.bf16.mxu0 %v1372
  %2355 = vmatpush1.bf16.msra.mxu0 %v1371
  %2356 = vmatprep.subr.bf16.mxu0 %v1368
  %2357 = vmatpush1.bf16.msra.mxu0 %v1367
  %2358 = vmatprep.subr.bf16.mxu0 %v1364
  %2359 = vmatpush1.bf16.msra.mxu0 %v1363
  %2360 = vmatprep.subr.bf16.mxu0 %v1360
  %2361 = vmatpush1.bf16.msra.mxu0 %v1359
  %2362 = vmatprep.subr.bf16.mxu0 %v1356
  %2363 = vmatpush1.bf16.msra.mxu0 %v1355
  %2364 = vmatprep.subr.bf16.mxu0 %v1352
  %2365 = vmatpush1.bf16.msra.mxu0 %v1351
  %2366 = vmatprep.subr.bf16.mxu0 %v1348
  %2367 = vmatpush1.bf16.msra.mxu0 %v1347
  %2368 = vmatprep.subr.bf16.mxu0 %v1344
  %2369 = vmatpush1.bf16.msra.mxu0 %v1343
  %2370 = vmatprep.subr.bf16.mxu0 %v1404
  %2371 = vmatpush2.bf16.msra.mxu0 %v1403
  %2372 = vmatprep.subr.bf16.mxu0 %v1400
  %2373 = vmatpush2.bf16.msra.mxu0 %v1399
  %2374 = vmatprep.subr.bf16.mxu0 %v1396
  %2375 = vmatpush2.bf16.msra.mxu0 %v1395
  %2376 = vmatprep.subr.bf16.mxu0 %v1392
  %2377 = vmatpush2.bf16.msra.mxu0 %v1391
  %2378 = vmatprep.subr.bf16.mxu0 %v1388
  %2379 = vmatpush2.bf16.msra.mxu0 %v1387
  %2380 = vmatprep.subr.bf16.mxu0 %v1384
  %2381 = vmatpush2.bf16.msra.mxu0 %v1383
  %2382 = vmatprep.subr.bf16.mxu0 %v1380
  %2383 = vmatpush2.bf16.msra.mxu0 %v1379
  %2384 = vmatprep.subr.bf16.mxu0 %v1376
  %2385 = vmatpush2.bf16.msra.mxu0 %v1375
  %2386 = vmatprep.mubr.bf16.mxu0 %v170
  %2387 = vmatmul.mubr.bf16.gmra.mxu0 %v169
  %v2388 = vpop.f32.mrf.mxu0
  %v2389 = vadd.f32 %v2276, %v2388
  %v2390 = vpop.f32.mrf.mxu0
  %v2391 = vadd.f32 %v2278, %v2390
  %v2392 = vpop.f32.mrf.mxu0
  %v2393 = vadd.f32 %v2280, %v2392
  %v2394 = vpop.f32.mrf.mxu0
  %v2395 = vadd.f32 %v2282, %v2394
  %2396 = vmatprep.mubr.bf16.mxu0 %v178
  %2397 = vmatmul.mubr.bf16.gmra.mxu0 %v177
  %v2398 = vpop.f32.mrf.mxu0
  %v2399 = vadd.f32 %v2286, %v2398
  %v2400 = vpop.f32.mrf.mxu0
  %v2401 = vadd.f32 %v2288, %v2400
  %v2402 = vpop.f32.mrf.mxu0
  %v2403 = vadd.f32 %v2290, %v2402
  %v2404 = vpop.f32.mrf.mxu0
  %v2405 = vadd.f32 %v2292, %v2404
  %2406 = vmatprep.mubr.bf16.mxu0 %v186
  %2407 = vmatmul.mubr.bf16.gmra.mxu0 %v185
  %v2408 = vpop.f32.mrf.mxu0
  %v2409 = vadd.f32 %v2296, %v2408
  %v2410 = vpop.f32.mrf.mxu0
  %v2411 = vadd.f32 %v2298, %v2410
  %v2412 = vpop.f32.mrf.mxu0
  %v2413 = vadd.f32 %v2300, %v2412
  %v2414 = vpop.f32.mrf.mxu0
  %v2415 = vadd.f32 %v2302, %v2414
  %2416 = vmatprep.mubr.bf16.mxu0 %v194
  %2417 = vmatmul.mubr.bf16.gmra.mxu0 %v193
  %v2418 = vpop.f32.mrf.mxu0
  %v2419 = vadd.f32 %v2306, %v2418
  %v2420 = vpop.f32.mrf.mxu0
  %v2421 = vadd.f32 %v2308, %v2420
  %v2422 = vpop.f32.mrf.mxu0
  %v2423 = vadd.f32 %v2310, %v2422
  %v2424 = vpop.f32.mrf.mxu0
  %v2425 = vadd.f32 %v2312, %v2424
  %2426 = vmatprep.mubr.bf16.mxu0 %v202
  %2427 = vmatmul.mubr.bf16.gmra.mxu0 %v201
  %v2428 = vpop.f32.mrf.mxu0
  %v2429 = vadd.f32 %v2316, %v2428
  %v2430 = vpop.f32.mrf.mxu0
  %v2431 = vadd.f32 %v2318, %v2430
  %v2432 = vpop.f32.mrf.mxu0
  %v2433 = vadd.f32 %v2320, %v2432
  %v2434 = vpop.f32.mrf.mxu0
  %v2435 = vadd.f32 %v2322, %v2434
  %2436 = vmatprep.mubr.bf16.mxu0 %v210
  %2437 = vmatmul.mubr.bf16.gmra.mxu0 %v209
  %v2438 = vpop.f32.mrf.mxu0
  %v2439 = vadd.f32 %v2326, %v2438
  %v2440 = vpop.f32.mrf.mxu0
  %v2441 = vadd.f32 %v2328, %v2440
  %v2442 = vpop.f32.mrf.mxu0
  %v2443 = vadd.f32 %v2330, %v2442
  %v2444 = vpop.f32.mrf.mxu0
  %v2445 = vadd.f32 %v2332, %v2444
  %2446 = vmatprep.mubr.bf16.mxu0 %v218
  %2447 = vmatmul.mubr.bf16.gmra.mxu0 %v217
  %v2448 = vpop.f32.mrf.mxu0
  %v2449 = vadd.f32 %v2336, %v2448
  %v2450 = vpop.f32.mrf.mxu0
  %v2451 = vadd.f32 %v2338, %v2450
  %v2452 = vpop.f32.mrf.mxu0
  %v2453 = vadd.f32 %v2340, %v2452
  %v2454 = vpop.f32.mrf.mxu0
  %v2455 = vadd.f32 %v2342, %v2454
  %2456 = vmatprep.mubr.bf16.mxu0 %v226
  %2457 = vmatmul.mubr.bf16.gmra.mxu0 %v225
  %v2458 = vpop.f32.mrf.mxu0
  %v2459 = vadd.f32 %v2346, %v2458
  %v2460 = vpop.f32.mrf.mxu0
  %v2461 = vadd.f32 %v2348, %v2460
  %v2462 = vpop.f32.mrf.mxu0
  %v2463 = vadd.f32 %v2350, %v2462
  %v2464 = vpop.f32.mrf.mxu0
  %v2465 = vadd.f32 %v2352, %v2464
  %2466 = vdwg.mxu0
  %2467 = vmatprep.subr.bf16.mxu0 %v1436
  %2468 = vmatpush1.bf16.msra.mxu0 %v1435
  %2469 = vmatprep.subr.bf16.mxu0 %v1432
  %2470 = vmatpush1.bf16.msra.mxu0 %v1431
  %2471 = vmatprep.subr.bf16.mxu0 %v1428
  %2472 = vmatpush1.bf16.msra.mxu0 %v1427
  %2473 = vmatprep.subr.bf16.mxu0 %v1424
  %2474 = vmatpush1.bf16.msra.mxu0 %v1423
  %2475 = vmatprep.subr.bf16.mxu0 %v1420
  %2476 = vmatpush1.bf16.msra.mxu0 %v1419
  %2477 = vmatprep.subr.bf16.mxu0 %v1416
  %2478 = vmatpush1.bf16.msra.mxu0 %v1415
  %2479 = vmatprep.subr.bf16.mxu0 %v1412
  %2480 = vmatpush1.bf16.msra.mxu0 %v1411
  %2481 = vmatprep.subr.bf16.mxu0 %v1408
  %2482 = vmatpush1.bf16.msra.mxu0 %v1407
  %2483 = vmatprep.subr.bf16.mxu0 %v1468
  %2484 = vmatpush2.bf16.msra.mxu0 %v1467
  %2485 = vmatprep.subr.bf16.mxu0 %v1464
  %2486 = vmatpush2.bf16.msra.mxu0 %v1463
  %2487 = vmatprep.subr.bf16.mxu0 %v1460
  %2488 = vmatpush2.bf16.msra.mxu0 %v1459
  %2489 = vmatprep.subr.bf16.mxu0 %v1456
  %2490 = vmatpush2.bf16.msra.mxu0 %v1455
  %2491 = vmatprep.subr.bf16.mxu0 %v1452
  %2492 = vmatpush2.bf16.msra.mxu0 %v1451
  %2493 = vmatprep.subr.bf16.mxu0 %v1448
  %2494 = vmatpush2.bf16.msra.mxu0 %v1447
  %2495 = vmatprep.subr.bf16.mxu0 %v1444
  %2496 = vmatpush2.bf16.msra.mxu0 %v1443
  %2497 = vmatprep.subr.bf16.mxu0 %v1440
  %2498 = vmatpush2.bf16.msra.mxu0 %v1439
  %2499 = vmatprep.mubr.bf16.mxu0 %v172
  %2500 = vmatmul.mubr.bf16.gmra.mxu0 %v171
  %v2501 = vpop.f32.mrf.mxu0
  %v2502 = vadd.f32 %v2389, %v2501
  %v2503 = vpop.f32.mrf.mxu0
  %v2504 = vadd.f32 %v2391, %v2503
  %v2505 = vpop.f32.mrf.mxu0
  %v2506 = vadd.f32 %v2393, %v2505
  %v2507 = vpop.f32.mrf.mxu0
  %v2508 = vadd.f32 %v2395, %v2507
  %2509 = vmatprep.mubr.bf16.mxu0 %v180
  %2510 = vmatmul.mubr.bf16.gmra.mxu0 %v179
  %v2511 = vpop.f32.mrf.mxu0
  %v2512 = vadd.f32 %v2399, %v2511
  %v2513 = vpop.f32.mrf.mxu0
  %v2514 = vadd.f32 %v2401, %v2513
  %v2515 = vpop.f32.mrf.mxu0
  %v2516 = vadd.f32 %v2403, %v2515
  %v2517 = vpop.f32.mrf.mxu0
  %v2518 = vadd.f32 %v2405, %v2517
  %2519 = vmatprep.mubr.bf16.mxu0 %v188
  %2520 = vmatmul.mubr.bf16.gmra.mxu0 %v187
  %v2521 = vpop.f32.mrf.mxu0
  %v2522 = vadd.f32 %v2409, %v2521
  %v2523 = vpop.f32.mrf.mxu0
  %v2524 = vadd.f32 %v2411, %v2523
  %v2525 = vpop.f32.mrf.mxu0
  %v2526 = vadd.f32 %v2413, %v2525
  %v2527 = vpop.f32.mrf.mxu0
  %v2528 = vadd.f32 %v2415, %v2527
  %2529 = vmatprep.mubr.bf16.mxu0 %v196
  %2530 = vmatmul.mubr.bf16.gmra.mxu0 %v195
  %v2531 = vpop.f32.mrf.mxu0
  %v2532 = vadd.f32 %v2419, %v2531
  %v2533 = vpop.f32.mrf.mxu0
  %v2534 = vadd.f32 %v2421, %v2533
  %v2535 = vpop.f32.mrf.mxu0
  %v2536 = vadd.f32 %v2423, %v2535
  %v2537 = vpop.f32.mrf.mxu0
  %v2538 = vadd.f32 %v2425, %v2537
  %2539 = vmatprep.mubr.bf16.mxu0 %v204
  %2540 = vmatmul.mubr.bf16.gmra.mxu0 %v203
  %v2541 = vpop.f32.mrf.mxu0
  %v2542 = vadd.f32 %v2429, %v2541
  %v2543 = vpop.f32.mrf.mxu0
  %v2544 = vadd.f32 %v2431, %v2543
  %v2545 = vpop.f32.mrf.mxu0
  %v2546 = vadd.f32 %v2433, %v2545
  %v2547 = vpop.f32.mrf.mxu0
  %v2548 = vadd.f32 %v2435, %v2547
  %2549 = vmatprep.mubr.bf16.mxu0 %v212
  %2550 = vmatmul.mubr.bf16.gmra.mxu0 %v211
  %v2551 = vpop.f32.mrf.mxu0
  %v2552 = vadd.f32 %v2439, %v2551
  %v2553 = vpop.f32.mrf.mxu0
  %v2554 = vadd.f32 %v2441, %v2553
  %v2555 = vpop.f32.mrf.mxu0
  %v2556 = vadd.f32 %v2443, %v2555
  %v2557 = vpop.f32.mrf.mxu0
  %v2558 = vadd.f32 %v2445, %v2557
  %2559 = vmatprep.mubr.bf16.mxu0 %v220
  %2560 = vmatmul.mubr.bf16.gmra.mxu0 %v219
  %v2561 = vpop.f32.mrf.mxu0
  %v2562 = vadd.f32 %v2449, %v2561
  %v2563 = vpop.f32.mrf.mxu0
  %v2564 = vadd.f32 %v2451, %v2563
  %v2565 = vpop.f32.mrf.mxu0
  %v2566 = vadd.f32 %v2453, %v2565
  %v2567 = vpop.f32.mrf.mxu0
  %v2568 = vadd.f32 %v2455, %v2567
  %2569 = vmatprep.mubr.bf16.mxu0 %v228
  %2570 = vmatmul.mubr.bf16.gmra.mxu0 %v227
  %v2571 = vpop.f32.mrf.mxu0
  %v2572 = vadd.f32 %v2459, %v2571
  %v2573 = vpop.f32.mrf.mxu0
  %v2574 = vadd.f32 %v2461, %v2573
  %v2575 = vpop.f32.mrf.mxu0
  %v2576 = vadd.f32 %v2463, %v2575
  %v2577 = vpop.f32.mrf.mxu0
  %v2578 = vadd.f32 %v2465, %v2577
  %2579 = vdwg.mxu0
  %2580 = vmatprep.subr.bf16.mxu0 %v1500
  %2581 = vmatpush1.bf16.msra.mxu0 %v1499
  %2582 = vmatprep.subr.bf16.mxu0 %v1496
  %2583 = vmatpush1.bf16.msra.mxu0 %v1495
  %2584 = vmatprep.subr.bf16.mxu0 %v1492
  %2585 = vmatpush1.bf16.msra.mxu0 %v1491
  %2586 = vmatprep.subr.bf16.mxu0 %v1488
  %2587 = vmatpush1.bf16.msra.mxu0 %v1487
  %2588 = vmatprep.subr.bf16.mxu0 %v1484
  %2589 = vmatpush1.bf16.msra.mxu0 %v1483
  %2590 = vmatprep.subr.bf16.mxu0 %v1480
  %2591 = vmatpush1.bf16.msra.mxu0 %v1479
  %2592 = vmatprep.subr.bf16.mxu0 %v1476
  %2593 = vmatpush1.bf16.msra.mxu0 %v1475
  %2594 = vmatprep.subr.bf16.mxu0 %v1472
  %2595 = vmatpush1.bf16.msra.mxu0 %v1471
  %2596 = vmatprep.subr.bf16.mxu0 %v1532
  %2597 = vmatpush2.bf16.msra.mxu0 %v1531
  %2598 = vmatprep.subr.bf16.mxu0 %v1528
  %2599 = vmatpush2.bf16.msra.mxu0 %v1527
  %2600 = vmatprep.subr.bf16.mxu0 %v1524
  %2601 = vmatpush2.bf16.msra.mxu0 %v1523
  %2602 = vmatprep.subr.bf16.mxu0 %v1520
  %2603 = vmatpush2.bf16.msra.mxu0 %v1519
  %2604 = vmatprep.subr.bf16.mxu0 %v1516
  %2605 = vmatpush2.bf16.msra.mxu0 %v1515
  %2606 = vmatprep.subr.bf16.mxu0 %v1512
  %2607 = vmatpush2.bf16.msra.mxu0 %v1511
  %2608 = vmatprep.subr.bf16.mxu0 %v1508
  %2609 = vmatpush2.bf16.msra.mxu0 %v1507
  %2610 = vmatprep.subr.bf16.mxu0 %v1504
  %2611 = vmatpush2.bf16.msra.mxu0 %v1503
  %2612 = vmatprep.mubr.bf16.mxu0 %v174
  %2613 = vmatmul.mubr.bf16.gmra.mxu0 %v173
  %v2614 = vpop.f32.mrf.mxu0
  %v2615 = vadd.f32 %v2502, %v2614
  %v2616 = vpop.f32.mrf.mxu0
  %v2617 = vadd.f32 %v2504, %v2616
  %v2618 = vpop.f32.mrf.mxu0
  %v2619 = vadd.f32 %v2506, %v2618
  %v2620 = vpop.f32.mrf.mxu0
  %v2621 = vadd.f32 %v2508, %v2620
  %2622 = vmatprep.mubr.bf16.mxu0 %v182
  %2623 = vmatmul.mubr.bf16.gmra.mxu0 %v181
  %v2624 = vpop.f32.mrf.mxu0
  %v2625 = vadd.f32 %v2512, %v2624
  %v2626 = vpop.f32.mrf.mxu0
  %v2627 = vadd.f32 %v2514, %v2626
  %v2628 = vpop.f32.mrf.mxu0
  %v2629 = vadd.f32 %v2516, %v2628
  %v2630 = vpop.f32.mrf.mxu0
  %v2631 = vadd.f32 %v2518, %v2630
  %2632 = vmatprep.mubr.bf16.mxu0 %v190
  %2633 = vmatmul.mubr.bf16.gmra.mxu0 %v189
  %v2634 = vpop.f32.mrf.mxu0
  %v2635 = vadd.f32 %v2522, %v2634
  %v2636 = vpop.f32.mrf.mxu0
  %v2637 = vadd.f32 %v2524, %v2636
  %v2638 = vpop.f32.mrf.mxu0
  %v2639 = vadd.f32 %v2526, %v2638
  %v2640 = vpop.f32.mrf.mxu0
  %v2641 = vadd.f32 %v2528, %v2640
  %2642 = vmatprep.mubr.bf16.mxu0 %v198
  %2643 = vmatmul.mubr.bf16.gmra.mxu0 %v197
  %v2644 = vpop.f32.mrf.mxu0
  %v2645 = vadd.f32 %v2532, %v2644
  %v2646 = vpop.f32.mrf.mxu0
  %v2647 = vadd.f32 %v2534, %v2646
  %v2648 = vpop.f32.mrf.mxu0
  %v2649 = vadd.f32 %v2536, %v2648
  %v2650 = vpop.f32.mrf.mxu0
  %v2651 = vadd.f32 %v2538, %v2650
  %2652 = vmatprep.mubr.bf16.mxu0 %v206
  %2653 = vmatmul.mubr.bf16.gmra.mxu0 %v205
  %v2654 = vpop.f32.mrf.mxu0
  %v2655 = vadd.f32 %v2542, %v2654
  %v2656 = vpop.f32.mrf.mxu0
  %v2657 = vadd.f32 %v2544, %v2656
  %v2658 = vpop.f32.mrf.mxu0
  %v2659 = vadd.f32 %v2546, %v2658
  %v2660 = vpop.f32.mrf.mxu0
  %v2661 = vadd.f32 %v2548, %v2660
  %2662 = vmatprep.mubr.bf16.mxu0 %v214
  %2663 = vmatmul.mubr.bf16.gmra.mxu0 %v213
  %v2664 = vpop.f32.mrf.mxu0
  %v2665 = vadd.f32 %v2552, %v2664
  %v2666 = vpop.f32.mrf.mxu0
  %v2667 = vadd.f32 %v2554, %v2666
  %v2668 = vpop.f32.mrf.mxu0
  %v2669 = vadd.f32 %v2556, %v2668
  %v2670 = vpop.f32.mrf.mxu0
  %v2671 = vadd.f32 %v2558, %v2670
  %2672 = vmatprep.mubr.bf16.mxu0 %v222
  %2673 = vmatmul.mubr.bf16.gmra.mxu0 %v221
  %v2674 = vpop.f32.mrf.mxu0
  %v2675 = vadd.f32 %v2562, %v2674
  %v2676 = vpop.f32.mrf.mxu0
  %v2677 = vadd.f32 %v2564, %v2676
  %v2678 = vpop.f32.mrf.mxu0
  %v2679 = vadd.f32 %v2566, %v2678
  %v2680 = vpop.f32.mrf.mxu0
  %v2681 = vadd.f32 %v2568, %v2680
  %2682 = vmatprep.mubr.bf16.mxu0 %v230
  %2683 = vmatmul.mubr.bf16.gmra.mxu0 %v229
  %v2684 = vpop.f32.mrf.mxu0
  %v2685 = vadd.f32 %v2572, %v2684
  %v2686 = vpop.f32.mrf.mxu0
  %v2687 = vadd.f32 %v2574, %v2686
  %v2688 = vpop.f32.mrf.mxu0
  %v2689 = vadd.f32 %v2576, %v2688
  %v2690 = vpop.f32.mrf.mxu0
  %v2691 = vadd.f32 %v2578, %v2690
  %2692 = vdwg.mxu0
  %vm2693 = vcmp.gt.f32.partialorder %v2163, 0.0
  %vm2694 = vcmp.gt.f32.partialorder %v2165, 0.0
  %vm2695 = vcmp.gt.f32.partialorder %v2615, 0.0
  %vm2696 = vcmp.gt.f32.partialorder %v2617, 0.0
  %vm2697 = vcmp.gt.f32.partialorder %v2167, 0.0
  %vm2698 = vcmp.gt.f32.partialorder %v2169, 0.0
  %vm2699 = vcmp.gt.f32.partialorder %v2619, 0.0
  %vm2700 = vcmp.gt.f32.partialorder %v2621, 0.0
  %vm2701 = vcmp.gt.f32.partialorder %v2173, 0.0
  %vm2702 = vcmp.gt.f32.partialorder %v2175, 0.0
  %vm2703 = vcmp.gt.f32.partialorder %v2625, 0.0
  %vm2704 = vcmp.gt.f32.partialorder %v2627, 0.0
  %vm2705 = vcmp.gt.f32.partialorder %v2177, 0.0
  %vm2706 = vcmp.gt.f32.partialorder %v2179, 0.0
  %vm2707 = vcmp.gt.f32.partialorder %v2629, 0.0
  %vm2708 = vcmp.gt.f32.partialorder %v2631, 0.0
  %vm2709 = vcmp.gt.f32.partialorder %v2183, 0.0
  %vm2710 = vcmp.gt.f32.partialorder %v2185, 0.0
  %vm2711 = vcmp.gt.f32.partialorder %v2635, 0.0
  %vm2712 = vcmp.gt.f32.partialorder %v2637, 0.0
  %vm2713 = vcmp.gt.f32.partialorder %v2187, 0.0
  %vm2714 = vcmp.gt.f32.partialorder %v2189, 0.0
  %vm2715 = vcmp.gt.f32.partialorder %v2639, 0.0
  %vm2716 = vcmp.gt.f32.partialorder %v2641, 0.0
  %vm2717 = vcmp.gt.f32.partialorder %v2193, 0.0
  %vm2718 = vcmp.gt.f32.partialorder %v2195, 0.0
  %vm2719 = vcmp.gt.f32.partialorder %v2645, 0.0
  %vm2720 = vcmp.gt.f32.partialorder %v2647, 0.0
  %vm2721 = vcmp.gt.f32.partialorder %v2197, 0.0
  %vm2722 = vcmp.gt.f32.partialorder %v2199, 0.0
  %vm2723 = vcmp.gt.f32.partialorder %v2649, 0.0
  %vm2724 = vcmp.gt.f32.partialorder %v2651, 0.0
  %vm2725 = vcmp.gt.f32.partialorder %v2203, 0.0
  %vm2726 = vcmp.gt.f32.partialorder %v2205, 0.0
  %vm2727 = vcmp.gt.f32.partialorder %v2655, 0.0
  %vm2728 = vcmp.gt.f32.partialorder %v2657, 0.0
  %vm2729 = vcmp.gt.f32.partialorder %v2207, 0.0
  %vm2730 = vcmp.gt.f32.partialorder %v2209, 0.0
  %vm2731 = vcmp.gt.f32.partialorder %v2659, 0.0
  %vm2732 = vcmp.gt.f32.partialorder %v2661, 0.0
  %vm2733 = vcmp.gt.f32.partialorder %v2213, 0.0
  %vm2734 = vcmp.gt.f32.partialorder %v2215, 0.0
  %vm2735 = vcmp.gt.f32.partialorder %v2665, 0.0
  %vm2736 = vcmp.gt.f32.partialorder %v2667, 0.0
  %vm2737 = vcmp.gt.f32.partialorder %v2217, 0.0
  %vm2738 = vcmp.gt.f32.partialorder %v2219, 0.0
  %vm2739 = vcmp.gt.f32.partialorder %v2669, 0.0
  %vm2740 = vcmp.gt.f32.partialorder %v2671, 0.0
  %vm2741 = vcmp.gt.f32.partialorder %v2223, 0.0
  %vm2742 = vcmp.gt.f32.partialorder %v2225, 0.0
  %vm2743 = vcmp.gt.f32.partialorder %v2675, 0.0
  %vm2744 = vcmp.gt.f32.partialorder %v2677, 0.0
  %vm2745 = vcmp.gt.f32.partialorder %v2227, 0.0
  %vm2746 = vcmp.gt.f32.partialorder %v2229, 0.0
  %vm2747 = vcmp.gt.f32.partialorder %v2679, 0.0
  %vm2748 = vcmp.gt.f32.partialorder %v2681, 0.0
  %vm2749 = vcmp.gt.f32.partialorder %v2233, 0.0
  %vm2750 = vcmp.gt.f32.partialorder %v2235, 0.0
  %vm2751 = vcmp.gt.f32.partialorder %v2685, 0.0
  %vm2752 = vcmp.gt.f32.partialorder %v2687, 0.0
  %vm2753 = vcmp.gt.f32.partialorder %v2237, 0.0
  %vm2754 = vcmp.gt.f32.partialorder %v2239, 0.0
  %vm2755 = vcmp.gt.f32.partialorder %v2689, 0.0
  %vm2756 = vcmp.gt.f32.partialorder %v2691, 0.0
  %v2757 = vmul.f32 %v2163, 0.2
  %v2758 = vmul.f32 %v2165, 0.2
  %v2759 = vmul.f32 %v2615, 0.2
  %v2760 = vmul.f32 %v2617, 0.2
  %v2761 = vmul.f32 %v2167, 0.2
  %v2762 = vmul.f32 %v2169, 0.2
  %v2763 = vmul.f32 %v2619, 0.2
  %v2764 = vmul.f32 %v2621, 0.2
  %v2765 = vmul.f32 %v2173, 0.2
  %v2766 = vmul.f32 %v2175, 0.2
  %v2767 = vmul.f32 %v2625, 0.2
  %v2768 = vmul.f32 %v2627, 0.2
  %v2769 = vmul.f32 %v2177, 0.2
  %v2770 = vmul.f32 %v2179, 0.2
  %v2771 = vmul.f32 %v2629, 0.2
  %v2772 = vmul.f32 %v2631, 0.2
  %v2773 = vmul.f32 %v2183, 0.2
  %v2774 = vmul.f32 %v2185, 0.2
  %v2775 = vmul.f32 %v2635, 0.2
  %v2776 = vmul.f32 %v2637, 0.2
  %v2777 = vmul.f32 %v2187, 0.2
  %v2778 = vmul.f32 %v2189, 0.2
  %v2779 = vmul.f32 %v2639, 0.2
  %v2780 = vmul.f32 %v2641, 0.2
  %v2781 = vmul.f32 %v2193, 0.2
  %v2782 = vmul.f32 %v2195, 0.2
  %v2783 = vmul.f32 %v2645, 0.2
  %v2784 = vmul.f32 %v2647, 0.2
  %v2785 = vmul.f32 %v2197, 0.2
  %v2786 = vmul.f32 %v2199, 0.2
  %v2787 = vmul.f32 %v2649, 0.2
  %v2788 = vmul.f32 %v2651, 0.2
  %v2789 = vmul.f32 %v2203, 0.2
  %v2790 = vmul.f32 %v2205, 0.2
  %v2791 = vmul.f32 %v2655, 0.2
  %v2792 = vmul.f32 %v2657, 0.2
  %v2793 = vmul.f32 %v2207, 0.2
  %v2794 = vmul.f32 %v2209, 0.2
  %v2795 = vmul.f32 %v2659, 0.2
  %v2796 = vmul.f32 %v2661, 0.2
  %v2797 = vmul.f32 %v2213, 0.2
  %v2798 = vmul.f32 %v2215, 0.2
  %v2799 = vmul.f32 %v2665, 0.2
  %v2800 = vmul.f32 %v2667, 0.2
  %v2801 = vmul.f32 %v2217, 0.2
  %v2802 = vmul.f32 %v2219, 0.2
  %v2803 = vmul.f32 %v2669, 0.2
  %v2804 = vmul.f32 %v2671, 0.2
  %v2805 = vmul.f32 %v2223, 0.2
  %v2806 = vmul.f32 %v2225, 0.2
  %v2807 = vmul.f32 %v2675, 0.2
  %v2808 = vmul.f32 %v2677, 0.2
  %v2809 = vmul.f32 %v2227, 0.2
  %v2810 = vmul.f32 %v2229, 0.2
  %v2811 = vmul.f32 %v2679, 0.2
  %v2812 = vmul.f32 %v2681, 0.2
  %v2813 = vmul.f32 %v2233, 0.2
  %v2814 = vmul.f32 %v2235, 0.2
  %v2815 = vmul.f32 %v2685, 0.2
  %v2816 = vmul.f32 %v2687, 0.2
  %v2817 = vmul.f32 %v2237, 0.2
  %v2818 = vmul.f32 %v2239, 0.2
  %v2819 = vmul.f32 %v2689, 0.2
  %v2820 = vmul.f32 %v2691, 0.2
  %v2821 = vsel %vm2693, %v2163, %v2757
  %v2822 = vsel %vm2694, %v2165, %v2758
  %v2823 = vsel %vm2695, %v2615, %v2759
  %v2824 = vsel %vm2696, %v2617, %v2760
  %v2825 = vsel %vm2697, %v2167, %v2761
  %v2826 = vsel %vm2698, %v2169, %v2762
  %v2827 = vsel %vm2699, %v2619, %v2763
  %v2828 = vsel %vm2700, %v2621, %v2764
  %v2829 = vsel %vm2701, %v2173, %v2765
  %v2830 = vsel %vm2702, %v2175, %v2766
  %v2831 = vsel %vm2703, %v2625, %v2767
  %v2832 = vsel %vm2704, %v2627, %v2768
  %v2833 = vsel %vm2705, %v2177, %v2769
  %v2834 = vsel %vm2706, %v2179, %v2770
  %v2835 = vsel %vm2707, %v2629, %v2771
  %v2836 = vsel %vm2708, %v2631, %v2772
  %v2837 = vsel %vm2709, %v2183, %v2773
  %v2838 = vsel %vm2710, %v2185, %v2774
  %v2839 = vsel %vm2711, %v2635, %v2775
  %v2840 = vsel %vm2712, %v2637, %v2776
  %v2841 = vsel %vm2713, %v2187, %v2777
  %v2842 = vsel %vm2714, %v2189, %v2778
  %v2843 = vsel %vm2715, %v2639, %v2779
  %v2844 = vsel %vm2716, %v2641, %v2780
  %v2845 = vsel %vm2717, %v2193, %v2781
  %v2846 = vsel %vm2718, %v2195, %v2782
  %v2847 = vsel %vm2719, %v2645, %v2783
  %v2848 = vsel %vm2720, %v2647, %v2784
  %v2849 = vsel %vm2721, %v2197, %v2785
  %v2850 = vsel %vm2722, %v2199, %v2786
  %v2851 = vsel %vm2723, %v2649, %v2787
  %v2852 = vsel %vm2724, %v2651, %v2788
  %v2853 = vsel %vm2725, %v2203, %v2789
  %v2854 = vsel %vm2726, %v2205, %v2790
  %v2855 = vsel %vm2727, %v2655, %v2791
  %v2856 = vsel %vm2728, %v2657, %v2792
  %v2857 = vsel %vm2729, %v2207, %v2793
  %v2858 = vsel %vm2730, %v2209, %v2794
  %v2859 = vsel %vm2731, %v2659, %v2795
  %v2860 = vsel %vm2732, %v2661, %v2796
  %v2861 = vsel %vm2733, %v2213, %v2797
  %v2862 = vsel %vm2734, %v2215, %v2798
  %v2863 = vsel %vm2735, %v2665, %v2799
  %v2864 = vsel %vm2736, %v2667, %v2800
  %v2865 = vsel %vm2737, %v2217, %v2801
  %v2866 = vsel %vm2738, %v2219, %v2802
  %v2867 = vsel %vm2739, %v2669, %v2803
  %v2868 = vsel %vm2740, %v2671, %v2804
  %v2869 = vsel %vm2741, %v2223, %v2805
  %v2870 = vsel %vm2742, %v2225, %v2806
  %v2871 = vsel %vm2743, %v2675, %v2807
  %v2872 = vsel %vm2744, %v2677, %v2808
  %v2873 = vsel %vm2745, %v2227, %v2809
  %v2874 = vsel %vm2746, %v2229, %v2810
  %v2875 = vsel %vm2747, %v2679, %v2811
  %v2876 = vsel %vm2748, %v2681, %v2812
  %v2877 = vsel %vm2749, %v2233, %v2813
  %v2878 = vsel %vm2750, %v2235, %v2814
  %v2879 = vsel %vm2751, %v2685, %v2815
  %v2880 = vsel %vm2752, %v2687, %v2816
  %v2881 = vsel %vm2753, %v2237, %v2817
  %v2882 = vsel %vm2754, %v2239, %v2818
  %v2883 = vsel %vm2755, %v2689, %v2819
  %v2884 = vsel %vm2756, %v2691, %v2820
  %v2885 = vpack.c.bf16 %v2825, %v2821
  %v2886 = vpack.c.bf16 %v2826, %v2822
  %v2887 = vpack.c.bf16 %v2827, %v2823
  %v2888 = vpack.c.bf16 %v2828, %v2824
  %v2889 = vpack.c.bf16 %v2833, %v2829
  %v2890 = vpack.c.bf16 %v2834, %v2830
  %v2891 = vpack.c.bf16 %v2835, %v2831
  %v2892 = vpack.c.bf16 %v2836, %v2832
  %v2893 = vpack.c.bf16 %v2841, %v2837
  %v2894 = vpack.c.bf16 %v2842, %v2838
  %v2895 = vpack.c.bf16 %v2843, %v2839
  %v2896 = vpack.c.bf16 %v2844, %v2840
  %v2897 = vpack.c.bf16 %v2849, %v2845
  %v2898 = vpack.c.bf16 %v2850, %v2846
  %v2899 = vpack.c.bf16 %v2851, %v2847
  %v2900 = vpack.c.bf16 %v2852, %v2848
  %v2901 = vpack.c.bf16 %v2857, %v2853
  %v2902 = vpack.c.bf16 %v2858, %v2854
  %v2903 = vpack.c.bf16 %v2859, %v2855
  %v2904 = vpack.c.bf16 %v2860, %v2856
  %v2905 = vpack.c.bf16 %v2865, %v2861
  %v2906 = vpack.c.bf16 %v2866, %v2862
  %v2907 = vpack.c.bf16 %v2867, %v2863
  %v2908 = vpack.c.bf16 %v2868, %v2864
  %v2909 = vpack.c.bf16 %v2873, %v2869
  %v2910 = vpack.c.bf16 %v2874, %v2870
  %v2911 = vpack.c.bf16 %v2875, %v2871
  %v2912 = vpack.c.bf16 %v2876, %v2872
  %v2913 = vpack.c.bf16 %v2881, %v2877
  %v2914 = vpack.c.bf16 %v2882, %v2878
  %v2915 = vpack.c.bf16 %v2883, %v2879
  %v2916 = vpack.c.bf16 %v2884, %v2880
  %v2917 = vld [vmem:[%s3] sm:$0xff]
  %v2918 = vld [vmem:[%s3 + $0x8] sm:$0xff]
  %v2919 = vld [vmem:[%s3 + $0x10] sm:$0xff]
  %v2920 = vld [vmem:[%s3 + $0x18] sm:$0xff]
  %v2921 = vld [vmem:[%s3 + $0x20] sm:$0xff]
  %v2922 = vld [vmem:[%s3 + $0x28] sm:$0xff]
  %v2923 = vld [vmem:[%s3 + $0x30] sm:$0xff]
  %v2924 = vld [vmem:[%s3 + $0x38] sm:$0xff]
  %v2925 = vld [vmem:[%s3 + $0x40] sm:$0xff]
  %v2926 = vld [vmem:[%s3 + $0x48] sm:$0xff]
  %v2927 = vld [vmem:[%s3 + $0x50] sm:$0xff]
  %v2928 = vld [vmem:[%s3 + $0x58] sm:$0xff]
  %v2929 = vld [vmem:[%s3 + $0x60] sm:$0xff]
  %v2930 = vld [vmem:[%s3 + $0x68] sm:$0xff]
  %v2931 = vld [vmem:[%s3 + $0x70] sm:$0xff]
  %v2932 = vld [vmem:[%s3 + $0x78] sm:$0xff]
  %v2933 = vld [vmem:[%s3 + $0x80] sm:$0xff]
  %v2934 = vld [vmem:[%s3 + $0x88] sm:$0xff]
  %v2935 = vld [vmem:[%s3 + $0x90] sm:$0xff]
  %v2936 = vld [vmem:[%s3 + $0x98] sm:$0xff]
  %v2937 = vld [vmem:[%s3 + $0xa0] sm:$0xff]
  %v2938 = vld [vmem:[%s3 + $0xa8] sm:$0xff]
  %v2939 = vld [vmem:[%s3 + $0xb0] sm:$0xff]
  %v2940 = vld [vmem:[%s3 + $0xb8] sm:$0xff]
  %v2941 = vld [vmem:[%s3 + $0xc0] sm:$0xff]
  %v2942 = vld [vmem:[%s3 + $0xc8] sm:$0xff]
  %v2943 = vld [vmem:[%s3 + $0xd0] sm:$0xff]
  %v2944 = vld [vmem:[%s3 + $0xd8] sm:$0xff]
  %v2945 = vld [vmem:[%s3 + $0xe0] sm:$0xff]
  %v2946 = vld [vmem:[%s3 + $0xe8] sm:$0xff]
  %v2947 = vld [vmem:[%s3 + $0xf0] sm:$0xff]
  %v2948 = vld [vmem:[%s3 + $0xf8] sm:$0xff]
  %v2949 = vld [vmem:[%s3 + $0x100] sm:$0xff]
  %v2950 = vld [vmem:[%s3 + $0x108] sm:$0xff]
  %v2951 = vld [vmem:[%s3 + $0x110] sm:$0xff]
  %v2952 = vld [vmem:[%s3 + $0x118] sm:$0xff]
  %v2953 = vld [vmem:[%s3 + $0x120] sm:$0xff]
  %v2954 = vld [vmem:[%s3 + $0x128] sm:$0xff]
  %v2955 = vld [vmem:[%s3 + $0x130] sm:$0xff]
  %v2956 = vld [vmem:[%s3 + $0x138] sm:$0xff]
  %v2957 = vld [vmem:[%s3 + $0x140] sm:$0xff]
  %v2958 = vld [vmem:[%s3 + $0x148] sm:$0xff]
  %v2959 = vld [vmem:[%s3 + $0x150] sm:$0xff]
  %v2960 = vld [vmem:[%s3 + $0x158] sm:$0xff]
  %v2961 = vld [vmem:[%s3 + $0x160] sm:$0xff]
  %v2962 = vld [vmem:[%s3 + $0x168] sm:$0xff]
  %v2963 = vld [vmem:[%s3 + $0x170] sm:$0xff]
  %v2964 = vld [vmem:[%s3 + $0x178] sm:$0xff]
  %v2965 = vld [vmem:[%s3 + $0x180] sm:$0xff]
  %v2966 = vld [vmem:[%s3 + $0x188] sm:$0xff]
  %v2967 = vld [vmem:[%s3 + $0x190] sm:$0xff]
  %v2968 = vld [vmem:[%s3 + $0x198] sm:$0xff]
  %v2969 = vld [vmem:[%s3 + $0x1a0] sm:$0xff]
  %v2970 = vld [vmem:[%s3 + $0x1a8] sm:$0xff]
  %v2971 = vld [vmem:[%s3 + $0x1b0] sm:$0xff]
  %v2972 = vld [vmem:[%s3 + $0x1b8] sm:$0xff]
  %v2973 = vld [vmem:[%s3 + $0x1c0] sm:$0xff]
  %v2974 = vld [vmem:[%s3 + $0x1c8] sm:$0xff]
  %v2975 = vld [vmem:[%s3 + $0x1d0] sm:$0xff]
  %v2976 = vld [vmem:[%s3 + $0x1d8] sm:$0xff]
  %v2977 = vld [vmem:[%s3 + $0x1e0] sm:$0xff]
  %v2978 = vld [vmem:[%s3 + $0x1e8] sm:$0xff]
  %v2979 = vld [vmem:[%s3 + $0x1f0] sm:$0xff]
  %v2980 = vld [vmem:[%s3 + $0x1f8] sm:$0xff]
  %v2981 = vld [vmem:[%s4] sm:$0x3]
  %v2983 = vlaneseq
  %v2984 = vshrl.u32 %v2983, 7
  %v2985 = vsub.s32 0, %v2984
  %v2986 = vrot.slane %v2981, %v2985
  %v2987 = vlaneseq
  %v2988 = vshrl.u32 %v2987, 7
  %v2989 = vsub.s32 1, %v2988
  %v2990 = vrot.slane %v2981, %v2989
  %v3057 = vunpack.c.l.b16 %v2917
  %v3058 = vunpack.c.h.b16 %v2917
  %v3059 = vunpack.c.l.b16 %v2918
  %v3060 = vunpack.c.h.b16 %v2918
  %v3061 = vunpack.c.l.b16 %v2919
  %v3062 = vunpack.c.h.b16 %v2919
  %v3063 = vunpack.c.l.b16 %v2920
  %v3064 = vunpack.c.h.b16 %v2920
  %v3065 = vunpack.c.l.b16 %v2921
  %v3066 = vunpack.c.h.b16 %v2921
  %v3067 = vunpack.c.l.b16 %v2922
  %v3068 = vunpack.c.h.b16 %v2922
  %v3069 = vunpack.c.l.b16 %v2923
  %v3070 = vunpack.c.h.b16 %v2923
  %v3071 = vunpack.c.l.b16 %v2924
  %v3072 = vunpack.c.h.b16 %v2924
  %v3073 = vunpack.c.l.b16 %v2925
  %v3074 = vunpack.c.h.b16 %v2925
  %v3075 = vunpack.c.l.b16 %v2926
  %v3076 = vunpack.c.h.b16 %v2926
  %v3077 = vunpack.c.l.b16 %v2927
  %v3078 = vunpack.c.h.b16 %v2927
  %v3079 = vunpack.c.l.b16 %v2928
  %v3080 = vunpack.c.h.b16 %v2928
  %v3081 = vunpack.c.l.b16 %v2929
  %v3082 = vunpack.c.h.b16 %v2929
  %v3083 = vunpack.c.l.b16 %v2930
  %v3084 = vunpack.c.h.b16 %v2930
  %v3085 = vunpack.c.l.b16 %v2931
  %v3086 = vunpack.c.h.b16 %v2931
  %v3087 = vunpack.c.l.b16 %v2932
  %v3088 = vunpack.c.h.b16 %v2932
  %v3089 = vunpack.c.l.b16 %v2933
  %v3090 = vunpack.c.h.b16 %v2933
  %v3091 = vunpack.c.l.b16 %v2934
  %v3092 = vunpack.c.h.b16 %v2934
  %v3093 = vunpack.c.l.b16 %v2935
  %v3094 = vunpack.c.h.b16 %v2935
  %v3095 = vunpack.c.l.b16 %v2936
  %v3096 = vunpack.c.h.b16 %v2936
  %v3097 = vunpack.c.l.b16 %v2937
  %v3098 = vunpack.c.h.b16 %v2937
  %v3099 = vunpack.c.l.b16 %v2938
  %v3100 = vunpack.c.h.b16 %v2938
  %v3101 = vunpack.c.l.b16 %v2939
  %v3102 = vunpack.c.h.b16 %v2939
  %v3103 = vunpack.c.l.b16 %v2940
  %v3104 = vunpack.c.h.b16 %v2940
  %v3105 = vunpack.c.l.b16 %v2941
  %v3106 = vunpack.c.h.b16 %v2941
  %v3107 = vunpack.c.l.b16 %v2942
  %v3108 = vunpack.c.h.b16 %v2942
  %v3109 = vunpack.c.l.b16 %v2943
  %v3110 = vunpack.c.h.b16 %v2943
  %v3111 = vunpack.c.l.b16 %v2944
  %v3112 = vunpack.c.h.b16 %v2944
  %v3113 = vunpack.c.l.b16 %v2945
  %v3114 = vunpack.c.h.b16 %v2945
  %v3115 = vunpack.c.l.b16 %v2946
  %v3116 = vunpack.c.h.b16 %v2946
  %v3117 = vunpack.c.l.b16 %v2947
  %v3118 = vunpack.c.h.b16 %v2947
  %v3119 = vunpack.c.l.b16 %v2948
  %v3120 = vunpack.c.h.b16 %v2948
  %v3121 = vunpack.c.l.b16 %v2949
  %v3122 = vunpack.c.h.b16 %v2949
  %v3123 = vunpack.c.l.b16 %v2950
  %v3124 = vunpack.c.h.b16 %v2950
  %v3125 = vunpack.c.l.b16 %v2951
  %v3126 = vunpack.c.h.b16 %v2951
  %v3127 = vunpack.c.l.b16 %v2952
  %v3128 = vunpack.c.h.b16 %v2952
  %v3129 = vunpack.c.l.b16 %v2953
  %v3130 = vunpack.c.h.b16 %v2953
  %v3131 = vunpack.c.l.b16 %v2954
  %v3132 = vunpack.c.h.b16 %v2954
  %v3133 = vunpack.c.l.b16 %v2955
  %v3134 = vunpack.c.h.b16 %v2955
  %v3135 = vunpack.c.l.b16 %v2956
  %v3136 = vunpack.c.h.b16 %v2956
  %v3137 = vunpack.c.l.b16 %v2957
  %v3138 = vunpack.c.h.b16 %v2957
  %v3139 = vunpack.c.l.b16 %v2958
  %v3140 = vunpack.c.h.b16 %v2958
  %v3141 = vunpack.c.l.b16 %v2959
  %v3142 = vunpack.c.h.b16 %v2959
  %v3143 = vunpack.c.l.b16 %v2960
  %v3144 = vunpack.c.h.b16 %v2960
  %v3145 = vunpack.c.l.b16 %v2961
  %v3146 = vunpack.c.h.b16 %v2961
  %v3147 = vunpack.c.l.b16 %v2962
  %v3148 = vunpack.c.h.b16 %v2962
  %v3149 = vunpack.c.l.b16 %v2963
  %v3150 = vunpack.c.h.b16 %v2963
  %v3151 = vunpack.c.l.b16 %v2964
  %v3152 = vunpack.c.h.b16 %v2964
  %v3153 = vunpack.c.l.b16 %v2965
  %v3154 = vunpack.c.h.b16 %v2965
  %v3155 = vunpack.c.l.b16 %v2966
  %v3156 = vunpack.c.h.b16 %v2966
  %v3157 = vunpack.c.l.b16 %v2967
  %v3158 = vunpack.c.h.b16 %v2967
  %v3159 = vunpack.c.l.b16 %v2968
  %v3160 = vunpack.c.h.b16 %v2968
  %v3161 = vunpack.c.l.b16 %v2969
  %v3162 = vunpack.c.h.b16 %v2969
  %v3163 = vunpack.c.l.b16 %v2970
  %v3164 = vunpack.c.h.b16 %v2970
  %v3165 = vunpack.c.l.b16 %v2971
  %v3166 = vunpack.c.h.b16 %v2971
  %v3167 = vunpack.c.l.b16 %v2972
  %v3168 = vunpack.c.h.b16 %v2972
  %v3169 = vunpack.c.l.b16 %v2973
  %v3170 = vunpack.c.h.b16 %v2973
  %v3171 = vunpack.c.l.b16 %v2974
  %v3172 = vunpack.c.h.b16 %v2974
  %v3173 = vunpack.c.l.b16 %v2975
  %v3174 = vunpack.c.h.b16 %v2975
  %v3175 = vunpack.c.l.b16 %v2976
  %v3176 = vunpack.c.h.b16 %v2976
  %v3177 = vunpack.c.l.b16 %v2977
  %v3178 = vunpack.c.h.b16 %v2977
  %v3179 = vunpack.c.l.b16 %v2978
  %v3180 = vunpack.c.h.b16 %v2978
  %v3181 = vunpack.c.l.b16 %v2979
  %v3182 = vunpack.c.h.b16 %v2979
  %v3183 = vunpack.c.l.b16 %v2980
  %v3184 = vunpack.c.h.b16 %v2980
  %v3185 = vpack.c.b16 %v3059, %v3057
  %v3186 = vpack.c.b16 %v3060, %v3058
  %v3187 = vpack.c.b16 %v3063, %v3061
  %v3188 = vpack.c.b16 %v3064, %v3062
  %v3189 = vpack.c.b16 %v3067, %v3065
  %v3190 = vpack.c.b16 %v3068, %v3066
  %v3191 = vpack.c.b16 %v3071, %v3069
  %v3192 = vpack.c.b16 %v3072, %v3070
  %v3193 = vpack.c.b16 %v3075, %v3073
  %v3194 = vpack.c.b16 %v3076, %v3074
  %v3195 = vpack.c.b16 %v3079, %v3077
  %v3196 = vpack.c.b16 %v3080, %v3078
  %v3197 = vpack.c.b16 %v3083, %v3081
  %v3198 = vpack.c.b16 %v3084, %v3082
  %v3199 = vpack.c.b16 %v3087, %v3085
  %v3200 = vpack.c.b16 %v3088, %v3086
  %v3201 = vpack.c.b16 %v3091, %v3089
  %v3202 = vpack.c.b16 %v3092, %v3090
  %v3203 = vpack.c.b16 %v3095, %v3093
  %v3204 = vpack.c.b16 %v3096, %v3094
  %v3205 = vpack.c.b16 %v3099, %v3097
  %v3206 = vpack.c.b16 %v3100, %v3098
  %v3207 = vpack.c.b16 %v3103, %v3101
  %v3208 = vpack.c.b16 %v3104, %v3102
  %v3209 = vpack.c.b16 %v3107, %v3105
  %v3210 = vpack.c.b16 %v3108, %v3106
  %v3211 = vpack.c.b16 %v3111, %v3109
  %v3212 = vpack.c.b16 %v3112, %v3110
  %v3213 = vpack.c.b16 %v3115, %v3113
  %v3214 = vpack.c.b16 %v3116, %v3114
  %v3215 = vpack.c.b16 %v3119, %v3117
  %v3216 = vpack.c.b16 %v3120, %v3118
  %v3217 = vpack.c.b16 %v3123, %v3121
  %v3218 = vpack.c.b16 %v3124, %v3122
  %v3219 = vpack.c.b16 %v3127, %v3125
  %v3220 = vpack.c.b16 %v3128, %v3126
  %v3221 = vpack.c.b16 %v3131, %v3129
  %v3222 = vpack.c.b16 %v3132, %v3130
  %v3223 = vpack.c.b16 %v3135, %v3133
  %v3224 = vpack.c.b16 %v3136, %v3134
  %v3225 = vpack.c.b16 %v3139, %v3137
  %v3226 = vpack.c.b16 %v3140, %v3138
  %v3227 = vpack.c.b16 %v3143, %v3141
  %v3228 = vpack.c.b16 %v3144, %v3142
  %v3229 = vpack.c.b16 %v3147, %v3145
  %v3230 = vpack.c.b16 %v3148, %v3146
  %v3231 = vpack.c.b16 %v3151, %v3149
  %v3232 = vpack.c.b16 %v3152, %v3150
  %v3233 = vpack.c.b16 %v3155, %v3153
  %v3234 = vpack.c.b16 %v3156, %v3154
  %v3235 = vpack.c.b16 %v3159, %v3157
  %v3236 = vpack.c.b16 %v3160, %v3158
  %v3237 = vpack.c.b16 %v3163, %v3161
  %v3238 = vpack.c.b16 %v3164, %v3162
  %v3239 = vpack.c.b16 %v3167, %v3165
  %v3240 = vpack.c.b16 %v3168, %v3166
  %v3241 = vpack.c.b16 %v3171, %v3169
  %v3242 = vpack.c.b16 %v3172, %v3170
  %v3243 = vpack.c.b16 %v3175, %v3173
  %v3244 = vpack.c.b16 %v3176, %v3174
  %v3245 = vpack.c.b16 %v3179, %v3177
  %v3246 = vpack.c.b16 %v3180, %v3178
  %v3247 = vpack.c.b16 %v3183, %v3181
  %v3248 = vpack.c.b16 %v3184, %v3182
  %3313 = vmatprep.subr.bf16.mxu0 %v3200
  %3314 = vmatpush1.bf16.msra.mxu0 %v3199
  %3315 = vmatprep.subr.bf16.mxu0 %v3198
  %3316 = vmatpush1.bf16.msra.mxu0 %v3197
  %3317 = vmatprep.subr.bf16.mxu0 %v3196
  %3318 = vmatpush1.bf16.msra.mxu0 %v3195
  %3319 = vmatprep.subr.bf16.mxu0 %v3194
  %3320 = vmatpush1.bf16.msra.mxu0 %v3193
  %3321 = vmatprep.subr.bf16.mxu0 %v3192
  %3322 = vmatpush1.bf16.msra.mxu0 %v3191
  %3323 = vmatprep.subr.bf16.mxu0 %v3190
  %3324 = vmatpush1.bf16.msra.mxu0 %v3189
  %3325 = vmatprep.subr.bf16.mxu0 %v3188
  %3326 = vmatpush1.bf16.msra.mxu0 %v3187
  %3327 = vmatprep.subr.bf16.mxu0 %v3186
  %3328 = vmatpush1.bf16.msra.mxu0 %v3185
  %3329 = vmatprep.subr.bf16.mxu0 %v3216
  %3330 = vmatpush2.bf16.msra.mxu0 %v3215
  %3331 = vmatprep.subr.bf16.mxu0 %v3214
  %3332 = vmatpush2.bf16.msra.mxu0 %v3213
  %3333 = vmatprep.subr.bf16.mxu0 %v3212
  %3334 = vmatpush2.bf16.msra.mxu0 %v3211
  %3335 = vmatprep.subr.bf16.mxu0 %v3210
  %3336 = vmatpush2.bf16.msra.mxu0 %v3209
  %3337 = vmatprep.subr.bf16.mxu0 %v3208
  %3338 = vmatpush2.bf16.msra.mxu0 %v3207
  %3339 = vmatprep.subr.bf16.mxu0 %v3206
  %3340 = vmatpush2.bf16.msra.mxu0 %v3205
  %3341 = vmatprep.subr.bf16.mxu0 %v3204
  %3342 = vmatpush2.bf16.msra.mxu0 %v3203
  %3343 = vmatprep.subr.bf16.mxu0 %v3202
  %3344 = vmatpush2.bf16.msra.mxu0 %v3201
  %3345 = vmatprep.mubr.bf16.mxu0 %v2886
  %3346 = vmatmul.mubr.bf16.gmra.mxu0 %v2885
  %v3347 = vpop.f32.mrf.mxu0
  %v3348 = vadd.f32 %v2986, %v3347
  %v3349 = vpop.f32.mrf.mxu0
  %v3350 = vadd.f32 %v2990, %v3349
  %v3351 = vpop.f32.mrf.mxu0
  %v3352 = vadd.f32 %v2986, %v3351
  %v3353 = vpop.f32.mrf.mxu0
  %v3354 = vadd.f32 %v2990, %v3353
  %3355 = vmatprep.mubr.bf16.mxu0 %v2890
  %3356 = vmatmul.mubr.bf16.gmra.mxu0 %v2889
  %v3357 = vpop.f32.mrf.mxu0
  %v3358 = vadd.f32 %v2986, %v3357
  %v3359 = vpop.f32.mrf.mxu0
  %v3360 = vadd.f32 %v2990, %v3359
  %v3361 = vpop.f32.mrf.mxu0
  %v3362 = vadd.f32 %v2986, %v3361
  %v3363 = vpop.f32.mrf.mxu0
  %v3364 = vadd.f32 %v2990, %v3363
  %3365 = vmatprep.mubr.bf16.mxu0 %v2894
  %3366 = vmatmul.mubr.bf16.gmra.mxu0 %v2893
  %v3367 = vpop.f32.mrf.mxu0
  %v3368 = vadd.f32 %v2986, %v3367
  %v3369 = vpop.f32.mrf.mxu0
  %v3370 = vadd.f32 %v2990, %v3369
  %v3371 = vpop.f32.mrf.mxu0
  %v3372 = vadd.f32 %v2986, %v3371
  %v3373 = vpop.f32.mrf.mxu0
  %v3374 = vadd.f32 %v2990, %v3373
  %3375 = vmatprep.mubr.bf16.mxu0 %v2898
  %3376 = vmatmul.mubr.bf16.gmra.mxu0 %v2897
  %v3377 = vpop.f32.mrf.mxu0
  %v3378 = vadd.f32 %v2986, %v3377
  %v3379 = vpop.f32.mrf.mxu0
  %v3380 = vadd.f32 %v2990, %v3379
  %v3381 = vpop.f32.mrf.mxu0
  %v3382 = vadd.f32 %v2986, %v3381
  %v3383 = vpop.f32.mrf.mxu0
  %v3384 = vadd.f32 %v2990, %v3383
  %3385 = vmatprep.mubr.bf16.mxu0 %v2902
  %3386 = vmatmul.mubr.bf16.gmra.mxu0 %v2901
  %v3387 = vpop.f32.mrf.mxu0
  %v3388 = vadd.f32 %v2986, %v3387
  %v3389 = vpop.f32.mrf.mxu0
  %v3390 = vadd.f32 %v2990, %v3389
  %v3391 = vpop.f32.mrf.mxu0
  %v3392 = vadd.f32 %v2986, %v3391
  %v3393 = vpop.f32.mrf.mxu0
  %v3394 = vadd.f32 %v2990, %v3393
  %3395 = vmatprep.mubr.bf16.mxu0 %v2906
  %3396 = vmatmul.mubr.bf16.gmra.mxu0 %v2905
  %v3397 = vpop.f32.mrf.mxu0
  %v3398 = vadd.f32 %v2986, %v3397
  %v3399 = vpop.f32.mrf.mxu0
  %v3400 = vadd.f32 %v2990, %v3399
  %v3401 = vpop.f32.mrf.mxu0
  %v3402 = vadd.f32 %v2986, %v3401
  %v3403 = vpop.f32.mrf.mxu0
  %v3404 = vadd.f32 %v2990, %v3403
  %3405 = vmatprep.mubr.bf16.mxu0 %v2910
  %3406 = vmatmul.mubr.bf16.gmra.mxu0 %v2909
  %v3407 = vpop.f32.mrf.mxu0
  %v3408 = vadd.f32 %v2986, %v3407
  %v3409 = vpop.f32.mrf.mxu0
  %v3410 = vadd.f32 %v2990, %v3409
  %v3411 = vpop.f32.mrf.mxu0
  %v3412 = vadd.f32 %v2986, %v3411
  %v3413 = vpop.f32.mrf.mxu0
  %v3414 = vadd.f32 %v2990, %v3413
  %3415 = vmatprep.mubr.bf16.mxu0 %v2914
  %3416 = vmatmul.mubr.bf16.gmra.mxu0 %v2913
  %v3417 = vpop.f32.mrf.mxu0
  %v3418 = vadd.f32 %v2986, %v3417
  %v3419 = vpop.f32.mrf.mxu0
  %v3420 = vadd.f32 %v2990, %v3419
  %v3421 = vpop.f32.mrf.mxu0
  %v3422 = vadd.f32 %v2986, %v3421
  %v3423 = vpop.f32.mrf.mxu0
  %v3424 = vadd.f32 %v2990, %v3423
  %3425 = vdwg.mxu0
  %3426 = vmatprep.subr.bf16.mxu0 %v3232
  %3427 = vmatpush1.bf16.msra.mxu0 %v3231
  %3428 = vmatprep.subr.bf16.mxu0 %v3230
  %3429 = vmatpush1.bf16.msra.mxu0 %v3229
  %3430 = vmatprep.subr.bf16.mxu0 %v3228
  %3431 = vmatpush1.bf16.msra.mxu0 %v3227
  %3432 = vmatprep.subr.bf16.mxu0 %v3226
  %3433 = vmatpush1.bf16.msra.mxu0 %v3225
  %3434 = vmatprep.subr.bf16.mxu0 %v3224
  %3435 = vmatpush1.bf16.msra.mxu0 %v3223
  %3436 = vmatprep.subr.bf16.mxu0 %v3222
  %3437 = vmatpush1.bf16.msra.mxu0 %v3221
  %3438 = vmatprep.subr.bf16.mxu0 %v3220
  %3439 = vmatpush1.bf16.msra.mxu0 %v3219
  %3440 = vmatprep.subr.bf16.mxu0 %v3218
  %3441 = vmatpush1.bf16.msra.mxu0 %v3217
  %3442 = vmatprep.subr.bf16.mxu0 %v3248
  %3443 = vmatpush2.bf16.msra.mxu0 %v3247
  %3444 = vmatprep.subr.bf16.mxu0 %v3246
  %3445 = vmatpush2.bf16.msra.mxu0 %v3245
  %3446 = vmatprep.subr.bf16.mxu0 %v3244
  %3447 = vmatpush2.bf16.msra.mxu0 %v3243
  %3448 = vmatprep.subr.bf16.mxu0 %v3242
  %3449 = vmatpush2.bf16.msra.mxu0 %v3241
  %3450 = vmatprep.subr.bf16.mxu0 %v3240
  %3451 = vmatpush2.bf16.msra.mxu0 %v3239
  %3452 = vmatprep.subr.bf16.mxu0 %v3238
  %3453 = vmatpush2.bf16.msra.mxu0 %v3237
  %3454 = vmatprep.subr.bf16.mxu0 %v3236
  %3455 = vmatpush2.bf16.msra.mxu0 %v3235
  %3456 = vmatprep.subr.bf16.mxu0 %v3234
  %3457 = vmatpush2.bf16.msra.mxu0 %v3233
  %3458 = vmatprep.mubr.bf16.mxu0 %v2888
  %3459 = vmatmul.mubr.bf16.gmra.mxu0 %v2887
  %v3460 = vpop.f32.mrf.mxu0
  %v3461 = vadd.f32 %v3348, %v3460
  %v3462 = vpop.f32.mrf.mxu0
  %v3463 = vadd.f32 %v3350, %v3462
  %v3464 = vpop.f32.mrf.mxu0
  %v3465 = vadd.f32 %v3352, %v3464
  %v3466 = vpop.f32.mrf.mxu0
  %v3467 = vadd.f32 %v3354, %v3466
  %3468 = vmatprep.mubr.bf16.mxu0 %v2892
  %3469 = vmatmul.mubr.bf16.gmra.mxu0 %v2891
  %v3470 = vpop.f32.mrf.mxu0
  %v3471 = vadd.f32 %v3358, %v3470
  %v3472 = vpop.f32.mrf.mxu0
  %v3473 = vadd.f32 %v3360, %v3472
  %v3474 = vpop.f32.mrf.mxu0
  %v3475 = vadd.f32 %v3362, %v3474
  %v3476 = vpop.f32.mrf.mxu0
  %v3477 = vadd.f32 %v3364, %v3476
  %3478 = vmatprep.mubr.bf16.mxu0 %v2896
  %3479 = vmatmul.mubr.bf16.gmra.mxu0 %v2895
  %v3480 = vpop.f32.mrf.mxu0
  %v3481 = vadd.f32 %v3368, %v3480
  %v3482 = vpop.f32.mrf.mxu0
  %v3483 = vadd.f32 %v3370, %v3482
  %v3484 = vpop.f32.mrf.mxu0
  %v3485 = vadd.f32 %v3372, %v3484
  %v3486 = vpop.f32.mrf.mxu0
  %v3487 = vadd.f32 %v3374, %v3486
  %3488 = vmatprep.mubr.bf16.mxu0 %v2900
  %3489 = vmatmul.mubr.bf16.gmra.mxu0 %v2899
  %v3490 = vpop.f32.mrf.mxu0
  %v3491 = vadd.f32 %v3378, %v3490
  %v3492 = vpop.f32.mrf.mxu0
  %v3493 = vadd.f32 %v3380, %v3492
  %v3494 = vpop.f32.mrf.mxu0
  %v3495 = vadd.f32 %v3382, %v3494
  %v3496 = vpop.f32.mrf.mxu0
  %v3497 = vadd.f32 %v3384, %v3496
  %3498 = vmatprep.mubr.bf16.mxu0 %v2904
  %3499 = vmatmul.mubr.bf16.gmra.mxu0 %v2903
  %v3500 = vpop.f32.mrf.mxu0
  %v3501 = vadd.f32 %v3388, %v3500
  %v3502 = vpop.f32.mrf.mxu0
  %v3503 = vadd.f32 %v3390, %v3502
  %v3504 = vpop.f32.mrf.mxu0
  %v3505 = vadd.f32 %v3392, %v3504
  %v3506 = vpop.f32.mrf.mxu0
  %v3507 = vadd.f32 %v3394, %v3506
  %3508 = vmatprep.mubr.bf16.mxu0 %v2908
  %3509 = vmatmul.mubr.bf16.gmra.mxu0 %v2907
  %v3510 = vpop.f32.mrf.mxu0
  %v3511 = vadd.f32 %v3398, %v3510
  %v3512 = vpop.f32.mrf.mxu0
  %v3513 = vadd.f32 %v3400, %v3512
  %v3514 = vpop.f32.mrf.mxu0
  %v3515 = vadd.f32 %v3402, %v3514
  %v3516 = vpop.f32.mrf.mxu0
  %v3517 = vadd.f32 %v3404, %v3516
  %3518 = vmatprep.mubr.bf16.mxu0 %v2912
  %3519 = vmatmul.mubr.bf16.gmra.mxu0 %v2911
  %v3520 = vpop.f32.mrf.mxu0
  %v3521 = vadd.f32 %v3408, %v3520
  %v3522 = vpop.f32.mrf.mxu0
  %v3523 = vadd.f32 %v3410, %v3522
  %v3524 = vpop.f32.mrf.mxu0
  %v3525 = vadd.f32 %v3412, %v3524
  %v3526 = vpop.f32.mrf.mxu0
  %v3527 = vadd.f32 %v3414, %v3526
  %3528 = vmatprep.mubr.bf16.mxu0 %v2916
  %3529 = vmatmul.mubr.bf16.gmra.mxu0 %v2915
  %v3530 = vpop.f32.mrf.mxu0
  %v3531 = vadd.f32 %v3418, %v3530
  %v3532 = vpop.f32.mrf.mxu0
  %v3533 = vadd.f32 %v3420, %v3532
  %v3534 = vpop.f32.mrf.mxu0
  %v3535 = vadd.f32 %v3422, %v3534
  %v3536 = vpop.f32.mrf.mxu0
  %v3537 = vadd.f32 %v3424, %v3536
  %3538 = vdwg.mxu0
  %vm3539 = vcmp.gt.f32.partialorder %v3461, 0.0
  %vm3540 = vcmp.gt.f32.partialorder %v3463, 0.0
  %vm3541 = vcmp.gt.f32.partialorder %v3465, 0.0
  %vm3542 = vcmp.gt.f32.partialorder %v3467, 0.0
  %vm3543 = vcmp.gt.f32.partialorder %v3471, 0.0
  %vm3544 = vcmp.gt.f32.partialorder %v3473, 0.0
  %vm3545 = vcmp.gt.f32.partialorder %v3475, 0.0
  %vm3546 = vcmp.gt.f32.partialorder %v3477, 0.0
  %vm3547 = vcmp.gt.f32.partialorder %v3481, 0.0
  %vm3548 = vcmp.gt.f32.partialorder %v3483, 0.0
  %vm3549 = vcmp.gt.f32.partialorder %v3485, 0.0
  %vm3550 = vcmp.gt.f32.partialorder %v3487, 0.0
  %vm3551 = vcmp.gt.f32.partialorder %v3491, 0.0
  %vm3552 = vcmp.gt.f32.partialorder %v3493, 0.0
  %vm3553 = vcmp.gt.f32.partialorder %v3495, 0.0
  %vm3554 = vcmp.gt.f32.partialorder %v3497, 0.0
  %vm3555 = vcmp.gt.f32.partialorder %v3501, 0.0
  %vm3556 = vcmp.gt.f32.partialorder %v3503, 0.0
  %vm3557 = vcmp.gt.f32.partialorder %v3505, 0.0
  %vm3558 = vcmp.gt.f32.partialorder %v3507, 0.0
  %vm3559 = vcmp.gt.f32.partialorder %v3511, 0.0
  %vm3560 = vcmp.gt.f32.partialorder %v3513, 0.0
  %vm3561 = vcmp.gt.f32.partialorder %v3515, 0.0
  %vm3562 = vcmp.gt.f32.partialorder %v3517, 0.0
  %vm3563 = vcmp.gt.f32.partialorder %v3521, 0.0
  %vm3564 = vcmp.gt.f32.partialorder %v3523, 0.0
  %vm3565 = vcmp.gt.f32.partialorder %v3525, 0.0
  %vm3566 = vcmp.gt.f32.partialorder %v3527, 0.0
  %vm3567 = vcmp.gt.f32.partialorder %v3531, 0.0
  %vm3568 = vcmp.gt.f32.partialorder %v3533, 0.0
  %vm3569 = vcmp.gt.f32.partialorder %v3535, 0.0
  %vm3570 = vcmp.gt.f32.partialorder %v3537, 0.0
  %v3571 = vmul.f32 %v3461, 0.2
  %v3572 = vmul.f32 %v3463, 0.2
  %v3573 = vmul.f32 %v3465, 0.2
  %v3574 = vmul.f32 %v3467, 0.2
  %v3575 = vmul.f32 %v3471, 0.2
  %v3576 = vmul.f32 %v3473, 0.2
  %v3577 = vmul.f32 %v3475, 0.2
  %v3578 = vmul.f32 %v3477, 0.2
  %v3579 = vmul.f32 %v3481, 0.2
  %v3580 = vmul.f32 %v3483, 0.2
  %v3581 = vmul.f32 %v3485, 0.2
  %v3582 = vmul.f32 %v3487, 0.2
  %v3583 = vmul.f32 %v3491, 0.2
  %v3584 = vmul.f32 %v3493, 0.2
  %v3585 = vmul.f32 %v3495, 0.2
  %v3586 = vmul.f32 %v3497, 0.2
  %v3587 = vmul.f32 %v3501, 0.2
  %v3588 = vmul.f32 %v3503, 0.2
  %v3589 = vmul.f32 %v3505, 0.2
  %v3590 = vmul.f32 %v3507, 0.2
  %v3591 = vmul.f32 %v3511, 0.2
  %v3592 = vmul.f32 %v3513, 0.2
  %v3593 = vmul.f32 %v3515, 0.2
  %v3594 = vmul.f32 %v3517, 0.2
  %v3595 = vmul.f32 %v3521, 0.2
  %v3596 = vmul.f32 %v3523, 0.2
  %v3597 = vmul.f32 %v3525, 0.2
  %v3598 = vmul.f32 %v3527, 0.2
  %v3599 = vmul.f32 %v3531, 0.2
  %v3600 = vmul.f32 %v3533, 0.2
  %v3601 = vmul.f32 %v3535, 0.2
  %v3602 = vmul.f32 %v3537, 0.2
  %v3603 = vsel %vm3539, %v3461, %v3571
  %v3604 = vsel %vm3540, %v3463, %v3572
  %v3605 = vsel %vm3541, %v3465, %v3573
  %v3606 = vsel %vm3542, %v3467, %v3574
  %v3607 = vsel %vm3543, %v3471, %v3575
  %v3608 = vsel %vm3544, %v3473, %v3576
  %v3609 = vsel %vm3545, %v3475, %v3577
  %v3610 = vsel %vm3546, %v3477, %v3578
  %v3611 = vsel %vm3547, %v3481, %v3579
  %v3612 = vsel %vm3548, %v3483, %v3580
  %v3613 = vsel %vm3549, %v3485, %v3581
  %v3614 = vsel %vm3550, %v3487, %v3582
  %v3615 = vsel %vm3551, %v3491, %v3583
  %v3616 = vsel %vm3552, %v3493, %v3584
  %v3617 = vsel %vm3553, %v3495, %v3585
  %v3618 = vsel %vm3554, %v3497, %v3586
  %v3619 = vsel %vm3555, %v3501, %v3587
  %v3620 = vsel %vm3556, %v3503, %v3588
  %v3621 = vsel %vm3557, %v3505, %v3589
  %v3622 = vsel %vm3558, %v3507, %v3590
  %v3623 = vsel %vm3559, %v3511, %v3591
  %v3624 = vsel %vm3560, %v3513, %v3592
  %v3625 = vsel %vm3561, %v3515, %v3593
  %v3626 = vsel %vm3562, %v3517, %v3594
  %v3627 = vsel %vm3563, %v3521, %v3595
  %v3628 = vsel %vm3564, %v3523, %v3596
  %v3629 = vsel %vm3565, %v3525, %v3597
  %v3630 = vsel %vm3566, %v3527, %v3598
  %v3631 = vsel %vm3567, %v3531, %v3599
  %v3632 = vsel %vm3568, %v3533, %v3600
  %v3633 = vsel %vm3569, %v3535, %v3601
  %v3634 = vsel %vm3570, %v3537, %v3602
  %v3635 = vpack.c.bf16 %v3605, %v3603
  %v3636 = vpack.c.bf16 %v3606, %v3604
  %v3637 = vpack.c.bf16 %v3609, %v3607
  %v3638 = vpack.c.bf16 %v3610, %v3608
  %v3639 = vpack.c.bf16 %v3613, %v3611
  %v3640 = vpack.c.bf16 %v3614, %v3612
  %v3641 = vpack.c.bf16 %v3617, %v3615
  %v3642 = vpack.c.bf16 %v3618, %v3616
  %v3643 = vpack.c.bf16 %v3621, %v3619
  %v3644 = vpack.c.bf16 %v3622, %v3620
  %v3645 = vpack.c.bf16 %v3625, %v3623
  %v3646 = vpack.c.bf16 %v3626, %v3624
  %v3647 = vpack.c.bf16 %v3629, %v3627
  %v3648 = vpack.c.bf16 %v3630, %v3628
  %v3649 = vpack.c.bf16 %v3633, %v3631
  %v3650 = vpack.c.bf16 %v3634, %v3632
  %v3651 = vld [vmem:[%s5] sm:$0xf]
  %v3652 = vld [vmem:[%s5 + $0x4] sm:$0xf]
  %v3653 = vld [vmem:[%s5 + $0x8] sm:$0xf]
  %v3654 = vld [vmem:[%s5 + $0xc] sm:$0xf]
  %v3655 = vld [vmem:[%s5 + $0x10] sm:$0xf]
  %v3656 = vld [vmem:[%s5 + $0x14] sm:$0xf]
  %v3657 = vld [vmem:[%s5 + $0x18] sm:$0xf]
  %v3658 = vld [vmem:[%s5 + $0x1c] sm:$0xf]
  %v3659 = vld [vmem:[%s5 + $0x20] sm:$0xf]
  %v3660 = vld [vmem:[%s5 + $0x24] sm:$0xf]
  %v3661 = vld [vmem:[%s5 + $0x28] sm:$0xf]
  %v3662 = vld [vmem:[%s5 + $0x2c] sm:$0xf]
  %v3663 = vld [vmem:[%s5 + $0x30] sm:$0xf]
  %v3664 = vld [vmem:[%s5 + $0x34] sm:$0xf]
  %v3665 = vld [vmem:[%s5 + $0x38] sm:$0xf]
  %v3666 = vld [vmem:[%s5 + $0x3c] sm:$0xf]
  %v3667 = vld [vmem:[%s5 + $0x40] sm:$0xf]
  %v3668 = vld [vmem:[%s5 + $0x44] sm:$0xf]
  %v3669 = vld [vmem:[%s5 + $0x48] sm:$0xf]
  %v3670 = vld [vmem:[%s5 + $0x4c] sm:$0xf]
  %v3671 = vld [vmem:[%s5 + $0x50] sm:$0xf]
  %v3672 = vld [vmem:[%s5 + $0x54] sm:$0xf]
  %v3673 = vld [vmem:[%s5 + $0x58] sm:$0xf]
  %v3674 = vld [vmem:[%s5 + $0x5c] sm:$0xf]
  %v3675 = vld [vmem:[%s5 + $0x60] sm:$0xf]
  %v3676 = vld [vmem:[%s5 + $0x64] sm:$0xf]
  %v3677 = vld [vmem:[%s5 + $0x68] sm:$0xf]
  %v3678 = vld [vmem:[%s5 + $0x6c] sm:$0xf]
  %v3679 = vld [vmem:[%s5 + $0x70] sm:$0xf]
  %v3680 = vld [vmem:[%s5 + $0x74] sm:$0xf]
  %v3681 = vld [vmem:[%s5 + $0x78] sm:$0xf]
  %v3682 = vld [vmem:[%s5 + $0x7c] sm:$0xf]
  %v3683 = vld [vmem:[%s6] sm:$0x1]
  %v3685 = vlaneseq
  %v3686 = vshrl.u32 %v3685, 7
  %v3687 = vsub.s32 0, %v3686
  %v3688 = vrot.slane %v3683, %v3687
  %v3722 = vunpack.c.l.b16 %v3651
  %v3723 = vunpack.c.l.b16 %v3652
  %v3724 = vunpack.c.l.b16 %v3653
  %v3725 = vunpack.c.l.b16 %v3654
  %v3726 = vunpack.c.l.b16 %v3655
  %v3727 = vunpack.c.l.b16 %v3656
  %v3728 = vunpack.c.l.b16 %v3657
  %v3729 = vunpack.c.l.b16 %v3658
  %v3730 = vunpack.c.l.b16 %v3659
  %v3731 = vunpack.c.l.b16 %v3660
  %v3732 = vunpack.c.l.b16 %v3661
  %v3733 = vunpack.c.l.b16 %v3662
  %v3734 = vunpack.c.l.b16 %v3663
  %v3735 = vunpack.c.l.b16 %v3664
  %v3736 = vunpack.c.l.b16 %v3665
  %v3737 = vunpack.c.l.b16 %v3666
  %v3738 = vunpack.c.l.b16 %v3667
  %v3739 = vunpack.c.l.b16 %v3668
  %v3740 = vunpack.c.l.b16 %v3669
  %v3741 = vunpack.c.l.b16 %v3670
  %v3742 = vunpack.c.l.b16 %v3671
  %v3743 = vunpack.c.l.b16 %v3672
  %v3744 = vunpack.c.l.b16 %v3673
  %v3745 = vunpack.c.l.b16 %v3674
  %v3746 = vunpack.c.l.b16 %v3675
  %v3747 = vunpack.c.l.b16 %v3676
  %v3748 = vunpack.c.l.b16 %v3677
  %v3749 = vunpack.c.l.b16 %v3678
  %v3750 = vunpack.c.l.b16 %v3679
  %v3751 = vunpack.c.l.b16 %v3680
  %v3752 = vunpack.c.l.b16 %v3681
  %v3753 = vunpack.c.l.b16 %v3682
  %v3754 = vpack.c.b16 %v3723, %v3722
  %v3755 = vpack.c.b16 %v3725, %v3724
  %v3756 = vpack.c.b16 %v3727, %v3726
  %v3757 = vpack.c.b16 %v3729, %v3728
  %v3758 = vpack.c.b16 %v3731, %v3730
  %v3759 = vpack.c.b16 %v3733, %v3732
  %v3760 = vpack.c.b16 %v3735, %v3734
  %v3761 = vpack.c.b16 %v3737, %v3736
  %v3762 = vpack.c.b16 %v3739, %v3738
  %v3763 = vpack.c.b16 %v3741, %v3740
  %v3764 = vpack.c.b16 %v3743, %v3742
  %v3765 = vpack.c.b16 %v3745, %v3744
  %v3766 = vpack.c.b16 %v3747, %v3746
  %v3767 = vpack.c.b16 %v3749, %v3748
  %v3768 = vpack.c.b16 %v3751, %v3750
  %v3769 = vpack.c.b16 %v3753, %v3752
  %3786 = vmatprep.subr.bf16.mxu0 0
  %3787 = vmatpush1.bf16.msra.mxu0 %v3761
  %3788 = vmatprep.subr.bf16.mxu0 0
  %3789 = vmatpush1.bf16.msra.mxu0 %v3760
  %3790 = vmatprep.subr.bf16.mxu0 0
  %3791 = vmatpush1.bf16.msra.mxu0 %v3759
  %3792 = vmatprep.subr.bf16.mxu0 0
  %3793 = vmatpush1.bf16.msra.mxu0 %v3758
  %3794 = vmatprep.subr.bf16.mxu0 0
  %3795 = vmatpush1.bf16.msra.mxu0 %v3757
  %3796 = vmatprep.subr.bf16.mxu0 0
  %3797 = vmatpush1.bf16.msra.mxu0 %v3756
  %3798 = vmatprep.subr.bf16.mxu0 0
  %3799 = vmatpush1.bf16.msra.mxu0 %v3755
  %3800 = vmatprep.subr.bf16.mxu0 0
  %3801 = vmatpush1.bf16.msra.mxu0 %v3754
  %3802 = vmatprep.subr.bf16.mxu0 0
  %3803 = vmatpush2.bf16.msra.mxu0 %v3769
  %3804 = vmatprep.subr.bf16.mxu0 0
  %3805 = vmatpush2.bf16.msra.mxu0 %v3768
  %3806 = vmatprep.subr.bf16.mxu0 0
  %3807 = vmatpush2.bf16.msra.mxu0 %v3767
  %3808 = vmatprep.subr.bf16.mxu0 0
  %3809 = vmatpush2.bf16.msra.mxu0 %v3766
  %3810 = vmatprep.subr.bf16.mxu0 0
  %3811 = vmatpush2.bf16.msra.mxu0 %v3765
  %3812 = vmatprep.subr.bf16.mxu0 0
  %3813 = vmatpush2.bf16.msra.mxu0 %v3764
  %3814 = vmatprep.subr.bf16.mxu0 0
  %3815 = vmatpush2.bf16.msra.mxu0 %v3763
  %3816 = vmatprep.subr.bf16.mxu0 0
  %3817 = vmatpush2.bf16.msra.mxu0 %v3762
  %3818 = vmatprep.mubr.bf16.mxu0 %v3636
  %3819 = vmatmul.mubr.bf16.gmra.mxu0 %v3635
  %v3820 = vpop.f32.mrf.mxu0
  %v3821 = vadd.f32 %v3688, %v3820
  %v3822 = vpop.f32.mrf.mxu0
  %v3823 = vpop.f32.mrf.mxu0
  %v3824 = vadd.f32 %v3688, %v3823
  %v3825 = vpop.f32.mrf.mxu0
  %3826 = vmatprep.mubr.bf16.mxu0 %v3638
  %3827 = vmatmul.mubr.bf16.gmra.mxu0 %v3637
  %v3828 = vpop.f32.mrf.mxu0
  %v3829 = vadd.f32 %v3688, %v3828
  %v3830 = vpop.f32.mrf.mxu0
  %v3831 = vpop.f32.mrf.mxu0
  %v3832 = vadd.f32 %v3688, %v3831
  %v3833 = vpop.f32.mrf.mxu0
  %3834 = vmatprep.mubr.bf16.mxu0 %v3640
  %3835 = vmatmul.mubr.bf16.gmra.mxu0 %v3639
  %v3836 = vpop.f32.mrf.mxu0
  %v3837 = vadd.f32 %v3688, %v3836
  %v3838 = vpop.f32.mrf.mxu0
  %v3839 = vpop.f32.mrf.mxu0
  %v3840 = vadd.f32 %v3688, %v3839
  %v3841 = vpop.f32.mrf.mxu0
  %3842 = vmatprep.mubr.bf16.mxu0 %v3642
  %3843 = vmatmul.mubr.bf16.gmra.mxu0 %v3641
  %v3844 = vpop.f32.mrf.mxu0
  %v3845 = vadd.f32 %v3688, %v3844
  %v3846 = vpop.f32.mrf.mxu0
  %v3847 = vpop.f32.mrf.mxu0
  %v3848 = vadd.f32 %v3688, %v3847
  %v3849 = vpop.f32.mrf.mxu0
  %3850 = vmatprep.mubr.bf16.mxu0 %v3644
  %3851 = vmatmul.mubr.bf16.gmra.mxu0 %v3643
  %v3852 = vpop.f32.mrf.mxu0
  %v3853 = vadd.f32 %v3688, %v3852
  %v3854 = vpop.f32.mrf.mxu0
  %v3855 = vpop.f32.mrf.mxu0
  %v3856 = vadd.f32 %v3688, %v3855
  %v3857 = vpop.f32.mrf.mxu0
  %3858 = vmatprep.mubr.bf16.mxu0 %v3646
  %3859 = vmatmul.mubr.bf16.gmra.mxu0 %v3645
  %v3860 = vpop.f32.mrf.mxu0
  %v3861 = vadd.f32 %v3688, %v3860
  %v3862 = vpop.f32.mrf.mxu0
  %v3863 = vpop.f32.mrf.mxu0
  %v3864 = vadd.f32 %v3688, %v3863
  %v3865 = vpop.f32.mrf.mxu0
  %3866 = vmatprep.mubr.bf16.mxu0 %v3648
  %3867 = vmatmul.mubr.bf16.gmra.mxu0 %v3647
  %v3868 = vpop.f32.mrf.mxu0
  %v3869 = vadd.f32 %v3688, %v3868
  %v3870 = vpop.f32.mrf.mxu0
  %v3871 = vpop.f32.mrf.mxu0
  %v3872 = vadd.f32 %v3688, %v3871
  %v3873 = vpop.f32.mrf.mxu0
  %3874 = vmatprep.mubr.bf16.mxu0 %v3650
  %3875 = vmatmul.mubr.bf16.gmra.mxu0 %v3649
  %v3876 = vpop.f32.mrf.mxu0
  %v3877 = vadd.f32 %v3688, %v3876
  %v3878 = vpop.f32.mrf.mxu0
  %v3879 = vpop.f32.mrf.mxu0
  %v3880 = vadd.f32 %v3688, %v3879
  %v3881 = vpop.f32.mrf.mxu0
  %3882 = vdwg.mxu0
  %vm3883 = vcmp.gt.f32.partialorder %v3821, 0.0
  %vm3884 = vcmp.gt.f32.partialorder %v3824, 0.0
  %vm3885 = vcmp.gt.f32.partialorder %v3829, 0.0
  %vm3886 = vcmp.gt.f32.partialorder %v3832, 0.0
  %vm3887 = vcmp.gt.f32.partialorder %v3837, 0.0
  %vm3888 = vcmp.gt.f32.partialorder %v3840, 0.0
  %vm3889 = vcmp.gt.f32.partialorder %v3845, 0.0
  %vm3890 = vcmp.gt.f32.partialorder %v3848, 0.0
  %vm3891 = vcmp.gt.f32.partialorder %v3853, 0.0
  %vm3892 = vcmp.gt.f32.partialorder %v3856, 0.0
  %vm3893 = vcmp.gt.f32.partialorder %v3861, 0.0
  %vm3894 = vcmp.gt.f32.partialorder %v3864, 0.0
  %vm3895 = vcmp.gt.f32.partialorder %v3869, 0.0
  %vm3896 = vcmp.gt.f32.partialorder %v3872, 0.0
  %vm3897 = vcmp.gt.f32.partialorder %v3877, 0.0
  %vm3898 = vcmp.gt.f32.partialorder %v3880, 0.0
  %v3899 = vmul.f32 %v3821, 0.2
  %v3900 = vmul.f32 %v3824, 0.2
  %v3901 = vmul.f32 %v3829, 0.2
  %v3902 = vmul.f32 %v3832, 0.2
  %v3903 = vmul.f32 %v3837, 0.2
  %v3904 = vmul.f32 %v3840, 0.2
  %v3905 = vmul.f32 %v3845, 0.2
  %v3906 = vmul.f32 %v3848, 0.2
  %v3907 = vmul.f32 %v3853, 0.2
  %v3908 = vmul.f32 %v3856, 0.2
  %v3909 = vmul.f32 %v3861, 0.2
  %v3910 = vmul.f32 %v3864, 0.2
  %v3911 = vmul.f32 %v3869, 0.2
  %v3912 = vmul.f32 %v3872, 0.2
  %v3913 = vmul.f32 %v3877, 0.2
  %v3914 = vmul.f32 %v3880, 0.2
  %v3915 = vsel %vm3883, %v3821, %v3899
  %v3916 = vsel %vm3884, %v3824, %v3900
  %v3917 = vsel %vm3885, %v3829, %v3901
  %v3918 = vsel %vm3886, %v3832, %v3902
  %v3919 = vsel %vm3887, %v3837, %v3903
  %v3920 = vsel %vm3888, %v3840, %v3904
  %v3921 = vsel %vm3889, %v3845, %v3905
  %v3922 = vsel %vm3890, %v3848, %v3906
  %v3923 = vsel %vm3891, %v3853, %v3907
  %v3924 = vsel %vm3892, %v3856, %v3908
  %v3925 = vsel %vm3893, %v3861, %v3909
  %v3926 = vsel %vm3894, %v3864, %v3910
  %v3927 = vsel %vm3895, %v3869, %v3911
  %v3928 = vsel %vm3896, %v3872, %v3912
  %v3929 = vsel %vm3897, %v3877, %v3913
  %v3930 = vsel %vm3898, %v3880, %v3914
  %v3931 = vpack.c.bf16 %v3916, %v3915
  %v3932 = vpack.c.bf16 %v3918, %v3917
  %v3933 = vpack.c.bf16 %v3920, %v3919
  %v3934 = vpack.c.bf16 %v3922, %v3921
  %v3935 = vpack.c.bf16 %v3924, %v3923
  %v3936 = vpack.c.bf16 %v3926, %v3925
  %v3937 = vpack.c.bf16 %v3928, %v3927
  %v3938 = vpack.c.bf16 %v3930, %v3929
  %v3939 = vld [vmem:[%s7] sm:$0xf]
  %v3940 = vld [vmem:[%s7 + $0x4] sm:$0xf]
  %v3941 = vld [vmem:[%s7 + $0x8] sm:$0xf]
  %v3942 = vld [vmem:[%s7 + $0xc] sm:$0xf]
  %v3943 = vld [vmem:[%s7 + $0x10] sm:$0xf]
  %v3944 = vld [vmem:[%s7 + $0x14] sm:$0xf]
  %v3945 = vld [vmem:[%s7 + $0x18] sm:$0xf]
  %v3946 = vld [vmem:[%s7 + $0x1c] sm:$0xf]
  %v3947 = vld [vmem:[%s7 + $0x20] sm:$0xf]
  %v3948 = vld [vmem:[%s7 + $0x24] sm:$0xf]
  %v3949 = vld [vmem:[%s7 + $0x28] sm:$0xf]
  %v3950 = vld [vmem:[%s7 + $0x2c] sm:$0xf]
  %v3951 = vld [vmem:[%s7 + $0x30] sm:$0xf]
  %v3952 = vld [vmem:[%s7 + $0x34] sm:$0xf]
  %v3953 = vld [vmem:[%s7 + $0x38] sm:$0xf]
  %v3954 = vld [vmem:[%s7 + $0x3c] sm:$0xf]
  %v3955 = vld [vmem:[%s8] sm:$0x1]
  %v3957 = vlaneseq
  %v3958 = vshrl.u32 %v3957, 7
  %v3959 = vsub.s32 0, %v3958
  %v3960 = vrot.slane %v3955, %v3959
  %v3978 = vunpack.c.l.b16 %v3939
  %v3979 = vunpack.c.l.b16 %v3940
  %v3980 = vunpack.c.l.b16 %v3941
  %v3981 = vunpack.c.l.b16 %v3942
  %v3982 = vunpack.c.l.b16 %v3943
  %v3983 = vunpack.c.l.b16 %v3944
  %v3984 = vunpack.c.l.b16 %v3945
  %v3985 = vunpack.c.l.b16 %v3946
  %v3986 = vunpack.c.l.b16 %v3947
  %v3987 = vunpack.c.l.b16 %v3948
  %v3988 = vunpack.c.l.b16 %v3949
  %v3989 = vunpack.c.l.b16 %v3950
  %v3990 = vunpack.c.l.b16 %v3951
  %v3991 = vunpack.c.l.b16 %v3952
  %v3992 = vunpack.c.l.b16 %v3953
  %v3993 = vunpack.c.l.b16 %v3954
  %v3994 = vpack.c.b16 %v3979, %v3978
  %v3995 = vpack.c.b16 %v3981, %v3980
  %v3996 = vpack.c.b16 %v3983, %v3982
  %v3997 = vpack.c.b16 %v3985, %v3984
  %v3998 = vpack.c.b16 %v3987, %v3986
  %v3999 = vpack.c.b16 %v3989, %v3988
  %v4000 = vpack.c.b16 %v3991, %v3990
  %v4001 = vpack.c.b16 %v3993, %v3992
  %4010 = vmatprep.subr.bf16.mxu0 0
  %4011 = vmatpush1.bf16.msra.mxu0 %v4001
  %4012 = vmatprep.subr.bf16.mxu0 0
  %4013 = vmatpush1.bf16.msra.mxu0 %v4000
  %4014 = vmatprep.subr.bf16.mxu0 0
  %4015 = vmatpush1.bf16.msra.mxu0 %v3999
  %4016 = vmatprep.subr.bf16.mxu0 0
  %4017 = vmatpush1.bf16.msra.mxu0 %v3998
  %4018 = vmatprep.subr.bf16.mxu0 0
  %4019 = vmatpush1.bf16.msra.mxu0 %v3997
  %4020 = vmatprep.subr.bf16.mxu0 0
  %4021 = vmatpush1.bf16.msra.mxu0 %v3996
  %4022 = vmatprep.subr.bf16.mxu0 0
  %4023 = vmatpush1.bf16.msra.mxu0 %v3995
  %4024 = vmatprep.subr.bf16.mxu0 0
  %4025 = vmatpush1.bf16.msra.mxu0 %v3994
  %4026 = vmatprep.subr.bf16.mxu0 0
  %4027 = vmatpush2.bf16.msra.mxu0 0
  %4028 = vmatprep.subr.bf16.mxu0 0
  %4029 = vmatpush2.bf16.msra.mxu0 0
  %4030 = vmatprep.subr.bf16.mxu0 0
  %4031 = vmatpush2.bf16.msra.mxu0 0
  %4032 = vmatprep.subr.bf16.mxu0 0
  %4033 = vmatpush2.bf16.msra.mxu0 0
  %4034 = vmatprep.subr.bf16.mxu0 0
  %4035 = vmatpush2.bf16.msra.mxu0 0
  %4036 = vmatprep.subr.bf16.mxu0 0
  %4037 = vmatpush2.bf16.msra.mxu0 0
  %4038 = vmatprep.subr.bf16.mxu0 0
  %4039 = vmatpush2.bf16.msra.mxu0 0
  %4040 = vmatprep.subr.bf16.mxu0 0
  %4041 = vmatpush2.bf16.msra.mxu0 0
  %4042 = vmatprep.mubr.bf16.mxu0 0
  %4043 = vmatmul.mubr.bf16.gmra.mxu0 %v3931
  %v4044 = vpop.f32.mrf.mxu0
  %v4045 = vadd.f32 %v3960, %v4044
  %v4046 = vpop.f32.mrf.mxu0
  %v4047 = vpop.f32.mrf.mxu0
  %v4048 = vadd.f32 %v3960, %v4047
  %v4049 = vpop.f32.mrf.mxu0
  %4050 = vmatprep.mubr.bf16.mxu0 0
  %4051 = vmatmul.mubr.bf16.gmra.mxu0 %v3932
  %v4052 = vpop.f32.mrf.mxu0
  %v4053 = vadd.f32 %v3960, %v4052
  %v4054 = vpop.f32.mrf.mxu0
  %v4055 = vpop.f32.mrf.mxu0
  %v4056 = vadd.f32 %v3960, %v4055
  %v4057 = vpop.f32.mrf.mxu0
  %4058 = vmatprep.mubr.bf16.mxu0 0
  %4059 = vmatmul.mubr.bf16.gmra.mxu0 %v3933
  %v4060 = vpop.f32.mrf.mxu0
  %v4061 = vadd.f32 %v3960, %v4060
  %v4062 = vpop.f32.mrf.mxu0
  %v4063 = vpop.f32.mrf.mxu0
  %v4064 = vadd.f32 %v3960, %v4063
  %v4065 = vpop.f32.mrf.mxu0
  %4066 = vmatprep.mubr.bf16.mxu0 0
  %4067 = vmatmul.mubr.bf16.gmra.mxu0 %v3934
  %v4068 = vpop.f32.mrf.mxu0
  %v4069 = vadd.f32 %v3960, %v4068
  %v4070 = vpop.f32.mrf.mxu0
  %v4071 = vpop.f32.mrf.mxu0
  %v4072 = vadd.f32 %v3960, %v4071
  %v4073 = vpop.f32.mrf.mxu0
  %4074 = vmatprep.mubr.bf16.mxu0 0
  %4075 = vmatmul.mubr.bf16.gmra.mxu0 %v3935
  %v4076 = vpop.f32.mrf.mxu0
  %v4077 = vadd.f32 %v3960, %v4076
  %v4078 = vpop.f32.mrf.mxu0
  %v4079 = vpop.f32.mrf.mxu0
  %v4080 = vadd.f32 %v3960, %v4079
  %v4081 = vpop.f32.mrf.mxu0
  %4082 = vmatprep.mubr.bf16.mxu0 0
  %4083 = vmatmul.mubr.bf16.gmra.mxu0 %v3936
  %v4084 = vpop.f32.mrf.mxu0
  %v4085 = vadd.f32 %v3960, %v4084
  %v4086 = vpop.f32.mrf.mxu0
  %v4087 = vpop.f32.mrf.mxu0
  %v4088 = vadd.f32 %v3960, %v4087
  %v4089 = vpop.f32.mrf.mxu0
  %4090 = vmatprep.mubr.bf16.mxu0 0
  %4091 = vmatmul.mubr.bf16.gmra.mxu0 %v3937
  %v4092 = vpop.f32.mrf.mxu0
  %v4093 = vadd.f32 %v3960, %v4092
  %v4094 = vpop.f32.mrf.mxu0
  %v4095 = vpop.f32.mrf.mxu0
  %v4096 = vadd.f32 %v3960, %v4095
  %v4097 = vpop.f32.mrf.mxu0
  %4098 = vmatprep.mubr.bf16.mxu0 0
  %4099 = vmatmul.mubr.bf16.gmra.mxu0 %v3938
  %v4100 = vpop.f32.mrf.mxu0
  %v4101 = vadd.f32 %v3960, %v4100
  %v4102 = vpop.f32.mrf.mxu0
  %v4103 = vpop.f32.mrf.mxu0
  %v4104 = vadd.f32 %v3960, %v4103
  %v4105 = vpop.f32.mrf.mxu0
  %4106 = vdwg.mxu0
  %vm4107 = vcmp.gt.f32.partialorder %v4045, 0.0
  %vm4108 = vcmp.gt.f32.partialorder %v4048, 0.0
  %vm4109 = vcmp.gt.f32.partialorder %v4053, 0.0
  %vm4110 = vcmp.gt.f32.partialorder %v4056, 0.0
  %vm4111 = vcmp.gt.f32.partialorder %v4061, 0.0
  %vm4112 = vcmp.gt.f32.partialorder %v4064, 0.0
  %vm4113 = vcmp.gt.f32.partialorder %v4069, 0.0
  %vm4114 = vcmp.gt.f32.partialorder %v4072, 0.0
  %vm4115 = vcmp.gt.f32.partialorder %v4077, 0.0
  %vm4116 = vcmp.gt.f32.partialorder %v4080, 0.0
  %vm4117 = vcmp.gt.f32.partialorder %v4085, 0.0
  %vm4118 = vcmp.gt.f32.partialorder %v4088, 0.0
  %vm4119 = vcmp.gt.f32.partialorder %v4093, 0.0
  %vm4120 = vcmp.gt.f32.partialorder %v4096, 0.0
  %vm4121 = vcmp.gt.f32.partialorder %v4101, 0.0
  %vm4122 = vcmp.gt.f32.partialorder %v4104, 0.0
  %v4123 = vmul.f32 %v4045, 0.2
  %v4124 = vmul.f32 %v4048, 0.2
  %v4125 = vmul.f32 %v4053, 0.2
  %v4126 = vmul.f32 %v4056, 0.2
  %v4127 = vmul.f32 %v4061, 0.2
  %v4128 = vmul.f32 %v4064, 0.2
  %v4129 = vmul.f32 %v4069, 0.2
  %v4130 = vmul.f32 %v4072, 0.2
  %v4131 = vmul.f32 %v4077, 0.2
  %v4132 = vmul.f32 %v4080, 0.2
  %v4133 = vmul.f32 %v4085, 0.2
  %v4134 = vmul.f32 %v4088, 0.2
  %v4135 = vmul.f32 %v4093, 0.2
  %v4136 = vmul.f32 %v4096, 0.2
  %v4137 = vmul.f32 %v4101, 0.2
  %v4138 = vmul.f32 %v4104, 0.2
  %v4139 = vsel %vm4107, %v4045, %v4123
  %v4140 = vsel %vm4108, %v4048, %v4124
  %v4141 = vsel %vm4109, %v4053, %v4125
  %v4142 = vsel %vm4110, %v4056, %v4126
  %v4143 = vsel %vm4111, %v4061, %v4127
  %v4144 = vsel %vm4112, %v4064, %v4128
  %v4145 = vsel %vm4113, %v4069, %v4129
  %v4146 = vsel %vm4114, %v4072, %v4130
  %v4147 = vsel %vm4115, %v4077, %v4131
  %v4148 = vsel %vm4116, %v4080, %v4132
  %v4149 = vsel %vm4117, %v4085, %v4133
  %v4150 = vsel %vm4118, %v4088, %v4134
  %v4151 = vsel %vm4119, %v4093, %v4135
  %v4152 = vsel %vm4120, %v4096, %v4136
  %v4153 = vsel %vm4121, %v4101, %v4137
  %v4154 = vsel %vm4122, %v4104, %v4138
  %v4155 = vpack.c.bf16 %v4140, %v4139
  %v4156 = vpack.c.bf16 %v4142, %v4141
  %v4157 = vpack.c.bf16 %v4144, %v4143
  %v4158 = vpack.c.bf16 %v4146, %v4145
  %v4159 = vpack.c.bf16 %v4148, %v4147
  %v4160 = vpack.c.bf16 %v4150, %v4149
  %v4161 = vpack.c.bf16 %v4152, %v4151
  %v4162 = vpack.c.bf16 %v4154, %v4153
  %v4163 = vld [vmem:[%s9] sm:$0xf]
  %v4164 = vld [vmem:[%s9 + $0x4] sm:$0xf]
  %v4165 = vld [vmem:[%s9 + $0x8] sm:$0xf]
  %v4166 = vld [vmem:[%s9 + $0xc] sm:$0xf]
  %v4167 = vld [vmem:[%s9 + $0x10] sm:$0xf]
  %v4168 = vld [vmem:[%s9 + $0x14] sm:$0xf]
  %v4169 = vld [vmem:[%s9 + $0x18] sm:$0xf]
  %v4170 = vld [vmem:[%s9 + $0x1c] sm:$0xf]
  %v4171 = vld [vmem:[%s10] sm:$0x1]
  %v4173 = vlaneseq
  %v4174 = vshrl.u32 %v4173, 7
  %v4175 = vsub.s32 0, %v4174
  %v4176 = vrot.slane %v4171, %v4175
  %v4186 = vunpack.c.l.b16 %v4163
  %v4187 = vunpack.c.l.b16 %v4164
  %v4188 = vunpack.c.l.b16 %v4165
  %v4189 = vunpack.c.l.b16 %v4166
  %v4190 = vunpack.c.l.b16 %v4167
  %v4191 = vunpack.c.l.b16 %v4168
  %v4192 = vunpack.c.l.b16 %v4169
  %v4193 = vunpack.c.l.b16 %v4170
  %v4194 = vpack.c.b16 %v4187, %v4186
  %v4195 = vpack.c.b16 %v4189, %v4188
  %v4196 = vpack.c.b16 %v4191, %v4190
  %v4197 = vpack.c.b16 %v4193, %v4192
  %vm4202 = vcmask 523264
  %v4204 = vsel %vm4202, %v4155, 0
  %v4207 = vsel %vm4202, %v4156, 0
  %v4210 = vsel %vm4202, %v4157, 0
  %v4213 = vsel %vm4202, %v4158, 0
  %v4216 = vsel %vm4202, %v4159, 0
  %v4219 = vsel %vm4202, %v4160, 0
  %v4222 = vsel %vm4202, %v4161, 0
  %v4225 = vsel %vm4202, %v4162, 0
  %4227 = vmatprep.subr.bf16.mxu0 0
  %4228 = vmatpush1.bf16.msra.mxu0 0
  %4229 = vmatprep.subr.bf16.mxu0 0
  %4230 = vmatpush1.bf16.msra.mxu0 0
  %4231 = vmatprep.subr.bf16.mxu0 0
  %4232 = vmatpush1.bf16.msra.mxu0 0
  %4233 = vmatprep.subr.bf16.mxu0 0
  %4234 = vmatpush1.bf16.msra.mxu0 0
  %4235 = vmatprep.subr.bf16.mxu0 0
  %4236 = vmatpush1.bf16.msra.mxu0 %v4197
  %4237 = vmatprep.subr.bf16.mxu0 0
  %4238 = vmatpush1.bf16.msra.mxu0 %v4196
  %4239 = vmatprep.subr.bf16.mxu0 0
  %4240 = vmatpush1.bf16.msra.mxu0 %v4195
  %4241 = vmatprep.subr.bf16.mxu0 0
  %4242 = vmatpush1.bf16.msra.mxu0 %v4194
  %4243 = vmatprep.subr.bf16.mxu0 0
  %4244 = vmatpush2.bf16.msra.mxu0 0
  %4245 = vmatprep.subr.bf16.mxu0 0
  %4246 = vmatpush2.bf16.msra.mxu0 0
  %4247 = vmatprep.subr.bf16.mxu0 0
  %4248 = vmatpush2.bf16.msra.mxu0 0
  %4249 = vmatprep.subr.bf16.mxu0 0
  %4250 = vmatpush2.bf16.msra.mxu0 0
  %4251 = vmatprep.subr.bf16.mxu0 0
  %4252 = vmatpush2.bf16.msra.mxu0 0
  %4253 = vmatprep.subr.bf16.mxu0 0
  %4254 = vmatpush2.bf16.msra.mxu0 0
  %4255 = vmatprep.subr.bf16.mxu0 0
  %4256 = vmatpush2.bf16.msra.mxu0 0
  %4257 = vmatprep.subr.bf16.mxu0 0
  %4258 = vmatpush2.bf16.msra.mxu0 0
  %4259 = vmatprep.mubr.bf16.mxu0 0
  %4260 = vmatmul.mubr.bf16.gmra.mxu0 %v4204
  %v4261 = vpop.f32.mrf.mxu0
  %v4262 = vadd.f32 %v4176, %v4261
  %v4263 = vpop.f32.mrf.mxu0
  %v4264 = vpop.f32.mrf.mxu0
  %v4265 = vadd.f32 %v4176, %v4264
  %v4266 = vpop.f32.mrf.mxu0
  %4267 = vmatprep.mubr.bf16.mxu0 0
  %4268 = vmatmul.mubr.bf16.gmra.mxu0 %v4207
  %v4269 = vpop.f32.mrf.mxu0
  %v4270 = vadd.f32 %v4176, %v4269
  %v4271 = vpop.f32.mrf.mxu0
  %v4272 = vpop.f32.mrf.mxu0
  %v4273 = vadd.f32 %v4176, %v4272
  %v4274 = vpop.f32.mrf.mxu0
  %4275 = vmatprep.mubr.bf16.mxu0 0
  %4276 = vmatmul.mubr.bf16.gmra.mxu0 %v4210
  %v4277 = vpop.f32.mrf.mxu0
  %v4278 = vadd.f32 %v4176, %v4277
  %v4279 = vpop.f32.mrf.mxu0
  %v4280 = vpop.f32.mrf.mxu0
  %v4281 = vadd.f32 %v4176, %v4280
  %v4282 = vpop.f32.mrf.mxu0
  %4283 = vmatprep.mubr.bf16.mxu0 0
  %4284 = vmatmul.mubr.bf16.gmra.mxu0 %v4213
  %v4285 = vpop.f32.mrf.mxu0
  %v4286 = vadd.f32 %v4176, %v4285
  %v4287 = vpop.f32.mrf.mxu0
  %v4288 = vpop.f32.mrf.mxu0
  %v4289 = vadd.f32 %v4176, %v4288
  %v4290 = vpop.f32.mrf.mxu0
  %4291 = vmatprep.mubr.bf16.mxu0 0
  %4292 = vmatmul.mubr.bf16.gmra.mxu0 %v4216
  %v4293 = vpop.f32.mrf.mxu0
  %v4294 = vadd.f32 %v4176, %v4293
  %v4295 = vpop.f32.mrf.mxu0
  %v4296 = vpop.f32.mrf.mxu0
  %v4297 = vadd.f32 %v4176, %v4296
  %v4298 = vpop.f32.mrf.mxu0
  %4299 = vmatprep.mubr.bf16.mxu0 0
  %4300 = vmatmul.mubr.bf16.gmra.mxu0 %v4219
  %v4301 = vpop.f32.mrf.mxu0
  %v4302 = vadd.f32 %v4176, %v4301
  %v4303 = vpop.f32.mrf.mxu0
  %v4304 = vpop.f32.mrf.mxu0
  %v4305 = vadd.f32 %v4176, %v4304
  %v4306 = vpop.f32.mrf.mxu0
  %4307 = vmatprep.mubr.bf16.mxu0 0
  %4308 = vmatmul.mubr.bf16.gmra.mxu0 %v4222
  %v4309 = vpop.f32.mrf.mxu0
  %v4310 = vadd.f32 %v4176, %v4309
  %v4311 = vpop.f32.mrf.mxu0
  %v4312 = vpop.f32.mrf.mxu0
  %v4313 = vadd.f32 %v4176, %v4312
  %v4314 = vpop.f32.mrf.mxu0
  %4315 = vmatprep.mubr.bf16.mxu0 0
  %4316 = vmatmul.mubr.bf16.gmra.mxu0 %v4225
  %v4317 = vpop.f32.mrf.mxu0
  %v4318 = vadd.f32 %v4176, %v4317
  %v4319 = vpop.f32.mrf.mxu0
  %v4320 = vpop.f32.mrf.mxu0
  %v4321 = vadd.f32 %v4176, %v4320
  %v4322 = vpop.f32.mrf.mxu0
  %4323 = vdwg.mxu0
  %v4324 = vtanh.pop %v4262
  %v4325 = vtanh.pop %v4265
  %v4326 = vtanh.pop %v4270
  %v4327 = vtanh.pop %v4273
  %v4328 = vtanh.pop %v4278
  %v4329 = vtanh.pop %v4281
  %v4330 = vtanh.pop %v4286
  %v4331 = vtanh.pop %v4289
  %v4332 = vtanh.pop %v4294
  %v4333 = vtanh.pop %v4297
  %v4334 = vtanh.pop %v4302
  %v4335 = vtanh.pop %v4305
  %v4336 = vtanh.pop %v4310
  %v4337 = vtanh.pop %v4313
  %v4338 = vtanh.pop %v4318
  %v4339 = vtanh.pop %v4321
  %vm4340 = vcmask 261120
  %4341 = vst.msk [vmem:[%s11] sm:$0xff] %vm4340, %v4324
  %4342 = vst.msk [vmem:[%s11 + $0x8] sm:$0xff] %vm4340, %v4325
  %4343 = vst.msk [vmem:[%s11 + $0x10] sm:$0xff] %vm4340, %v4326
  %4344 = vst.msk [vmem:[%s11 + $0x18] sm:$0xff] %vm4340, %v4327
  %4345 = vst.msk [vmem:[%s11 + $0x20] sm:$0xff] %vm4340, %v4328
  %4346 = vst.msk [vmem:[%s11 + $0x28] sm:$0xff] %vm4340, %v4329
  %4347 = vst.msk [vmem:[%s11 + $0x30] sm:$0xff] %vm4340, %v4330
  %4348 = vst.msk [vmem:[%s11 + $0x38] sm:$0xff] %vm4340, %v4331
  %4349 = vst.msk [vmem:[%s11 + $0x40] sm:$0xff] %vm4340, %v4332
  %4350 = vst.msk [vmem:[%s11 + $0x48] sm:$0xff] %vm4340, %v4333
  %4351 = vst.msk [vmem:[%s11 + $0x50] sm:$0xff] %vm4340, %v4334
  %4352 = vst.msk [vmem:[%s11 + $0x58] sm:$0xff] %vm4340, %v4335
  %4353 = vst.msk [vmem:[%s11 + $0x60] sm:$0xff] %vm4340, %v4336
  %4354 = vst.msk [vmem:[%s11 + $0x68] sm:$0xff] %vm4340, %v4337
  %4355 = vst.msk [vmem:[%s11 + $0x70] sm:$0xff] %vm4340, %v4338
  %4356 = vst.msk [vmem:[%s11 + $0x78] sm:$0xff] %vm4340, %v4339
  // Predicated region
  $region46: #{_encoder3_forward_impl.1} parent=0 // pred_check
    _
  $region47: #{_encoder3_forward_impl.1} parent=0 // pred_check_branch
    %4358 = sbr.rel (0) target = $region49
  $region48: #{_encoder3_forward_impl.1} parent=0 // pred_region
    _
  $region49: #{_encoder3_forward_impl.1} parent=0 // pred_fallthru
    _
  // Predicated region
  $region50: #{_encoder3_forward_impl.1} parent=0 // pred_check
    _
  $region51: #{_encoder3_forward_impl.1} parent=0 // pred_check_branch
    %4360 = sbr.rel (0) target = $region53
  $region52: #{_encoder3_forward_impl.1} parent=0 // pred_region
    _
  $region53: #{_encoder3_forward_impl.1} parent=0 // pred_fallthru
    _

// kernel: _encoder3_forward_impl.1
$region0: #{_encoder3_forward_impl.1}
  #allocation0 [shape = 'u32[]', space=smem, size = 0x4, offset = 0x4, fixed_abs, tag = 'smem constant byte address 0x4 - core index']
  #allocation1 [shape = 'u32[144,128]{1,0:T(1,128)}', space=vmem, size = 0x12000, scoped, tag = 'internal scratch']
  %s0 = inlined_call_operand.vmem [shape: f32[128,1024], index: 0, kind: input, shape index: {}]
  %s1 = inlined_call_operand.vmem [shape: bf16[1024,512], index: 1, kind: input, shape index: {}]
  %s2 = inlined_call_operand.vmem [shape: f32[1,512], index: 2, kind: input, shape index: {}]
  %s3 = inlined_call_operand.vmem [shape: bf16[512,256], index: 3, kind: input, shape index: {}]
  %s4 = inlined_call_operand.vmem [shape: f32[1,256], index: 4, kind: input, shape index: {}]
  %s5 = inlined_call_operand.vmem [shape: bf16[256,128], index: 5, kind: input, shape index: {}]
  %s6 = inlined_call_operand.vmem [shape: f32[1,128], index: 6, kind: input, shape index: {}]
  %s7 = inlined_call_operand.vmem [shape: bf16[128,64], index: 7, kind: input, shape index: {}]
  %s8 = inlined_call_operand.vmem [shape: f32[1,64], index: 8, kind: input, shape index: {}]
  %s9 = inlined_call_operand.vmem [shape: bf16[64,32], index: 9, kind: input, shape index: {}]
  %s10 = inlined_call_operand.vmem [shape: f32[1,32], index: 10, kind: input, shape index: {}]
  %s11 = inlined_call_operand.vmem [shape: f32[128,32], index: 11, kind: output, shape index: {}]
  %s12 = sld [smem:[#allocation0]]
  $region54: #{_encoder3_forward_impl.1} parent=0
    _
  %s14 = ssub.s32 1, %s12
  %s15 = scalar_select 0, %s14, %s12
  // Predicated region
  $region2: #{_encoder3_forward_impl.1} parent=0 // pred_check
    _
  $region3: #{_encoder3_forward_impl.1} parent=0 // pred_check_branch
    %17 = sbr.rel (0) target = $region5
  $region4: #{_encoder3_forward_impl.1} parent=0 // pred_region
    _
  $region5: #{_encoder3_forward_impl.1} parent=0 // pred_fallthru
    _
  // Predicated region
  $region6: #{_encoder3_forward_impl.1} parent=0 // pred_check
    _
  $region7: #{_encoder3_forward_impl.1} parent=0 // pred_check_branch
    %19 = sbr.rel (0) target = $region9
  $region8: #{_encoder3_forward_impl.1} parent=0 // pred_region
    _
  $region9: #{_encoder3_forward_impl.1} parent=0 // pred_fallthru
    _
  // Predicated region
  $region10: #{_encoder3_forward_impl.1} parent=0 // pred_check
    _
  $region11: #{_encoder3_forward_impl.1} parent=0 // pred_check_branch
    %21 = sbr.rel (0) target = $region13
  $region12: #{_encoder3_forward_impl.1} parent=0 // pred_region
    _
  $region13: #{_encoder3_forward_impl.1} parent=0 // pred_fallthru
    _
  // Predicated region
  $region14: #{_encoder3_forward_impl.1} parent=0 // pred_check
    _
  $region15: #{_encoder3_forward_impl.1} parent=0 // pred_check_branch
    %23 = sbr.rel (0) target = $region17
  $region16: #{_encoder3_forward_impl.1} parent=0 // pred_region
    _
  $region17: #{_encoder3_forward_impl.1} parent=0 // pred_fallthru
    _
  // Predicated region
  $region18: #{_encoder3_forward_impl.1} parent=0 // pred_check
    _
  $region19: #{_encoder3_forward_impl.1} parent=0 // pred_check_branch
    %25 = sbr.rel (0) target = $region21
  $region20: #{_encoder3_forward_impl.1} parent=0 // pred_region
    _
  $region21: #{_encoder3_forward_impl.1} parent=0 // pred_fallthru
    _
  // Predicated region
  $region22: #{_encoder3_forward_impl.1} parent=0 // pred_check
    _
  $region23: #{_encoder3_forward_impl.1} parent=0 // pred_check_branch
    %27 = sbr.rel (0) target = $region25
  $region24: #{_encoder3_forward_impl.1} parent=0 // pred_region
    _
  $region25: #{_encoder3_forward_impl.1} parent=0 // pred_fallthru
    _
  // Predicated region
  $region26: #{_encoder3_forward_impl.1} parent=0 // pred_check
    _
  $region27: #{_encoder3_forward_impl.1} parent=0 // pred_check_branch
    %29 = sbr.rel (0) target = $region29
  $region28: #{_encoder3_forward_impl.1} parent=0 // pred_region
    _
  $region29: #{_encoder3_forward_impl.1} parent=0 // pred_fallthru
    _
  // Predicated region
  $region30: #{_encoder3_forward_impl.1} parent=0 // pred_check
    _
  $region31: #{_encoder3_forward_impl.1} parent=0 // pred_check_branch
    %31 = sbr.rel (0) target = $region33
  $region32: #{_encoder3_forward_impl.1} parent=0 // pred_region
    _
  $region33: #{_encoder3_forward_impl.1} parent=0 // pred_fallthru
    _
  // Predicated region
  $region34: #{_encoder3_forward_impl.1} parent=0 // pred_check
    _
  $region35: #{_encoder3_forward_impl.1} parent=0 // pred_check_branch
    %33 = sbr.rel (0) target = $region37
  $region36: #{_encoder3_forward_impl.1} parent=0 // pred_region
    _
  $region37: #{_encoder3_forward_impl.1} parent=0 // pred_fallthru
    _
  // Predicated region
  $region38: #{_encoder3_forward_impl.1} parent=0 // pred_check
    _
  $region39: #{_encoder3_forward_impl.1} parent=0 // pred_check_branch
    %35 = sbr.rel (0) target = $region41
  $region40: #{_encoder3_forward_impl.1} parent=0 // pred_region
    _
  $region41: #{_encoder3_forward_impl.1} parent=0 // pred_fallthru
    _
  // Predicated region
  $region42: #{_encoder3_forward_impl.1} parent=0 // pred_check
    _
  $region43: #{_encoder3_forward_impl.1} parent=0 // pred_check_branch
    %37 = sbr.rel (0) target = $region45
  $region44: #{_encoder3_forward_impl.1} parent=0 // pred_region
    _
  $region45: #{_encoder3_forward_impl.1} parent=0 // pred_fallthru
    _
  %v39 = vld [vmem:[%s0] sm:$0xff]
  %v40 = vld [vmem:[%s0 + $0x8] sm:$0xff]
  %v41 = vld [vmem:[%s0 + $0x10] sm:$0xff]
  %v42 = vld [vmem:[%s0 + $0x18] sm:$0xff]
  %v43 = vld [vmem:[%s0 + $0x20] sm:$0xff]
  %v44 = vld [vmem:[%s0 + $0x28] sm:$0xff]
  %v45 = vld [vmem:[%s0 + $0x30] sm:$0xff]
  %v46 = vld [vmem:[%s0 + $0x38] sm:$0xff]
  %v47 = vld [vmem:[%s0 + $0x40] sm:$0xff]
  %v48 = vld [vmem:[%s0 + $0x48] sm:$0xff]
  %v49 = vld [vmem:[%s0 + $0x50] sm:$0xff]
  %v50 = vld [vmem:[%s0 + $0x58] sm:$0xff]
  %v51 = vld [vmem:[%s0 + $0x60] sm:$0xff]
  %v52 = vld [vmem:[%s0 + $0x68] sm:$0xff]
  %v53 = vld [vmem:[%s0 + $0x70] sm:$0xff]
  %v54 = vld [vmem:[%s0 + $0x78] sm:$0xff]
  %v55 = vld [vmem:[%s0 + $0x80] sm:$0xff]
  %v56 = vld [vmem:[%s0 + $0x88] sm:$0xff]
  %v57 = vld [vmem:[%s0 + $0x90] sm:$0xff]
  %v58 = vld [vmem:[%s0 + $0x98] sm:$0xff]
  %v59 = vld [vmem:[%s0 + $0xa0] sm:$0xff]
  %v60 = vld [vmem:[%s0 + $0xa8] sm:$0xff]
  %v61 = vld [vmem:[%s0 + $0xb0] sm:$0xff]
  %v62 = vld [vmem:[%s0 + $0xb8] sm:$0xff]
  %v63 = vld [vmem:[%s0 + $0xc0] sm:$0xff]
  %v64 = vld [vmem:[%s0 + $0xc8] sm:$0xff]
  %v65 = vld [vmem:[%s0 + $0xd0] sm:$0xff]
  %v66 = vld [vmem:[%s0 + $0xd8] sm:$0xff]
  %v67 = vld [vmem:[%s0 + $0xe0] sm:$0xff]
  %v68 = vld [vmem:[%s0 + $0xe8] sm:$0xff]
  %v69 = vld [vmem:[%s0 + $0xf0] sm:$0xff]
  %v70 = vld [vmem:[%s0 + $0xf8] sm:$0xff]
  %v71 = vld [vmem:[%s0 + $0x100] sm:$0xff]
  %v72 = vld [vmem:[%s0 + $0x108] sm:$0xff]
  %v73 = vld [vmem:[%s0 + $0x110] sm:$0xff]
  %v74 = vld [vmem:[%s0 + $0x118] sm:$0xff]
  %v75 = vld [vmem:[%s0 + $0x120] sm:$0xff]
  %v76 = vld [vmem:[%s0 + $0x128] sm:$0xff]
  %v77 = vld [vmem:[%s0 + $0x130] sm:$0xff]
  %v78 = vld [vmem:[%s0 + $0x138] sm:$0xff]
  %v79 = vld [vmem:[%s0 + $0x140] sm:$0xff]
  %v80 = vld [vmem:[%s0 + $0x148] sm:$0xff]
  %v81 = vld [vmem:[%s0 + $0x150] sm:$0xff]
  %v82 = vld [vmem:[%s0 + $0x158] sm:$0xff]
  %v83 = vld [vmem:[%s0 + $0x160] sm:$0xff]
  %v84 = vld [vmem:[%s0 + $0x168] sm:$0xff]
  %v85 = vld [vmem:[%s0 + $0x170] sm:$0xff]
  %v86 = vld [vmem:[%s0 + $0x178] sm:$0xff]
  %v87 = vld [vmem:[%s0 + $0x180] sm:$0xff]
  %v88 = vld [vmem:[%s0 + $0x188] sm:$0xff]
  %v89 = vld [vmem:[%s0 + $0x190] sm:$0xff]
  %v90 = vld [vmem:[%s0 + $0x198] sm:$0xff]
  %v91 = vld [vmem:[%s0 + $0x1a0] sm:$0xff]
  %v92 = vld [vmem:[%s0 + $0x1a8] sm:$0xff]
  %v93 = vld [vmem:[%s0 + $0x1b0] sm:$0xff]
  %v94 = vld [vmem:[%s0 + $0x1b8] sm:$0xff]
  %v95 = vld [vmem:[%s0 + $0x1c0] sm:$0xff]
  %v96 = vld [vmem:[%s0 + $0x1c8] sm:$0xff]
  %v97 = vld [vmem:[%s0 + $0x1d0] sm:$0xff]
  %v98 = vld [vmem:[%s0 + $0x1d8] sm:$0xff]
  %v99 = vld [vmem:[%s0 + $0x1e0] sm:$0xff]
  %v100 = vld [vmem:[%s0 + $0x1e8] sm:$0xff]
  %v101 = vld [vmem:[%s0 + $0x1f0] sm:$0xff]
  %v102 = vld [vmem:[%s0 + $0x1f8] sm:$0xff]
  %v103 = vld [vmem:[%s0 + $0x200] sm:$0xff]
  %v104 = vld [vmem:[%s0 + $0x208] sm:$0xff]
  %v105 = vld [vmem:[%s0 + $0x210] sm:$0xff]
  %v106 = vld [vmem:[%s0 + $0x218] sm:$0xff]
  %v107 = vld [vmem:[%s0 + $0x220] sm:$0xff]
  %v108 = vld [vmem:[%s0 + $0x228] sm:$0xff]
  %v109 = vld [vmem:[%s0 + $0x230] sm:$0xff]
  %v110 = vld [vmem:[%s0 + $0x238] sm:$0xff]
  %v111 = vld [vmem:[%s0 + $0x240] sm:$0xff]
  %v112 = vld [vmem:[%s0 + $0x248] sm:$0xff]
  %v113 = vld [vmem:[%s0 + $0x250] sm:$0xff]
  %v114 = vld [vmem:[%s0 + $0x258] sm:$0xff]
  %v115 = vld [vmem:[%s0 + $0x260] sm:$0xff]
  %v116 = vld [vmem:[%s0 + $0x268] sm:$0xff]
  %v117 = vld [vmem:[%s0 + $0x270] sm:$0xff]
  %v118 = vld [vmem:[%s0 + $0x278] sm:$0xff]
  %v119 = vld [vmem:[%s0 + $0x280] sm:$0xff]
  %v120 = vld [vmem:[%s0 + $0x288] sm:$0xff]
  %v121 = vld [vmem:[%s0 + $0x290] sm:$0xff]
  %v122 = vld [vmem:[%s0 + $0x298] sm:$0xff]
  %v123 = vld [vmem:[%s0 + $0x2a0] sm:$0xff]
  %v124 = vld [vmem:[%s0 + $0x2a8] sm:$0xff]
  %v125 = vld [vmem:[%s0 + $0x2b0] sm:$0xff]
  %v126 = vld [vmem:[%s0 + $0x2b8] sm:$0xff]
  %v127 = vld [vmem:[%s0 + $0x2c0] sm:$0xff]
  %v128 = vld [vmem:[%s0 + $0x2c8] sm:$0xff]
  %v129 = vld [vmem:[%s0 + $0x2d0] sm:$0xff]
  %v130 = vld [vmem:[%s0 + $0x2d8] sm:$0xff]
  %v131 = vld [vmem:[%s0 + $0x2e0] sm:$0xff]
  %v132 = vld [vmem:[%s0 + $0x2e8] sm:$0xff]
  %v133 = vld [vmem:[%s0 + $0x2f0] sm:$0xff]
  %v134 = vld [vmem:[%s0 + $0x2f8] sm:$0xff]
  %v135 = vld [vmem:[%s0 + $0x300] sm:$0xff]
  %v136 = vld [vmem:[%s0 + $0x308] sm:$0xff]
  %v137 = vld [vmem:[%s0 + $0x310] sm:$0xff]
  %v138 = vld [vmem:[%s0 + $0x318] sm:$0xff]
  %v139 = vld [vmem:[%s0 + $0x320] sm:$0xff]
  %v140 = vld [vmem:[%s0 + $0x328] sm:$0xff]
  %v141 = vld [vmem:[%s0 + $0x330] sm:$0xff]
  %v142 = vld [vmem:[%s0 + $0x338] sm:$0xff]
  %v143 = vld [vmem:[%s0 + $0x340] sm:$0xff]
  %v144 = vld [vmem:[%s0 + $0x348] sm:$0xff]
  %v145 = vld [vmem:[%s0 + $0x350] sm:$0xff]
  %v146 = vld [vmem:[%s0 + $0x358] sm:$0xff]
  %v147 = vld [vmem:[%s0 + $0x360] sm:$0xff]
  %v148 = vld [vmem:[%s0 + $0x368] sm:$0xff]
  %v149 = vld [vmem:[%s0 + $0x370] sm:$0xff]
  %v150 = vld [vmem:[%s0 + $0x378] sm:$0xff]
  %v151 = vld [vmem:[%s0 + $0x380] sm:$0xff]
  %v152 = vld [vmem:[%s0 + $0x388] sm:$0xff]
  %v153 = vld [vmem:[%s0 + $0x390] sm:$0xff]
  %v154 = vld [vmem:[%s0 + $0x398] sm:$0xff]
  %v155 = vld [vmem:[%s0 + $0x3a0] sm:$0xff]
  %v156 = vld [vmem:[%s0 + $0x3a8] sm:$0xff]
  %v157 = vld [vmem:[%s0 + $0x3b0] sm:$0xff]
  %v158 = vld [vmem:[%s0 + $0x3b8] sm:$0xff]
  %v159 = vld [vmem:[%s0 + $0x3c0] sm:$0xff]
  %v160 = vld [vmem:[%s0 + $0x3c8] sm:$0xff]
  %v161 = vld [vmem:[%s0 + $0x3d0] sm:$0xff]
  %v162 = vld [vmem:[%s0 + $0x3d8] sm:$0xff]
  %v163 = vld [vmem:[%s0 + $0x3e0] sm:$0xff]
  %v164 = vld [vmem:[%s0 + $0x3e8] sm:$0xff]
  %v165 = vld [vmem:[%s0 + $0x3f0] sm:$0xff]
  %v166 = vld [vmem:[%s0 + $0x3f8] sm:$0xff]
  %v167 = vpack.c.bf16 %v47, %v39
  %v168 = vpack.c.bf16 %v48, %v40
  %v169 = vpack.c.bf16 %v49, %v41
  %v170 = vpack.c.bf16 %v50, %v42
  %v171 = vpack.c.bf16 %v51, %v43
  %v172 = vpack.c.bf16 %v52, %v44
  %v173 = vpack.c.bf16 %v53, %v45
  %v174 = vpack.c.bf16 %v54, %v46
  %v175 = vpack.c.bf16 %v63, %v55
  %v176 = vpack.c.bf16 %v64, %v56
  %v177 = vpack.c.bf16 %v65, %v57
  %v178 = vpack.c.bf16 %v66, %v58
  %v179 = vpack.c.bf16 %v67, %v59
  %v180 = vpack.c.bf16 %v68, %v60
  %v181 = vpack.c.bf16 %v69, %v61
  %v182 = vpack.c.bf16 %v70, %v62
  %v183 = vpack.c.bf16 %v79, %v71
  %v184 = vpack.c.bf16 %v80, %v72
  %v185 = vpack.c.bf16 %v81, %v73
  %v186 = vpack.c.bf16 %v82, %v74
  %v187 = vpack.c.bf16 %v83, %v75
  %v188 = vpack.c.bf16 %v84, %v76
  %v189 = vpack.c.bf16 %v85, %v77
  %v190 = vpack.c.bf16 %v86, %v78
  %v191 = vpack.c.bf16 %v95, %v87
  %v192 = vpack.c.bf16 %v96, %v88
  %v193 = vpack.c.bf16 %v97, %v89
  %v194 = vpack.c.bf16 %v98, %v90
  %v195 = vpack.c.bf16 %v99, %v91
  %v196 = vpack.c.bf16 %v100, %v92
  %v197 = vpack.c.bf16 %v101, %v93
  %v198 = vpack.c.bf16 %v102, %v94
  %v199 = vpack.c.bf16 %v111, %v103
  %v200 = vpack.c.bf16 %v112, %v104
  %v201 = vpack.c.bf16 %v113, %v105
  %v202 = vpack.c.bf16 %v114, %v106
  %v203 = vpack.c.bf16 %v115, %v107
  %v204 = vpack.c.bf16 %v116, %v108
  %v205 = vpack.c.bf16 %v117, %v109
  %v206 = vpack.c.bf16 %v118, %v110
  %v207 = vpack.c.bf16 %v127, %v119
  %v208 = vpack.c.bf16 %v128, %v120
  %v209 = vpack.c.bf16 %v129, %v121
  %v210 = vpack.c.bf16 %v130, %v122
  %v211 = vpack.c.bf16 %v131, %v123
  %v212 = vpack.c.bf16 %v132, %v124
  %v213 = vpack.c.bf16 %v133, %v125
  %v214 = vpack.c.bf16 %v134, %v126
  %v215 = vpack.c.bf16 %v143, %v135
  %v216 = vpack.c.bf16 %v144, %v136
  %v217 = vpack.c.bf16 %v145, %v137
  %v218 = vpack.c.bf16 %v146, %v138
  %v219 = vpack.c.bf16 %v147, %v139
  %v220 = vpack.c.bf16 %v148, %v140
  %v221 = vpack.c.bf16 %v149, %v141
  %v222 = vpack.c.bf16 %v150, %v142
  %v223 = vpack.c.bf16 %v159, %v151
  %v224 = vpack.c.bf16 %v160, %v152
  %v225 = vpack.c.bf16 %v161, %v153
  %v226 = vpack.c.bf16 %v162, %v154
  %v227 = vpack.c.bf16 %v163, %v155
  %v228 = vpack.c.bf16 %v164, %v156
  %v229 = vpack.c.bf16 %v165, %v157
  %v230 = vpack.c.bf16 %v166, %v158
  %v231 = vld [vmem:[%s1] sm:$0xff]
  %v232 = vld [vmem:[%s1 + $0x8] sm:$0xff]
  %v233 = vld [vmem:[%s1 + $0x10] sm:$0xff]
  %v234 = vld [vmem:[%s1 + $0x18] sm:$0xff]
  %v235 = vld [vmem:[%s1 + $0x20] sm:$0xff]
  %v236 = vld [vmem:[%s1 + $0x28] sm:$0xff]
  %v237 = vld [vmem:[%s1 + $0x30] sm:$0xff]
  %v238 = vld [vmem:[%s1 + $0x38] sm:$0xff]
  %v239 = vld [vmem:[%s1 + $0x40] sm:$0xff]
  %v240 = vld [vmem:[%s1 + $0x48] sm:$0xff]
  %v241 = vld [vmem:[%s1 + $0x50] sm:$0xff]
  %v242 = vld [vmem:[%s1 + $0x58] sm:$0xff]
  %v243 = vld [vmem:[%s1 + $0x60] sm:$0xff]
  %v244 = vld [vmem:[%s1 + $0x68] sm:$0xff]
  %v245 = vld [vmem:[%s1 + $0x70] sm:$0xff]
  %v246 = vld [vmem:[%s1 + $0x78] sm:$0xff]
  %v247 = vld [vmem:[%s1 + $0x80] sm:$0xff]
  %v248 = vld [vmem:[%s1 + $0x88] sm:$0xff]
  %v249 = vld [vmem:[%s1 + $0x90] sm:$0xff]
  %v250 = vld [vmem:[%s1 + $0x98] sm:$0xff]
  %v251 = vld [vmem:[%s1 + $0xa0] sm:$0xff]
  %v252 = vld [vmem:[%s1 + $0xa8] sm:$0xff]
  %v253 = vld [vmem:[%s1 + $0xb0] sm:$0xff]
  %v254 = vld [vmem:[%s1 + $0xb8] sm:$0xff]
  %v255 = vld [vmem:[%s1 + $0xc0] sm:$0xff]
  %v256 = vld [vmem:[%s1 + $0xc8] sm:$0xff]
  %v257 = vld [vmem:[%s1 + $0xd0] sm:$0xff]
  %v258 = vld [vmem:[%s1 + $0xd8] sm:$0xff]
  %v259 = vld [vmem:[%s1 + $0xe0] sm:$0xff]
  %v260 = vld [vmem:[%s1 + $0xe8] sm:$0xff]
  %v261 = vld [vmem:[%s1 + $0xf0] sm:$0xff]
  %v262 = vld [vmem:[%s1 + $0xf8] sm:$0xff]
  %v263 = vld [vmem:[%s1 + $0x100] sm:$0xff]
  %v264 = vld [vmem:[%s1 + $0x108] sm:$0xff]
  %v265 = vld [vmem:[%s1 + $0x110] sm:$0xff]
  %v266 = vld [vmem:[%s1 + $0x118] sm:$0xff]
  %v267 = vld [vmem:[%s1 + $0x120] sm:$0xff]
  %v268 = vld [vmem:[%s1 + $0x128] sm:$0xff]
  %v269 = vld [vmem:[%s1 + $0x130] sm:$0xff]
  %v270 = vld [vmem:[%s1 + $0x138] sm:$0xff]
  %v271 = vld [vmem:[%s1 + $0x140] sm:$0xff]
  %v272 = vld [vmem:[%s1 + $0x148] sm:$0xff]
  %v273 = vld [vmem:[%s1 + $0x150] sm:$0xff]
  %v274 = vld [vmem:[%s1 + $0x158] sm:$0xff]
  %v275 = vld [vmem:[%s1 + $0x160] sm:$0xff]
  %v276 = vld [vmem:[%s1 + $0x168] sm:$0xff]
  %v277 = vld [vmem:[%s1 + $0x170] sm:$0xff]
  %v278 = vld [vmem:[%s1 + $0x178] sm:$0xff]
  %v279 = vld [vmem:[%s1 + $0x180] sm:$0xff]
  %v280 = vld [vmem:[%s1 + $0x188] sm:$0xff]
  %v281 = vld [vmem:[%s1 + $0x190] sm:$0xff]
  %v282 = vld [vmem:[%s1 + $0x198] sm:$0xff]
  %v283 = vld [vmem:[%s1 + $0x1a0] sm:$0xff]
  %v284 = vld [vmem:[%s1 + $0x1a8] sm:$0xff]
  %v285 = vld [vmem:[%s1 + $0x1b0] sm:$0xff]
  %v286 = vld [vmem:[%s1 + $0x1b8] sm:$0xff]
  %v287 = vld [vmem:[%s1 + $0x1c0] sm:$0xff]
  %v288 = vld [vmem:[%s1 + $0x1c8] sm:$0xff]
  %v289 = vld [vmem:[%s1 + $0x1d0] sm:$0xff]
  %v290 = vld [vmem:[%s1 + $0x1d8] sm:$0xff]
  %v291 = vld [vmem:[%s1 + $0x1e0] sm:$0xff]
  %v292 = vld [vmem:[%s1 + $0x1e8] sm:$0xff]
  %v293 = vld [vmem:[%s1 + $0x1f0] sm:$0xff]
  %v294 = vld [vmem:[%s1 + $0x1f8] sm:$0xff]
  %v295 = vld [vmem:[%s1 + $0x200] sm:$0xff]
  %v296 = vld [vmem:[%s1 + $0x208] sm:$0xff]
  %v297 = vld [vmem:[%s1 + $0x210] sm:$0xff]
  %v298 = vld [vmem:[%s1 + $0x218] sm:$0xff]
  %v299 = vld [vmem:[%s1 + $0x220] sm:$0xff]
  %v300 = vld [vmem:[%s1 + $0x228] sm:$0xff]
  %v301 = vld [vmem:[%s1 + $0x230] sm:$0xff]
  %v302 = vld [vmem:[%s1 + $0x238] sm:$0xff]
  %v303 = vld [vmem:[%s1 + $0x240] sm:$0xff]
  %v304 = vld [vmem:[%s1 + $0x248] sm:$0xff]
  %v305 = vld [vmem:[%s1 + $0x250] sm:$0xff]
  %v306 = vld [vmem:[%s1 + $0x258] sm:$0xff]
  %v307 = vld [vmem:[%s1 + $0x260] sm:$0xff]
  %v308 = vld [vmem:[%s1 + $0x268] sm:$0xff]
  %v309 = vld [vmem:[%s1 + $0x270] sm:$0xff]
  %v310 = vld [vmem:[%s1 + $0x278] sm:$0xff]
  %v311 = vld [vmem:[%s1 + $0x280] sm:$0xff]
  %v312 = vld [vmem:[%s1 + $0x288] sm:$0xff]
  %v313 = vld [vmem:[%s1 + $0x290] sm:$0xff]
  %v314 = vld [vmem:[%s1 + $0x298] sm:$0xff]
  %v315 = vld [vmem:[%s1 + $0x2a0] sm:$0xff]
  %v316 = vld [vmem:[%s1 + $0x2a8] sm:$0xff]
  %v317 = vld [vmem:[%s1 + $0x2b0] sm:$0xff]
  %v318 = vld [vmem:[%s1 + $0x2b8] sm:$0xff]
  %v319 = vld [vmem:[%s1 + $0x2c0] sm:$0xff]
  %v320 = vld [vmem:[%s1 + $0x2c8] sm:$0xff]
  %v321 = vld [vmem:[%s1 + $0x2d0] sm:$0xff]
  %v322 = vld [vmem:[%s1 + $0x2d8] sm:$0xff]
  %v323 = vld [vmem:[%s1 + $0x2e0] sm:$0xff]
  %v324 = vld [vmem:[%s1 + $0x2e8] sm:$0xff]
  %v325 = vld [vmem:[%s1 + $0x2f0] sm:$0xff]
  %v326 = vld [vmem:[%s1 + $0x2f8] sm:$0xff]
  %v327 = vld [vmem:[%s1 + $0x300] sm:$0xff]
  %v328 = vld [vmem:[%s1 + $0x308] sm:$0xff]
  %v329 = vld [vmem:[%s1 + $0x310] sm:$0xff]
  %v330 = vld [vmem:[%s1 + $0x318] sm:$0xff]
  %v331 = vld [vmem:[%s1 + $0x320] sm:$0xff]
  %v332 = vld [vmem:[%s1 + $0x328] sm:$0xff]
  %v333 = vld [vmem:[%s1 + $0x330] sm:$0xff]
  %v334 = vld [vmem:[%s1 + $0x338] sm:$0xff]
  %v335 = vld [vmem:[%s1 + $0x340] sm:$0xff]
  %v336 = vld [vmem:[%s1 + $0x348] sm:$0xff]
  %v337 = vld [vmem:[%s1 + $0x350] sm:$0xff]
  %v338 = vld [vmem:[%s1 + $0x358] sm:$0xff]
  %v339 = vld [vmem:[%s1 + $0x360] sm:$0xff]
  %v340 = vld [vmem:[%s1 + $0x368] sm:$0xff]
  %v341 = vld [vmem:[%s1 + $0x370] sm:$0xff]
  %v342 = vld [vmem:[%s1 + $0x378] sm:$0xff]
  %v343 = vld [vmem:[%s1 + $0x380] sm:$0xff]
  %v344 = vld [vmem:[%s1 + $0x388] sm:$0xff]
  %v345 = vld [vmem:[%s1 + $0x390] sm:$0xff]
  %v346 = vld [vmem:[%s1 + $0x398] sm:$0xff]
  %v347 = vld [vmem:[%s1 + $0x3a0] sm:$0xff]
  %v348 = vld [vmem:[%s1 + $0x3a8] sm:$0xff]
  %v349 = vld [vmem:[%s1 + $0x3b0] sm:$0xff]
  %v350 = vld [vmem:[%s1 + $0x3b8] sm:$0xff]
  %v351 = vld [vmem:[%s1 + $0x3c0] sm:$0xff]
  %v352 = vld [vmem:[%s1 + $0x3c8] sm:$0xff]
  %v353 = vld [vmem:[%s1 + $0x3d0] sm:$0xff]
  %v354 = vld [vmem:[%s1 + $0x3d8] sm:$0xff]
  %v355 = vld [vmem:[%s1 + $0x3e0] sm:$0xff]
  %v356 = vld [vmem:[%s1 + $0x3e8] sm:$0xff]
  %v357 = vld [vmem:[%s1 + $0x3f0] sm:$0xff]
  %v358 = vld [vmem:[%s1 + $0x3f8] sm:$0xff]
  %v359 = vld [vmem:[%s1 + $0x400] sm:$0xff]
  %v360 = vld [vmem:[%s1 + $0x408] sm:$0xff]
  %v361 = vld [vmem:[%s1 + $0x410] sm:$0xff]
  %v362 = vld [vmem:[%s1 + $0x418] sm:$0xff]
  %v363 = vld [vmem:[%s1 + $0x420] sm:$0xff]
  %v364 = vld [vmem:[%s1 + $0x428] sm:$0xff]
  %v365 = vld [vmem:[%s1 + $0x430] sm:$0xff]
  %v366 = vld [vmem:[%s1 + $0x438] sm:$0xff]
  %v367 = vld [vmem:[%s1 + $0x440] sm:$0xff]
  %v368 = vld [vmem:[%s1 + $0x448] sm:$0xff]
  %v369 = vld [vmem:[%s1 + $0x450] sm:$0xff]
  %v370 = vld [vmem:[%s1 + $0x458] sm:$0xff]
  %v371 = vld [vmem:[%s1 + $0x460] sm:$0xff]
  %v372 = vld [vmem:[%s1 + $0x468] sm:$0xff]
  %v373 = vld [vmem:[%s1 + $0x470] sm:$0xff]
  %v374 = vld [vmem:[%s1 + $0x478] sm:$0xff]
  %v375 = vld [vmem:[%s1 + $0x480] sm:$0xff]
  %v376 = vld [vmem:[%s1 + $0x488] sm:$0xff]
  %v377 = vld [vmem:[%s1 + $0x490] sm:$0xff]
  %v378 = vld [vmem:[%s1 + $0x498] sm:$0xff]
  %v379 = vld [vmem:[%s1 + $0x4a0] sm:$0xff]
  %v380 = vld [vmem:[%s1 + $0x4a8] sm:$0xff]
  %v381 = vld [vmem:[%s1 + $0x4b0] sm:$0xff]
  %v382 = vld [vmem:[%s1 + $0x4b8] sm:$0xff]
  %v383 = vld [vmem:[%s1 + $0x4c0] sm:$0xff]
  %v384 = vld [vmem:[%s1 + $0x4c8] sm:$0xff]
  %v385 = vld [vmem:[%s1 + $0x4d0] sm:$0xff]
  %v386 = vld [vmem:[%s1 + $0x4d8] sm:$0xff]
  %v387 = vld [vmem:[%s1 + $0x4e0] sm:$0xff]
  %v388 = vld [vmem:[%s1 + $0x4e8] sm:$0xff]
  %v389 = vld [vmem:[%s1 + $0x4f0] sm:$0xff]
  %v390 = vld [vmem:[%s1 + $0x4f8] sm:$0xff]
  %v391 = vld [vmem:[%s1 + $0x500] sm:$0xff]
  %v392 = vld [vmem:[%s1 + $0x508] sm:$0xff]
  %v393 = vld [vmem:[%s1 + $0x510] sm:$0xff]
  %v394 = vld [vmem:[%s1 + $0x518] sm:$0xff]
  %v395 = vld [vmem:[%s1 + $0x520] sm:$0xff]
  %v396 = vld [vmem:[%s1 + $0x528] sm:$0xff]
  %v397 = vld [vmem:[%s1 + $0x530] sm:$0xff]
  %v398 = vld [vmem:[%s1 + $0x538] sm:$0xff]
  %v399 = vld [vmem:[%s1 + $0x540] sm:$0xff]
  %v400 = vld [vmem:[%s1 + $0x548] sm:$0xff]
  %v401 = vld [vmem:[%s1 + $0x550] sm:$0xff]
  %v402 = vld [vmem:[%s1 + $0x558] sm:$0xff]
  %v403 = vld [vmem:[%s1 + $0x560] sm:$0xff]
  %v404 = vld [vmem:[%s1 + $0x568] sm:$0xff]
  %v405 = vld [vmem:[%s1 + $0x570] sm:$0xff]
  %v406 = vld [vmem:[%s1 + $0x578] sm:$0xff]
  %v407 = vld [vmem:[%s1 + $0x580] sm:$0xff]
  %v408 = vld [vmem:[%s1 + $0x588] sm:$0xff]
  %v409 = vld [vmem:[%s1 + $0x590] sm:$0xff]
  %v410 = vld [vmem:[%s1 + $0x598] sm:$0xff]
  %v411 = vld [vmem:[%s1 + $0x5a0] sm:$0xff]
  %v412 = vld [vmem:[%s1 + $0x5a8] sm:$0xff]
  %v413 = vld [vmem:[%s1 + $0x5b0] sm:$0xff]
  %v414 = vld [vmem:[%s1 + $0x5b8] sm:$0xff]
  %v415 = vld [vmem:[%s1 + $0x5c0] sm:$0xff]
  %v416 = vld [vmem:[%s1 + $0x5c8] sm:$0xff]
  %v417 = vld [vmem:[%s1 + $0x5d0] sm:$0xff]
  %v418 = vld [vmem:[%s1 + $0x5d8] sm:$0xff]
  %v419 = vld [vmem:[%s1 + $0x5e0] sm:$0xff]
  %v420 = vld [vmem:[%s1 + $0x5e8] sm:$0xff]
  %v421 = vld [vmem:[%s1 + $0x5f0] sm:$0xff]
  %v422 = vld [vmem:[%s1 + $0x5f8] sm:$0xff]
  %v423 = vld [vmem:[%s1 + $0x600] sm:$0xff]
  %v424 = vld [vmem:[%s1 + $0x608] sm:$0xff]
  %v425 = vld [vmem:[%s1 + $0x610] sm:$0xff]
  %v426 = vld [vmem:[%s1 + $0x618] sm:$0xff]
  %v427 = vld [vmem:[%s1 + $0x620] sm:$0xff]
  %v428 = vld [vmem:[%s1 + $0x628] sm:$0xff]
  %v429 = vld [vmem:[%s1 + $0x630] sm:$0xff]
  %v430 = vld [vmem:[%s1 + $0x638] sm:$0xff]
  %v431 = vld [vmem:[%s1 + $0x640] sm:$0xff]
  %v432 = vld [vmem:[%s1 + $0x648] sm:$0xff]
  %v433 = vld [vmem:[%s1 + $0x650] sm:$0xff]
  %v434 = vld [vmem:[%s1 + $0x658] sm:$0xff]
  %v435 = vld [vmem:[%s1 + $0x660] sm:$0xff]
  %v436 = vld [vmem:[%s1 + $0x668] sm:$0xff]
  %v437 = vld [vmem:[%s1 + $0x670] sm:$0xff]
  %v438 = vld [vmem:[%s1 + $0x678] sm:$0xff]
  %v439 = vld [vmem:[%s1 + $0x680] sm:$0xff]
  %v440 = vld [vmem:[%s1 + $0x688] sm:$0xff]
  %v441 = vld [vmem:[%s1 + $0x690] sm:$0xff]
  %v442 = vld [vmem:[%s1 + $0x698] sm:$0xff]
  %v443 = vld [vmem:[%s1 + $0x6a0] sm:$0xff]
  %v444 = vld [vmem:[%s1 + $0x6a8] sm:$0xff]
  %v445 = vld [vmem:[%s1 + $0x6b0] sm:$0xff]
  %v446 = vld [vmem:[%s1 + $0x6b8] sm:$0xff]
  %v447 = vld [vmem:[%s1 + $0x6c0] sm:$0xff]
  %v448 = vld [vmem:[%s1 + $0x6c8] sm:$0xff]
  %v449 = vld [vmem:[%s1 + $0x6d0] sm:$0xff]
  %v450 = vld [vmem:[%s1 + $0x6d8] sm:$0xff]
  %v451 = vld [vmem:[%s1 + $0x6e0] sm:$0xff]
  %v452 = vld [vmem:[%s1 + $0x6e8] sm:$0xff]
  %v453 = vld [vmem:[%s1 + $0x6f0] sm:$0xff]
  %v454 = vld [vmem:[%s1 + $0x6f8] sm:$0xff]
  %v455 = vld [vmem:[%s1 + $0x700] sm:$0xff]
  %v456 = vld [vmem:[%s1 + $0x708] sm:$0xff]
  %v457 = vld [vmem:[%s1 + $0x710] sm:$0xff]
  %v458 = vld [vmem:[%s1 + $0x718] sm:$0xff]
  %v459 = vld [vmem:[%s1 + $0x720] sm:$0xff]
  %v460 = vld [vmem:[%s1 + $0x728] sm:$0xff]
  %v461 = vld [vmem:[%s1 + $0x730] sm:$0xff]
  %v462 = vld [vmem:[%s1 + $0x738] sm:$0xff]
  %v463 = vld [vmem:[%s1 + $0x740] sm:$0xff]
  %v464 = vld [vmem:[%s1 + $0x748] sm:$0xff]
  %v465 = vld [vmem:[%s1 + $0x750] sm:$0xff]
  %v466 = vld [vmem:[%s1 + $0x758] sm:$0xff]
  %v467 = vld [vmem:[%s1 + $0x760] sm:$0xff]
  %v468 = vld [vmem:[%s1 + $0x768] sm:$0xff]
  %v469 = vld [vmem:[%s1 + $0x770] sm:$0xff]
  %v470 = vld [vmem:[%s1 + $0x778] sm:$0xff]
  %v471 = vld [vmem:[%s1 + $0x780] sm:$0xff]
  %v472 = vld [vmem:[%s1 + $0x788] sm:$0xff]
  %v473 = vld [vmem:[%s1 + $0x790] sm:$0xff]
  %v474 = vld [vmem:[%s1 + $0x798] sm:$0xff]
  %v475 = vld [vmem:[%s1 + $0x7a0] sm:$0xff]
  %v476 = vld [vmem:[%s1 + $0x7a8] sm:$0xff]
  %v477 = vld [vmem:[%s1 + $0x7b0] sm:$0xff]
  %v478 = vld [vmem:[%s1 + $0x7b8] sm:$0xff]
  %v479 = vld [vmem:[%s1 + $0x7c0] sm:$0xff]
  %v480 = vld [vmem:[%s1 + $0x7c8] sm:$0xff]
  %v481 = vld [vmem:[%s1 + $0x7d0] sm:$0xff]
  %v482 = vld [vmem:[%s1 + $0x7d8] sm:$0xff]
  %v483 = vld [vmem:[%s1 + $0x7e0] sm:$0xff]
  %v484 = vld [vmem:[%s1 + $0x7e8] sm:$0xff]
  %v485 = vld [vmem:[%s1 + $0x7f0] sm:$0xff]
  %v486 = vld [vmem:[%s1 + $0x7f8] sm:$0xff]
  %v487 = vld [vmem:[%s2] sm:$0xf]
  %v489 = vlaneseq
  %v490 = vshrl.u32 %v489, 7
  %v491 = vsub.s32 0, %v490
  %v492 = vrot.slane %v487, %v491
  %v493 = vlaneseq
  %v494 = vshrl.u32 %v493, 7
  %v495 = vsub.s32 1, %v494
  %v496 = vrot.slane %v487, %v495
  %v497 = vlaneseq
  %v498 = vshrl.u32 %v497, 7
  %v499 = vsub.s32 2, %v498
  %v500 = vrot.slane %v487, %v499
  %v501 = vlaneseq
  %v502 = vshrl.u32 %v501, 7
  %v503 = vsub.s32 3, %v502
  %v504 = vrot.slane %v487, %v503
  %v765 = vunpack.c.l.b16 %v231
  %v766 = vunpack.c.h.b16 %v231
  %v767 = vunpack.c.l.b16 %v232
  %v768 = vunpack.c.h.b16 %v232
  %v769 = vunpack.c.l.b16 %v233
  %v770 = vunpack.c.h.b16 %v233
  %v771 = vunpack.c.l.b16 %v234
  %v772 = vunpack.c.h.b16 %v234
  %v773 = vunpack.c.l.b16 %v235
  %v774 = vunpack.c.h.b16 %v235
  %v775 = vunpack.c.l.b16 %v236
  %v776 = vunpack.c.h.b16 %v236
  %v777 = vunpack.c.l.b16 %v237
  %v778 = vunpack.c.h.b16 %v237
  %v779 = vunpack.c.l.b16 %v238
  %v780 = vunpack.c.h.b16 %v238
  %v781 = vunpack.c.l.b16 %v239
  %v782 = vunpack.c.h.b16 %v239
  %v783 = vunpack.c.l.b16 %v240
  %v784 = vunpack.c.h.b16 %v240
  %v785 = vunpack.c.l.b16 %v241
  %v786 = vunpack.c.h.b16 %v241
  %v787 = vunpack.c.l.b16 %v242
  %v788 = vunpack.c.h.b16 %v242
  %v789 = vunpack.c.l.b16 %v243
  %v790 = vunpack.c.h.b16 %v243
  %v791 = vunpack.c.l.b16 %v244
  %v792 = vunpack.c.h.b16 %v244
  %v793 = vunpack.c.l.b16 %v245
  %v794 = vunpack.c.h.b16 %v245
  %v795 = vunpack.c.l.b16 %v246
  %v796 = vunpack.c.h.b16 %v246
  %v797 = vunpack.c.l.b16 %v247
  %v798 = vunpack.c.h.b16 %v247
  %v799 = vunpack.c.l.b16 %v248
  %v800 = vunpack.c.h.b16 %v248
  %v801 = vunpack.c.l.b16 %v249
  %v802 = vunpack.c.h.b16 %v249
  %v803 = vunpack.c.l.b16 %v250
  %v804 = vunpack.c.h.b16 %v250
  %v805 = vunpack.c.l.b16 %v251
  %v806 = vunpack.c.h.b16 %v251
  %v807 = vunpack.c.l.b16 %v252
  %v808 = vunpack.c.h.b16 %v252
  %v809 = vunpack.c.l.b16 %v253
  %v810 = vunpack.c.h.b16 %v253
  %v811 = vunpack.c.l.b16 %v254
  %v812 = vunpack.c.h.b16 %v254
  %v813 = vunpack.c.l.b16 %v255
  %v814 = vunpack.c.h.b16 %v255
  %v815 = vunpack.c.l.b16 %v256
  %v816 = vunpack.c.h.b16 %v256
  %v817 = vunpack.c.l.b16 %v257
  %v818 = vunpack.c.h.b16 %v257
  %v819 = vunpack.c.l.b16 %v258
  %v820 = vunpack.c.h.b16 %v258
  %v821 = vunpack.c.l.b16 %v259
  %v822 = vunpack.c.h.b16 %v259
  %v823 = vunpack.c.l.b16 %v260
  %v824 = vunpack.c.h.b16 %v260
  %v825 = vunpack.c.l.b16 %v261
  %v826 = vunpack.c.h.b16 %v261
  %v827 = vunpack.c.l.b16 %v262
  %v828 = vunpack.c.h.b16 %v262
  %v829 = vunpack.c.l.b16 %v263
  %v830 = vunpack.c.h.b16 %v263
  %v831 = vunpack.c.l.b16 %v264
  %v832 = vunpack.c.h.b16 %v264
  %v833 = vunpack.c.l.b16 %v265
  %v834 = vunpack.c.h.b16 %v265
  %v835 = vunpack.c.l.b16 %v266
  %v836 = vunpack.c.h.b16 %v266
  %v837 = vunpack.c.l.b16 %v267
  %v838 = vunpack.c.h.b16 %v267
  %v839 = vunpack.c.l.b16 %v268
  %v840 = vunpack.c.h.b16 %v268
  %v841 = vunpack.c.l.b16 %v269
  %v842 = vunpack.c.h.b16 %v269
  %v843 = vunpack.c.l.b16 %v270
  %v844 = vunpack.c.h.b16 %v270
  %v845 = vunpack.c.l.b16 %v271
  %v846 = vunpack.c.h.b16 %v271
  %v847 = vunpack.c.l.b16 %v272
  %v848 = vunpack.c.h.b16 %v272
  %v849 = vunpack.c.l.b16 %v273
  %v850 = vunpack.c.h.b16 %v273
  %v851 = vunpack.c.l.b16 %v274
  %v852 = vunpack.c.h.b16 %v274
  %v853 = vunpack.c.l.b16 %v275
  %v854 = vunpack.c.h.b16 %v275
  %v855 = vunpack.c.l.b16 %v276
  %v856 = vunpack.c.h.b16 %v276
  %v857 = vunpack.c.l.b16 %v277
  %v858 = vunpack.c.h.b16 %v277
  %v859 = vunpack.c.l.b16 %v278
  %v860 = vunpack.c.h.b16 %v278
  %v861 = vunpack.c.l.b16 %v279
  %v862 = vunpack.c.h.b16 %v279
  %v863 = vunpack.c.l.b16 %v280
  %v864 = vunpack.c.h.b16 %v280
  %v865 = vunpack.c.l.b16 %v281
  %v866 = vunpack.c.h.b16 %v281
  %v867 = vunpack.c.l.b16 %v282
  %v868 = vunpack.c.h.b16 %v282
  %v869 = vunpack.c.l.b16 %v283
  %v870 = vunpack.c.h.b16 %v283
  %v871 = vunpack.c.l.b16 %v284
  %v872 = vunpack.c.h.b16 %v284
  %v873 = vunpack.c.l.b16 %v285
  %v874 = vunpack.c.h.b16 %v285
  %v875 = vunpack.c.l.b16 %v286
  %v876 = vunpack.c.h.b16 %v286
  %v877 = vunpack.c.l.b16 %v287
  %v878 = vunpack.c.h.b16 %v287
  %v879 = vunpack.c.l.b16 %v288
  %v880 = vunpack.c.h.b16 %v288
  %v881 = vunpack.c.l.b16 %v289
  %v882 = vunpack.c.h.b16 %v289
  %v883 = vunpack.c.l.b16 %v290
  %v884 = vunpack.c.h.b16 %v290
  %v885 = vunpack.c.l.b16 %v291
  %v886 = vunpack.c.h.b16 %v291
  %v887 = vunpack.c.l.b16 %v292
  %v888 = vunpack.c.h.b16 %v292
  %v889 = vunpack.c.l.b16 %v293
  %v890 = vunpack.c.h.b16 %v293
  %v891 = vunpack.c.l.b16 %v294
  %v892 = vunpack.c.h.b16 %v294
  %v893 = vunpack.c.l.b16 %v295
  %v894 = vunpack.c.h.b16 %v295
  %v895 = vunpack.c.l.b16 %v296
  %v896 = vunpack.c.h.b16 %v296
  %v897 = vunpack.c.l.b16 %v297
  %v898 = vunpack.c.h.b16 %v297
  %v899 = vunpack.c.l.b16 %v298
  %v900 = vunpack.c.h.b16 %v298
  %v901 = vunpack.c.l.b16 %v299
  %v902 = vunpack.c.h.b16 %v299
  %v903 = vunpack.c.l.b16 %v300
  %v904 = vunpack.c.h.b16 %v300
  %v905 = vunpack.c.l.b16 %v301
  %v906 = vunpack.c.h.b16 %v301
  %v907 = vunpack.c.l.b16 %v302
  %v908 = vunpack.c.h.b16 %v302
  %v909 = vunpack.c.l.b16 %v303
  %v910 = vunpack.c.h.b16 %v303
  %v911 = vunpack.c.l.b16 %v304
  %v912 = vunpack.c.h.b16 %v304
  %v913 = vunpack.c.l.b16 %v305
  %v914 = vunpack.c.h.b16 %v305
  %v915 = vunpack.c.l.b16 %v306
  %v916 = vunpack.c.h.b16 %v306
  %v917 = vunpack.c.l.b16 %v307
  %v918 = vunpack.c.h.b16 %v307
  %v919 = vunpack.c.l.b16 %v308
  %v920 = vunpack.c.h.b16 %v308
  %v921 = vunpack.c.l.b16 %v309
  %v922 = vunpack.c.h.b16 %v309
  %v923 = vunpack.c.l.b16 %v310
  %v924 = vunpack.c.h.b16 %v310
  %v925 = vunpack.c.l.b16 %v311
  %v926 = vunpack.c.h.b16 %v311
  %v927 = vunpack.c.l.b16 %v312
  %v928 = vunpack.c.h.b16 %v312
  %v929 = vunpack.c.l.b16 %v313
  %v930 = vunpack.c.h.b16 %v313
  %v931 = vunpack.c.l.b16 %v314
  %v932 = vunpack.c.h.b16 %v314
  %v933 = vunpack.c.l.b16 %v315
  %v934 = vunpack.c.h.b16 %v315
  %v935 = vunpack.c.l.b16 %v316
  %v936 = vunpack.c.h.b16 %v316
  %v937 = vunpack.c.l.b16 %v317
  %v938 = vunpack.c.h.b16 %v317
  %v939 = vunpack.c.l.b16 %v318
  %v940 = vunpack.c.h.b16 %v318
  %v941 = vunpack.c.l.b16 %v319
  %v942 = vunpack.c.h.b16 %v319
  %v943 = vunpack.c.l.b16 %v320
  %v944 = vunpack.c.h.b16 %v320
  %v945 = vunpack.c.l.b16 %v321
  %v946 = vunpack.c.h.b16 %v321
  %v947 = vunpack.c.l.b16 %v322
  %v948 = vunpack.c.h.b16 %v322
  %v949 = vunpack.c.l.b16 %v323
  %v950 = vunpack.c.h.b16 %v323
  %v951 = vunpack.c.l.b16 %v324
  %v952 = vunpack.c.h.b16 %v324
  %v953 = vunpack.c.l.b16 %v325
  %v954 = vunpack.c.h.b16 %v325
  %v955 = vunpack.c.l.b16 %v326
  %v956 = vunpack.c.h.b16 %v326
  %v957 = vunpack.c.l.b16 %v327
  %v958 = vunpack.c.h.b16 %v327
  %v959 = vunpack.c.l.b16 %v328
  %v960 = vunpack.c.h.b16 %v328
  %v961 = vunpack.c.l.b16 %v329
  %v962 = vunpack.c.h.b16 %v329
  %v963 = vunpack.c.l.b16 %v330
  %v964 = vunpack.c.h.b16 %v330
  %v965 = vunpack.c.l.b16 %v331
  %v966 = vunpack.c.h.b16 %v331
  %v967 = vunpack.c.l.b16 %v332
  %v968 = vunpack.c.h.b16 %v332
  %v969 = vunpack.c.l.b16 %v333
  %v970 = vunpack.c.h.b16 %v333
  %v971 = vunpack.c.l.b16 %v334
  %v972 = vunpack.c.h.b16 %v334
  %v973 = vunpack.c.l.b16 %v335
  %v974 = vunpack.c.h.b16 %v335
  %v975 = vunpack.c.l.b16 %v336
  %v976 = vunpack.c.h.b16 %v336
  %v977 = vunpack.c.l.b16 %v337
  %v978 = vunpack.c.h.b16 %v337
  %v979 = vunpack.c.l.b16 %v338
  %v980 = vunpack.c.h.b16 %v338
  %v981 = vunpack.c.l.b16 %v339
  %v982 = vunpack.c.h.b16 %v339
  %v983 = vunpack.c.l.b16 %v340
  %v984 = vunpack.c.h.b16 %v340
  %v985 = vunpack.c.l.b16 %v341
  %v986 = vunpack.c.h.b16 %v341
  %v987 = vunpack.c.l.b16 %v342
  %v988 = vunpack.c.h.b16 %v342
  %v989 = vunpack.c.l.b16 %v343
  %v990 = vunpack.c.h.b16 %v343
  %v991 = vunpack.c.l.b16 %v344
  %v992 = vunpack.c.h.b16 %v344
  %v993 = vunpack.c.l.b16 %v345
  %v994 = vunpack.c.h.b16 %v345
  %v995 = vunpack.c.l.b16 %v346
  %v996 = vunpack.c.h.b16 %v346
  %v997 = vunpack.c.l.b16 %v347
  %v998 = vunpack.c.h.b16 %v347
  %v999 = vunpack.c.l.b16 %v348
  %v1000 = vunpack.c.h.b16 %v348
  %v1001 = vunpack.c.l.b16 %v349
  %v1002 = vunpack.c.h.b16 %v349
  %v1003 = vunpack.c.l.b16 %v350
  %v1004 = vunpack.c.h.b16 %v350
  %v1005 = vunpack.c.l.b16 %v351
  %v1006 = vunpack.c.h.b16 %v351
  %v1007 = vunpack.c.l.b16 %v352
  %v1008 = vunpack.c.h.b16 %v352
  %v1009 = vunpack.c.l.b16 %v353
  %v1010 = vunpack.c.h.b16 %v353
  %v1011 = vunpack.c.l.b16 %v354
  %v1012 = vunpack.c.h.b16 %v354
  %v1013 = vunpack.c.l.b16 %v355
  %v1014 = vunpack.c.h.b16 %v355
  %v1015 = vunpack.c.l.b16 %v356
  %v1016 = vunpack.c.h.b16 %v356
  %v1017 = vunpack.c.l.b16 %v357
  %v1018 = vunpack.c.h.b16 %v357
  %v1019 = vunpack.c.l.b16 %v358
  %v1020 = vunpack.c.h.b16 %v358
  %v1021 = vunpack.c.l.b16 %v359
  %v1022 = vunpack.c.h.b16 %v359
  %v1023 = vunpack.c.l.b16 %v360
  %v1024 = vunpack.c.h.b16 %v360
  %v1025 = vunpack.c.l.b16 %v361
  %v1026 = vunpack.c.h.b16 %v361
  %v1027 = vunpack.c.l.b16 %v362
  %v1028 = vunpack.c.h.b16 %v362
  %v1029 = vunpack.c.l.b16 %v363
  %v1030 = vunpack.c.h.b16 %v363
  %v1031 = vunpack.c.l.b16 %v364
  %v1032 = vunpack.c.h.b16 %v364
  %v1033 = vunpack.c.l.b16 %v365
  %v1034 = vunpack.c.h.b16 %v365
  %v1035 = vunpack.c.l.b16 %v366
  %v1036 = vunpack.c.h.b16 %v366
  %v1037 = vunpack.c.l.b16 %v367
  %v1038 = vunpack.c.h.b16 %v367
  %v1039 = vunpack.c.l.b16 %v368
  %v1040 = vunpack.c.h.b16 %v368
  %v1041 = vunpack.c.l.b16 %v369
  %v1042 = vunpack.c.h.b16 %v369
  %v1043 = vunpack.c.l.b16 %v370
  %v1044 = vunpack.c.h.b16 %v370
  %v1045 = vunpack.c.l.b16 %v371
  %v1046 = vunpack.c.h.b16 %v371
  %v1047 = vunpack.c.l.b16 %v372
  %v1048 = vunpack.c.h.b16 %v372
  %v1049 = vunpack.c.l.b16 %v373
  %v1050 = vunpack.c.h.b16 %v373
  %v1051 = vunpack.c.l.b16 %v374
  %v1052 = vunpack.c.h.b16 %v374
  %v1053 = vunpack.c.l.b16 %v375
  %v1054 = vunpack.c.h.b16 %v375
  %v1055 = vunpack.c.l.b16 %v376
  %v1056 = vunpack.c.h.b16 %v376
  %v1057 = vunpack.c.l.b16 %v377
  %v1058 = vunpack.c.h.b16 %v377
  %v1059 = vunpack.c.l.b16 %v378
  %v1060 = vunpack.c.h.b16 %v378
  %v1061 = vunpack.c.l.b16 %v379
  %v1062 = vunpack.c.h.b16 %v379
  %v1063 = vunpack.c.l.b16 %v380
  %v1064 = vunpack.c.h.b16 %v380
  %v1065 = vunpack.c.l.b16 %v381
  %v1066 = vunpack.c.h.b16 %v381
  %v1067 = vunpack.c.l.b16 %v382
  %v1068 = vunpack.c.h.b16 %v382
  %v1069 = vunpack.c.l.b16 %v383
  %v1070 = vunpack.c.h.b16 %v383
  %v1071 = vunpack.c.l.b16 %v384
  %v1072 = vunpack.c.h.b16 %v384
  %v1073 = vunpack.c.l.b16 %v385
  %v1074 = vunpack.c.h.b16 %v385
  %v1075 = vunpack.c.l.b16 %v386
  %v1076 = vunpack.c.h.b16 %v386
  %v1077 = vunpack.c.l.b16 %v387
  %v1078 = vunpack.c.h.b16 %v387
  %v1079 = vunpack.c.l.b16 %v388
  %v1080 = vunpack.c.h.b16 %v388
  %v1081 = vunpack.c.l.b16 %v389
  %v1082 = vunpack.c.h.b16 %v389
  %v1083 = vunpack.c.l.b16 %v390
  %v1084 = vunpack.c.h.b16 %v390
  %v1085 = vunpack.c.l.b16 %v391
  %v1086 = vunpack.c.h.b16 %v391
  %v1087 = vunpack.c.l.b16 %v392
  %v1088 = vunpack.c.h.b16 %v392
  %v1089 = vunpack.c.l.b16 %v393
  %v1090 = vunpack.c.h.b16 %v393
  %v1091 = vunpack.c.l.b16 %v394
  %v1092 = vunpack.c.h.b16 %v394
  %v1093 = vunpack.c.l.b16 %v395
  %v1094 = vunpack.c.h.b16 %v395
  %v1095 = vunpack.c.l.b16 %v396
  %v1096 = vunpack.c.h.b16 %v396
  %v1097 = vunpack.c.l.b16 %v397
  %v1098 = vunpack.c.h.b16 %v397
  %v1099 = vunpack.c.l.b16 %v398
  %v1100 = vunpack.c.h.b16 %v398
  %v1101 = vunpack.c.l.b16 %v399
  %v1102 = vunpack.c.h.b16 %v399
  %v1103 = vunpack.c.l.b16 %v400
  %v1104 = vunpack.c.h.b16 %v400
  %v1105 = vunpack.c.l.b16 %v401
  %v1106 = vunpack.c.h.b16 %v401
  %v1107 = vunpack.c.l.b16 %v402
  %v1108 = vunpack.c.h.b16 %v402
  %v1109 = vunpack.c.l.b16 %v403
  %v1110 = vunpack.c.h.b16 %v403
  %v1111 = vunpack.c.l.b16 %v404
  %v1112 = vunpack.c.h.b16 %v404
  %v1113 = vunpack.c.l.b16 %v405
  %v1114 = vunpack.c.h.b16 %v405
  %v1115 = vunpack.c.l.b16 %v406
  %v1116 = vunpack.c.h.b16 %v406
  %v1117 = vunpack.c.l.b16 %v407
  %v1118 = vunpack.c.h.b16 %v407
  %v1119 = vunpack.c.l.b16 %v408
  %v1120 = vunpack.c.h.b16 %v408
  %v1121 = vunpack.c.l.b16 %v409
  %v1122 = vunpack.c.h.b16 %v409
  %v1123 = vunpack.c.l.b16 %v410
  %v1124 = vunpack.c.h.b16 %v410
  %v1125 = vunpack.c.l.b16 %v411
  %v1126 = vunpack.c.h.b16 %v411
  %v1127 = vunpack.c.l.b16 %v412
  %v1128 = vunpack.c.h.b16 %v412
  %v1129 = vunpack.c.l.b16 %v413
  %v1130 = vunpack.c.h.b16 %v413
  %v1131 = vunpack.c.l.b16 %v414
  %v1132 = vunpack.c.h.b16 %v414
  %v1133 = vunpack.c.l.b16 %v415
  %v1134 = vunpack.c.h.b16 %v415
  %v1135 = vunpack.c.l.b16 %v416
  %v1136 = vunpack.c.h.b16 %v416
  %v1137 = vunpack.c.l.b16 %v417
  %v1138 = vunpack.c.h.b16 %v417
  %v1139 = vunpack.c.l.b16 %v418
  %v1140 = vunpack.c.h.b16 %v418
  %v1141 = vunpack.c.l.b16 %v419
  %v1142 = vunpack.c.h.b16 %v419
  %v1143 = vunpack.c.l.b16 %v420
  %v1144 = vunpack.c.h.b16 %v420
  %v1145 = vunpack.c.l.b16 %v421
  %v1146 = vunpack.c.h.b16 %v421
  %v1147 = vunpack.c.l.b16 %v422
  %v1148 = vunpack.c.h.b16 %v422
  %v1149 = vunpack.c.l.b16 %v423
  %v1150 = vunpack.c.h.b16 %v423
  %v1151 = vunpack.c.l.b16 %v424
  %v1152 = vunpack.c.h.b16 %v424
  %v1153 = vunpack.c.l.b16 %v425
  %v1154 = vunpack.c.h.b16 %v425
  %v1155 = vunpack.c.l.b16 %v426
  %v1156 = vunpack.c.h.b16 %v426
  %v1157 = vunpack.c.l.b16 %v427
  %v1158 = vunpack.c.h.b16 %v427
  %v1159 = vunpack.c.l.b16 %v428
  %v1160 = vunpack.c.h.b16 %v428
  %v1161 = vunpack.c.l.b16 %v429
  %v1162 = vunpack.c.h.b16 %v429
  %v1163 = vunpack.c.l.b16 %v430
  %v1164 = vunpack.c.h.b16 %v430
  %v1165 = vunpack.c.l.b16 %v431
  %v1166 = vunpack.c.h.b16 %v431
  %v1167 = vunpack.c.l.b16 %v432
  %v1168 = vunpack.c.h.b16 %v432
  %v1169 = vunpack.c.l.b16 %v433
  %v1170 = vunpack.c.h.b16 %v433
  %v1171 = vunpack.c.l.b16 %v434
  %v1172 = vunpack.c.h.b16 %v434
  %v1173 = vunpack.c.l.b16 %v435
  %v1174 = vunpack.c.h.b16 %v435
  %v1175 = vunpack.c.l.b16 %v436
  %v1176 = vunpack.c.h.b16 %v436
  %v1177 = vunpack.c.l.b16 %v437
  %v1178 = vunpack.c.h.b16 %v437
  %v1179 = vunpack.c.l.b16 %v438
  %v1180 = vunpack.c.h.b16 %v438
  %v1181 = vunpack.c.l.b16 %v439
  %v1182 = vunpack.c.h.b16 %v439
  %v1183 = vunpack.c.l.b16 %v440
  %v1184 = vunpack.c.h.b16 %v440
  %v1185 = vunpack.c.l.b16 %v441
  %v1186 = vunpack.c.h.b16 %v441
  %v1187 = vunpack.c.l.b16 %v442
  %v1188 = vunpack.c.h.b16 %v442
  %v1189 = vunpack.c.l.b16 %v443
  %v1190 = vunpack.c.h.b16 %v443
  %v1191 = vunpack.c.l.b16 %v444
  %v1192 = vunpack.c.h.b16 %v444
  %v1193 = vunpack.c.l.b16 %v445
  %v1194 = vunpack.c.h.b16 %v445
  %v1195 = vunpack.c.l.b16 %v446
  %v1196 = vunpack.c.h.b16 %v446
  %v1197 = vunpack.c.l.b16 %v447
  %v1198 = vunpack.c.h.b16 %v447
  %v1199 = vunpack.c.l.b16 %v448
  %v1200 = vunpack.c.h.b16 %v448
  %v1201 = vunpack.c.l.b16 %v449
  %v1202 = vunpack.c.h.b16 %v449
  %v1203 = vunpack.c.l.b16 %v450
  %v1204 = vunpack.c.h.b16 %v450
  %v1205 = vunpack.c.l.b16 %v451
  %v1206 = vunpack.c.h.b16 %v451
  %v1207 = vunpack.c.l.b16 %v452
  %v1208 = vunpack.c.h.b16 %v452
  %v1209 = vunpack.c.l.b16 %v453
  %v1210 = vunpack.c.h.b16 %v453
  %v1211 = vunpack.c.l.b16 %v454
  %v1212 = vunpack.c.h.b16 %v454
  %v1213 = vunpack.c.l.b16 %v455
  %v1214 = vunpack.c.h.b16 %v455
  %v1215 = vunpack.c.l.b16 %v456
  %v1216 = vunpack.c.h.b16 %v456
  %v1217 = vunpack.c.l.b16 %v457
  %v1218 = vunpack.c.h.b16 %v457
  %v1219 = vunpack.c.l.b16 %v458
  %v1220 = vunpack.c.h.b16 %v458
  %v1221 = vunpack.c.l.b16 %v459
  %v1222 = vunpack.c.h.b16 %v459
  %v1223 = vunpack.c.l.b16 %v460
  %v1224 = vunpack.c.h.b16 %v460
  %v1225 = vunpack.c.l.b16 %v461
  %v1226 = vunpack.c.h.b16 %v461
  %v1227 = vunpack.c.l.b16 %v462
  %v1228 = vunpack.c.h.b16 %v462
  %v1229 = vunpack.c.l.b16 %v463
  %v1230 = vunpack.c.h.b16 %v463
  %v1231 = vunpack.c.l.b16 %v464
  %v1232 = vunpack.c.h.b16 %v464
  %v1233 = vunpack.c.l.b16 %v465
  %v1234 = vunpack.c.h.b16 %v465
  %v1235 = vunpack.c.l.b16 %v466
  %v1236 = vunpack.c.h.b16 %v466
  %v1237 = vunpack.c.l.b16 %v467
  %v1238 = vunpack.c.h.b16 %v467
  %v1239 = vunpack.c.l.b16 %v468
  %v1240 = vunpack.c.h.b16 %v468
  %v1241 = vunpack.c.l.b16 %v469
  %v1242 = vunpack.c.h.b16 %v469
  %v1243 = vunpack.c.l.b16 %v470
  %v1244 = vunpack.c.h.b16 %v470
  %v1245 = vunpack.c.l.b16 %v471
  %v1246 = vunpack.c.h.b16 %v471
  %v1247 = vunpack.c.l.b16 %v472
  %v1248 = vunpack.c.h.b16 %v472
  %v1249 = vunpack.c.l.b16 %v473
  %v1250 = vunpack.c.h.b16 %v473
  %v1251 = vunpack.c.l.b16 %v474
  %v1252 = vunpack.c.h.b16 %v474
  %v1253 = vunpack.c.l.b16 %v475
  %v1254 = vunpack.c.h.b16 %v475
  %v1255 = vunpack.c.l.b16 %v476
  %v1256 = vunpack.c.h.b16 %v476
  %v1257 = vunpack.c.l.b16 %v477
  %v1258 = vunpack.c.h.b16 %v477
  %v1259 = vunpack.c.l.b16 %v478
  %v1260 = vunpack.c.h.b16 %v478
  %v1261 = vunpack.c.l.b16 %v479
  %v1262 = vunpack.c.h.b16 %v479
  %v1263 = vunpack.c.l.b16 %v480
  %v1264 = vunpack.c.h.b16 %v480
  %v1265 = vunpack.c.l.b16 %v481
  %v1266 = vunpack.c.h.b16 %v481
  %v1267 = vunpack.c.l.b16 %v482
  %v1268 = vunpack.c.h.b16 %v482
  %v1269 = vunpack.c.l.b16 %v483
  %v1270 = vunpack.c.h.b16 %v483
  %v1271 = vunpack.c.l.b16 %v484
  %v1272 = vunpack.c.h.b16 %v484
  %v1273 = vunpack.c.l.b16 %v485
  %v1274 = vunpack.c.h.b16 %v485
  %v1275 = vunpack.c.l.b16 %v486
  %v1276 = vunpack.c.h.b16 %v486
  %v1277 = vpack.c.b16 %v769, %v765
  %v1278 = vpack.c.b16 %v770, %v766
  %v1279 = vpack.c.b16 %v771, %v767
  %v1280 = vpack.c.b16 %v772, %v768
  %v1281 = vpack.c.b16 %v777, %v773
  %v1282 = vpack.c.b16 %v778, %v774
  %v1283 = vpack.c.b16 %v779, %v775
  %v1284 = vpack.c.b16 %v780, %v776
  %v1285 = vpack.c.b16 %v785, %v781
  %v1286 = vpack.c.b16 %v786, %v782
  %v1287 = vpack.c.b16 %v787, %v783
  %v1288 = vpack.c.b16 %v788, %v784
  %v1289 = vpack.c.b16 %v793, %v789
  %v1290 = vpack.c.b16 %v794, %v790
  %v1291 = vpack.c.b16 %v795, %v791
  %v1292 = vpack.c.b16 %v796, %v792
  %v1293 = vpack.c.b16 %v801, %v797
  %v1294 = vpack.c.b16 %v802, %v798
  %v1295 = vpack.c.b16 %v803, %v799
  %v1296 = vpack.c.b16 %v804, %v800
  %v1297 = vpack.c.b16 %v809, %v805
  %v1298 = vpack.c.b16 %v810, %v806
  %v1299 = vpack.c.b16 %v811, %v807
  %v1300 = vpack.c.b16 %v812, %v808
  %v1301 = vpack.c.b16 %v817, %v813
  %v1302 = vpack.c.b16 %v818, %v814
  %v1303 = vpack.c.b16 %v819, %v815
  %v1304 = vpack.c.b16 %v820, %v816
  %v1305 = vpack.c.b16 %v825, %v821
  %v1306 = vpack.c.b16 %v826, %v822
  %v1307 = vpack.c.b16 %v827, %v823
  %v1308 = vpack.c.b16 %v828, %v824
  %v1309 = vpack.c.b16 %v833, %v829
  %v1310 = vpack.c.b16 %v834, %v830
  %v1311 = vpack.c.b16 %v835, %v831
  %v1312 = vpack.c.b16 %v836, %v832
  %v1313 = vpack.c.b16 %v841, %v837
  %v1314 = vpack.c.b16 %v842, %v838
  %v1315 = vpack.c.b16 %v843, %v839
  %v1316 = vpack.c.b16 %v844, %v840
  %v1317 = vpack.c.b16 %v849, %v845
  %v1318 = vpack.c.b16 %v850, %v846
  %v1319 = vpack.c.b16 %v851, %v847
  %v1320 = vpack.c.b16 %v852, %v848
  %v1321 = vpack.c.b16 %v857, %v853
  %v1322 = vpack.c.b16 %v858, %v854
  %v1323 = vpack.c.b16 %v859, %v855
  %v1324 = vpack.c.b16 %v860, %v856
  %v1325 = vpack.c.b16 %v865, %v861
  %v1326 = vpack.c.b16 %v866, %v862
  %v1327 = vpack.c.b16 %v867, %v863
  %v1328 = vpack.c.b16 %v868, %v864
  %v1329 = vpack.c.b16 %v873, %v869
  %v1330 = vpack.c.b16 %v874, %v870
  %v1331 = vpack.c.b16 %v875, %v871
  %v1332 = vpack.c.b16 %v876, %v872
  %v1333 = vpack.c.b16 %v881, %v877
  %v1334 = vpack.c.b16 %v882, %v878
  %v1335 = vpack.c.b16 %v883, %v879
  %v1336 = vpack.c.b16 %v884, %v880
  %v1337 = vpack.c.b16 %v889, %v885
  %v1338 = vpack.c.b16 %v890, %v886
  %v1339 = vpack.c.b16 %v891, %v887
  %v1340 = vpack.c.b16 %v892, %v888
  %v1341 = vpack.c.b16 %v897, %v893
  %v1342 = vpack.c.b16 %v898, %v894
  %v1343 = vpack.c.b16 %v899, %v895
  %v1344 = vpack.c.b16 %v900, %v896
  %v1345 = vpack.c.b16 %v905, %v901
  %v1346 = vpack.c.b16 %v906, %v902
  %v1347 = vpack.c.b16 %v907, %v903
  %v1348 = vpack.c.b16 %v908, %v904
  %v1349 = vpack.c.b16 %v913, %v909
  %v1350 = vpack.c.b16 %v914, %v910
  %v1351 = vpack.c.b16 %v915, %v911
  %v1352 = vpack.c.b16 %v916, %v912
  %v1353 = vpack.c.b16 %v921, %v917
  %v1354 = vpack.c.b16 %v922, %v918
  %v1355 = vpack.c.b16 %v923, %v919
  %v1356 = vpack.c.b16 %v924, %v920
  %v1357 = vpack.c.b16 %v929, %v925
  %v1358 = vpack.c.b16 %v930, %v926
  %v1359 = vpack.c.b16 %v931, %v927
  %v1360 = vpack.c.b16 %v932, %v928
  %v1361 = vpack.c.b16 %v937, %v933
  %v1362 = vpack.c.b16 %v938, %v934
  %v1363 = vpack.c.b16 %v939, %v935
  %v1364 = vpack.c.b16 %v940, %v936
  %v1365 = vpack.c.b16 %v945, %v941
  %v1366 = vpack.c.b16 %v946, %v942
  %v1367 = vpack.c.b16 %v947, %v943
  %v1368 = vpack.c.b16 %v948, %v944
  %v1369 = vpack.c.b16 %v953, %v949
  %v1370 = vpack.c.b16 %v954, %v950
  %v1371 = vpack.c.b16 %v955, %v951
  %v1372 = vpack.c.b16 %v956, %v952
  %v1373 = vpack.c.b16 %v961, %v957
  %v1374 = vpack.c.b16 %v962, %v958
  %v1375 = vpack.c.b16 %v963, %v959
  %v1376 = vpack.c.b16 %v964, %v960
  %v1377 = vpack.c.b16 %v969, %v965
  %v1378 = vpack.c.b16 %v970, %v966
  %v1379 = vpack.c.b16 %v971, %v967
  %v1380 = vpack.c.b16 %v972, %v968
  %v1381 = vpack.c.b16 %v977, %v973
  %v1382 = vpack.c.b16 %v978, %v974
  %v1383 = vpack.c.b16 %v979, %v975
  %v1384 = vpack.c.b16 %v980, %v976
  %v1385 = vpack.c.b16 %v985, %v981
  %v1386 = vpack.c.b16 %v986, %v982
  %v1387 = vpack.c.b16 %v987, %v983
  %v1388 = vpack.c.b16 %v988, %v984
  %v1389 = vpack.c.b16 %v993, %v989
  %v1390 = vpack.c.b16 %v994, %v990
  %v1391 = vpack.c.b16 %v995, %v991
  %v1392 = vpack.c.b16 %v996, %v992
  %v1393 = vpack.c.b16 %v1001, %v997
  %v1394 = vpack.c.b16 %v1002, %v998
  %v1395 = vpack.c.b16 %v1003, %v999
  %v1396 = vpack.c.b16 %v1004, %v1000
  %v1397 = vpack.c.b16 %v1009, %v1005
  %v1398 = vpack.c.b16 %v1010, %v1006
  %v1399 = vpack.c.b16 %v1011, %v1007
  %v1400 = vpack.c.b16 %v1012, %v1008
  %v1401 = vpack.c.b16 %v1017, %v1013
  %v1402 = vpack.c.b16 %v1018, %v1014
  %v1403 = vpack.c.b16 %v1019, %v1015
  %v1404 = vpack.c.b16 %v1020, %v1016
  %v1405 = vpack.c.b16 %v1025, %v1021
  %v1406 = vpack.c.b16 %v1026, %v1022
  %v1407 = vpack.c.b16 %v1027, %v1023
  %v1408 = vpack.c.b16 %v1028, %v1024
  %v1409 = vpack.c.b16 %v1033, %v1029
  %v1410 = vpack.c.b16 %v1034, %v1030
  %v1411 = vpack.c.b16 %v1035, %v1031
  %v1412 = vpack.c.b16 %v1036, %v1032
  %v1413 = vpack.c.b16 %v1041, %v1037
  %v1414 = vpack.c.b16 %v1042, %v1038
  %v1415 = vpack.c.b16 %v1043, %v1039
  %v1416 = vpack.c.b16 %v1044, %v1040
  %v1417 = vpack.c.b16 %v1049, %v1045
  %v1418 = vpack.c.b16 %v1050, %v1046
  %v1419 = vpack.c.b16 %v1051, %v1047
  %v1420 = vpack.c.b16 %v1052, %v1048
  %v1421 = vpack.c.b16 %v1057, %v1053
  %v1422 = vpack.c.b16 %v1058, %v1054
  %v1423 = vpack.c.b16 %v1059, %v1055
  %v1424 = vpack.c.b16 %v1060, %v1056
  %v1425 = vpack.c.b16 %v1065, %v1061
  %v1426 = vpack.c.b16 %v1066, %v1062
  %v1427 = vpack.c.b16 %v1067, %v1063
  %v1428 = vpack.c.b16 %v1068, %v1064
  %v1429 = vpack.c.b16 %v1073, %v1069
  %v1430 = vpack.c.b16 %v1074, %v1070
  %v1431 = vpack.c.b16 %v1075, %v1071
  %v1432 = vpack.c.b16 %v1076, %v1072
  %v1433 = vpack.c.b16 %v1081, %v1077
  %v1434 = vpack.c.b16 %v1082, %v1078
  %v1435 = vpack.c.b16 %v1083, %v1079
  %v1436 = vpack.c.b16 %v1084, %v1080
  %v1437 = vpack.c.b16 %v1089, %v1085
  %v1438 = vpack.c.b16 %v1090, %v1086
  %v1439 = vpack.c.b16 %v1091, %v1087
  %v1440 = vpack.c.b16 %v1092, %v1088
  %v1441 = vpack.c.b16 %v1097, %v1093
  %v1442 = vpack.c.b16 %v1098, %v1094
  %v1443 = vpack.c.b16 %v1099, %v1095
  %v1444 = vpack.c.b16 %v1100, %v1096
  %v1445 = vpack.c.b16 %v1105, %v1101
  %v1446 = vpack.c.b16 %v1106, %v1102
  %v1447 = vpack.c.b16 %v1107, %v1103
  %v1448 = vpack.c.b16 %v1108, %v1104
  %v1449 = vpack.c.b16 %v1113, %v1109
  %v1450 = vpack.c.b16 %v1114, %v1110
  %v1451 = vpack.c.b16 %v1115, %v1111
  %v1452 = vpack.c.b16 %v1116, %v1112
  %v1453 = vpack.c.b16 %v1121, %v1117
  %v1454 = vpack.c.b16 %v1122, %v1118
  %v1455 = vpack.c.b16 %v1123, %v1119
  %v1456 = vpack.c.b16 %v1124, %v1120
  %v1457 = vpack.c.b16 %v1129, %v1125
  %v1458 = vpack.c.b16 %v1130, %v1126
  %v1459 = vpack.c.b16 %v1131, %v1127
  %v1460 = vpack.c.b16 %v1132, %v1128
  %v1461 = vpack.c.b16 %v1137, %v1133
  %v1462 = vpack.c.b16 %v1138, %v1134
  %v1463 = vpack.c.b16 %v1139, %v1135
  %v1464 = vpack.c.b16 %v1140, %v1136
  %v1465 = vpack.c.b16 %v1145, %v1141
  %v1466 = vpack.c.b16 %v1146, %v1142
  %v1467 = vpack.c.b16 %v1147, %v1143
  %v1468 = vpack.c.b16 %v1148, %v1144
  %v1469 = vpack.c.b16 %v1153, %v1149
  %v1470 = vpack.c.b16 %v1154, %v1150
  %v1471 = vpack.c.b16 %v1155, %v1151
  %v1472 = vpack.c.b16 %v1156, %v1152
  %v1473 = vpack.c.b16 %v1161, %v1157
  %v1474 = vpack.c.b16 %v1162, %v1158
  %v1475 = vpack.c.b16 %v1163, %v1159
  %v1476 = vpack.c.b16 %v1164, %v1160
  %v1477 = vpack.c.b16 %v1169, %v1165
  %v1478 = vpack.c.b16 %v1170, %v1166
  %v1479 = vpack.c.b16 %v1171, %v1167
  %v1480 = vpack.c.b16 %v1172, %v1168
  %v1481 = vpack.c.b16 %v1177, %v1173
  %v1482 = vpack.c.b16 %v1178, %v1174
  %v1483 = vpack.c.b16 %v1179, %v1175
  %v1484 = vpack.c.b16 %v1180, %v1176
  %v1485 = vpack.c.b16 %v1185, %v1181
  %v1486 = vpack.c.b16 %v1186, %v1182
  %v1487 = vpack.c.b16 %v1187, %v1183
  %v1488 = vpack.c.b16 %v1188, %v1184
  %v1489 = vpack.c.b16 %v1193, %v1189
  %v1490 = vpack.c.b16 %v1194, %v1190
  %v1491 = vpack.c.b16 %v1195, %v1191
  %v1492 = vpack.c.b16 %v1196, %v1192
  %v1493 = vpack.c.b16 %v1201, %v1197
  %v1494 = vpack.c.b16 %v1202, %v1198
  %v1495 = vpack.c.b16 %v1203, %v1199
  %v1496 = vpack.c.b16 %v1204, %v1200
  %v1497 = vpack.c.b16 %v1209, %v1205
  %v1498 = vpack.c.b16 %v1210, %v1206
  %v1499 = vpack.c.b16 %v1211, %v1207
  %v1500 = vpack.c.b16 %v1212, %v1208
  %v1501 = vpack.c.b16 %v1217, %v1213
  %v1502 = vpack.c.b16 %v1218, %v1214
  %v1503 = vpack.c.b16 %v1219, %v1215
  %v1504 = vpack.c.b16 %v1220, %v1216
  %v1505 = vpack.c.b16 %v1225, %v1221
  %v1506 = vpack.c.b16 %v1226, %v1222
  %v1507 = vpack.c.b16 %v1227, %v1223
  %v1508 = vpack.c.b16 %v1228, %v1224
  %v1509 = vpack.c.b16 %v1233, %v1229
  %v1510 = vpack.c.b16 %v1234, %v1230
  %v1511 = vpack.c.b16 %v1235, %v1231
  %v1512 = vpack.c.b16 %v1236, %v1232
  %v1513 = vpack.c.b16 %v1241, %v1237
  %v1514 = vpack.c.b16 %v1242, %v1238
  %v1515 = vpack.c.b16 %v1243, %v1239
  %v1516 = vpack.c.b16 %v1244, %v1240
  %v1517 = vpack.c.b16 %v1249, %v1245
  %v1518 = vpack.c.b16 %v1250, %v1246
  %v1519 = vpack.c.b16 %v1251, %v1247
  %v1520 = vpack.c.b16 %v1252, %v1248
  %v1521 = vpack.c.b16 %v1257, %v1253
  %v1522 = vpack.c.b16 %v1258, %v1254
  %v1523 = vpack.c.b16 %v1259, %v1255
  %v1524 = vpack.c.b16 %v1260, %v1256
  %v1525 = vpack.c.b16 %v1265, %v1261
  %v1526 = vpack.c.b16 %v1266, %v1262
  %v1527 = vpack.c.b16 %v1267, %v1263
  %v1528 = vpack.c.b16 %v1268, %v1264
  %v1529 = vpack.c.b16 %v1273, %v1269
  %v1530 = vpack.c.b16 %v1274, %v1270
  %v1531 = vpack.c.b16 %v1275, %v1271
  %v1532 = vpack.c.b16 %v1276, %v1272
  %1789 = vmatprep.subr.bf16.mxu0 %v1306
  %1790 = vmatpush1.bf16.msra.mxu0 %v1305
  %1791 = vmatprep.subr.bf16.mxu0 %v1302
  %1792 = vmatpush1.bf16.msra.mxu0 %v1301
  %1793 = vmatprep.subr.bf16.mxu0 %v1298
  %1794 = vmatpush1.bf16.msra.mxu0 %v1297
  %1795 = vmatprep.subr.bf16.mxu0 %v1294
  %1796 = vmatpush1.bf16.msra.mxu0 %v1293
  %1797 = vmatprep.subr.bf16.mxu0 %v1290
  %1798 = vmatpush1.bf16.msra.mxu0 %v1289
  %1799 = vmatprep.subr.bf16.mxu0 %v1286
  %1800 = vmatpush1.bf16.msra.mxu0 %v1285
  %1801 = vmatprep.subr.bf16.mxu0 %v1282
  %1802 = vmatpush1.bf16.msra.mxu0 %v1281
  %1803 = vmatprep.subr.bf16.mxu0 %v1278
  %1804 = vmatpush1.bf16.msra.mxu0 %v1277
  %1805 = vmatprep.subr.bf16.mxu0 %v1338
  %1806 = vmatpush2.bf16.msra.mxu0 %v1337
  %1807 = vmatprep.subr.bf16.mxu0 %v1334
  %1808 = vmatpush2.bf16.msra.mxu0 %v1333
  %1809 = vmatprep.subr.bf16.mxu0 %v1330
  %1810 = vmatpush2.bf16.msra.mxu0 %v1329
  %1811 = vmatprep.subr.bf16.mxu0 %v1326
  %1812 = vmatpush2.bf16.msra.mxu0 %v1325
  %1813 = vmatprep.subr.bf16.mxu0 %v1322
  %1814 = vmatpush2.bf16.msra.mxu0 %v1321
  %1815 = vmatprep.subr.bf16.mxu0 %v1318
  %1816 = vmatpush2.bf16.msra.mxu0 %v1317
  %1817 = vmatprep.subr.bf16.mxu0 %v1314
  %1818 = vmatpush2.bf16.msra.mxu0 %v1313
  %1819 = vmatprep.subr.bf16.mxu0 %v1310
  %1820 = vmatpush2.bf16.msra.mxu0 %v1309
  %1821 = vmatprep.mubr.bf16.mxu0 %v168
  %1822 = vmatmul.mubr.bf16.gmra.mxu0 %v167
  %v1823 = vpop.f32.mrf.mxu0
  %v1824 = vadd.f32 %v492, %v1823
  %v1825 = vpop.f32.mrf.mxu0
  %v1826 = vadd.f32 %v496, %v1825
  %v1827 = vpop.f32.mrf.mxu0
  %v1828 = vadd.f32 %v492, %v1827
  %v1829 = vpop.f32.mrf.mxu0
  %v1830 = vadd.f32 %v496, %v1829
  %1831 = vmatprep.mubr.bf16.mxu0 %v176
  %1832 = vmatmul.mubr.bf16.gmra.mxu0 %v175
  %v1833 = vpop.f32.mrf.mxu0
  %v1834 = vadd.f32 %v492, %v1833
  %v1835 = vpop.f32.mrf.mxu0
  %v1836 = vadd.f32 %v496, %v1835
  %v1837 = vpop.f32.mrf.mxu0
  %v1838 = vadd.f32 %v492, %v1837
  %v1839 = vpop.f32.mrf.mxu0
  %v1840 = vadd.f32 %v496, %v1839
  %1841 = vmatprep.mubr.bf16.mxu0 %v184
  %1842 = vmatmul.mubr.bf16.gmra.mxu0 %v183
  %v1843 = vpop.f32.mrf.mxu0
  %v1844 = vadd.f32 %v492, %v1843
  %v1845 = vpop.f32.mrf.mxu0
  %v1846 = vadd.f32 %v496, %v1845
  %v1847 = vpop.f32.mrf.mxu0
  %v1848 = vadd.f32 %v492, %v1847
  %v1849 = vpop.f32.mrf.mxu0
  %v1850 = vadd.f32 %v496, %v1849
  %1851 = vmatprep.mubr.bf16.mxu0 %v192
  %1852 = vmatmul.mubr.bf16.gmra.mxu0 %v191
  %v1853 = vpop.f32.mrf.mxu0
  %v1854 = vadd.f32 %v492, %v1853
  %v1855 = vpop.f32.mrf.mxu0
  %v1856 = vadd.f32 %v496, %v1855
  %v1857 = vpop.f32.mrf.mxu0
  %v1858 = vadd.f32 %v492, %v1857
  %v1859 = vpop.f32.mrf.mxu0
  %v1860 = vadd.f32 %v496, %v1859
  %1861 = vmatprep.mubr.bf16.mxu0 %v200
  %1862 = vmatmul.mubr.bf16.gmra.mxu0 %v199
  %v1863 = vpop.f32.mrf.mxu0
  %v1864 = vadd.f32 %v492, %v1863
  %v1865 = vpop.f32.mrf.mxu0
  %v1866 = vadd.f32 %v496, %v1865
  %v1867 = vpop.f32.mrf.mxu0
  %v1868 = vadd.f32 %v492, %v1867
  %v1869 = vpop.f32.mrf.mxu0
  %v1870 = vadd.f32 %v496, %v1869
  %1871 = vmatprep.mubr.bf16.mxu0 %v208
  %1872 = vmatmul.mubr.bf16.gmra.mxu0 %v207
  %v1873 = vpop.f32.mrf.mxu0
  %v1874 = vadd.f32 %v492, %v1873
  %v1875 = vpop.f32.mrf.mxu0
  %v1876 = vadd.f32 %v496, %v1875
  %v1877 = vpop.f32.mrf.mxu0
  %v1878 = vadd.f32 %v492, %v1877
  %v1879 = vpop.f32.mrf.mxu0
  %v1880 = vadd.f32 %v496, %v1879
  %1881 = vmatprep.mubr.bf16.mxu0 %v216
  %1882 = vmatmul.mubr.bf16.gmra.mxu0 %v215
  %v1883 = vpop.f32.mrf.mxu0
  %v1884 = vadd.f32 %v492, %v1883
  %v1885 = vpop.f32.mrf.mxu0
  %v1886 = vadd.f32 %v496, %v1885
  %v1887 = vpop.f32.mrf.mxu0
  %v1888 = vadd.f32 %v492, %v1887
  %v1889 = vpop.f32.mrf.mxu0
  %v1890 = vadd.f32 %v496, %v1889
  %1891 = vmatprep.mubr.bf16.mxu0 %v224
  %1892 = vmatmul.mubr.bf16.gmra.mxu0 %v223
  %v1893 = vpop.f32.mrf.mxu0
  %v1894 = vadd.f32 %v492, %v1893
  %v1895 = vpop.f32.mrf.mxu0
  %v1896 = vadd.f32 %v496, %v1895
  %v1897 = vpop.f32.mrf.mxu0
  %v1898 = vadd.f32 %v492, %v1897
  %v1899 = vpop.f32.mrf.mxu0
  %v1900 = vadd.f32 %v496, %v1899
  %1901 = vdwg.mxu0
  %1902 = vmatprep.subr.bf16.mxu0 %v1370
  %1903 = vmatpush1.bf16.msra.mxu0 %v1369
  %1904 = vmatprep.subr.bf16.mxu0 %v1366
  %1905 = vmatpush1.bf16.msra.mxu0 %v1365
  %1906 = vmatprep.subr.bf16.mxu0 %v1362
  %1907 = vmatpush1.bf16.msra.mxu0 %v1361
  %1908 = vmatprep.subr.bf16.mxu0 %v1358
  %1909 = vmatpush1.bf16.msra.mxu0 %v1357
  %1910 = vmatprep.subr.bf16.mxu0 %v1354
  %1911 = vmatpush1.bf16.msra.mxu0 %v1353
  %1912 = vmatprep.subr.bf16.mxu0 %v1350
  %1913 = vmatpush1.bf16.msra.mxu0 %v1349
  %1914 = vmatprep.subr.bf16.mxu0 %v1346
  %1915 = vmatpush1.bf16.msra.mxu0 %v1345
  %1916 = vmatprep.subr.bf16.mxu0 %v1342
  %1917 = vmatpush1.bf16.msra.mxu0 %v1341
  %1918 = vmatprep.subr.bf16.mxu0 %v1402
  %1919 = vmatpush2.bf16.msra.mxu0 %v1401
  %1920 = vmatprep.subr.bf16.mxu0 %v1398
  %1921 = vmatpush2.bf16.msra.mxu0 %v1397
  %1922 = vmatprep.subr.bf16.mxu0 %v1394
  %1923 = vmatpush2.bf16.msra.mxu0 %v1393
  %1924 = vmatprep.subr.bf16.mxu0 %v1390
  %1925 = vmatpush2.bf16.msra.mxu0 %v1389
  %1926 = vmatprep.subr.bf16.mxu0 %v1386
  %1927 = vmatpush2.bf16.msra.mxu0 %v1385
  %1928 = vmatprep.subr.bf16.mxu0 %v1382
  %1929 = vmatpush2.bf16.msra.mxu0 %v1381
  %1930 = vmatprep.subr.bf16.mxu0 %v1378
  %1931 = vmatpush2.bf16.msra.mxu0 %v1377
  %1932 = vmatprep.subr.bf16.mxu0 %v1374
  %1933 = vmatpush2.bf16.msra.mxu0 %v1373
  %1934 = vmatprep.mubr.bf16.mxu0 %v170
  %1935 = vmatmul.mubr.bf16.gmra.mxu0 %v169
  %v1936 = vpop.f32.mrf.mxu0
  %v1937 = vadd.f32 %v1824, %v1936
  %v1938 = vpop.f32.mrf.mxu0
  %v1939 = vadd.f32 %v1826, %v1938
  %v1940 = vpop.f32.mrf.mxu0
  %v1941 = vadd.f32 %v1828, %v1940
  %v1942 = vpop.f32.mrf.mxu0
  %v1943 = vadd.f32 %v1830, %v1942
  %1944 = vmatprep.mubr.bf16.mxu0 %v178
  %1945 = vmatmul.mubr.bf16.gmra.mxu0 %v177
  %v1946 = vpop.f32.mrf.mxu0
  %v1947 = vadd.f32 %v1834, %v1946
  %v1948 = vpop.f32.mrf.mxu0
  %v1949 = vadd.f32 %v1836, %v1948
  %v1950 = vpop.f32.mrf.mxu0
  %v1951 = vadd.f32 %v1838, %v1950
  %v1952 = vpop.f32.mrf.mxu0
  %v1953 = vadd.f32 %v1840, %v1952
  %1954 = vmatprep.mubr.bf16.mxu0 %v186
  %1955 = vmatmul.mubr.bf16.gmra.mxu0 %v185
  %v1956 = vpop.f32.mrf.mxu0
  %v1957 = vadd.f32 %v1844, %v1956
  %v1958 = vpop.f32.mrf.mxu0
  %v1959 = vadd.f32 %v1846, %v1958
  %v1960 = vpop.f32.mrf.mxu0
  %v1961 = vadd.f32 %v1848, %v1960
  %v1962 = vpop.f32.mrf.mxu0
  %v1963 = vadd.f32 %v1850, %v1962
  %1964 = vmatprep.mubr.bf16.mxu0 %v194
  %1965 = vmatmul.mubr.bf16.gmra.mxu0 %v193
  %v1966 = vpop.f32.mrf.mxu0
  %v1967 = vadd.f32 %v1854, %v1966
  %v1968 = vpop.f32.mrf.mxu0
  %v1969 = vadd.f32 %v1856, %v1968
  %v1970 = vpop.f32.mrf.mxu0
  %v1971 = vadd.f32 %v1858, %v1970
  %v1972 = vpop.f32.mrf.mxu0
  %v1973 = vadd.f32 %v1860, %v1972
  %1974 = vmatprep.mubr.bf16.mxu0 %v202
  %1975 = vmatmul.mubr.bf16.gmra.mxu0 %v201
  %v1976 = vpop.f32.mrf.mxu0
  %v1977 = vadd.f32 %v1864, %v1976
  %v1978 = vpop.f32.mrf.mxu0
  %v1979 = vadd.f32 %v1866, %v1978
  %v1980 = vpop.f32.mrf.mxu0
  %v1981 = vadd.f32 %v1868, %v1980
  %v1982 = vpop.f32.mrf.mxu0
  %v1983 = vadd.f32 %v1870, %v1982
  %1984 = vmatprep.mubr.bf16.mxu0 %v210
  %1985 = vmatmul.mubr.bf16.gmra.mxu0 %v209
  %v1986 = vpop.f32.mrf.mxu0
  %v1987 = vadd.f32 %v1874, %v1986
  %v1988 = vpop.f32.mrf.mxu0
  %v1989 = vadd.f32 %v1876, %v1988
  %v1990 = vpop.f32.mrf.mxu0
  %v1991 = vadd.f32 %v1878, %v1990
  %v1992 = vpop.f32.mrf.mxu0
  %v1993 = vadd.f32 %v1880, %v1992
  %1994 = vmatprep.mubr.bf16.mxu0 %v218
  %1995 = vmatmul.mubr.bf16.gmra.mxu0 %v217
  %v1996 = vpop.f32.mrf.mxu0
  %v1997 = vadd.f32 %v1884, %v1996
  %v1998 = vpop.f32.mrf.mxu0
  %v1999 = vadd.f32 %v1886, %v1998
  %v2000 = vpop.f32.mrf.mxu0
  %v2001 = vadd.f32 %v1888, %v2000
  %v2002 = vpop.f32.mrf.mxu0
  %v2003 = vadd.f32 %v1890, %v2002
  %2004 = vmatprep.mubr.bf16.mxu0 %v226
  %2005 = vmatmul.mubr.bf16.gmra.mxu0 %v225
  %v2006 = vpop.f32.mrf.mxu0
  %v2007 = vadd.f32 %v1894, %v2006
  %v2008 = vpop.f32.mrf.mxu0
  %v2009 = vadd.f32 %v1896, %v2008
  %v2010 = vpop.f32.mrf.mxu0
  %v2011 = vadd.f32 %v1898, %v2010
  %v2012 = vpop.f32.mrf.mxu0
  %v2013 = vadd.f32 %v1900, %v2012
  %2014 = vdwg.mxu0
  %2015 = vmatprep.subr.bf16.mxu0 %v1434
  %2016 = vmatpush1.bf16.msra.mxu0 %v1433
  %2017 = vmatprep.subr.bf16.mxu0 %v1430
  %2018 = vmatpush1.bf16.msra.mxu0 %v1429
  %2019 = vmatprep.subr.bf16.mxu0 %v1426
  %2020 = vmatpush1.bf16.msra.mxu0 %v1425
  %2021 = vmatprep.subr.bf16.mxu0 %v1422
  %2022 = vmatpush1.bf16.msra.mxu0 %v1421
  %2023 = vmatprep.subr.bf16.mxu0 %v1418
  %2024 = vmatpush1.bf16.msra.mxu0 %v1417
  %2025 = vmatprep.subr.bf16.mxu0 %v1414
  %2026 = vmatpush1.bf16.msra.mxu0 %v1413
  %2027 = vmatprep.subr.bf16.mxu0 %v1410
  %2028 = vmatpush1.bf16.msra.mxu0 %v1409
  %2029 = vmatprep.subr.bf16.mxu0 %v1406
  %2030 = vmatpush1.bf16.msra.mxu0 %v1405
  %2031 = vmatprep.subr.bf16.mxu0 %v1466
  %2032 = vmatpush2.bf16.msra.mxu0 %v1465
  %2033 = vmatprep.subr.bf16.mxu0 %v1462
  %2034 = vmatpush2.bf16.msra.mxu0 %v1461
  %2035 = vmatprep.subr.bf16.mxu0 %v1458
  %2036 = vmatpush2.bf16.msra.mxu0 %v1457
  %2037 = vmatprep.subr.bf16.mxu0 %v1454
  %2038 = vmatpush2.bf16.msra.mxu0 %v1453
  %2039 = vmatprep.subr.bf16.mxu0 %v1450
  %2040 = vmatpush2.bf16.msra.mxu0 %v1449
  %2041 = vmatprep.subr.bf16.mxu0 %v1446
  %2042 = vmatpush2.bf16.msra.mxu0 %v1445
  %2043 = vmatprep.subr.bf16.mxu0 %v1442
  %2044 = vmatpush2.bf16.msra.mxu0 %v1441
  %2045 = vmatprep.subr.bf16.mxu0 %v1438
  %2046 = vmatpush2.bf16.msra.mxu0 %v1437
  %2047 = vmatprep.mubr.bf16.mxu0 %v172
  %2048 = vmatmul.mubr.bf16.gmra.mxu0 %v171
  %v2049 = vpop.f32.mrf.mxu0
  %v2050 = vadd.f32 %v1937, %v2049
  %v2051 = vpop.f32.mrf.mxu0
  %v2052 = vadd.f32 %v1939, %v2051
  %v2053 = vpop.f32.mrf.mxu0
  %v2054 = vadd.f32 %v1941, %v2053
  %v2055 = vpop.f32.mrf.mxu0
  %v2056 = vadd.f32 %v1943, %v2055
  %2057 = vmatprep.mubr.bf16.mxu0 %v180
  %2058 = vmatmul.mubr.bf16.gmra.mxu0 %v179
  %v2059 = vpop.f32.mrf.mxu0
  %v2060 = vadd.f32 %v1947, %v2059
  %v2061 = vpop.f32.mrf.mxu0
  %v2062 = vadd.f32 %v1949, %v2061
  %v2063 = vpop.f32.mrf.mxu0
  %v2064 = vadd.f32 %v1951, %v2063
  %v2065 = vpop.f32.mrf.mxu0
  %v2066 = vadd.f32 %v1953, %v2065
  %2067 = vmatprep.mubr.bf16.mxu0 %v188
  %2068 = vmatmul.mubr.bf16.gmra.mxu0 %v187
  %v2069 = vpop.f32.mrf.mxu0
  %v2070 = vadd.f32 %v1957, %v2069
  %v2071 = vpop.f32.mrf.mxu0
  %v2072 = vadd.f32 %v1959, %v2071
  %v2073 = vpop.f32.mrf.mxu0
  %v2074 = vadd.f32 %v1961, %v2073
  %v2075 = vpop.f32.mrf.mxu0
  %v2076 = vadd.f32 %v1963, %v2075
  %2077 = vmatprep.mubr.bf16.mxu0 %v196
  %2078 = vmatmul.mubr.bf16.gmra.mxu0 %v195
  %v2079 = vpop.f32.mrf.mxu0
  %v2080 = vadd.f32 %v1967, %v2079
  %v2081 = vpop.f32.mrf.mxu0
  %v2082 = vadd.f32 %v1969, %v2081
  %v2083 = vpop.f32.mrf.mxu0
  %v2084 = vadd.f32 %v1971, %v2083
  %v2085 = vpop.f32.mrf.mxu0
  %v2086 = vadd.f32 %v1973, %v2085
  %2087 = vmatprep.mubr.bf16.mxu0 %v204
  %2088 = vmatmul.mubr.bf16.gmra.mxu0 %v203
  %v2089 = vpop.f32.mrf.mxu0
  %v2090 = vadd.f32 %v1977, %v2089
  %v2091 = vpop.f32.mrf.mxu0
  %v2092 = vadd.f32 %v1979, %v2091
  %v2093 = vpop.f32.mrf.mxu0
  %v2094 = vadd.f32 %v1981, %v2093
  %v2095 = vpop.f32.mrf.mxu0
  %v2096 = vadd.f32 %v1983, %v2095
  %2097 = vmatprep.mubr.bf16.mxu0 %v212
  %2098 = vmatmul.mubr.bf16.gmra.mxu0 %v211
  %v2099 = vpop.f32.mrf.mxu0
  %v2100 = vadd.f32 %v1987, %v2099
  %v2101 = vpop.f32.mrf.mxu0
  %v2102 = vadd.f32 %v1989, %v2101
  %v2103 = vpop.f32.mrf.mxu0
  %v2104 = vadd.f32 %v1991, %v2103
  %v2105 = vpop.f32.mrf.mxu0
  %v2106 = vadd.f32 %v1993, %v2105
  %2107 = vmatprep.mubr.bf16.mxu0 %v220
  %2108 = vmatmul.mubr.bf16.gmra.mxu0 %v219
  %v2109 = vpop.f32.mrf.mxu0
  %v2110 = vadd.f32 %v1997, %v2109
  %v2111 = vpop.f32.mrf.mxu0
  %v2112 = vadd.f32 %v1999, %v2111
  %v2113 = vpop.f32.mrf.mxu0
  %v2114 = vadd.f32 %v2001, %v2113
  %v2115 = vpop.f32.mrf.mxu0
  %v2116 = vadd.f32 %v2003, %v2115
  %2117 = vmatprep.mubr.bf16.mxu0 %v228
  %2118 = vmatmul.mubr.bf16.gmra.mxu0 %v227
  %v2119 = vpop.f32.mrf.mxu0
  %v2120 = vadd.f32 %v2007, %v2119
  %v2121 = vpop.f32.mrf.mxu0
  %v2122 = vadd.f32 %v2009, %v2121
  %v2123 = vpop.f32.mrf.mxu0
  %v2124 = vadd.f32 %v2011, %v2123
  %v2125 = vpop.f32.mrf.mxu0
  %v2126 = vadd.f32 %v2013, %v2125
  %2127 = vdwg.mxu0
  %2128 = vmatprep.subr.bf16.mxu0 %v1498
  %2129 = vmatpush1.bf16.msra.mxu0 %v1497
  %2130 = vmatprep.subr.bf16.mxu0 %v1494
  %2131 = vmatpush1.bf16.msra.mxu0 %v1493
  %2132 = vmatprep.subr.bf16.mxu0 %v1490
  %2133 = vmatpush1.bf16.msra.mxu0 %v1489
  %2134 = vmatprep.subr.bf16.mxu0 %v1486
  %2135 = vmatpush1.bf16.msra.mxu0 %v1485
  %2136 = vmatprep.subr.bf16.mxu0 %v1482
  %2137 = vmatpush1.bf16.msra.mxu0 %v1481
  %2138 = vmatprep.subr.bf16.mxu0 %v1478
  %2139 = vmatpush1.bf16.msra.mxu0 %v1477
  %2140 = vmatprep.subr.bf16.mxu0 %v1474
  %2141 = vmatpush1.bf16.msra.mxu0 %v1473
  %2142 = vmatprep.subr.bf16.mxu0 %v1470
  %2143 = vmatpush1.bf16.msra.mxu0 %v1469
  %2144 = vmatprep.subr.bf16.mxu0 %v1530
  %2145 = vmatpush2.bf16.msra.mxu0 %v1529
  %2146 = vmatprep.subr.bf16.mxu0 %v1526
  %2147 = vmatpush2.bf16.msra.mxu0 %v1525
  %2148 = vmatprep.subr.bf16.mxu0 %v1522
  %2149 = vmatpush2.bf16.msra.mxu0 %v1521
  %2150 = vmatprep.subr.bf16.mxu0 %v1518
  %2151 = vmatpush2.bf16.msra.mxu0 %v1517
  %2152 = vmatprep.subr.bf16.mxu0 %v1514
  %2153 = vmatpush2.bf16.msra.mxu0 %v1513
  %2154 = vmatprep.subr.bf16.mxu0 %v1510
  %2155 = vmatpush2.bf16.msra.mxu0 %v1509
  %2156 = vmatprep.subr.bf16.mxu0 %v1506
  %2157 = vmatpush2.bf16.msra.mxu0 %v1505
  %2158 = vmatprep.subr.bf16.mxu0 %v1502
  %2159 = vmatpush2.bf16.msra.mxu0 %v1501
  %2160 = vmatprep.mubr.bf16.mxu0 %v174
  %2161 = vmatmul.mubr.bf16.gmra.mxu0 %v173
  %v2162 = vpop.f32.mrf.mxu0
  %v2163 = vadd.f32 %v2050, %v2162
  %v2164 = vpop.f32.mrf.mxu0
  %v2165 = vadd.f32 %v2052, %v2164
  %v2166 = vpop.f32.mrf.mxu0
  %v2167 = vadd.f32 %v2054, %v2166
  %v2168 = vpop.f32.mrf.mxu0
  %v2169 = vadd.f32 %v2056, %v2168
  %2170 = vmatprep.mubr.bf16.mxu0 %v182
  %2171 = vmatmul.mubr.bf16.gmra.mxu0 %v181
  %v2172 = vpop.f32.mrf.mxu0
  %v2173 = vadd.f32 %v2060, %v2172
  %v2174 = vpop.f32.mrf.mxu0
  %v2175 = vadd.f32 %v2062, %v2174
  %v2176 = vpop.f32.mrf.mxu0
  %v2177 = vadd.f32 %v2064, %v2176
  %v2178 = vpop.f32.mrf.mxu0
  %v2179 = vadd.f32 %v2066, %v2178
  %2180 = vmatprep.mubr.bf16.mxu0 %v190
  %2181 = vmatmul.mubr.bf16.gmra.mxu0 %v189
  %v2182 = vpop.f32.mrf.mxu0
  %v2183 = vadd.f32 %v2070, %v2182
  %v2184 = vpop.f32.mrf.mxu0
  %v2185 = vadd.f32 %v2072, %v2184
  %v2186 = vpop.f32.mrf.mxu0
  %v2187 = vadd.f32 %v2074, %v2186
  %v2188 = vpop.f32.mrf.mxu0
  %v2189 = vadd.f32 %v2076, %v2188
  %2190 = vmatprep.mubr.bf16.mxu0 %v198
  %2191 = vmatmul.mubr.bf16.gmra.mxu0 %v197
  %v2192 = vpop.f32.mrf.mxu0
  %v2193 = vadd.f32 %v2080, %v2192
  %v2194 = vpop.f32.mrf.mxu0
  %v2195 = vadd.f32 %v2082, %v2194
  %v2196 = vpop.f32.mrf.mxu0
  %v2197 = vadd.f32 %v2084, %v2196
  %v2198 = vpop.f32.mrf.mxu0
  %v2199 = vadd.f32 %v2086, %v2198
  %2200 = vmatprep.mubr.bf16.mxu0 %v206
  %2201 = vmatmul.mubr.bf16.gmra.mxu0 %v205
  %v2202 = vpop.f32.mrf.mxu0
  %v2203 = vadd.f32 %v2090, %v2202
  %v2204 = vpop.f32.mrf.mxu0
  %v2205 = vadd.f32 %v2092, %v2204
  %v2206 = vpop.f32.mrf.mxu0
  %v2207 = vadd.f32 %v2094, %v2206
  %v2208 = vpop.f32.mrf.mxu0
  %v2209 = vadd.f32 %v2096, %v2208
  %2210 = vmatprep.mubr.bf16.mxu0 %v214
  %2211 = vmatmul.mubr.bf16.gmra.mxu0 %v213
  %v2212 = vpop.f32.mrf.mxu0
  %v2213 = vadd.f32 %v2100, %v2212
  %v2214 = vpop.f32.mrf.mxu0
  %v2215 = vadd.f32 %v2102, %v2214
  %v2216 = vpop.f32.mrf.mxu0
  %v2217 = vadd.f32 %v2104, %v2216
  %v2218 = vpop.f32.mrf.mxu0
  %v2219 = vadd.f32 %v2106, %v2218
  %2220 = vmatprep.mubr.bf16.mxu0 %v222
  %2221 = vmatmul.mubr.bf16.gmra.mxu0 %v221
  %v2222 = vpop.f32.mrf.mxu0
  %v2223 = vadd.f32 %v2110, %v2222
  %v2224 = vpop.f32.mrf.mxu0
  %v2225 = vadd.f32 %v2112, %v2224
  %v2226 = vpop.f32.mrf.mxu0
  %v2227 = vadd.f32 %v2114, %v2226
  %v2228 = vpop.f32.mrf.mxu0
  %v2229 = vadd.f32 %v2116, %v2228
  %2230 = vmatprep.mubr.bf16.mxu0 %v230
  %2231 = vmatmul.mubr.bf16.gmra.mxu0 %v229
  %v2232 = vpop.f32.mrf.mxu0
  %v2233 = vadd.f32 %v2120, %v2232
  %v2234 = vpop.f32.mrf.mxu0
  %v2235 = vadd.f32 %v2122, %v2234
  %v2236 = vpop.f32.mrf.mxu0
  %v2237 = vadd.f32 %v2124, %v2236
  %v2238 = vpop.f32.mrf.mxu0
  %v2239 = vadd.f32 %v2126, %v2238
  %2240 = vdwg.mxu0
  %2241 = vmatprep.subr.bf16.mxu0 %v1308
  %2242 = vmatpush1.bf16.msra.mxu0 %v1307
  %2243 = vmatprep.subr.bf16.mxu0 %v1304
  %2244 = vmatpush1.bf16.msra.mxu0 %v1303
  %2245 = vmatprep.subr.bf16.mxu0 %v1300
  %2246 = vmatpush1.bf16.msra.mxu0 %v1299
  %2247 = vmatprep.subr.bf16.mxu0 %v1296
  %2248 = vmatpush1.bf16.msra.mxu0 %v1295
  %2249 = vmatprep.subr.bf16.mxu0 %v1292
  %2250 = vmatpush1.bf16.msra.mxu0 %v1291
  %2251 = vmatprep.subr.bf16.mxu0 %v1288
  %2252 = vmatpush1.bf16.msra.mxu0 %v1287
  %2253 = vmatprep.subr.bf16.mxu0 %v1284
  %2254 = vmatpush1.bf16.msra.mxu0 %v1283
  %2255 = vmatprep.subr.bf16.mxu0 %v1280
  %2256 = vmatpush1.bf16.msra.mxu0 %v1279
  %2257 = vmatprep.subr.bf16.mxu0 %v1340
  %2258 = vmatpush2.bf16.msra.mxu0 %v1339
  %2259 = vmatprep.subr.bf16.mxu0 %v1336
  %2260 = vmatpush2.bf16.msra.mxu0 %v1335
  %2261 = vmatprep.subr.bf16.mxu0 %v1332
  %2262 = vmatpush2.bf16.msra.mxu0 %v1331
  %2263 = vmatprep.subr.bf16.mxu0 %v1328
  %2264 = vmatpush2.bf16.msra.mxu0 %v1327
  %2265 = vmatprep.subr.bf16.mxu0 %v1324
  %2266 = vmatpush2.bf16.msra.mxu0 %v1323
  %2267 = vmatprep.subr.bf16.mxu0 %v1320
  %2268 = vmatpush2.bf16.msra.mxu0 %v1319
  %2269 = vmatprep.subr.bf16.mxu0 %v1316
  %2270 = vmatpush2.bf16.msra.mxu0 %v1315
  %2271 = vmatprep.subr.bf16.mxu0 %v1312
  %2272 = vmatpush2.bf16.msra.mxu0 %v1311
  %2273 = vmatprep.mubr.bf16.mxu0 %v168
  %2274 = vmatmul.mubr.bf16.gmra.mxu0 %v167
  %v2275 = vpop.f32.mrf.mxu0
  %v2276 = vadd.f32 %v500, %v2275
  %v2277 = vpop.f32.mrf.mxu0
  %v2278 = vadd.f32 %v504, %v2277
  %v2279 = vpop.f32.mrf.mxu0
  %v2280 = vadd.f32 %v500, %v2279
  %v2281 = vpop.f32.mrf.mxu0
  %v2282 = vadd.f32 %v504, %v2281
  %2283 = vmatprep.mubr.bf16.mxu0 %v176
  %2284 = vmatmul.mubr.bf16.gmra.mxu0 %v175
  %v2285 = vpop.f32.mrf.mxu0
  %v2286 = vadd.f32 %v500, %v2285
  %v2287 = vpop.f32.mrf.mxu0
  %v2288 = vadd.f32 %v504, %v2287
  %v2289 = vpop.f32.mrf.mxu0
  %v2290 = vadd.f32 %v500, %v2289
  %v2291 = vpop.f32.mrf.mxu0
  %v2292 = vadd.f32 %v504, %v2291
  %2293 = vmatprep.mubr.bf16.mxu0 %v184
  %2294 = vmatmul.mubr.bf16.gmra.mxu0 %v183
  %v2295 = vpop.f32.mrf.mxu0
  %v2296 = vadd.f32 %v500, %v2295
  %v2297 = vpop.f32.mrf.mxu0
  %v2298 = vadd.f32 %v504, %v2297
  %v2299 = vpop.f32.mrf.mxu0
  %v2300 = vadd.f32 %v500, %v2299
  %v2301 = vpop.f32.mrf.mxu0
  %v2302 = vadd.f32 %v504, %v2301
  %2303 = vmatprep.mubr.bf16.mxu0 %v192
  %2304 = vmatmul.mubr.bf16.gmra.mxu0 %v191
  %v2305 = vpop.f32.mrf.mxu0
  %v2306 = vadd.f32 %v500, %v2305
  %v2307 = vpop.f32.mrf.mxu0
  %v2308 = vadd.f32 %v504, %v2307
  %v2309 = vpop.f32.mrf.mxu0
  %v2310 = vadd.f32 %v500, %v2309
  %v2311 = vpop.f32.mrf.mxu0
  %v2312 = vadd.f32 %v504, %v2311
  %2313 = vmatprep.mubr.bf16.mxu0 %v200
  %2314 = vmatmul.mubr.bf16.gmra.mxu0 %v199
  %v2315 = vpop.f32.mrf.mxu0
  %v2316 = vadd.f32 %v500, %v2315
  %v2317 = vpop.f32.mrf.mxu0
  %v2318 = vadd.f32 %v504, %v2317
  %v2319 = vpop.f32.mrf.mxu0
  %v2320 = vadd.f32 %v500, %v2319
  %v2321 = vpop.f32.mrf.mxu0
  %v2322 = vadd.f32 %v504, %v2321
  %2323 = vmatprep.mubr.bf16.mxu0 %v208
  %2324 = vmatmul.mubr.bf16.gmra.mxu0 %v207
  %v2325 = vpop.f32.mrf.mxu0
  %v2326 = vadd.f32 %v500, %v2325
  %v2327 = vpop.f32.mrf.mxu0
  %v2328 = vadd.f32 %v504, %v2327
  %v2329 = vpop.f32.mrf.mxu0
  %v2330 = vadd.f32 %v500, %v2329
  %v2331 = vpop.f32.mrf.mxu0
  %v2332 = vadd.f32 %v504, %v2331
  %2333 = vmatprep.mubr.bf16.mxu0 %v216
  %2334 = vmatmul.mubr.bf16.gmra.mxu0 %v215
  %v2335 = vpop.f32.mrf.mxu0
  %v2336 = vadd.f32 %v500, %v2335
  %v2337 = vpop.f32.mrf.mxu0
  %v2338 = vadd.f32 %v504, %v2337
  %v2339 = vpop.f32.mrf.mxu0
  %v2340 = vadd.f32 %v500, %v2339
  %v2341 = vpop.f32.mrf.mxu0
  %v2342 = vadd.f32 %v504, %v2341
  %2343 = vmatprep.mubr.bf16.mxu0 %v224
  %2344 = vmatmul.mubr.bf16.gmra.mxu0 %v223
  %v2345 = vpop.f32.mrf.mxu0
  %v2346 = vadd.f32 %v500, %v2345
  %v2347 = vpop.f32.mrf.mxu0
  %v2348 = vadd.f32 %v504, %v2347
  %v2349 = vpop.f32.mrf.mxu0
  %v2350 = vadd.f32 %v500, %v2349
  %v2351 = vpop.f32.mrf.mxu0
  %v2352 = vadd.f32 %v504, %v2351
  %2353 = vdwg.mxu0
  %2354 = vmatprep.subr.bf16.mxu0 %v1372
  %2355 = vmatpush1.bf16.msra.mxu0 %v1371
  %2356 = vmatprep.subr.bf16.mxu0 %v1368
  %2357 = vmatpush1.bf16.msra.mxu0 %v1367
  %2358 = vmatprep.subr.bf16.mxu0 %v1364
  %2359 = vmatpush1.bf16.msra.mxu0 %v1363
  %2360 = vmatprep.subr.bf16.mxu0 %v1360
  %2361 = vmatpush1.bf16.msra.mxu0 %v1359
  %2362 = vmatprep.subr.bf16.mxu0 %v1356
  %2363 = vmatpush1.bf16.msra.mxu0 %v1355
  %2364 = vmatprep.subr.bf16.mxu0 %v1352
  %2365 = vmatpush1.bf16.msra.mxu0 %v1351
  %2366 = vmatprep.subr.bf16.mxu0 %v1348
  %2367 = vmatpush1.bf16.msra.mxu0 %v1347
  %2368 = vmatprep.subr.bf16.mxu0 %v1344
  %2369 = vmatpush1.bf16.msra.mxu0 %v1343
  %2370 = vmatprep.subr.bf16.mxu0 %v1404
  %2371 = vmatpush2.bf16.msra.mxu0 %v1403
  %2372 = vmatprep.subr.bf16.mxu0 %v1400
  %2373 = vmatpush2.bf16.msra.mxu0 %v1399
  %2374 = vmatprep.subr.bf16.mxu0 %v1396
  %2375 = vmatpush2.bf16.msra.mxu0 %v1395
  %2376 = vmatprep.subr.bf16.mxu0 %v1392
  %2377 = vmatpush2.bf16.msra.mxu0 %v1391
  %2378 = vmatprep.subr.bf16.mxu0 %v1388
  %2379 = vmatpush2.bf16.msra.mxu0 %v1387
  %2380 = vmatprep.subr.bf16.mxu0 %v1384
  %2381 = vmatpush2.bf16.msra.mxu0 %v1383
  %2382 = vmatprep.subr.bf16.mxu0 %v1380
  %2383 = vmatpush2.bf16.msra.mxu0 %v1379
  %2384 = vmatprep.subr.bf16.mxu0 %v1376
  %2385 = vmatpush2.bf16.msra.mxu0 %v1375
  %2386 = vmatprep.mubr.bf16.mxu0 %v170
  %2387 = vmatmul.mubr.bf16.gmra.mxu0 %v169
  %v2388 = vpop.f32.mrf.mxu0
  %v2389 = vadd.f32 %v2276, %v2388
  %v2390 = vpop.f32.mrf.mxu0
  %v2391 = vadd.f32 %v2278, %v2390
  %v2392 = vpop.f32.mrf.mxu0
  %v2393 = vadd.f32 %v2280, %v2392
  %v2394 = vpop.f32.mrf.mxu0
  %v2395 = vadd.f32 %v2282, %v2394
  %2396 = vmatprep.mubr.bf16.mxu0 %v178
  %2397 = vmatmul.mubr.bf16.gmra.mxu0 %v177
  %v2398 = vpop.f32.mrf.mxu0
  %v2399 = vadd.f32 %v2286, %v2398
  %v2400 = vpop.f32.mrf.mxu0
  %v2401 = vadd.f32 %v2288, %v2400
  %v2402 = vpop.f32.mrf.mxu0
  %v2403 = vadd.f32 %v2290, %v2402
  %v2404 = vpop.f32.mrf.mxu0
  %v2405 = vadd.f32 %v2292, %v2404
  %2406 = vmatprep.mubr.bf16.mxu0 %v186
  %2407 = vmatmul.mubr.bf16.gmra.mxu0 %v185
  %v2408 = vpop.f32.mrf.mxu0
  %v2409 = vadd.f32 %v2296, %v2408
  %v2410 = vpop.f32.mrf.mxu0
  %v2411 = vadd.f32 %v2298, %v2410
  %v2412 = vpop.f32.mrf.mxu0
  %v2413 = vadd.f32 %v2300, %v2412
  %v2414 = vpop.f32.mrf.mxu0
  %v2415 = vadd.f32 %v2302, %v2414
  %2416 = vmatprep.mubr.bf16.mxu0 %v194
  %2417 = vmatmul.mubr.bf16.gmra.mxu0 %v193
  %v2418 = vpop.f32.mrf.mxu0
  %v2419 = vadd.f32 %v2306, %v2418
  %v2420 = vpop.f32.mrf.mxu0
  %v2421 = vadd.f32 %v2308, %v2420
  %v2422 = vpop.f32.mrf.mxu0
  %v2423 = vadd.f32 %v2310, %v2422
  %v2424 = vpop.f32.mrf.mxu0
  %v2425 = vadd.f32 %v2312, %v2424
  %2426 = vmatprep.mubr.bf16.mxu0 %v202
  %2427 = vmatmul.mubr.bf16.gmra.mxu0 %v201
  %v2428 = vpop.f32.mrf.mxu0
  %v2429 = vadd.f32 %v2316, %v2428
  %v2430 = vpop.f32.mrf.mxu0
  %v2431 = vadd.f32 %v2318, %v2430
  %v2432 = vpop.f32.mrf.mxu0
  %v2433 = vadd.f32 %v2320, %v2432
  %v2434 = vpop.f32.mrf.mxu0
  %v2435 = vadd.f32 %v2322, %v2434
  %2436 = vmatprep.mubr.bf16.mxu0 %v210
  %2437 = vmatmul.mubr.bf16.gmra.mxu0 %v209
  %v2438 = vpop.f32.mrf.mxu0
  %v2439 = vadd.f32 %v2326, %v2438
  %v2440 = vpop.f32.mrf.mxu0
  %v2441 = vadd.f32 %v2328, %v2440
  %v2442 = vpop.f32.mrf.mxu0
  %v2443 = vadd.f32 %v2330, %v2442
  %v2444 = vpop.f32.mrf.mxu0
  %v2445 = vadd.f32 %v2332, %v2444
  %2446 = vmatprep.mubr.bf16.mxu0 %v218
  %2447 = vmatmul.mubr.bf16.gmra.mxu0 %v217
  %v2448 = vpop.f32.mrf.mxu0
  %v2449 = vadd.f32 %v2336, %v2448
  %v2450 = vpop.f32.mrf.mxu0
  %v2451 = vadd.f32 %v2338, %v2450
  %v2452 = vpop.f32.mrf.mxu0
  %v2453 = vadd.f32 %v2340, %v2452
  %v2454 = vpop.f32.mrf.mxu0
  %v2455 = vadd.f32 %v2342, %v2454
  %2456 = vmatprep.mubr.bf16.mxu0 %v226
  %2457 = vmatmul.mubr.bf16.gmra.mxu0 %v225
  %v2458 = vpop.f32.mrf.mxu0
  %v2459 = vadd.f32 %v2346, %v2458
  %v2460 = vpop.f32.mrf.mxu0
  %v2461 = vadd.f32 %v2348, %v2460
  %v2462 = vpop.f32.mrf.mxu0
  %v2463 = vadd.f32 %v2350, %v2462
  %v2464 = vpop.f32.mrf.mxu0
  %v2465 = vadd.f32 %v2352, %v2464
  %2466 = vdwg.mxu0
  %2467 = vmatprep.subr.bf16.mxu0 %v1436
  %2468 = vmatpush1.bf16.msra.mxu0 %v1435
  %2469 = vmatprep.subr.bf16.mxu0 %v1432
  %2470 = vmatpush1.bf16.msra.mxu0 %v1431
  %2471 = vmatprep.subr.bf16.mxu0 %v1428
  %2472 = vmatpush1.bf16.msra.mxu0 %v1427
  %2473 = vmatprep.subr.bf16.mxu0 %v1424
  %2474 = vmatpush1.bf16.msra.mxu0 %v1423
  %2475 = vmatprep.subr.bf16.mxu0 %v1420
  %2476 = vmatpush1.bf16.msra.mxu0 %v1419
  %2477 = vmatprep.subr.bf16.mxu0 %v1416
  %2478 = vmatpush1.bf16.msra.mxu0 %v1415
  %2479 = vmatprep.subr.bf16.mxu0 %v1412
  %2480 = vmatpush1.bf16.msra.mxu0 %v1411
  %2481 = vmatprep.subr.bf16.mxu0 %v1408
  %2482 = vmatpush1.bf16.msra.mxu0 %v1407
  %2483 = vmatprep.subr.bf16.mxu0 %v1468
  %2484 = vmatpush2.bf16.msra.mxu0 %v1467
  %2485 = vmatprep.subr.bf16.mxu0 %v1464
  %2486 = vmatpush2.bf16.msra.mxu0 %v1463
  %2487 = vmatprep.subr.bf16.mxu0 %v1460
  %2488 = vmatpush2.bf16.msra.mxu0 %v1459
  %2489 = vmatprep.subr.bf16.mxu0 %v1456
  %2490 = vmatpush2.bf16.msra.mxu0 %v1455
  %2491 = vmatprep.subr.bf16.mxu0 %v1452
  %2492 = vmatpush2.bf16.msra.mxu0 %v1451
  %2493 = vmatprep.subr.bf16.mxu0 %v1448
  %2494 = vmatpush2.bf16.msra.mxu0 %v1447
  %2495 = vmatprep.subr.bf16.mxu0 %v1444
  %2496 = vmatpush2.bf16.msra.mxu0 %v1443
  %2497 = vmatprep.subr.bf16.mxu0 %v1440
  %2498 = vmatpush2.bf16.msra.mxu0 %v1439
  %2499 = vmatprep.mubr.bf16.mxu0 %v172
  %2500 = vmatmul.mubr.bf16.gmra.mxu0 %v171
  %v2501 = vpop.f32.mrf.mxu0
  %v2502 = vadd.f32 %v2389, %v2501
  %v2503 = vpop.f32.mrf.mxu0
  %v2504 = vadd.f32 %v2391, %v2503
  %v2505 = vpop.f32.mrf.mxu0
  %v2506 = vadd.f32 %v2393, %v2505
  %v2507 = vpop.f32.mrf.mxu0
  %v2508 = vadd.f32 %v2395, %v2507
  %2509 = vmatprep.mubr.bf16.mxu0 %v180
  %2510 = vmatmul.mubr.bf16.gmra.mxu0 %v179
  %v2511 = vpop.f32.mrf.mxu0
  %v2512 = vadd.f32 %v2399, %v2511
  %v2513 = vpop.f32.mrf.mxu0
  %v2514 = vadd.f32 %v2401, %v2513
  %v2515 = vpop.f32.mrf.mxu0
  %v2516 = vadd.f32 %v2403, %v2515
  %v2517 = vpop.f32.mrf.mxu0
  %v2518 = vadd.f32 %v2405, %v2517
  %2519 = vmatprep.mubr.bf16.mxu0 %v188
  %2520 = vmatmul.mubr.bf16.gmra.mxu0 %v187
  %v2521 = vpop.f32.mrf.mxu0
  %v2522 = vadd.f32 %v2409, %v2521
  %v2523 = vpop.f32.mrf.mxu0
  %v2524 = vadd.f32 %v2411, %v2523
  %v2525 = vpop.f32.mrf.mxu0
  %v2526 = vadd.f32 %v2413, %v2525
  %v2527 = vpop.f32.mrf.mxu0
  %v2528 = vadd.f32 %v2415, %v2527
  %2529 = vmatprep.mubr.bf16.mxu0 %v196
  %2530 = vmatmul.mubr.bf16.gmra.mxu0 %v195
  %v2531 = vpop.f32.mrf.mxu0
  %v2532 = vadd.f32 %v2419, %v2531
  %v2533 = vpop.f32.mrf.mxu0
  %v2534 = vadd.f32 %v2421, %v2533
  %v2535 = vpop.f32.mrf.mxu0
  %v2536 = vadd.f32 %v2423, %v2535
  %v2537 = vpop.f32.mrf.mxu0
  %v2538 = vadd.f32 %v2425, %v2537
  %2539 = vmatprep.mubr.bf16.mxu0 %v204
  %2540 = vmatmul.mubr.bf16.gmra.mxu0 %v203
  %v2541 = vpop.f32.mrf.mxu0
  %v2542 = vadd.f32 %v2429, %v2541
  %v2543 = vpop.f32.mrf.mxu0
  %v2544 = vadd.f32 %v2431, %v2543
  %v2545 = vpop.f32.mrf.mxu0
  %v2546 = vadd.f32 %v2433, %v2545
  %v2547 = vpop.f32.mrf.mxu0
  %v2548 = vadd.f32 %v2435, %v2547
  %2549 = vmatprep.mubr.bf16.mxu0 %v212
  %2550 = vmatmul.mubr.bf16.gmra.mxu0 %v211
  %v2551 = vpop.f32.mrf.mxu0
  %v2552 = vadd.f32 %v2439, %v2551
  %v2553 = vpop.f32.mrf.mxu0
  %v2554 = vadd.f32 %v2441, %v2553
  %v2555 = vpop.f32.mrf.mxu0
  %v2556 = vadd.f32 %v2443, %v2555
  %v2557 = vpop.f32.mrf.mxu0
  %v2558 = vadd.f32 %v2445, %v2557
  %2559 = vmatprep.mubr.bf16.mxu0 %v220
  %2560 = vmatmul.mubr.bf16.gmra.mxu0 %v219
  %v2561 = vpop.f32.mrf.mxu0
  %v2562 = vadd.f32 %v2449, %v2561
  %v2563 = vpop.f32.mrf.mxu0
  %v2564 = vadd.f32 %v2451, %v2563
  %v2565 = vpop.f32.mrf.mxu0
  %v2566 = vadd.f32 %v2453, %v2565
  %v2567 = vpop.f32.mrf.mxu0
  %v2568 = vadd.f32 %v2455, %v2567
  %2569 = vmatprep.mubr.bf16.mxu0 %v228
  %2570 = vmatmul.mubr.bf16.gmra.mxu0 %v227
  %v2571 = vpop.f32.mrf.mxu0
  %v2572 = vadd.f32 %v2459, %v2571
  %v2573 = vpop.f32.mrf.mxu0
  %v2574 = vadd.f32 %v2461, %v2573
  %v2575 = vpop.f32.mrf.mxu0
  %v2576 = vadd.f32 %v2463, %v2575
  %v2577 = vpop.f32.mrf.mxu0
  %v2578 = vadd.f32 %v2465, %v2577
  %2579 = vdwg.mxu0
  %2580 = vmatprep.subr.bf16.mxu0 %v1500
  %2581 = vmatpush1.bf16.msra.mxu0 %v1499
  %2582 = vmatprep.subr.bf16.mxu0 %v1496
  %2583 = vmatpush1.bf16.msra.mxu0 %v1495
  %2584 = vmatprep.subr.bf16.mxu0 %v1492
  %2585 = vmatpush1.bf16.msra.mxu0 %v1491
  %2586 = vmatprep.subr.bf16.mxu0 %v1488
  %2587 = vmatpush1.bf16.msra.mxu0 %v1487
  %2588 = vmatprep.subr.bf16.mxu0 %v1484
  %2589 = vmatpush1.bf16.msra.mxu0 %v1483
  %2590 = vmatprep.subr.bf16.mxu0 %v1480
  %2591 = vmatpush1.bf16.msra.mxu0 %v1479
  %2592 = vmatprep.subr.bf16.mxu0 %v1476
  %2593 = vmatpush1.bf16.msra.mxu0 %v1475
  %2594 = vmatprep.subr.bf16.mxu0 %v1472
  %2595 = vmatpush1.bf16.msra.mxu0 %v1471
  %2596 = vmatprep.subr.bf16.mxu0 %v1532
  %2597 = vmatpush2.bf16.msra.mxu0 %v1531
  %2598 = vmatprep.subr.bf16.mxu0 %v1528
  %2599 = vmatpush2.bf16.msra.mxu0 %v1527
  %2600 = vmatprep.subr.bf16.mxu0 %v1524
  %2601 = vmatpush2.bf16.msra.mxu0 %v1523
  %2602 = vmatprep.subr.bf16.mxu0 %v1520
  %2603 = vmatpush2.bf16.msra.mxu0 %v1519
  %2604 = vmatprep.subr.bf16.mxu0 %v1516
  %2605 = vmatpush2.bf16.msra.mxu0 %v1515
  %2606 = vmatprep.subr.bf16.mxu0 %v1512
  %2607 = vmatpush2.bf16.msra.mxu0 %v1511
  %2608 = vmatprep.subr.bf16.mxu0 %v1508
  %2609 = vmatpush2.bf16.msra.mxu0 %v1507
  %2610 = vmatprep.subr.bf16.mxu0 %v1504
  %2611 = vmatpush2.bf16.msra.mxu0 %v1503
  %2612 = vmatprep.mubr.bf16.mxu0 %v174
  %2613 = vmatmul.mubr.bf16.gmra.mxu0 %v173
  %v2614 = vpop.f32.mrf.mxu0
  %v2615 = vadd.f32 %v2502, %v2614
  %v2616 = vpop.f32.mrf.mxu0
  %v2617 = vadd.f32 %v2504, %v2616
  %v2618 = vpop.f32.mrf.mxu0
  %v2619 = vadd.f32 %v2506, %v2618
  %v2620 = vpop.f32.mrf.mxu0
  %v2621 = vadd.f32 %v2508, %v2620
  %2622 = vmatprep.mubr.bf16.mxu0 %v182
  %2623 = vmatmul.mubr.bf16.gmra.mxu0 %v181
  %v2624 = vpop.f32.mrf.mxu0
  %v2625 = vadd.f32 %v2512, %v2624
  %v2626 = vpop.f32.mrf.mxu0
  %v2627 = vadd.f32 %v2514, %v2626
  %v2628 = vpop.f32.mrf.mxu0
  %v2629 = vadd.f32 %v2516, %v2628
  %v2630 = vpop.f32.mrf.mxu0
  %v2631 = vadd.f32 %v2518, %v2630
  %2632 = vmatprep.mubr.bf16.mxu0 %v190
  %2633 = vmatmul.mubr.bf16.gmra.mxu0 %v189
  %v2634 = vpop.f32.mrf.mxu0
  %v2635 = vadd.f32 %v2522, %v2634
  %v2636 = vpop.f32.mrf.mxu0
  %v2637 = vadd.f32 %v2524, %v2636
  %v2638 = vpop.f32.mrf.mxu0
  %v2639 = vadd.f32 %v2526, %v2638
  %v2640 = vpop.f32.mrf.mxu0
  %v2641 = vadd.f32 %v2528, %v2640
  %2642 = vmatprep.mubr.bf16.mxu0 %v198
  %2643 = vmatmul.mubr.bf16.gmra.mxu0 %v197
  %v2644 = vpop.f32.mrf.mxu0
  %v2645 = vadd.f32 %v2532, %v2644
  %v2646 = vpop.f32.mrf.mxu0
  %v2647 = vadd.f32 %v2534, %v2646
  %v2648 = vpop.f32.mrf.mxu0
  %v2649 = vadd.f32 %v2536, %v2648
  %v2650 = vpop.f32.mrf.mxu0
  %v2651 = vadd.f32 %v2538, %v2650
  %2652 = vmatprep.mubr.bf16.mxu0 %v206
  %2653 = vmatmul.mubr.bf16.gmra.mxu0 %v205
  %v2654 = vpop.f32.mrf.mxu0
  %v2655 = vadd.f32 %v2542, %v2654
  %v2656 = vpop.f32.mrf.mxu0
  %v2657 = vadd.f32 %v2544, %v2656
  %v2658 = vpop.f32.mrf.mxu0
  %v2659 = vadd.f32 %v2546, %v2658
  %v2660 = vpop.f32.mrf.mxu0
  %v2661 = vadd.f32 %v2548, %v2660
  %2662 = vmatprep.mubr.bf16.mxu0 %v214
  %2663 = vmatmul.mubr.bf16.gmra.mxu0 %v213
  %v2664 = vpop.f32.mrf.mxu0
  %v2665 = vadd.f32 %v2552, %v2664
  %v2666 = vpop.f32.mrf.mxu0
  %v2667 = vadd.f32 %v2554, %v2666
  %v2668 = vpop.f32.mrf.mxu0
  %v2669 = vadd.f32 %v2556, %v2668
  %v2670 = vpop.f32.mrf.mxu0
  %v2671 = vadd.f32 %v2558, %v2670
  %2672 = vmatprep.mubr.bf16.mxu0 %v222
  %2673 = vmatmul.mubr.bf16.gmra.mxu0 %v221
  %v2674 = vpop.f32.mrf.mxu0
  %v2675 = vadd.f32 %v2562, %v2674
  %v2676 = vpop.f32.mrf.mxu0
  %v2677 = vadd.f32 %v2564, %v2676
  %v2678 = vpop.f32.mrf.mxu0
  %v2679 = vadd.f32 %v2566, %v2678
  %v2680 = vpop.f32.mrf.mxu0
  %v2681 = vadd.f32 %v2568, %v2680
  %2682 = vmatprep.mubr.bf16.mxu0 %v230
  %2683 = vmatmul.mubr.bf16.gmra.mxu0 %v229
  %v2684 = vpop.f32.mrf.mxu0
  %v2685 = vadd.f32 %v2572, %v2684
  %v2686 = vpop.f32.mrf.mxu0
  %v2687 = vadd.f32 %v2574, %v2686
  %v2688 = vpop.f32.mrf.mxu0
  %v2689 = vadd.f32 %v2576, %v2688
  %v2690 = vpop.f32.mrf.mxu0
  %v2691 = vadd.f32 %v2578, %v2690
  %2692 = vdwg.mxu0
  %vm2693 = vcmp.gt.f32.partialorder %v2163, 0.0
  %vm2694 = vcmp.gt.f32.partialorder %v2165, 0.0
  %vm2695 = vcmp.gt.f32.partialorder %v2615, 0.0
  %vm2696 = vcmp.gt.f32.partialorder %v2617, 0.0
  %vm2697 = vcmp.gt.f32.partialorder %v2167, 0.0
  %vm2698 = vcmp.gt.f32.partialorder %v2169, 0.0
  %vm2699 = vcmp.gt.f32.partialorder %v2619, 0.0
  %vm2700 = vcmp.gt.f32.partialorder %v2621, 0.0
  %vm2701 = vcmp.gt.f32.partialorder %v2173, 0.0
  %vm2702 = vcmp.gt.f32.partialorder %v2175, 0.0
  %vm2703 = vcmp.gt.f32.partialorder %v2625, 0.0
  %vm2704 = vcmp.gt.f32.partialorder %v2627, 0.0
  %vm2705 = vcmp.gt.f32.partialorder %v2177, 0.0
  %vm2706 = vcmp.gt.f32.partialorder %v2179, 0.0
  %vm2707 = vcmp.gt.f32.partialorder %v2629, 0.0
  %vm2708 = vcmp.gt.f32.partialorder %v2631, 0.0
  %vm2709 = vcmp.gt.f32.partialorder %v2183, 0.0
  %vm2710 = vcmp.gt.f32.partialorder %v2185, 0.0
  %vm2711 = vcmp.gt.f32.partialorder %v2635, 0.0
  %vm2712 = vcmp.gt.f32.partialorder %v2637, 0.0
  %vm2713 = vcmp.gt.f32.partialorder %v2187, 0.0
  %vm2714 = vcmp.gt.f32.partialorder %v2189, 0.0
  %vm2715 = vcmp.gt.f32.partialorder %v2639, 0.0
  %vm2716 = vcmp.gt.f32.partialorder %v2641, 0.0
  %vm2717 = vcmp.gt.f32.partialorder %v2193, 0.0
  %vm2718 = vcmp.gt.f32.partialorder %v2195, 0.0
  %vm2719 = vcmp.gt.f32.partialorder %v2645, 0.0
  %vm2720 = vcmp.gt.f32.partialorder %v2647, 0.0
  %vm2721 = vcmp.gt.f32.partialorder %v2197, 0.0
  %vm2722 = vcmp.gt.f32.partialorder %v2199, 0.0
  %vm2723 = vcmp.gt.f32.partialorder %v2649, 0.0
  %vm2724 = vcmp.gt.f32.partialorder %v2651, 0.0
  %vm2725 = vcmp.gt.f32.partialorder %v2203, 0.0
  %vm2726 = vcmp.gt.f32.partialorder %v2205, 0.0
  %vm2727 = vcmp.gt.f32.partialorder %v2655, 0.0
  %vm2728 = vcmp.gt.f32.partialorder %v2657, 0.0
  %vm2729 = vcmp.gt.f32.partialorder %v2207, 0.0
  %vm2730 = vcmp.gt.f32.partialorder %v2209, 0.0
  %vm2731 = vcmp.gt.f32.partialorder %v2659, 0.0
  %vm2732 = vcmp.gt.f32.partialorder %v2661, 0.0
  %vm2733 = vcmp.gt.f32.partialorder %v2213, 0.0
  %vm2734 = vcmp.gt.f32.partialorder %v2215, 0.0
  %vm2735 = vcmp.gt.f32.partialorder %v2665, 0.0
  %vm2736 = vcmp.gt.f32.partialorder %v2667, 0.0
  %vm2737 = vcmp.gt.f32.partialorder %v2217, 0.0
  %vm2738 = vcmp.gt.f32.partialorder %v2219, 0.0
  %vm2739 = vcmp.gt.f32.partialorder %v2669, 0.0
  %vm2740 = vcmp.gt.f32.partialorder %v2671, 0.0
  %vm2741 = vcmp.gt.f32.partialorder %v2223, 0.0
  %vm2742 = vcmp.gt.f32.partialorder %v2225, 0.0
  %vm2743 = vcmp.gt.f32.partialorder %v2675, 0.0
  %vm2744 = vcmp.gt.f32.partialorder %v2677, 0.0
  %vm2745 = vcmp.gt.f32.partialorder %v2227, 0.0
  %vm2746 = vcmp.gt.f32.partialorder %v2229, 0.0
  %vm2747 = vcmp.gt.f32.partialorder %v2679, 0.0
  %vm2748 = vcmp.gt.f32.partialorder %v2681, 0.0
  %vm2749 = vcmp.gt.f32.partialorder %v2233, 0.0
  %vm2750 = vcmp.gt.f32.partialorder %v2235, 0.0
  %vm2751 = vcmp.gt.f32.partialorder %v2685, 0.0
  %vm2752 = vcmp.gt.f32.partialorder %v2687, 0.0
  %vm2753 = vcmp.gt.f32.partialorder %v2237, 0.0
  %vm2754 = vcmp.gt.f32.partialorder %v2239, 0.0
  %vm2755 = vcmp.gt.f32.partialorder %v2689, 0.0
  %vm2756 = vcmp.gt.f32.partialorder %v2691, 0.0
  %v2757 = vmul.f32 %v2163, 0.2
  %v2758 = vmul.f32 %v2165, 0.2
  %v2759 = vmul.f32 %v2615, 0.2
  %v2760 = vmul.f32 %v2617, 0.2
  %v2761 = vmul.f32 %v2167, 0.2
  %v2762 = vmul.f32 %v2169, 0.2
  %v2763 = vmul.f32 %v2619, 0.2
  %v2764 = vmul.f32 %v2621, 0.2
  %v2765 = vmul.f32 %v2173, 0.2
  %v2766 = vmul.f32 %v2175, 0.2
  %v2767 = vmul.f32 %v2625, 0.2
  %v2768 = vmul.f32 %v2627, 0.2
  %v2769 = vmul.f32 %v2177, 0.2
  %v2770 = vmul.f32 %v2179, 0.2
  %v2771 = vmul.f32 %v2629, 0.2
  %v2772 = vmul.f32 %v2631, 0.2
  %v2773 = vmul.f32 %v2183, 0.2
  %v2774 = vmul.f32 %v2185, 0.2
  %v2775 = vmul.f32 %v2635, 0.2
  %v2776 = vmul.f32 %v2637, 0.2
  %v2777 = vmul.f32 %v2187, 0.2
  %v2778 = vmul.f32 %v2189, 0.2
  %v2779 = vmul.f32 %v2639, 0.2
  %v2780 = vmul.f32 %v2641, 0.2
  %v2781 = vmul.f32 %v2193, 0.2
  %v2782 = vmul.f32 %v2195, 0.2
  %v2783 = vmul.f32 %v2645, 0.2
  %v2784 = vmul.f32 %v2647, 0.2
  %v2785 = vmul.f32 %v2197, 0.2
  %v2786 = vmul.f32 %v2199, 0.2
  %v2787 = vmul.f32 %v2649, 0.2
  %v2788 = vmul.f32 %v2651, 0.2
  %v2789 = vmul.f32 %v2203, 0.2
  %v2790 = vmul.f32 %v2205, 0.2
  %v2791 = vmul.f32 %v2655, 0.2
  %v2792 = vmul.f32 %v2657, 0.2
  %v2793 = vmul.f32 %v2207, 0.2
  %v2794 = vmul.f32 %v2209, 0.2
  %v2795 = vmul.f32 %v2659, 0.2
  %v2796 = vmul.f32 %v2661, 0.2
  %v2797 = vmul.f32 %v2213, 0.2
  %v2798 = vmul.f32 %v2215, 0.2
  %v2799 = vmul.f32 %v2665, 0.2
  %v2800 = vmul.f32 %v2667, 0.2
  %v2801 = vmul.f32 %v2217, 0.2
  %v2802 = vmul.f32 %v2219, 0.2
  %v2803 = vmul.f32 %v2669, 0.2
  %v2804 = vmul.f32 %v2671, 0.2
  %v2805 = vmul.f32 %v2223, 0.2
  %v2806 = vmul.f32 %v2225, 0.2
  %v2807 = vmul.f32 %v2675, 0.2
  %v2808 = vmul.f32 %v2677, 0.2
  %v2809 = vmul.f32 %v2227, 0.2
  %v2810 = vmul.f32 %v2229, 0.2
  %v2811 = vmul.f32 %v2679, 0.2
  %v2812 = vmul.f32 %v2681, 0.2
  %v2813 = vmul.f32 %v2233, 0.2
  %v2814 = vmul.f32 %v2235, 0.2
  %v2815 = vmul.f32 %v2685, 0.2
  %v2816 = vmul.f32 %v2687, 0.2
  %v2817 = vmul.f32 %v2237, 0.2
  %v2818 = vmul.f32 %v2239, 0.2
  %v2819 = vmul.f32 %v2689, 0.2
  %v2820 = vmul.f32 %v2691, 0.2
  %v2821 = vsel %vm2693, %v2163, %v2757
  %v2822 = vsel %vm2694, %v2165, %v2758
  %v2823 = vsel %vm2695, %v2615, %v2759
  %v2824 = vsel %vm2696, %v2617, %v2760
  %v2825 = vsel %vm2697, %v2167, %v2761
  %v2826 = vsel %vm2698, %v2169, %v2762
  %v2827 = vsel %vm2699, %v2619, %v2763
  %v2828 = vsel %vm2700, %v2621, %v2764
  %v2829 = vsel %vm2701, %v2173, %v2765
  %v2830 = vsel %vm2702, %v2175, %v2766
  %v2831 = vsel %vm2703, %v2625, %v2767
  %v2832 = vsel %vm2704, %v2627, %v2768
  %v2833 = vsel %vm2705, %v2177, %v2769
  %v2834 = vsel %vm2706, %v2179, %v2770
  %v2835 = vsel %vm2707, %v2629, %v2771
  %v2836 = vsel %vm2708, %v2631, %v2772
  %v2837 = vsel %vm2709, %v2183, %v2773
  %v2838 = vsel %vm2710, %v2185, %v2774
  %v2839 = vsel %vm2711, %v2635, %v2775
  %v2840 = vsel %vm2712, %v2637, %v2776
  %v2841 = vsel %vm2713, %v2187, %v2777
  %v2842 = vsel %vm2714, %v2189, %v2778
  %v2843 = vsel %vm2715, %v2639, %v2779
  %v2844 = vsel %vm2716, %v2641, %v2780
  %v2845 = vsel %vm2717, %v2193, %v2781
  %v2846 = vsel %vm2718, %v2195, %v2782
  %v2847 = vsel %vm2719, %v2645, %v2783
  %v2848 = vsel %vm2720, %v2647, %v2784
  %v2849 = vsel %vm2721, %v2197, %v2785
  %v2850 = vsel %vm2722, %v2199, %v2786
  %v2851 = vsel %vm2723, %v2649, %v2787
  %v2852 = vsel %vm2724, %v2651, %v2788
  %v2853 = vsel %vm2725, %v2203, %v2789
  %v2854 = vsel %vm2726, %v2205, %v2790
  %v2855 = vsel %vm2727, %v2655, %v2791
  %v2856 = vsel %vm2728, %v2657, %v2792
  %v2857 = vsel %vm2729, %v2207, %v2793
  %v2858 = vsel %vm2730, %v2209, %v2794
  %v2859 = vsel %vm2731, %v2659, %v2795
  %v2860 = vsel %vm2732, %v2661, %v2796
  %v2861 = vsel %vm2733, %v2213, %v2797
  %v2862 = vsel %vm2734, %v2215, %v2798
  %v2863 = vsel %vm2735, %v2665, %v2799
  %v2864 = vsel %vm2736, %v2667, %v2800
  %v2865 = vsel %vm2737, %v2217, %v2801
  %v2866 = vsel %vm2738, %v2219, %v2802
  %v2867 = vsel %vm2739, %v2669, %v2803
  %v2868 = vsel %vm2740, %v2671, %v2804
  %v2869 = vsel %vm2741, %v2223, %v2805
  %v2870 = vsel %vm2742, %v2225, %v2806
  %v2871 = vsel %vm2743, %v2675, %v2807
  %v2872 = vsel %vm2744, %v2677, %v2808
  %v2873 = vsel %vm2745, %v2227, %v2809
  %v2874 = vsel %vm2746, %v2229, %v2810
  %v2875 = vsel %vm2747, %v2679, %v2811
  %v2876 = vsel %vm2748, %v2681, %v2812
  %v2877 = vsel %vm2749, %v2233, %v2813
  %v2878 = vsel %vm2750, %v2235, %v2814
  %v2879 = vsel %vm2751, %v2685, %v2815
  %v2880 = vsel %vm2752, %v2687, %v2816
  %v2881 = vsel %vm2753, %v2237, %v2817
  %v2882 = vsel %vm2754, %v2239, %v2818
  %v2883 = vsel %vm2755, %v2689, %v2819
  %v2884 = vsel %vm2756, %v2691, %v2820
  %v2885 = vpack.c.bf16 %v2825, %v2821
  %v2886 = vpack.c.bf16 %v2826, %v2822
  %v2887 = vpack.c.bf16 %v2827, %v2823
  %v2888 = vpack.c.bf16 %v2828, %v2824
  %v2889 = vpack.c.bf16 %v2833, %v2829
  %v2890 = vpack.c.bf16 %v2834, %v2830
  %v2891 = vpack.c.bf16 %v2835, %v2831
  %v2892 = vpack.c.bf16 %v2836, %v2832
  %v2893 = vpack.c.bf16 %v2841, %v2837
  %v2894 = vpack.c.bf16 %v2842, %v2838
  %v2895 = vpack.c.bf16 %v2843, %v2839
  %v2896 = vpack.c.bf16 %v2844, %v2840
  %v2897 = vpack.c.bf16 %v2849, %v2845
  %v2898 = vpack.c.bf16 %v2850, %v2846
  %v2899 = vpack.c.bf16 %v2851, %v2847
  %v2900 = vpack.c.bf16 %v2852, %v2848
  %v2901 = vpack.c.bf16 %v2857, %v2853
  %v2902 = vpack.c.bf16 %v2858, %v2854
  %v2903 = vpack.c.bf16 %v2859, %v2855
  %v2904 = vpack.c.bf16 %v2860, %v2856
  %v2905 = vpack.c.bf16 %v2865, %v2861
  %v2906 = vpack.c.bf16 %v2866, %v2862
  %v2907 = vpack.c.bf16 %v2867, %v2863
  %v2908 = vpack.c.bf16 %v2868, %v2864
  %v2909 = vpack.c.bf16 %v2873, %v2869
  %v2910 = vpack.c.bf16 %v2874, %v2870
  %v2911 = vpack.c.bf16 %v2875, %v2871
  %v2912 = vpack.c.bf16 %v2876, %v2872
  %v2913 = vpack.c.bf16 %v2881, %v2877
  %v2914 = vpack.c.bf16 %v2882, %v2878
  %v2915 = vpack.c.bf16 %v2883, %v2879
  %v2916 = vpack.c.bf16 %v2884, %v2880
  %v2917 = vld [vmem:[%s3] sm:$0xff]
  %v2918 = vld [vmem:[%s3 + $0x8] sm:$0xff]
  %v2919 = vld [vmem:[%s3 + $0x10] sm:$0xff]
  %v2920 = vld [vmem:[%s3 + $0x18] sm:$0xff]
  %v2921 = vld [vmem:[%s3 + $0x20] sm:$0xff]
  %v2922 = vld [vmem:[%s3 + $0x28] sm:$0xff]
  %v2923 = vld [vmem:[%s3 + $0x30] sm:$0xff]
  %v2924 = vld [vmem:[%s3 + $0x38] sm:$0xff]
  %v2925 = vld [vmem:[%s3 + $0x40] sm:$0xff]
  %v2926 = vld [vmem:[%s3 + $0x48] sm:$0xff]
  %v2927 = vld [vmem:[%s3 + $0x50] sm:$0xff]
  %v2928 = vld [vmem:[%s3 + $0x58] sm:$0xff]
  %v2929 = vld [vmem:[%s3 + $0x60] sm:$0xff]
  %v2930 = vld [vmem:[%s3 + $0x68] sm:$0xff]
  %v2931 = vld [vmem:[%s3 + $0x70] sm:$0xff]
  %v2932 = vld [vmem:[%s3 + $0x78] sm:$0xff]
  %v2933 = vld [vmem:[%s3 + $0x80] sm:$0xff]
  %v2934 = vld [vmem:[%s3 + $0x88] sm:$0xff]
  %v2935 = vld [vmem:[%s3 + $0x90] sm:$0xff]
  %v2936 = vld [vmem:[%s3 + $0x98] sm:$0xff]
  %v2937 = vld [vmem:[%s3 + $0xa0] sm:$0xff]
  %v2938 = vld [vmem:[%s3 + $0xa8] sm:$0xff]
  %v2939 = vld [vmem:[%s3 + $0xb0] sm:$0xff]
  %v2940 = vld [vmem:[%s3 + $0xb8] sm:$0xff]
  %v2941 = vld [vmem:[%s3 + $0xc0] sm:$0xff]
  %v2942 = vld [vmem:[%s3 + $0xc8] sm:$0xff]
  %v2943 = vld [vmem:[%s3 + $0xd0] sm:$0xff]
  %v2944 = vld [vmem:[%s3 + $0xd8] sm:$0xff]
  %v2945 = vld [vmem:[%s3 + $0xe0] sm:$0xff]
  %v2946 = vld [vmem:[%s3 + $0xe8] sm:$0xff]
  %v2947 = vld [vmem:[%s3 + $0xf0] sm:$0xff]
  %v2948 = vld [vmem:[%s3 + $0xf8] sm:$0xff]
  %v2949 = vld [vmem:[%s3 + $0x100] sm:$0xff]
  %v2950 = vld [vmem:[%s3 + $0x108] sm:$0xff]
  %v2951 = vld [vmem:[%s3 + $0x110] sm:$0xff]
  %v2952 = vld [vmem:[%s3 + $0x118] sm:$0xff]
  %v2953 = vld [vmem:[%s3 + $0x120] sm:$0xff]
  %v2954 = vld [vmem:[%s3 + $0x128] sm:$0xff]
  %v2955 = vld [vmem:[%s3 + $0x130] sm:$0xff]
  %v2956 = vld [vmem:[%s3 + $0x138] sm:$0xff]
  %v2957 = vld [vmem:[%s3 + $0x140] sm:$0xff]
  %v2958 = vld [vmem:[%s3 + $0x148] sm:$0xff]
  %v2959 = vld [vmem:[%s3 + $0x150] sm:$0xff]
  %v2960 = vld [vmem:[%s3 + $0x158] sm:$0xff]
  %v2961 = vld [vmem:[%s3 + $0x160] sm:$0xff]
  %v2962 = vld [vmem:[%s3 + $0x168] sm:$0xff]
  %v2963 = vld [vmem:[%s3 + $0x170] sm:$0xff]
  %v2964 = vld [vmem:[%s3 + $0x178] sm:$0xff]
  %v2965 = vld [vmem:[%s3 + $0x180] sm:$0xff]
  %v2966 = vld [vmem:[%s3 + $0x188] sm:$0xff]
  %v2967 = vld [vmem:[%s3 + $0x190] sm:$0xff]
  %v2968 = vld [vmem:[%s3 + $0x198] sm:$0xff]
  %v2969 = vld [vmem:[%s3 + $0x1a0] sm:$0xff]
  %v2970 = vld [vmem:[%s3 + $0x1a8] sm:$0xff]
  %v2971 = vld [vmem:[%s3 + $0x1b0] sm:$0xff]
  %v2972 = vld [vmem:[%s3 + $0x1b8] sm:$0xff]
  %v2973 = vld [vmem:[%s3 + $0x1c0] sm:$0xff]
  %v2974 = vld [vmem:[%s3 + $0x1c8] sm:$0xff]
  %v2975 = vld [vmem:[%s3 + $0x1d0] sm:$0xff]
  %v2976 = vld [vmem:[%s3 + $0x1d8] sm:$0xff]
  %v2977 = vld [vmem:[%s3 + $0x1e0] sm:$0xff]
  %v2978 = vld [vmem:[%s3 + $0x1e8] sm:$0xff]
  %v2979 = vld [vmem:[%s3 + $0x1f0] sm:$0xff]
  %v2980 = vld [vmem:[%s3 + $0x1f8] sm:$0xff]
  %v2981 = vld [vmem:[%s4] sm:$0x3]
  %v2983 = vlaneseq
  %v2984 = vshrl.u32 %v2983, 7
  %v2985 = vsub.s32 0, %v2984
  %v2986 = vrot.slane %v2981, %v2985
  %v2987 = vlaneseq
  %v2988 = vshrl.u32 %v2987, 7
  %v2989 = vsub.s32 1, %v2988
  %v2990 = vrot.slane %v2981, %v2989
  %v3057 = vunpack.c.l.b16 %v2917
  %v3058 = vunpack.c.h.b16 %v2917
  %v3059 = vunpack.c.l.b16 %v2918
  %v3060 = vunpack.c.h.b16 %v2918
  %v3061 = vunpack.c.l.b16 %v2919
  %v3062 = vunpack.c.h.b16 %v2919
  %v3063 = vunpack.c.l.b16 %v2920
  %v3064 = vunpack.c.h.b16 %v2920
  %v3065 = vunpack.c.l.b16 %v2921
  %v3066 = vunpack.c.h.b16 %v2921
  %v3067 = vunpack.c.l.b16 %v2922
  %v3068 = vunpack.c.h.b16 %v2922
  %v3069 = vunpack.c.l.b16 %v2923
  %v3070 = vunpack.c.h.b16 %v2923
  %v3071 = vunpack.c.l.b16 %v2924
  %v3072 = vunpack.c.h.b16 %v2924
  %v3073 = vunpack.c.l.b16 %v2925
  %v3074 = vunpack.c.h.b16 %v2925
  %v3075 = vunpack.c.l.b16 %v2926
  %v3076 = vunpack.c.h.b16 %v2926
  %v3077 = vunpack.c.l.b16 %v2927
  %v3078 = vunpack.c.h.b16 %v2927
  %v3079 = vunpack.c.l.b16 %v2928
  %v3080 = vunpack.c.h.b16 %v2928
  %v3081 = vunpack.c.l.b16 %v2929
  %v3082 = vunpack.c.h.b16 %v2929
  %v3083 = vunpack.c.l.b16 %v2930
  %v3084 = vunpack.c.h.b16 %v2930
  %v3085 = vunpack.c.l.b16 %v2931
  %v3086 = vunpack.c.h.b16 %v2931
  %v3087 = vunpack.c.l.b16 %v2932
  %v3088 = vunpack.c.h.b16 %v2932
  %v3089 = vunpack.c.l.b16 %v2933
  %v3090 = vunpack.c.h.b16 %v2933
  %v3091 = vunpack.c.l.b16 %v2934
  %v3092 = vunpack.c.h.b16 %v2934
  %v3093 = vunpack.c.l.b16 %v2935
  %v3094 = vunpack.c.h.b16 %v2935
  %v3095 = vunpack.c.l.b16 %v2936
  %v3096 = vunpack.c.h.b16 %v2936
  %v3097 = vunpack.c.l.b16 %v2937
  %v3098 = vunpack.c.h.b16 %v2937
  %v3099 = vunpack.c.l.b16 %v2938
  %v3100 = vunpack.c.h.b16 %v2938
  %v3101 = vunpack.c.l.b16 %v2939
  %v3102 = vunpack.c.h.b16 %v2939
  %v3103 = vunpack.c.l.b16 %v2940
  %v3104 = vunpack.c.h.b16 %v2940
  %v3105 = vunpack.c.l.b16 %v2941
  %v3106 = vunpack.c.h.b16 %v2941
  %v3107 = vunpack.c.l.b16 %v2942
  %v3108 = vunpack.c.h.b16 %v2942
  %v3109 = vunpack.c.l.b16 %v2943
  %v3110 = vunpack.c.h.b16 %v2943
  %v3111 = vunpack.c.l.b16 %v2944
  %v3112 = vunpack.c.h.b16 %v2944
  %v3113 = vunpack.c.l.b16 %v2945
  %v3114 = vunpack.c.h.b16 %v2945
  %v3115 = vunpack.c.l.b16 %v2946
  %v3116 = vunpack.c.h.b16 %v2946
  %v3117 = vunpack.c.l.b16 %v2947
  %v3118 = vunpack.c.h.b16 %v2947
  %v3119 = vunpack.c.l.b16 %v2948
  %v3120 = vunpack.c.h.b16 %v2948
  %v3121 = vunpack.c.l.b16 %v2949
  %v3122 = vunpack.c.h.b16 %v2949
  %v3123 = vunpack.c.l.b16 %v2950
  %v3124 = vunpack.c.h.b16 %v2950
  %v3125 = vunpack.c.l.b16 %v2951
  %v3126 = vunpack.c.h.b16 %v2951
  %v3127 = vunpack.c.l.b16 %v2952
  %v3128 = vunpack.c.h.b16 %v2952
  %v3129 = vunpack.c.l.b16 %v2953
  %v3130 = vunpack.c.h.b16 %v2953
  %v3131 = vunpack.c.l.b16 %v2954
  %v3132 = vunpack.c.h.b16 %v2954
  %v3133 = vunpack.c.l.b16 %v2955
  %v3134 = vunpack.c.h.b16 %v2955
  %v3135 = vunpack.c.l.b16 %v2956
  %v3136 = vunpack.c.h.b16 %v2956
  %v3137 = vunpack.c.l.b16 %v2957
  %v3138 = vunpack.c.h.b16 %v2957
  %v3139 = vunpack.c.l.b16 %v2958
  %v3140 = vunpack.c.h.b16 %v2958
  %v3141 = vunpack.c.l.b16 %v2959
  %v3142 = vunpack.c.h.b16 %v2959
  %v3143 = vunpack.c.l.b16 %v2960
  %v3144 = vunpack.c.h.b16 %v2960
  %v3145 = vunpack.c.l.b16 %v2961
  %v3146 = vunpack.c.h.b16 %v2961
  %v3147 = vunpack.c.l.b16 %v2962
  %v3148 = vunpack.c.h.b16 %v2962
  %v3149 = vunpack.c.l.b16 %v2963
  %v3150 = vunpack.c.h.b16 %v2963
  %v3151 = vunpack.c.l.b16 %v2964
  %v3152 = vunpack.c.h.b16 %v2964
  %v3153 = vunpack.c.l.b16 %v2965
  %v3154 = vunpack.c.h.b16 %v2965
  %v3155 = vunpack.c.l.b16 %v2966
  %v3156 = vunpack.c.h.b16 %v2966
  %v3157 = vunpack.c.l.b16 %v2967
  %v3158 = vunpack.c.h.b16 %v2967
  %v3159 = vunpack.c.l.b16 %v2968
  %v3160 = vunpack.c.h.b16 %v2968
  %v3161 = vunpack.c.l.b16 %v2969
  %v3162 = vunpack.c.h.b16 %v2969
  %v3163 = vunpack.c.l.b16 %v2970
  %v3164 = vunpack.c.h.b16 %v2970
  %v3165 = vunpack.c.l.b16 %v2971
  %v3166 = vunpack.c.h.b16 %v2971
  %v3167 = vunpack.c.l.b16 %v2972
  %v3168 = vunpack.c.h.b16 %v2972
  %v3169 = vunpack.c.l.b16 %v2973
  %v3170 = vunpack.c.h.b16 %v2973
  %v3171 = vunpack.c.l.b16 %v2974
  %v3172 = vunpack.c.h.b16 %v2974
  %v3173 = vunpack.c.l.b16 %v2975
  %v3174 = vunpack.c.h.b16 %v2975
  %v3175 = vunpack.c.l.b16 %v2976
  %v3176 = vunpack.c.h.b16 %v2976
  %v3177 = vunpack.c.l.b16 %v2977
  %v3178 = vunpack.c.h.b16 %v2977
  %v3179 = vunpack.c.l.b16 %v2978
  %v3180 = vunpack.c.h.b16 %v2978
  %v3181 = vunpack.c.l.b16 %v2979
  %v3182 = vunpack.c.h.b16 %v2979
  %v3183 = vunpack.c.l.b16 %v2980
  %v3184 = vunpack.c.h.b16 %v2980
  %v3185 = vpack.c.b16 %v3059, %v3057
  %v3186 = vpack.c.b16 %v3060, %v3058
  %v3187 = vpack.c.b16 %v3063, %v3061
  %v3188 = vpack.c.b16 %v3064, %v3062
  %v3189 = vpack.c.b16 %v3067, %v3065
  %v3190 = vpack.c.b16 %v3068, %v3066
  %v3191 = vpack.c.b16 %v3071, %v3069
  %v3192 = vpack.c.b16 %v3072, %v3070
  %v3193 = vpack.c.b16 %v3075, %v3073
  %v3194 = vpack.c.b16 %v3076, %v3074
  %v3195 = vpack.c.b16 %v3079, %v3077
  %v3196 = vpack.c.b16 %v3080, %v3078
  %v3197 = vpack.c.b16 %v3083, %v3081
  %v3198 = vpack.c.b16 %v3084, %v3082
  %v3199 = vpack.c.b16 %v3087, %v3085
  %v3200 = vpack.c.b16 %v3088, %v3086
  %v3201 = vpack.c.b16 %v3091, %v3089
  %v3202 = vpack.c.b16 %v3092, %v3090
  %v3203 = vpack.c.b16 %v3095, %v3093
  %v3204 = vpack.c.b16 %v3096, %v3094
  %v3205 = vpack.c.b16 %v3099, %v3097
  %v3206 = vpack.c.b16 %v3100, %v3098
  %v3207 = vpack.c.b16 %v3103, %v3101
  %v3208 = vpack.c.b16 %v3104, %v3102
  %v3209 = vpack.c.b16 %v3107, %v3105
  %v3210 = vpack.c.b16 %v3108, %v3106
  %v3211 = vpack.c.b16 %v3111, %v3109
  %v3212 = vpack.c.b16 %v3112, %v3110
  %v3213 = vpack.c.b16 %v3115, %v3113
  %v3214 = vpack.c.b16 %v3116, %v3114
  %v3215 = vpack.c.b16 %v3119, %v3117
  %v3216 = vpack.c.b16 %v3120, %v3118
  %v3217 = vpack.c.b16 %v3123, %v3121
  %v3218 = vpack.c.b16 %v3124, %v3122
  %v3219 = vpack.c.b16 %v3127, %v3125
  %v3220 = vpack.c.b16 %v3128, %v3126
  %v3221 = vpack.c.b16 %v3131, %v3129
  %v3222 = vpack.c.b16 %v3132, %v3130
  %v3223 = vpack.c.b16 %v3135, %v3133
  %v3224 = vpack.c.b16 %v3136, %v3134
  %v3225 = vpack.c.b16 %v3139, %v3137
  %v3226 = vpack.c.b16 %v3140, %v3138
  %v3227 = vpack.c.b16 %v3143, %v3141
  %v3228 = vpack.c.b16 %v3144, %v3142
  %v3229 = vpack.c.b16 %v3147, %v3145
  %v3230 = vpack.c.b16 %v3148, %v3146
  %v3231 = vpack.c.b16 %v3151, %v3149
  %v3232 = vpack.c.b16 %v3152, %v3150
  %v3233 = vpack.c.b16 %v3155, %v3153
  %v3234 = vpack.c.b16 %v3156, %v3154
  %v3235 = vpack.c.b16 %v3159, %v3157
  %v3236 = vpack.c.b16 %v3160, %v3158
  %v3237 = vpack.c.b16 %v3163, %v3161
  %v3238 = vpack.c.b16 %v3164, %v3162
  %v3239 = vpack.c.b16 %v3167, %v3165
  %v3240 = vpack.c.b16 %v3168, %v3166
  %v3241 = vpack.c.b16 %v3171, %v3169
  %v3242 = vpack.c.b16 %v3172, %v3170
  %v3243 = vpack.c.b16 %v3175, %v3173
  %v3244 = vpack.c.b16 %v3176, %v3174
  %v3245 = vpack.c.b16 %v3179, %v3177
  %v3246 = vpack.c.b16 %v3180, %v3178
  %v3247 = vpack.c.b16 %v3183, %v3181
  %v3248 = vpack.c.b16 %v3184, %v3182
  %3313 = vmatprep.subr.bf16.mxu0 %v3200
  %3314 = vmatpush1.bf16.msra.mxu0 %v3199
  %3315 = vmatprep.subr.bf16.mxu0 %v3198
  %3316 = vmatpush1.bf16.msra.mxu0 %v3197
  %3317 = vmatprep.subr.bf16.mxu0 %v3196
  %3318 = vmatpush1.bf16.msra.mxu0 %v3195
  %3319 = vmatprep.subr.bf16.mxu0 %v3194
  %3320 = vmatpush1.bf16.msra.mxu0 %v3193
  %3321 = vmatprep.subr.bf16.mxu0 %v3192
  %3322 = vmatpush1.bf16.msra.mxu0 %v3191
  %3323 = vmatprep.subr.bf16.mxu0 %v3190
  %3324 = vmatpush1.bf16.msra.mxu0 %v3189
  %3325 = vmatprep.subr.bf16.mxu0 %v3188
  %3326 = vmatpush1.bf16.msra.mxu0 %v3187
  %3327 = vmatprep.subr.bf16.mxu0 %v3186
  %3328 = vmatpush1.bf16.msra.mxu0 %v3185
  %3329 = vmatprep.subr.bf16.mxu0 %v3216
  %3330 = vmatpush2.bf16.msra.mxu0 %v3215
  %3331 = vmatprep.subr.bf16.mxu0 %v3214
  %3332 = vmatpush2.bf16.msra.mxu0 %v3213
  %3333 = vmatprep.subr.bf16.mxu0 %v3212
  %3334 = vmatpush2.bf16.msra.mxu0 %v3211
  %3335 = vmatprep.subr.bf16.mxu0 %v3210
  %3336 = vmatpush2.bf16.msra.mxu0 %v3209
  %3337 = vmatprep.subr.bf16.mxu0 %v3208
  %3338 = vmatpush2.bf16.msra.mxu0 %v3207
  %3339 = vmatprep.subr.bf16.mxu0 %v3206
  %3340 = vmatpush2.bf16.msra.mxu0 %v3205
  %3341 = vmatprep.subr.bf16.mxu0 %v3204
  %3342 = vmatpush2.bf16.msra.mxu0 %v3203
  %3343 = vmatprep.subr.bf16.mxu0 %v3202
  %3344 = vmatpush2.bf16.msra.mxu0 %v3201
  %3345 = vmatprep.mubr.bf16.mxu0 %v2886
  %3346 = vmatmul.mubr.bf16.gmra.mxu0 %v2885
  %v3347 = vpop.f32.mrf.mxu0
  %v3348 = vadd.f32 %v2986, %v3347
  %v3349 = vpop.f32.mrf.mxu0
  %v3350 = vadd.f32 %v2990, %v3349
  %v3351 = vpop.f32.mrf.mxu0
  %v3352 = vadd.f32 %v2986, %v3351
  %v3353 = vpop.f32.mrf.mxu0
  %v3354 = vadd.f32 %v2990, %v3353
  %3355 = vmatprep.mubr.bf16.mxu0 %v2890
  %3356 = vmatmul.mubr.bf16.gmra.mxu0 %v2889
  %v3357 = vpop.f32.mrf.mxu0
  %v3358 = vadd.f32 %v2986, %v3357
  %v3359 = vpop.f32.mrf.mxu0
  %v3360 = vadd.f32 %v2990, %v3359
  %v3361 = vpop.f32.mrf.mxu0
  %v3362 = vadd.f32 %v2986, %v3361
  %v3363 = vpop.f32.mrf.mxu0
  %v3364 = vadd.f32 %v2990, %v3363
  %3365 = vmatprep.mubr.bf16.mxu0 %v2894
  %3366 = vmatmul.mubr.bf16.gmra.mxu0 %v2893
  %v3367 = vpop.f32.mrf.mxu0
  %v3368 = vadd.f32 %v2986, %v3367
  %v3369 = vpop.f32.mrf.mxu0
  %v3370 = vadd.f32 %v2990, %v3369
  %v3371 = vpop.f32.mrf.mxu0
  %v3372 = vadd.f32 %v2986, %v3371
  %v3373 = vpop.f32.mrf.mxu0
  %v3374 = vadd.f32 %v2990, %v3373
  %3375 = vmatprep.mubr.bf16.mxu0 %v2898
  %3376 = vmatmul.mubr.bf16.gmra.mxu0 %v2897
  %v3377 = vpop.f32.mrf.mxu0
  %v3378 = vadd.f32 %v2986, %v3377
  %v3379 = vpop.f32.mrf.mxu0
  %v3380 = vadd.f32 %v2990, %v3379
  %v3381 = vpop.f32.mrf.mxu0
  %v3382 = vadd.f32 %v2986, %v3381
  %v3383 = vpop.f32.mrf.mxu0
  %v3384 = vadd.f32 %v2990, %v3383
  %3385 = vmatprep.mubr.bf16.mxu0 %v2902
  %3386 = vmatmul.mubr.bf16.gmra.mxu0 %v2901
  %v3387 = vpop.f32.mrf.mxu0
  %v3388 = vadd.f32 %v2986, %v3387
  %v3389 = vpop.f32.mrf.mxu0
  %v3390 = vadd.f32 %v2990, %v3389
  %v3391 = vpop.f32.mrf.mxu0
  %v3392 = vadd.f32 %v2986, %v3391
  %v3393 = vpop.f32.mrf.mxu0
  %v3394 = vadd.f32 %v2990, %v3393
  %3395 = vmatprep.mubr.bf16.mxu0 %v2906
  %3396 = vmatmul.mubr.bf16.gmra.mxu0 %v2905
  %v3397 = vpop.f32.mrf.mxu0
  %v3398 = vadd.f32 %v2986, %v3397
  %v3399 = vpop.f32.mrf.mxu0
  %v3400 = vadd.f32 %v2990, %v3399
  %v3401 = vpop.f32.mrf.mxu0
  %v3402 = vadd.f32 %v2986, %v3401
  %v3403 = vpop.f32.mrf.mxu0
  %v3404 = vadd.f32 %v2990, %v3403
  %3405 = vmatprep.mubr.bf16.mxu0 %v2910
  %3406 = vmatmul.mubr.bf16.gmra.mxu0 %v2909
  %v3407 = vpop.f32.mrf.mxu0
  %v3408 = vadd.f32 %v2986, %v3407
  %v3409 = vpop.f32.mrf.mxu0
  %v3410 = vadd.f32 %v2990, %v3409
  %v3411 = vpop.f32.mrf.mxu0
  %v3412 = vadd.f32 %v2986, %v3411
  %v3413 = vpop.f32.mrf.mxu0
  %v3414 = vadd.f32 %v2990, %v3413
  %3415 = vmatprep.mubr.bf16.mxu0 %v2914
  %3416 = vmatmul.mubr.bf16.gmra.mxu0 %v2913
  %v3417 = vpop.f32.mrf.mxu0
  %v3418 = vadd.f32 %v2986, %v3417
  %v3419 = vpop.f32.mrf.mxu0
  %v3420 = vadd.f32 %v2990, %v3419
  %v3421 = vpop.f32.mrf.mxu0
  %v3422 = vadd.f32 %v2986, %v3421
  %v3423 = vpop.f32.mrf.mxu0
  %v3424 = vadd.f32 %v2990, %v3423
  %3425 = vdwg.mxu0
  %3426 = vmatprep.subr.bf16.mxu0 %v3232
  %3427 = vmatpush1.bf16.msra.mxu0 %v3231
  %3428 = vmatprep.subr.bf16.mxu0 %v3230
  %3429 = vmatpush1.bf16.msra.mxu0 %v3229
  %3430 = vmatprep.subr.bf16.mxu0 %v3228
  %3431 = vmatpush1.bf16.msra.mxu0 %v3227
  %3432 = vmatprep.subr.bf16.mxu0 %v3226
  %3433 = vmatpush1.bf16.msra.mxu0 %v3225
  %3434 = vmatprep.subr.bf16.mxu0 %v3224
  %3435 = vmatpush1.bf16.msra.mxu0 %v3223
  %3436 = vmatprep.subr.bf16.mxu0 %v3222
  %3437 = vmatpush1.bf16.msra.mxu0 %v3221
  %3438 = vmatprep.subr.bf16.mxu0 %v3220
  %3439 = vmatpush1.bf16.msra.mxu0 %v3219
  %3440 = vmatprep.subr.bf16.mxu0 %v3218
  %3441 = vmatpush1.bf16.msra.mxu0 %v3217
  %3442 = vmatprep.subr.bf16.mxu0 %v3248
  %3443 = vmatpush2.bf16.msra.mxu0 %v3247
  %3444 = vmatprep.subr.bf16.mxu0 %v3246
  %3445 = vmatpush2.bf16.msra.mxu0 %v3245
  %3446 = vmatprep.subr.bf16.mxu0 %v3244
  %3447 = vmatpush2.bf16.msra.mxu0 %v3243
  %3448 = vmatprep.subr.bf16.mxu0 %v3242
  %3449 = vmatpush2.bf16.msra.mxu0 %v3241
  %3450 = vmatprep.subr.bf16.mxu0 %v3240
  %3451 = vmatpush2.bf16.msra.mxu0 %v3239
  %3452 = vmatprep.subr.bf16.mxu0 %v3238
  %3453 = vmatpush2.bf16.msra.mxu0 %v3237
  %3454 = vmatprep.subr.bf16.mxu0 %v3236
  %3455 = vmatpush2.bf16.msra.mxu0 %v3235
  %3456 = vmatprep.subr.bf16.mxu0 %v3234
  %3457 = vmatpush2.bf16.msra.mxu0 %v3233
  %3458 = vmatprep.mubr.bf16.mxu0 %v2888
  %3459 = vmatmul.mubr.bf16.gmra.mxu0 %v2887
  %v3460 = vpop.f32.mrf.mxu0
  %v3461 = vadd.f32 %v3348, %v3460
  %v3462 = vpop.f32.mrf.mxu0
  %v3463 = vadd.f32 %v3350, %v3462
  %v3464 = vpop.f32.mrf.mxu0
  %v3465 = vadd.f32 %v3352, %v3464
  %v3466 = vpop.f32.mrf.mxu0
  %v3467 = vadd.f32 %v3354, %v3466
  %3468 = vmatprep.mubr.bf16.mxu0 %v2892
  %3469 = vmatmul.mubr.bf16.gmra.mxu0 %v2891
  %v3470 = vpop.f32.mrf.mxu0
  %v3471 = vadd.f32 %v3358, %v3470
  %v3472 = vpop.f32.mrf.mxu0
  %v3473 = vadd.f32 %v3360, %v3472
  %v3474 = vpop.f32.mrf.mxu0
  %v3475 = vadd.f32 %v3362, %v3474
  %v3476 = vpop.f32.mrf.mxu0
  %v3477 = vadd.f32 %v3364, %v3476
  %3478 = vmatprep.mubr.bf16.mxu0 %v2896
  %3479 = vmatmul.mubr.bf16.gmra.mxu0 %v2895
  %v3480 = vpop.f32.mrf.mxu0
  %v3481 = vadd.f32 %v3368, %v3480
  %v3482 = vpop.f32.mrf.mxu0
  %v3483 = vadd.f32 %v3370, %v3482
  %v3484 = vpop.f32.mrf.mxu0
  %v3485 = vadd.f32 %v3372, %v3484
  %v3486 = vpop.f32.mrf.mxu0
  %v3487 = vadd.f32 %v3374, %v3486
  %3488 = vmatprep.mubr.bf16.mxu0 %v2900
  %3489 = vmatmul.mubr.bf16.gmra.mxu0 %v2899
  %v3490 = vpop.f32.mrf.mxu0
  %v3491 = vadd.f32 %v3378, %v3490
  %v3492 = vpop.f32.mrf.mxu0
  %v3493 = vadd.f32 %v3380, %v3492
  %v3494 = vpop.f32.mrf.mxu0
  %v3495 = vadd.f32 %v3382, %v3494
  %v3496 = vpop.f32.mrf.mxu0
  %v3497 = vadd.f32 %v3384, %v3496
  %3498 = vmatprep.mubr.bf16.mxu0 %v2904
  %3499 = vmatmul.mubr.bf16.gmra.mxu0 %v2903
  %v3500 = vpop.f32.mrf.mxu0
  %v3501 = vadd.f32 %v3388, %v3500
  %v3502 = vpop.f32.mrf.mxu0
  %v3503 = vadd.f32 %v3390, %v3502
  %v3504 = vpop.f32.mrf.mxu0
  %v3505 = vadd.f32 %v3392, %v3504
  %v3506 = vpop.f32.mrf.mxu0
  %v3507 = vadd.f32 %v3394, %v3506
  %3508 = vmatprep.mubr.bf16.mxu0 %v2908
  %3509 = vmatmul.mubr.bf16.gmra.mxu0 %v2907
  %v3510 = vpop.f32.mrf.mxu0
  %v3511 = vadd.f32 %v3398, %v3510
  %v3512 = vpop.f32.mrf.mxu0
  %v3513 = vadd.f32 %v3400, %v3512
  %v3514 = vpop.f32.mrf.mxu0
  %v3515 = vadd.f32 %v3402, %v3514
  %v3516 = vpop.f32.mrf.mxu0
  %v3517 = vadd.f32 %v3404, %v3516
  %3518 = vmatprep.mubr.bf16.mxu0 %v2912
  %3519 = vmatmul.mubr.bf16.gmra.mxu0 %v2911
  %v3520 = vpop.f32.mrf.mxu0
  %v3521 = vadd.f32 %v3408, %v3520
  %v3522 = vpop.f32.mrf.mxu0
  %v3523 = vadd.f32 %v3410, %v3522
  %v3524 = vpop.f32.mrf.mxu0
  %v3525 = vadd.f32 %v3412, %v3524
  %v3526 = vpop.f32.mrf.mxu0
  %v3527 = vadd.f32 %v3414, %v3526
  %3528 = vmatprep.mubr.bf16.mxu0 %v2916
  %3529 = vmatmul.mubr.bf16.gmra.mxu0 %v2915
  %v3530 = vpop.f32.mrf.mxu0
  %v3531 = vadd.f32 %v3418, %v3530
  %v3532 = vpop.f32.mrf.mxu0
  %v3533 = vadd.f32 %v3420, %v3532
  %v3534 = vpop.f32.mrf.mxu0
  %v3535 = vadd.f32 %v3422, %v3534
  %v3536 = vpop.f32.mrf.mxu0
  %v3537 = vadd.f32 %v3424, %v3536
  %3538 = vdwg.mxu0
  %vm3539 = vcmp.gt.f32.partialorder %v3461, 0.0
  %vm3540 = vcmp.gt.f32.partialorder %v3463, 0.0
  %vm3541 = vcmp.gt.f32.partialorder %v3465, 0.0
  %vm3542 = vcmp.gt.f32.partialorder %v3467, 0.0
  %vm3543 = vcmp.gt.f32.partialorder %v3471, 0.0
  %vm3544 = vcmp.gt.f32.partialorder %v3473, 0.0
  %vm3545 = vcmp.gt.f32.partialorder %v3475, 0.0
  %vm3546 = vcmp.gt.f32.partialorder %v3477, 0.0
  %vm3547 = vcmp.gt.f32.partialorder %v3481, 0.0
  %vm3548 = vcmp.gt.f32.partialorder %v3483, 0.0
  %vm3549 = vcmp.gt.f32.partialorder %v3485, 0.0
  %vm3550 = vcmp.gt.f32.partialorder %v3487, 0.0
  %vm3551 = vcmp.gt.f32.partialorder %v3491, 0.0
  %vm3552 = vcmp.gt.f32.partialorder %v3493, 0.0
  %vm3553 = vcmp.gt.f32.partialorder %v3495, 0.0
  %vm3554 = vcmp.gt.f32.partialorder %v3497, 0.0
  %vm3555 = vcmp.gt.f32.partialorder %v3501, 0.0
  %vm3556 = vcmp.gt.f32.partialorder %v3503, 0.0
  %vm3557 = vcmp.gt.f32.partialorder %v3505, 0.0
  %vm3558 = vcmp.gt.f32.partialorder %v3507, 0.0
  %vm3559 = vcmp.gt.f32.partialorder %v3511, 0.0
  %vm3560 = vcmp.gt.f32.partialorder %v3513, 0.0
  %vm3561 = vcmp.gt.f32.partialorder %v3515, 0.0
  %vm3562 = vcmp.gt.f32.partialorder %v3517, 0.0
  %vm3563 = vcmp.gt.f32.partialorder %v3521, 0.0
  %vm3564 = vcmp.gt.f32.partialorder %v3523, 0.0
  %vm3565 = vcmp.gt.f32.partialorder %v3525, 0.0
  %vm3566 = vcmp.gt.f32.partialorder %v3527, 0.0
  %vm3567 = vcmp.gt.f32.partialorder %v3531, 0.0
  %vm3568 = vcmp.gt.f32.partialorder %v3533, 0.0
  %vm3569 = vcmp.gt.f32.partialorder %v3535, 0.0
  %vm3570 = vcmp.gt.f32.partialorder %v3537, 0.0
  %v3571 = vmul.f32 %v3461, 0.2
  %v3572 = vmul.f32 %v3463, 0.2
  %v3573 = vmul.f32 %v3465, 0.2
  %v3574 = vmul.f32 %v3467, 0.2
  %v3575 = vmul.f32 %v3471, 0.2
  %v3576 = vmul.f32 %v3473, 0.2
  %v3577 = vmul.f32 %v3475, 0.2
  %v3578 = vmul.f32 %v3477, 0.2
  %v3579 = vmul.f32 %v3481, 0.2
  %v3580 = vmul.f32 %v3483, 0.2
  %v3581 = vmul.f32 %v3485, 0.2
  %v3582 = vmul.f32 %v3487, 0.2
  %v3583 = vmul.f32 %v3491, 0.2
  %v3584 = vmul.f32 %v3493, 0.2
  %v3585 = vmul.f32 %v3495, 0.2
  %v3586 = vmul.f32 %v3497, 0.2
  %v3587 = vmul.f32 %v3501, 0.2
  %v3588 = vmul.f32 %v3503, 0.2
  %v3589 = vmul.f32 %v3505, 0.2
  %v3590 = vmul.f32 %v3507, 0.2
  %v3591 = vmul.f32 %v3511, 0.2
  %v3592 = vmul.f32 %v3513, 0.2
  %v3593 = vmul.f32 %v3515, 0.2
  %v3594 = vmul.f32 %v3517, 0.2
  %v3595 = vmul.f32 %v3521, 0.2
  %v3596 = vmul.f32 %v3523, 0.2
  %v3597 = vmul.f32 %v3525, 0.2
  %v3598 = vmul.f32 %v3527, 0.2
  %v3599 = vmul.f32 %v3531, 0.2
  %v3600 = vmul.f32 %v3533, 0.2
  %v3601 = vmul.f32 %v3535, 0.2
  %v3602 = vmul.f32 %v3537, 0.2
  %v3603 = vsel %vm3539, %v3461, %v3571
  %v3604 = vsel %vm3540, %v3463, %v3572
  %v3605 = vsel %vm3541, %v3465, %v3573
  %v3606 = vsel %vm3542, %v3467, %v3574
  %v3607 = vsel %vm3543, %v3471, %v3575
  %v3608 = vsel %vm3544, %v3473, %v3576
  %v3609 = vsel %vm3545, %v3475, %v3577
  %v3610 = vsel %vm3546, %v3477, %v3578
  %v3611 = vsel %vm3547, %v3481, %v3579
  %v3612 = vsel %vm3548, %v3483, %v3580
  %v3613 = vsel %vm3549, %v3485, %v3581
  %v3614 = vsel %vm3550, %v3487, %v3582
  %v3615 = vsel %vm3551, %v3491, %v3583
  %v3616 = vsel %vm3552, %v3493, %v3584
  %v3617 = vsel %vm3553, %v3495, %v3585
  %v3618 = vsel %vm3554, %v3497, %v3586
  %v3619 = vsel %vm3555, %v3501, %v3587
  %v3620 = vsel %vm3556, %v3503, %v3588
  %v3621 = vsel %vm3557, %v3505, %v3589
  %v3622 = vsel %vm3558, %v3507, %v3590
  %v3623 = vsel %vm3559, %v3511, %v3591
  %v3624 = vsel %vm3560, %v3513, %v3592
  %v3625 = vsel %vm3561, %v3515, %v3593
  %v3626 = vsel %vm3562, %v3517, %v3594
  %v3627 = vsel %vm3563, %v3521, %v3595
  %v3628 = vsel %vm3564, %v3523, %v3596
  %v3629 = vsel %vm3565, %v3525, %v3597
  %v3630 = vsel %vm3566, %v3527, %v3598
  %v3631 = vsel %vm3567, %v3531, %v3599
  %v3632 = vsel %vm3568, %v3533, %v3600
  %v3633 = vsel %vm3569, %v3535, %v3601
  %v3634 = vsel %vm3570, %v3537, %v3602
  %v3635 = vpack.c.bf16 %v3605, %v3603
  %v3636 = vpack.c.bf16 %v3606, %v3604
  %v3637 = vpack.c.bf16 %v3609, %v3607
  %v3638 = vpack.c.bf16 %v3610, %v3608
  %v3639 = vpack.c.bf16 %v3613, %v3611
  %v3640 = vpack.c.bf16 %v3614, %v3612
  %v3641 = vpack.c.bf16 %v3617, %v3615
  %v3642 = vpack.c.bf16 %v3618, %v3616
  %v3643 = vpack.c.bf16 %v3621, %v3619
  %v3644 = vpack.c.bf16 %v3622, %v3620
  %v3645 = vpack.c.bf16 %v3625, %v3623
  %v3646 = vpack.c.bf16 %v3626, %v3624
  %v3647 = vpack.c.bf16 %v3629, %v3627
  %v3648 = vpack.c.bf16 %v3630, %v3628
  %v3649 = vpack.c.bf16 %v3633, %v3631
  %v3650 = vpack.c.bf16 %v3634, %v3632
  %v3651 = vld [vmem:[%s5] sm:$0xf]
  %v3652 = vld [vmem:[%s5 + $0x4] sm:$0xf]
  %v3653 = vld [vmem:[%s5 + $0x8] sm:$0xf]
  %v3654 = vld [vmem:[%s5 + $0xc] sm:$0xf]
  %v3655 = vld [vmem:[%s5 + $0x10] sm:$0xf]
  %v3656 = vld [vmem:[%s5 + $0x14] sm:$0xf]
  %v3657 = vld [vmem:[%s5 + $0x18] sm:$0xf]
  %v3658 = vld [vmem:[%s5 + $0x1c] sm:$0xf]
  %v3659 = vld [vmem:[%s5 + $0x20] sm:$0xf]
  %v3660 = vld [vmem:[%s5 + $0x24] sm:$0xf]
  %v3661 = vld [vmem:[%s5 + $0x28] sm:$0xf]
  %v3662 = vld [vmem:[%s5 + $0x2c] sm:$0xf]
  %v3663 = vld [vmem:[%s5 + $0x30] sm:$0xf]
  %v3664 = vld [vmem:[%s5 + $0x34] sm:$0xf]
  %v3665 = vld [vmem:[%s5 + $0x38] sm:$0xf]
  %v3666 = vld [vmem:[%s5 + $0x3c] sm:$0xf]
  %v3667 = vld [vmem:[%s5 + $0x40] sm:$0xf]
  %v3668 = vld [vmem:[%s5 + $0x44] sm:$0xf]
  %v3669 = vld [vmem:[%s5 + $0x48] sm:$0xf]
  %v3670 = vld [vmem:[%s5 + $0x4c] sm:$0xf]
  %v3671 = vld [vmem:[%s5 + $0x50] sm:$0xf]
  %v3672 = vld [vmem:[%s5 + $0x54] sm:$0xf]
  %v3673 = vld [vmem:[%s5 + $0x58] sm:$0xf]
  %v3674 = vld [vmem:[%s5 + $0x5c] sm:$0xf]
  %v3675 = vld [vmem:[%s5 + $0x60] sm:$0xf]
  %v3676 = vld [vmem:[%s5 + $0x64] sm:$0xf]
  %v3677 = vld [vmem:[%s5 + $0x68] sm:$0xf]
  %v3678 = vld [vmem:[%s5 + $0x6c] sm:$0xf]
  %v3679 = vld [vmem:[%s5 + $0x70] sm:$0xf]
  %v3680 = vld [vmem:[%s5 + $0x74] sm:$0xf]
  %v3681 = vld [vmem:[%s5 + $0x78] sm:$0xf]
  %v3682 = vld [vmem:[%s5 + $0x7c] sm:$0xf]
  %v3683 = vld [vmem:[%s6] sm:$0x1]
  %v3685 = vlaneseq
  %v3686 = vshrl.u32 %v3685, 7
  %v3687 = vsub.s32 0, %v3686
  %v3688 = vrot.slane %v3683, %v3687
  %v3722 = vunpack.c.l.b16 %v3651
  %v3723 = vunpack.c.l.b16 %v3652
  %v3724 = vunpack.c.l.b16 %v3653
  %v3725 = vunpack.c.l.b16 %v3654
  %v3726 = vunpack.c.l.b16 %v3655
  %v3727 = vunpack.c.l.b16 %v3656
  %v3728 = vunpack.c.l.b16 %v3657
  %v3729 = vunpack.c.l.b16 %v3658
  %v3730 = vunpack.c.l.b16 %v3659
  %v3731 = vunpack.c.l.b16 %v3660
  %v3732 = vunpack.c.l.b16 %v3661
  %v3733 = vunpack.c.l.b16 %v3662
  %v3734 = vunpack.c.l.b16 %v3663
  %v3735 = vunpack.c.l.b16 %v3664
  %v3736 = vunpack.c.l.b16 %v3665
  %v3737 = vunpack.c.l.b16 %v3666
  %v3738 = vunpack.c.l.b16 %v3667
  %v3739 = vunpack.c.l.b16 %v3668
  %v3740 = vunpack.c.l.b16 %v3669
  %v3741 = vunpack.c.l.b16 %v3670
  %v3742 = vunpack.c.l.b16 %v3671
  %v3743 = vunpack.c.l.b16 %v3672
  %v3744 = vunpack.c.l.b16 %v3673
  %v3745 = vunpack.c.l.b16 %v3674
  %v3746 = vunpack.c.l.b16 %v3675
  %v3747 = vunpack.c.l.b16 %v3676
  %v3748 = vunpack.c.l.b16 %v3677
  %v3749 = vunpack.c.l.b16 %v3678
  %v3750 = vunpack.c.l.b16 %v3679
  %v3751 = vunpack.c.l.b16 %v3680
  %v3752 = vunpack.c.l.b16 %v3681
  %v3753 = vunpack.c.l.b16 %v3682
  %v3754 = vpack.c.b16 %v3723, %v3722
  %v3755 = vpack.c.b16 %v3725, %v3724
  %v3756 = vpack.c.b16 %v3727, %v3726
  %v3757 = vpack.c.b16 %v3729, %v3728
  %v3758 = vpack.c.b16 %v3731, %v3730
  %v3759 = vpack.c.b16 %v3733, %v3732
  %v3760 = vpack.c.b16 %v3735, %v3734
  %v3761 = vpack.c.b16 %v3737, %v3736
  %v3762 = vpack.c.b16 %v3739, %v3738
  %v3763 = vpack.c.b16 %v3741, %v3740
  %v3764 = vpack.c.b16 %v3743, %v3742
  %v3765 = vpack.c.b16 %v3745, %v3744
  %v3766 = vpack.c.b16 %v3747, %v3746
  %v3767 = vpack.c.b16 %v3749, %v3748
  %v3768 = vpack.c.b16 %v3751, %v3750
  %v3769 = vpack.c.b16 %v3753, %v3752
  %3786 = vmatprep.subr.bf16.mxu0 0
  %3787 = vmatpush1.bf16.msra.mxu0 %v3761
  %3788 = vmatprep.subr.bf16.mxu0 0
  %3789 = vmatpush1.bf16.msra.mxu0 %v3760
  %3790 = vmatprep.subr.bf16.mxu0 0
  %3791 = vmatpush1.bf16.msra.mxu0 %v3759
  %3792 = vmatprep.subr.bf16.mxu0 0
  %3793 = vmatpush1.bf16.msra.mxu0 %v3758
  %3794 = vmatprep.subr.bf16.mxu0 0
  %3795 = vmatpush1.bf16.msra.mxu0 %v3757
  %3796 = vmatprep.subr.bf16.mxu0 0
  %3797 = vmatpush1.bf16.msra.mxu0 %v3756
  %3798 = vmatprep.subr.bf16.mxu0 0
  %3799 = vmatpush1.bf16.msra.mxu0 %v3755
  %3800 = vmatprep.subr.bf16.mxu0 0
  %3801 = vmatpush1.bf16.msra.mxu0 %v3754
  %3802 = vmatprep.subr.bf16.mxu0 0
  %3803 = vmatpush2.bf16.msra.mxu0 %v3769
  %3804 = vmatprep.subr.bf16.mxu0 0
  %3805 = vmatpush2.bf16.msra.mxu0 %v3768
  %3806 = vmatprep.subr.bf16.mxu0 0
  %3807 = vmatpush2.bf16.msra.mxu0 %v3767
  %3808 = vmatprep.subr.bf16.mxu0 0
  %3809 = vmatpush2.bf16.msra.mxu0 %v3766
  %3810 = vmatprep.subr.bf16.mxu0 0
  %3811 = vmatpush2.bf16.msra.mxu0 %v3765
  %3812 = vmatprep.subr.bf16.mxu0 0
  %3813 = vmatpush2.bf16.msra.mxu0 %v3764
  %3814 = vmatprep.subr.bf16.mxu0 0
  %3815 = vmatpush2.bf16.msra.mxu0 %v3763
  %3816 = vmatprep.subr.bf16.mxu0 0
  %3817 = vmatpush2.bf16.msra.mxu0 %v3762
  %3818 = vmatprep.mubr.bf16.mxu0 %v3636
  %3819 = vmatmul.mubr.bf16.gmra.mxu0 %v3635
  %v3820 = vpop.f32.mrf.mxu0
  %v3821 = vadd.f32 %v3688, %v3820
  %v3822 = vpop.f32.mrf.mxu0
  %v3823 = vpop.f32.mrf.mxu0
  %v3824 = vadd.f32 %v3688, %v3823
  %v3825 = vpop.f32.mrf.mxu0
  %3826 = vmatprep.mubr.bf16.mxu0 %v3638
  %3827 = vmatmul.mubr.bf16.gmra.mxu0 %v3637
  %v3828 = vpop.f32.mrf.mxu0
  %v3829 = vadd.f32 %v3688, %v3828
  %v3830 = vpop.f32.mrf.mxu0
  %v3831 = vpop.f32.mrf.mxu0
  %v3832 = vadd.f32 %v3688, %v3831
  %v3833 = vpop.f32.mrf.mxu0
  %3834 = vmatprep.mubr.bf16.mxu0 %v3640
  %3835 = vmatmul.mubr.bf16.gmra.mxu0 %v3639
  %v3836 = vpop.f32.mrf.mxu0
  %v3837 = vadd.f32 %v3688, %v3836
  %v3838 = vpop.f32.mrf.mxu0
  %v3839 = vpop.f32.mrf.mxu0
  %v3840 = vadd.f32 %v3688, %v3839
  %v3841 = vpop.f32.mrf.mxu0
  %3842 = vmatprep.mubr.bf16.mxu0 %v3642
  %3843 = vmatmul.mubr.bf16.gmra.mxu0 %v3641
  %v3844 = vpop.f32.mrf.mxu0
  %v3845 = vadd.f32 %v3688, %v3844
  %v3846 = vpop.f32.mrf.mxu0
  %v3847 = vpop.f32.mrf.mxu0
  %v3848 = vadd.f32 %v3688, %v3847
  %v3849 = vpop.f32.mrf.mxu0
  %3850 = vmatprep.mubr.bf16.mxu0 %v3644
  %3851 = vmatmul.mubr.bf16.gmra.mxu0 %v3643
  %v3852 = vpop.f32.mrf.mxu0
  %v3853 = vadd.f32 %v3688, %v3852
  %v3854 = vpop.f32.mrf.mxu0
  %v3855 = vpop.f32.mrf.mxu0
  %v3856 = vadd.f32 %v3688, %v3855
  %v3857 = vpop.f32.mrf.mxu0
  %3858 = vmatprep.mubr.bf16.mxu0 %v3646
  %3859 = vmatmul.mubr.bf16.gmra.mxu0 %v3645
  %v3860 = vpop.f32.mrf.mxu0
  %v3861 = vadd.f32 %v3688, %v3860
  %v3862 = vpop.f32.mrf.mxu0
  %v3863 = vpop.f32.mrf.mxu0
  %v3864 = vadd.f32 %v3688, %v3863
  %v3865 = vpop.f32.mrf.mxu0
  %3866 = vmatprep.mubr.bf16.mxu0 %v3648
  %3867 = vmatmul.mubr.bf16.gmra.mxu0 %v3647
  %v3868 = vpop.f32.mrf.mxu0
  %v3869 = vadd.f32 %v3688, %v3868
  %v3870 = vpop.f32.mrf.mxu0
  %v3871 = vpop.f32.mrf.mxu0
  %v3872 = vadd.f32 %v3688, %v3871
  %v3873 = vpop.f32.mrf.mxu0
  %3874 = vmatprep.mubr.bf16.mxu0 %v3650
  %3875 = vmatmul.mubr.bf16.gmra.mxu0 %v3649
  %v3876 = vpop.f32.mrf.mxu0
  %v3877 = vadd.f32 %v3688, %v3876
  %v3878 = vpop.f32.mrf.mxu0
  %v3879 = vpop.f32.mrf.mxu0
  %v3880 = vadd.f32 %v3688, %v3879
  %v3881 = vpop.f32.mrf.mxu0
  %3882 = vdwg.mxu0
  %vm3883 = vcmp.gt.f32.partialorder %v3821, 0.0
  %vm3884 = vcmp.gt.f32.partialorder %v3824, 0.0
  %vm3885 = vcmp.gt.f32.partialorder %v3829, 0.0
  %vm3886 = vcmp.gt.f32.partialorder %v3832, 0.0
  %vm3887 = vcmp.gt.f32.partialorder %v3837, 0.0
  %vm3888 = vcmp.gt.f32.partialorder %v3840, 0.0
  %vm3889 = vcmp.gt.f32.partialorder %v3845, 0.0
  %vm3890 = vcmp.gt.f32.partialorder %v3848, 0.0
  %vm3891 = vcmp.gt.f32.partialorder %v3853, 0.0
  %vm3892 = vcmp.gt.f32.partialorder %v3856, 0.0
  %vm3893 = vcmp.gt.f32.partialorder %v3861, 0.0
  %vm3894 = vcmp.gt.f32.partialorder %v3864, 0.0
  %vm3895 = vcmp.gt.f32.partialorder %v3869, 0.0
  %vm3896 = vcmp.gt.f32.partialorder %v3872, 0.0
  %vm3897 = vcmp.gt.f32.partialorder %v3877, 0.0
  %vm3898 = vcmp.gt.f32.partialorder %v3880, 0.0
  %v3899 = vmul.f32 %v3821, 0.2
  %v3900 = vmul.f32 %v3824, 0.2
  %v3901 = vmul.f32 %v3829, 0.2
  %v3902 = vmul.f32 %v3832, 0.2
  %v3903 = vmul.f32 %v3837, 0.2
  %v3904 = vmul.f32 %v3840, 0.2
  %v3905 = vmul.f32 %v3845, 0.2
  %v3906 = vmul.f32 %v3848, 0.2
  %v3907 = vmul.f32 %v3853, 0.2
  %v3908 = vmul.f32 %v3856, 0.2
  %v3909 = vmul.f32 %v3861, 0.2
  %v3910 = vmul.f32 %v3864, 0.2
  %v3911 = vmul.f32 %v3869, 0.2
  %v3912 = vmul.f32 %v3872, 0.2
  %v3913 = vmul.f32 %v3877, 0.2
  %v3914 = vmul.f32 %v3880, 0.2
  %v3915 = vsel %vm3883, %v3821, %v3899
  %v3916 = vsel %vm3884, %v3824, %v3900
  %v3917 = vsel %vm3885, %v3829, %v3901
  %v3918 = vsel %vm3886, %v3832, %v3902
  %v3919 = vsel %vm3887, %v3837, %v3903
  %v3920 = vsel %vm3888, %v3840, %v3904
  %v3921 = vsel %vm3889, %v3845, %v3905
  %v3922 = vsel %vm3890, %v3848, %v3906
  %v3923 = vsel %vm3891, %v3853, %v3907
  %v3924 = vsel %vm3892, %v3856, %v3908
  %v3925 = vsel %vm3893, %v3861, %v3909
  %v3926 = vsel %vm3894, %v3864, %v3910
  %v3927 = vsel %vm3895, %v3869, %v3911
  %v3928 = vsel %vm3896, %v3872, %v3912
  %v3929 = vsel %vm3897, %v3877, %v3913
  %v3930 = vsel %vm3898, %v3880, %v3914
  %v3931 = vpack.c.bf16 %v3916, %v3915
  %v3932 = vpack.c.bf16 %v3918, %v3917
  %v3933 = vpack.c.bf16 %v3920, %v3919
  %v3934 = vpack.c.bf16 %v3922, %v3921
  %v3935 = vpack.c.bf16 %v3924, %v3923
  %v3936 = vpack.c.bf16 %v3926, %v3925
  %v3937 = vpack.c.bf16 %v3928, %v3927
  %v3938 = vpack.c.bf16 %v3930, %v3929
  %v3939 = vld [vmem:[%s7] sm:$0xf]
  %v3940 = vld [vmem:[%s7 + $0x4] sm:$0xf]
  %v3941 = vld [vmem:[%s7 + $0x8] sm:$0xf]
  %v3942 = vld [vmem:[%s7 + $0xc] sm:$0xf]
  %v3943 = vld [vmem:[%s7 + $0x10] sm:$0xf]
  %v3944 = vld [vmem:[%s7 + $0x14] sm:$0xf]
  %v3945 = vld [vmem:[%s7 + $0x18] sm:$0xf]
  %v3946 = vld [vmem:[%s7 + $0x1c] sm:$0xf]
  %v3947 = vld [vmem:[%s7 + $0x20] sm:$0xf]
  %v3948 = vld [vmem:[%s7 + $0x24] sm:$0xf]
  %v3949 = vld [vmem:[%s7 + $0x28] sm:$0xf]
  %v3950 = vld [vmem:[%s7 + $0x2c] sm:$0xf]
  %v3951 = vld [vmem:[%s7 + $0x30] sm:$0xf]
  %v3952 = vld [vmem:[%s7 + $0x34] sm:$0xf]
  %v3953 = vld [vmem:[%s7 + $0x38] sm:$0xf]
  %v3954 = vld [vmem:[%s7 + $0x3c] sm:$0xf]
  %v3955 = vld [vmem:[%s8] sm:$0x1]
  %v3957 = vlaneseq
  %v3958 = vshrl.u32 %v3957, 7
  %v3959 = vsub.s32 0, %v3958
  %v3960 = vrot.slane %v3955, %v3959
  %v3978 = vunpack.c.l.b16 %v3939
  %v3979 = vunpack.c.l.b16 %v3940
  %v3980 = vunpack.c.l.b16 %v3941
  %v3981 = vunpack.c.l.b16 %v3942
  %v3982 = vunpack.c.l.b16 %v3943
  %v3983 = vunpack.c.l.b16 %v3944
  %v3984 = vunpack.c.l.b16 %v3945
  %v3985 = vunpack.c.l.b16 %v3946
  %v3986 = vunpack.c.l.b16 %v3947
  %v3987 = vunpack.c.l.b16 %v3948
  %v3988 = vunpack.c.l.b16 %v3949
  %v3989 = vunpack.c.l.b16 %v3950
  %v3990 = vunpack.c.l.b16 %v3951
  %v3991 = vunpack.c.l.b16 %v3952
  %v3992 = vunpack.c.l.b16 %v3953
  %v3993 = vunpack.c.l.b16 %v3954
  %v3994 = vpack.c.b16 %v3979, %v3978
  %v3995 = vpack.c.b16 %v3981, %v3980
  %v3996 = vpack.c.b16 %v3983, %v3982
  %v3997 = vpack.c.b16 %v3985, %v3984
  %v3998 = vpack.c.b16 %v3987, %v3986
  %v3999 = vpack.c.b16 %v3989, %v3988
  %v4000 = vpack.c.b16 %v3991, %v3990
  %v4001 = vpack.c.b16 %v3993, %v3992
  %4010 = vmatprep.subr.bf16.mxu0 0
  %4011 = vmatpush1.bf16.msra.mxu0 %v4001
  %4012 = vmatprep.subr.bf16.mxu0 0
  %4013 = vmatpush1.bf16.msra.mxu0 %v4000
  %4014 = vmatprep.subr.bf16.mxu0 0
  %4015 = vmatpush1.bf16.msra.mxu0 %v3999
  %4016 = vmatprep.subr.bf16.mxu0 0
  %4017 = vmatpush1.bf16.msra.mxu0 %v3998
  %4018 = vmatprep.subr.bf16.mxu0 0
  %4019 = vmatpush1.bf16.msra.mxu0 %v3997
  %4020 = vmatprep.subr.bf16.mxu0 0
  %4021 = vmatpush1.bf16.msra.mxu0 %v3996
  %4022 = vmatprep.subr.bf16.mxu0 0
  %4023 = vmatpush1.bf16.msra.mxu0 %v3995
  %4024 = vmatprep.subr.bf16.mxu0 0
  %4025 = vmatpush1.bf16.msra.mxu0 %v3994
  %4026 = vmatprep.subr.bf16.mxu0 0
  %4027 = vmatpush2.bf16.msra.mxu0 0
  %4028 = vmatprep.subr.bf16.mxu0 0
  %4029 = vmatpush2.bf16.msra.mxu0 0
  %4030 = vmatprep.subr.bf16.mxu0 0
  %4031 = vmatpush2.bf16.msra.mxu0 0
  %4032 = vmatprep.subr.bf16.mxu0 0
  %4033 = vmatpush2.bf16.msra.mxu0 0
  %4034 = vmatprep.subr.bf16.mxu0 0
  %4035 = vmatpush2.bf16.msra.mxu0 0
  %4036 = vmatprep.subr.bf16.mxu0 0
  %4037 = vmatpush2.bf16.msra.mxu0 0
  %4038 = vmatprep.subr.bf16.mxu0 0
  %4039 = vmatpush2.bf16.msra.mxu0 0
  %4040 = vmatprep.subr.bf16.mxu0 0
  %4041 = vmatpush2.bf16.msra.mxu0 0
  %4042 = vmatprep.mubr.bf16.mxu0 0
  %4043 = vmatmul.mubr.bf16.gmra.mxu0 %v3931
  %v4044 = vpop.f32.mrf.mxu0
  %v4045 = vadd.f32 %v3960, %v4044
  %v4046 = vpop.f32.mrf.mxu0
  %v4047 = vpop.f32.mrf.mxu0
  %v4048 = vadd.f32 %v3960, %v4047
  %v4049 = vpop.f32.mrf.mxu0
  %4050 = vmatprep.mubr.bf16.mxu0 0
  %4051 = vmatmul.mubr.bf16.gmra.mxu0 %v3932
  %v4052 = vpop.f32.mrf.mxu0
  %v4053 = vadd.f32 %v3960, %v4052
  %v4054 = vpop.f32.mrf.mxu0
  %v4055 = vpop.f32.mrf.mxu0
  %v4056 = vadd.f32 %v3960, %v4055
  %v4057 = vpop.f32.mrf.mxu0
  %4058 = vmatprep.mubr.bf16.mxu0 0
  %4059 = vmatmul.mubr.bf16.gmra.mxu0 %v3933
  %v4060 = vpop.f32.mrf.mxu0
  %v4061 = vadd.f32 %v3960, %v4060
  %v4062 = vpop.f32.mrf.mxu0
  %v4063 = vpop.f32.mrf.mxu0
  %v4064 = vadd.f32 %v3960, %v4063
  %v4065 = vpop.f32.mrf.mxu0
  %4066 = vmatprep.mubr.bf16.mxu0 0
  %4067 = vmatmul.mubr.bf16.gmra.mxu0 %v3934
  %v4068 = vpop.f32.mrf.mxu0
  %v4069 = vadd.f32 %v3960, %v4068
  %v4070 = vpop.f32.mrf.mxu0
  %v4071 = vpop.f32.mrf.mxu0
  %v4072 = vadd.f32 %v3960, %v4071
  %v4073 = vpop.f32.mrf.mxu0
  %4074 = vmatprep.mubr.bf16.mxu0 0
  %4075 = vmatmul.mubr.bf16.gmra.mxu0 %v3935
  %v4076 = vpop.f32.mrf.mxu0
  %v4077 = vadd.f32 %v3960, %v4076
  %v4078 = vpop.f32.mrf.mxu0
  %v4079 = vpop.f32.mrf.mxu0
  %v4080 = vadd.f32 %v3960, %v4079
  %v4081 = vpop.f32.mrf.mxu0
  %4082 = vmatprep.mubr.bf16.mxu0 0
  %4083 = vmatmul.mubr.bf16.gmra.mxu0 %v3936
  %v4084 = vpop.f32.mrf.mxu0
  %v4085 = vadd.f32 %v3960, %v4084
  %v4086 = vpop.f32.mrf.mxu0
  %v4087 = vpop.f32.mrf.mxu0
  %v4088 = vadd.f32 %v3960, %v4087
  %v4089 = vpop.f32.mrf.mxu0
  %4090 = vmatprep.mubr.bf16.mxu0 0
  %4091 = vmatmul.mubr.bf16.gmra.mxu0 %v3937
  %v4092 = vpop.f32.mrf.mxu0
  %v4093 = vadd.f32 %v3960, %v4092
  %v4094 = vpop.f32.mrf.mxu0
  %v4095 = vpop.f32.mrf.mxu0
  %v4096 = vadd.f32 %v3960, %v4095
  %v4097 = vpop.f32.mrf.mxu0
  %4098 = vmatprep.mubr.bf16.mxu0 0
  %4099 = vmatmul.mubr.bf16.gmra.mxu0 %v3938
  %v4100 = vpop.f32.mrf.mxu0
  %v4101 = vadd.f32 %v3960, %v4100
  %v4102 = vpop.f32.mrf.mxu0
  %v4103 = vpop.f32.mrf.mxu0
  %v4104 = vadd.f32 %v3960, %v4103
  %v4105 = vpop.f32.mrf.mxu0
  %4106 = vdwg.mxu0
  %vm4107 = vcmp.gt.f32.partialorder %v4045, 0.0
  %vm4108 = vcmp.gt.f32.partialorder %v4048, 0.0
  %vm4109 = vcmp.gt.f32.partialorder %v4053, 0.0
  %vm4110 = vcmp.gt.f32.partialorder %v4056, 0.0
  %vm4111 = vcmp.gt.f32.partialorder %v4061, 0.0
  %vm4112 = vcmp.gt.f32.partialorder %v4064, 0.0
  %vm4113 = vcmp.gt.f32.partialorder %v4069, 0.0
  %vm4114 = vcmp.gt.f32.partialorder %v4072, 0.0
  %vm4115 = vcmp.gt.f32.partialorder %v4077, 0.0
  %vm4116 = vcmp.gt.f32.partialorder %v4080, 0.0
  %vm4117 = vcmp.gt.f32.partialorder %v4085, 0.0
  %vm4118 = vcmp.gt.f32.partialorder %v4088, 0.0
  %vm4119 = vcmp.gt.f32.partialorder %v4093, 0.0
  %vm4120 = vcmp.gt.f32.partialorder %v4096, 0.0
  %vm4121 = vcmp.gt.f32.partialorder %v4101, 0.0
  %vm4122 = vcmp.gt.f32.partialorder %v4104, 0.0
  %v4123 = vmul.f32 %v4045, 0.2
  %v4124 = vmul.f32 %v4048, 0.2
  %v4125 = vmul.f32 %v4053, 0.2
  %v4126 = vmul.f32 %v4056, 0.2
  %v4127 = vmul.f32 %v4061, 0.2
  %v4128 = vmul.f32 %v4064, 0.2
  %v4129 = vmul.f32 %v4069, 0.2
  %v4130 = vmul.f32 %v4072, 0.2
  %v4131 = vmul.f32 %v4077, 0.2
  %v4132 = vmul.f32 %v4080, 0.2
  %v4133 = vmul.f32 %v4085, 0.2
  %v4134 = vmul.f32 %v4088, 0.2
  %v4135 = vmul.f32 %v4093, 0.2
  %v4136 = vmul.f32 %v4096, 0.2
  %v4137 = vmul.f32 %v4101, 0.2
  %v4138 = vmul.f32 %v4104, 0.2
  %v4139 = vsel %vm4107, %v4045, %v4123
  %v4140 = vsel %vm4108, %v4048, %v4124
  %v4141 = vsel %vm4109, %v4053, %v4125
  %v4142 = vsel %vm4110, %v4056, %v4126
  %v4143 = vsel %vm4111, %v4061, %v4127
  %v4144 = vsel %vm4112, %v4064, %v4128
  %v4145 = vsel %vm4113, %v4069, %v4129
  %v4146 = vsel %vm4114, %v4072, %v4130
  %v4147 = vsel %vm4115, %v4077, %v4131
  %v4148 = vsel %vm4116, %v4080, %v4132
  %v4149 = vsel %vm4117, %v4085, %v4133
  %v4150 = vsel %vm4118, %v4088, %v4134
  %v4151 = vsel %vm4119, %v4093, %v4135
  %v4152 = vsel %vm4120, %v4096, %v4136
  %v4153 = vsel %vm4121, %v4101, %v4137
  %v4154 = vsel %vm4122, %v4104, %v4138
  %v4155 = vpack.c.bf16 %v4140, %v4139
  %v4156 = vpack.c.bf16 %v4142, %v4141
  %v4157 = vpack.c.bf16 %v4144, %v4143
  %v4158 = vpack.c.bf16 %v4146, %v4145
  %v4159 = vpack.c.bf16 %v4148, %v4147
  %v4160 = vpack.c.bf16 %v4150, %v4149
  %v4161 = vpack.c.bf16 %v4152, %v4151
  %v4162 = vpack.c.bf16 %v4154, %v4153
  %v4163 = vld [vmem:[%s9] sm:$0xf]
  %v4164 = vld [vmem:[%s9 + $0x4] sm:$0xf]
  %v4165 = vld [vmem:[%s9 + $0x8] sm:$0xf]
  %v4166 = vld [vmem:[%s9 + $0xc] sm:$0xf]
  %v4167 = vld [vmem:[%s9 + $0x10] sm:$0xf]
  %v4168 = vld [vmem:[%s9 + $0x14] sm:$0xf]
  %v4169 = vld [vmem:[%s9 + $0x18] sm:$0xf]
  %v4170 = vld [vmem:[%s9 + $0x1c] sm:$0xf]
  %v4171 = vld [vmem:[%s10] sm:$0x1]
  %v4173 = vlaneseq
  %v4174 = vshrl.u32 %v4173, 7
  %v4175 = vsub.s32 0, %v4174
  %v4176 = vrot.slane %v4171, %v4175
  %v4186 = vunpack.c.l.b16 %v4163
  %v4187 = vunpack.c.l.b16 %v4164
  %v4188 = vunpack.c.l.b16 %v4165
  %v4189 = vunpack.c.l.b16 %v4166
  %v4190 = vunpack.c.l.b16 %v4167
  %v4191 = vunpack.c.l.b16 %v4168
  %v4192 = vunpack.c.l.b16 %v4169
  %v4193 = vunpack.c.l.b16 %v4170
  %v4194 = vpack.c.b16 %v4187, %v4186
  %v4195 = vpack.c.b16 %v4189, %v4188
  %v4196 = vpack.c.b16 %v4191, %v4190
  %v4197 = vpack.c.b16 %v4193, %v4192
  %vm4202 = vcmask 523264
  %v4204 = vsel %vm4202, %v4155, 0
  %v4207 = vsel %vm4202, %v4156, 0
  %v4210 = vsel %vm4202, %v4157, 0
  %v4213 = vsel %vm4202, %v4158, 0
  %v4216 = vsel %vm4202, %v4159, 0
  %v4219 = vsel %vm4202, %v4160, 0
  %v4222 = vsel %vm4202, %v4161, 0
  %v4225 = vsel %vm4202, %v4162, 0
  %4227 = vmatprep.subr.bf16.mxu0 0
  %4228 = vmatpush1.bf16.msra.mxu0 0
  %4229 = vmatprep.subr.bf16.mxu0 0
  %4230 = vmatpush1.bf16.msra.mxu0 0
  %4231 = vmatprep.subr.bf16.mxu0 0
  %4232 = vmatpush1.bf16.msra.mxu0 0
  %4233 = vmatprep.subr.bf16.mxu0 0
  %4234 = vmatpush1.bf16.msra.mxu0 0
  %4235 = vmatprep.subr.bf16.mxu0 0
  %4236 = vmatpush1.bf16.msra.mxu0 %v4197
  %4237 = vmatprep.subr.bf16.mxu0 0
  %4238 = vmatpush1.bf16.msra.mxu0 %v4196
  %4239 = vmatprep.subr.bf16.mxu0 0
  %4240 = vmatpush1.bf16.msra.mxu0 %v4195
  %4241 = vmatprep.subr.bf16.mxu0 0
  %4242 = vmatpush1.bf16.msra.mxu0 %v4194
  %4243 = vmatprep.subr.bf16.mxu0 0
  %4244 = vmatpush2.bf16.msra.mxu0 0
  %4245 = vmatprep.subr.bf16.mxu0 0
  %4246 = vmatpush2.bf16.msra.mxu0 0
  %4247 = vmatprep.subr.bf16.mxu0 0
  %4248 = vmatpush2.bf16.msra.mxu0 0
  %4249 = vmatprep.subr.bf16.mxu0 0
  %4250 = vmatpush2.bf16.msra.mxu0 0
  %4251 = vmatprep.subr.bf16.mxu0 0
  %4252 = vmatpush2.bf16.msra.mxu0 0
  %4253 = vmatprep.subr.bf16.mxu0 0
  %4254 = vmatpush2.bf16.msra.mxu0 0
  %4255 = vmatprep.subr.bf16.mxu0 0
  %4256 = vmatpush2.bf16.msra.mxu0 0
  %4257 = vmatprep.subr.bf16.mxu0 0
  %4258 = vmatpush2.bf16.msra.mxu0 0
  %4259 = vmatprep.mubr.bf16.mxu0 0
  %4260 = vmatmul.mubr.bf16.gmra.mxu0 %v4204
  %v4261 = vpop.f32.mrf.mxu0
  %v4262 = vadd.f32 %v4176, %v4261
  %v4263 = vpop.f32.mrf.mxu0
  %v4264 = vpop.f32.mrf.mxu0
  %v4265 = vadd.f32 %v4176, %v4264
  %v4266 = vpop.f32.mrf.mxu0
  %4267 = vmatprep.mubr.bf16.mxu0 0
  %4268 = vmatmul.mubr.bf16.gmra.mxu0 %v4207
  %v4269 = vpop.f32.mrf.mxu0
  %v4270 = vadd.f32 %v4176, %v4269
  %v4271 = vpop.f32.mrf.mxu0
  %v4272 = vpop.f32.mrf.mxu0
  %v4273 = vadd.f32 %v4176, %v4272
  %v4274 = vpop.f32.mrf.mxu0
  %4275 = vmatprep.mubr.bf16.mxu0 0
  %4276 = vmatmul.mubr.bf16.gmra.mxu0 %v4210
  %v4277 = vpop.f32.mrf.mxu0
  %v4278 = vadd.f32 %v4176, %v4277
  %v4279 = vpop.f32.mrf.mxu0
  %v4280 = vpop.f32.mrf.mxu0
  %v4281 = vadd.f32 %v4176, %v4280
  %v4282 = vpop.f32.mrf.mxu0
  %4283 = vmatprep.mubr.bf16.mxu0 0
  %4284 = vmatmul.mubr.bf16.gmra.mxu0 %v4213
  %v4285 = vpop.f32.mrf.mxu0
  %v4286 = vadd.f32 %v4176, %v4285
  %v4287 = vpop.f32.mrf.mxu0
  %v4288 = vpop.f32.mrf.mxu0
  %v4289 = vadd.f32 %v4176, %v4288
  %v4290 = vpop.f32.mrf.mxu0
  %4291 = vmatprep.mubr.bf16.mxu0 0
  %4292 = vmatmul.mubr.bf16.gmra.mxu0 %v4216
  %v4293 = vpop.f32.mrf.mxu0
  %v4294 = vadd.f32 %v4176, %v4293
  %v4295 = vpop.f32.mrf.mxu0
  %v4296 = vpop.f32.mrf.mxu0
  %v4297 = vadd.f32 %v4176, %v4296
  %v4298 = vpop.f32.mrf.mxu0
  %4299 = vmatprep.mubr.bf16.mxu0 0
  %4300 = vmatmul.mubr.bf16.gmra.mxu0 %v4219
  %v4301 = vpop.f32.mrf.mxu0
  %v4302 = vadd.f32 %v4176, %v4301
  %v4303 = vpop.f32.mrf.mxu0
  %v4304 = vpop.f32.mrf.mxu0
  %v4305 = vadd.f32 %v4176, %v4304
  %v4306 = vpop.f32.mrf.mxu0
  %4307 = vmatprep.mubr.bf16.mxu0 0
  %4308 = vmatmul.mubr.bf16.gmra.mxu0 %v4222
  %v4309 = vpop.f32.mrf.mxu0
  %v4310 = vadd.f32 %v4176, %v4309
  %v4311 = vpop.f32.mrf.mxu0
  %v4312 = vpop.f32.mrf.mxu0
  %v4313 = vadd.f32 %v4176, %v4312
  %v4314 = vpop.f32.mrf.mxu0
  %4315 = vmatprep.mubr.bf16.mxu0 0
  %4316 = vmatmul.mubr.bf16.gmra.mxu0 %v4225
  %v4317 = vpop.f32.mrf.mxu0
  %v4318 = vadd.f32 %v4176, %v4317
  %v4319 = vpop.f32.mrf.mxu0
  %v4320 = vpop.f32.mrf.mxu0
  %v4321 = vadd.f32 %v4176, %v4320
  %v4322 = vpop.f32.mrf.mxu0
  %4323 = vdwg.mxu0
  %v4324 = vtanh.pop %v4262
  %v4325 = vtanh.pop %v4265
  %v4326 = vtanh.pop %v4270
  %v4327 = vtanh.pop %v4273
  %v4328 = vtanh.pop %v4278
  %v4329 = vtanh.pop %v4281
  %v4330 = vtanh.pop %v4286
  %v4331 = vtanh.pop %v4289
  %v4332 = vtanh.pop %v4294
  %v4333 = vtanh.pop %v4297
  %v4334 = vtanh.pop %v4302
  %v4335 = vtanh.pop %v4305
  %v4336 = vtanh.pop %v4310
  %v4337 = vtanh.pop %v4313
  %v4338 = vtanh.pop %v4318
  %v4339 = vtanh.pop %v4321
  %vm4340 = vcmask 261120
  %4341 = vst.msk [vmem:[%s11] sm:$0xff] %vm4340, %v4324
  %4342 = vst.msk [vmem:[%s11 + $0x8] sm:$0xff] %vm4340, %v4325
  %4343 = vst.msk [vmem:[%s11 + $0x10] sm:$0xff] %vm4340, %v4326
  %4344 = vst.msk [vmem:[%s11 + $0x18] sm:$0xff] %vm4340, %v4327
  %4345 = vst.msk [vmem:[%s11 + $0x20] sm:$0xff] %vm4340, %v4328
  %4346 = vst.msk [vmem:[%s11 + $0x28] sm:$0xff] %vm4340, %v4329
  %4347 = vst.msk [vmem:[%s11 + $0x30] sm:$0xff] %vm4340, %v4330
  %4348 = vst.msk [vmem:[%s11 + $0x38] sm:$0xff] %vm4340, %v4331
  %4349 = vst.msk [vmem:[%s11 + $0x40] sm:$0xff] %vm4340, %v4332
  %4350 = vst.msk [vmem:[%s11 + $0x48] sm:$0xff] %vm4340, %v4333
  %4351 = vst.msk [vmem:[%s11 + $0x50] sm:$0xff] %vm4340, %v4334
  %4352 = vst.msk [vmem:[%s11 + $0x58] sm:$0xff] %vm4340, %v4335
  %4353 = vst.msk [vmem:[%s11 + $0x60] sm:$0xff] %vm4340, %v4336
  %4354 = vst.msk [vmem:[%s11 + $0x68] sm:$0xff] %vm4340, %v4337
  %4355 = vst.msk [vmem:[%s11 + $0x70] sm:$0xff] %vm4340, %v4338
  %4356 = vst.msk [vmem:[%s11 + $0x78] sm:$0xff] %vm4340, %v4339
  // Predicated region
  $region46: #{_encoder3_forward_impl.1} parent=0 // pred_check
    _
  $region47: #{_encoder3_forward_impl.1} parent=0 // pred_check_branch
    %4358 = sbr.rel (0) target = $region49
  $region48: #{_encoder3_forward_impl.1} parent=0 // pred_region
    _
  $region49: #{_encoder3_forward_impl.1} parent=0 // pred_fallthru
    _
  // Predicated region
  $region50: #{_encoder3_forward_impl.1} parent=0 // pred_check
    _
  $region51: #{_encoder3_forward_impl.1} parent=0 // pred_check_branch
    %4360 = sbr.rel (0) target = $region53
  $region52: #{_encoder3_forward_impl.1} parent=0 // pred_region
    _
  $region53: #{_encoder3_forward_impl.1} parent=0 // pred_fallthru
    _

</llo_original>
